<compile_context>
chip_gen: v6e
topology: v6e:2x2x1
jax: 0.10.0
libtpu: 0.0.40
codegen_flags: <defaults>
</compile_context>

<pallas_src>
import functools

import jax
import jax.numpy as jnp
from jax.experimental import pallas as pl
from jax.experimental.pallas import tpu as pltpu


def _rope_kernel(pos_ref, inv_ref, cos_ref, sin_ref, *, k):
    """One row-tile of the fused RoPE cos/sin computation.

    pos_ref : [TR, k]  int32   (k consecutive flattened positions per packed row)
    inv_ref : [k, L]   float32 (row j = duplicated inv_freq in lanes j*dim:(j+1)*dim, else 0)
    cos_ref : [TR, L]  float32
    sin_ref : [TR, L]  float32
    """
    # Positions are exact in float32 for values < 2**24 (ample for real context lengths).
    pos = pos_ref[...].astype(jnp.float32)                # [TR, k]

    # Full-output-lane-width angle, built as a sum of disjoint-support broadcasts.
    # 2k-1 VPU ops per vreg; no concatenate / repeat / XLU shuffles; exact f32 math.
    ang = pos[:, 0:1] * inv_ref[0:1, :]                   # [TR, L]
    for j in range(1, k):                                 # static loop, k = 128 // dim (tiny)
        ang = ang + pos[:, j:j + 1] * inv_ref[j:j + 1, :]

    # One full-lane-width transcendental each (EUP at 100% occupancy), one dense store each.
    cos_ref[...] = jnp.cos(ang)
    sin_ref[...] = jnp.sin(ang)


def rotary_embedding_forward(position_ids, dim, base=10000.0, *, tile_rows=4096):
    """Equivalent of RotaryEmbedding(dim, use_rotate_half=True, use_fp32=True).forward.

    position_ids: [B, S] integer array.  Returns (cos, sin), each [B, S, dim] float32.
    """
    assert dim % 2 == 0
    B, S = position_ids.shape
    N = B * S
    half = dim // 2

    # --- tiny host-side glue (identical to get_inv_freq in the module) ---------------------
    inv_h = 1.0 / (base ** (jnp.arange(0, dim, 2, dtype=jnp.float32) / dim))     # [half]
    inv_full = jnp.concatenate([inv_h, inv_h])                                   # [dim]

    # Pack k consecutive positions per output row so the output lane width L = k*dim is a
    # multiple of 128 (dense unmasked stores / dense HBM writeback).  Pure row-major reshape.
    k = (128 // dim) if (dim < 128 and 128 % dim == 0) else 1
    L = k * dim

    # Expansion table: E[j, j*dim:(j+1)*dim] = inv_full, zeros elsewhere.
    E = (jnp.eye(k, dtype=jnp.float32)[:, :, None] * inv_full[None, None, :]).reshape(k, L)

    R = pl.cdiv(N, k)                                     # packed row count

    # --- tile-size choice -------------------------------------------------------------------
    # VMEM budget per row (double-buffered): 2 f32 output rows of width L, plus the int32
    # position row which is lane-padded to 128 regardless of k.
    bytes_per_row = 2 * L * 4 * 2 + 128 * 4 * 2
    tr_cap = max(8, ((24 * 1024 * 1024) // bytes_per_row) // 8 * 8)
    # Force >= 2 grid steps when possible so "parallel" shards across v7x's 2 TensorCores.
    split = max(8, ((pl.cdiv(R, 2) + 7) // 8) * 8)
    tile_rows = max(8, (tile_rows // 8) * 8)
    tr = min(tile_rows, tr_cap, split)

    r_pad = pl.cdiv(R, tr) * tr
    n_pad = r_pad * k

    pos_flat = position_ids.reshape(N).astype(jnp.int32)
    if n_pad != N:
        pos_flat = jnp.pad(pos_flat, (0, n_pad - N))      # padded rows computed then sliced off
    pos2d = pos_flat.reshape(r_pad, k)

    grid = (r_pad // tr,)

    cos_p, sin_p = pl.pallas_call(
        functools.partial(_rope_kernel, k=k),
        grid=grid,
        in_specs=[
            pl.BlockSpec((tr, k), lambda i: (i, 0)),      # packed rows on sublanes
            pl.BlockSpec((k, L), lambda i: (0, 0)),       # expansion table, resident
        ],
        out_specs=(
            pl.BlockSpec((tr, L), lambda i: (i, 0)),
            pl.BlockSpec((tr, L), lambda i: (i, 0)),
        ),
        out_shape=(
            jax.ShapeDtypeStruct((r_pad, L), jnp.float32),
            jax.ShapeDtypeStruct((r_pad, L), jnp.float32),
        ),
        compiler_params=pltpu.CompilerParams(
            dimension_semantics=("parallel",),            # shards rows across v7x's 2 TCs
            vmem_limit_bytes=32 * 1024 * 1024,
        ),
    )(pos2d, E)

    def _unpack(o):
        o = o.reshape(n_pad, dim)
        if n_pad != N:
            o = o[:N]
        return o.reshape(B, S, dim)

    return _unpack(cos_p), _unpack(sin_p)


def _reference(position_ids, dim, base=10000.0):
    # Pure-JAX mirror of the PyTorch cache-then-gather path.
    inv_freq = 1.0 / (base ** (jnp.arange(0, dim, 2, dtype=jnp.float32) / dim))       # [dim//2]
    freqs = position_ids.astype(jnp.float32)[..., None] * inv_freq[None, None, :]     # [B,S,dim//2]
    cos_h, sin_h = jnp.cos(freqs), jnp.sin(freqs)
    cos = jnp.concatenate([cos_h, cos_h], axis=-1)
    sin = jnp.concatenate([sin_h, sin_h], axis=-1)
    return cos, sin


if __name__ == "__main__":
    base = 10000.0

    # Case 1: dim=64 < 128 -> k=2 positions packed per 128-lane row; grid split into 2 blocks.
    B, S, dim = 2, 512, 64
    max_position_embeddings = 512
    pos = jax.random.randint(jax.random.PRNGKey(0), (B, S), 0, max_position_embeddings,
                             dtype=jnp.int32)
    cos, sin = rotary_embedding_forward(pos, dim, base=base)
    cos = jax.block_until_ready(cos)
    sin = jax.block_until_ready(sin)
    cos_r, sin_r = _reference(pos, dim, base=base)
    assert cos.shape == (B, S, dim) and sin.shape == (B, S, dim)
    assert cos.dtype == jnp.float32 and sin.dtype == jnp.float32
    assert jnp.allclose(cos, cos_r, atol=1e-4, rtol=1e-5)
    assert jnp.allclose(sin, sin_r, atol=1e-4, rtol=1e-5)

    # Case 2: ragged B*S (exercises pad + slice-back path), dim=32 -> k=4.
    B2, S2, dim2 = 2, 13, 32
    pos2 = jax.random.randint(jax.random.PRNGKey(1), (B2, S2), 0, 64, dtype=jnp.int32)
    cos2, sin2 = rotary_embedding_forward(pos2, dim2, base=base)
    jax.block_until_ready((cos2, sin2))
    cos2_r, sin2_r = _reference(pos2, dim2, base=base)
    assert jnp.allclose(cos2, cos2_r, atol=1e-4, rtol=1e-5)
    assert jnp.allclose(sin2, sin2_r, atol=1e-4, rtol=1e-5)

    # Case 3: dim=128 (already lane-dense, k=1), grid of 2 blocks.
    B3, S3, dim3 = 2, 8, 128
    pos3 = jax.random.randint(jax.random.PRNGKey(2), (B3, S3), 0, 64, dtype=jnp.int32)
    cos3, sin3 = rotary_embedding_forward(pos3, dim3, base=base)
    jax.block_until_ready((cos3, sin3))
    cos3_r, sin3_r = _reference(pos3, dim3, base=base)
    assert jnp.allclose(cos3, cos3_r, atol=1e-4, rtol=1e-5)
    assert jnp.allclose(sin3, sin3_r, atol=1e-4, rtol=1e-5)

    # TODO(synk): use_complex=True path (torch.polar -> complex64 freqs_cis) has no Pallas TPU
    # equivalent (no complex dtype); the (cos,-sin,sin,cos) 2x2 freqs_cis variant and the
    # stateful max_seq_len_cached growth / cast_cache device logic are host-side glue, not kernels.
    print("KERNEL_OK")
</pallas_src>

<mosaic_0001>
module attributes {stable_mosaic.version = 11 : i64} {
  func.func @_rope_kernel(%arg0: i32, %arg1: memref<256x2xi32, #tpu.memory_space<vmem>>, %arg2: memref<2x128xf32, #tpu.memory_space<vmem>>, %arg3: memref<256x128xf32, #tpu.memory_space<vmem>>, %arg4: memref<256x128xf32, #tpu.memory_space<vmem>>) attributes {dimension_semantics = [#tpu.dimension_semantics<parallel>], iteration_bounds = array<i64: 2>, scalar_prefetch = 0 : i64, scratch_operands = 0 : i64, tpu.core_type = #tpu.core_type<tc>, window_params = [{transform_indices = @transform_0, window_bounds = array<i64: 256, 2>}, {pipeline_mode = #tpu.pipeline_mode<synchronous>, transform_indices = @transform_1, window_bounds = array<i64: 2, 128>}, {transform_indices = @transform_2, window_bounds = array<i64: 256, 128>}, {transform_indices = @transform_3, window_bounds = array<i64: 256, 128>}]} {
    %c0 = arith.constant 0 : index
    %c0_0 = arith.constant 0 : index
    %0 = vector.load %arg1[%c0, %c0_0] : memref<256x2xi32, #tpu.memory_space<vmem>>, vector<256x2xi32>
    %1 = arith.sitofp %0 : vector<256x2xi32> to vector<256x2xf32>
    %2 = vector.extract_strided_slice %1 {offsets = [0, 0], sizes = [256, 1], strides = [1, 1]} : vector<256x2xf32> to vector<256x1xf32>
    %c0_1 = arith.constant 0 : index
    %c0_2 = arith.constant 0 : index
    %3 = vector.load %arg2[%c0_1, %c0_2] : memref<2x128xf32, #tpu.memory_space<vmem>>, vector<1x128xf32>
    %4 = vector.broadcast %2 : vector<256x1xf32> to vector<256x128xf32>
    %5 = vector.broadcast %3 : vector<1x128xf32> to vector<256x128xf32>
    %6 = arith.mulf %4, %5 : vector<256x128xf32>
    %7 = vector.extract_strided_slice %1 {offsets = [0, 1], sizes = [256, 1], strides = [1, 1]} : vector<256x2xf32> to vector<256x1xf32>
    %c1 = arith.constant 1 : index
    %c0_3 = arith.constant 0 : index
    %8 = vector.load %arg2[%c1, %c0_3] : memref<2x128xf32, #tpu.memory_space<vmem>>, vector<1x128xf32>
    %9 = vector.broadcast %7 : vector<256x1xf32> to vector<256x128xf32>
    %10 = vector.broadcast %8 : vector<1x128xf32> to vector<256x128xf32>
    %11 = arith.mulf %9, %10 : vector<256x128xf32>
    %12 = arith.addf %6, %11 : vector<256x128xf32>
    %13 = math.cos %12 : vector<256x128xf32>
    %c0_4 = arith.constant 0 : index
    %c0_5 = arith.constant 0 : index
    %14 = vector.load %arg3[%c0_4, %c0_5] : memref<256x128xf32, #tpu.memory_space<vmem>>, vector<256x128xf32>
    tpu.vector_store %arg3[%c0_4, %c0_5], %13 {strides = array<i32>} : memref<256x128xf32, #tpu.memory_space<vmem>>, vector<256x128xf32>,
    %15 = math.sin %12 : vector<256x128xf32>
    %c0_6 = arith.constant 0 : index
    %c0_7 = arith.constant 0 : index
    %16 = vector.load %arg4[%c0_6, %c0_7] : memref<256x128xf32, #tpu.memory_space<vmem>>, vector<256x128xf32>
    tpu.vector_store %arg4[%c0_6, %c0_7], %15 {strides = array<i32>} : memref<256x128xf32, #tpu.memory_space<vmem>>, vector<256x128xf32>,
    return
  }
  func.func @transform_0(%arg0: i32) -> (i32, i32) {
    %c0_i32 = arith.constant 0 : i32
    %c0_i32_0 = arith.constant 0 : i32
    return %arg0, %c0_i32 : i32, i32
  }
  func.func @transform_1(%arg0: i32) -> (i32, i32) {
    %c0_i32 = arith.constant 0 : i32
    %c0_i32_0 = arith.constant 0 : i32
    %c0_i32_1 = arith.constant 0 : i32
    return %c0_i32, %c0_i32_0 : i32, i32
  }
  func.func @transform_2(%arg0: i32) -> (i32, i32) {
    %c0_i32 = arith.constant 0 : i32
    %c0_i32_0 = arith.constant 0 : i32
    return %arg0, %c0_i32 : i32, i32
  }
  func.func @transform_3(%arg0: i32) -> (i32, i32) {
    %c0_i32 = arith.constant 0 : i32
    %c0_i32_0 = arith.constant 0 : i32
    return %arg0, %c0_i32 : i32, i32
  }
}

</mosaic_0001>

<llo_original>
// kernel: tpu_custom_call.1
$region0: #{tpu_custom_call.1}
  #allocation0 [shape = 'u32[]', space=smem, size = 0x4, offset = 0x4, fixed_abs, tag = 'smem constant byte address 0x4 - core index']
  #allocation1 [shape = 'u32[144,128]{1,0:T(1,128)}', space=vmem, size = 0x12000, scoped, tag = 'internal scratch']
  %s0 = inlined_call_operand.vmem [shape: s32[512,2], index: 0, kind: input, shape index: {}]
  %s1 = inlined_call_operand.vmem [shape: f32[2,128], index: 1, kind: input, shape index: {}]
  %s2 = inlined_call_operand.hbm [shape: f32[512,128], index: 2, kind: output, shape index: {0}]
  %s3 = inlined_call_operand.hbm [shape: f32[512,128], index: 3, kind: output, shape index: {1}]
  %4 = xla_tuple %s2, %s3
  %s5 = sld [smem:[#allocation0]]
  $region49: #{tpu_custom_call.1} parent=0
    _
  %s7 = ssub.s32 1, %s5
  %s8 = scalar_select 0, %s7, %s5
  $region1: #{tpu_custom_call.1} parent=0
    #allocation2 [shape = 'u8[262144]{0}', space=vmem, size = 0x40000, scoped, tag = 'output window, operand 0']
    #allocation3 [shape = 's32[2]{0}', space=sflag, size = 0x8, scoped, tag = 'scoped memory for tpu_custom_call.1']
    #allocation4 [shape = 'u8[262144]{0}', space=vmem, size = 0x40000, scoped, tag = 'output window, operand 1']
    #allocation5 [shape = 's32[2]{0}', space=sflag, size = 0x8, scoped, tag = 'scoped memory for tpu_custom_call.1']
    %9 = vsyncpa [#allocation3], 0
    %s10 = scalar_lea.sflag [#allocation3], 1
    %11 = vsyncpa %s10, 0
    %12 = vsyncpa [#allocation5], 0
    %s13 = scalar_lea.sflag [#allocation5], 1
    %14 = vsyncpa %s13, 0
    loop: start=0, step=1, limit=4
    $region2: #{tpu_custom_call.1} parent=1 // loop_pre_header
      _
    $region3: #{tpu_custom_call.1} parent=1 // loop_header
      %s16 = sphi 0, %s20
      %p17 = scmp.ge.s32.totalorder %s16, 4
      %s26 = sphi 0, %s28
      %s29 = sphi 0, %s26
      %s30 = sphi 0, %s29
      %s46 = sphi 0, %s30
      %s50 = sphi 0, %s50
      %s52 = sphi 0, %s50
      %s53 = sphi 0, %s52
      %s67 = sphi 0, %s53
      %s73 = sphi 0, %s75
      %s76 = sphi 0, %s73
      %s77 = sphi 0, %s76
      %s93 = sphi 0, %s77
      %s99 = sphi 0, %s101
      %s102 = sphi 0, %s99
      %s103 = sphi 0, %s102
      %s119 = sphi 0, %s103
    $region4: #{tpu_custom_call.1} parent=1 // loop_header_branch
      %19 = sbr.rel (%p17) target = $region8
    $region5: #{tpu_custom_call.1} parent=1 // loop_body
      %s21 = ssub.s32 %s16, 1
      %s22 = ssub.s32 %s16, 2
      %s23 = sadd.s32 %s16, 1
      %s24 = ssub.s32 %s16, %s23
      %p25 = scmp.eq.s32.totalorder %s24, 0
      %s27 = sadd.s32 %s26, 1
      %s28 = scalar_select %p25, %s26, %s27
      %p31 = pneg %p25
      %p32 = scmp.eq.s32.totalorder %s16, 1
      %p33 = por %p31, %p32
      %p34 = scmp.ne.s32.totalorder %s26, %s29
      %p35 = scmp.eq.s32.totalorder %s16, 0
      %p36 = por %p34, %p35
      %p37 = scmp.ne.s32.totalorder %s26, %s29
      %p38 = scmp.eq.s32.totalorder %s21, 1
      %p39 = por %p37, %p38
      %p40 = scmp.ne.s32.totalorder %s29, %s30
      %p41 = scmp.eq.s32.totalorder %s21, 0
      %p42 = por %p40, %p41
      %p43 = scmp.ne.s32.totalorder %s29, %s30
      %p44 = scmp.eq.s32.totalorder %s22, 1
      %p45 = por %p43, %p44
      %p47 = scmp.ne.s32.totalorder %s30, %s46
      %p48 = scmp.eq.s32.totalorder %s22, 0
      %p49 = por %p47, %p48
      %s51 = sadd.s32 %s50, 1
      %p54 = scmp.eq.s32.totalorder %s16, 1
      %p55 = scmp.ne.s32.totalorder %s50, %s52
      %p56 = scmp.eq.s32.totalorder %s16, 0
      %p57 = por %p55, %p56
      %p58 = scmp.ne.s32.totalorder %s50, %s52
      %p59 = scmp.eq.s32.totalorder %s21, 1
      %p60 = por %p58, %p59
      %p61 = scmp.ne.s32.totalorder %s52, %s53
      %p62 = scmp.eq.s32.totalorder %s21, 0
      %p63 = por %p61, %p62
      %p64 = scmp.ne.s32.totalorder %s52, %s53
      %p65 = scmp.eq.s32.totalorder %s22, 1
      %p66 = por %p64, %p65
      %p68 = scmp.ne.s32.totalorder %s53, %s67
      %p69 = scmp.eq.s32.totalorder %s22, 0
      %p70 = por %p68, %p69
      %s71 = ssub.s32 %s16, %s23
      %p72 = scmp.eq.s32.totalorder %s71, 0
      %s74 = sadd.s32 %s73, 1
      %s75 = scalar_select %p72, %s73, %s74
      %p78 = pneg %p72
      %p79 = scmp.eq.s32.totalorder %s16, 1
      %p80 = por %p78, %p79
      %p81 = scmp.ne.s32.totalorder %s73, %s76
      %p82 = scmp.eq.s32.totalorder %s16, 0
      %p83 = por %p81, %p82
      %p84 = scmp.ne.s32.totalorder %s73, %s76
      %p85 = scmp.eq.s32.totalorder %s21, 1
      %p86 = por %p84, %p85
      %p87 = scmp.ne.s32.totalorder %s76, %s77
      %p88 = scmp.eq.s32.totalorder %s21, 0
      %p89 = por %p87, %p88
      %p90 = scmp.ne.s32.totalorder %s76, %s77
      %p91 = scmp.eq.s32.totalorder %s22, 1
      %p92 = por %p90, %p91
      %p94 = scmp.ne.s32.totalorder %s77, %s93
      %p95 = scmp.eq.s32.totalorder %s22, 0
      %p96 = por %p94, %p95
      %s97 = ssub.s32 %s16, %s23
      %p98 = scmp.eq.s32.totalorder %s97, 0
      %s100 = sadd.s32 %s99, 1
      %s101 = scalar_select %p98, %s99, %s100
      %p104 = pneg %p98
      %p105 = scmp.eq.s32.totalorder %s16, 1
      %p106 = por %p104, %p105
      %p107 = scmp.ne.s32.totalorder %s99, %s102
      %p108 = scmp.eq.s32.totalorder %s16, 0
      %p109 = por %p107, %p108
      %p110 = scmp.ne.s32.totalorder %s99, %s102
      %p111 = scmp.eq.s32.totalorder %s21, 1
      %p112 = por %p110, %p111
      %p113 = scmp.ne.s32.totalorder %s102, %s103
      %p114 = scmp.eq.s32.totalorder %s21, 0
      %p115 = por %p113, %p114
      %p116 = scmp.ne.s32.totalorder %s102, %s103
      %p117 = scmp.eq.s32.totalorder %s22, 1
      %p118 = por %p116, %p117
      %p120 = scmp.ne.s32.totalorder %s103, %s119
      %p121 = scmp.eq.s32.totalorder %s22, 0
      %p122 = por %p120, %p121
      %p123 = scmp.le.s32.totalorder 1, %s16
      %p124 = scmp.lt.s32.totalorder %s16, 3
      %p125 = pnand %p123, %p124
      %p126 = pneg %p125
      // Predicated region
      $region9: #{tpu_custom_call.1} parent=5 // pred_check
        _
      $region10: #{tpu_custom_call.1} parent=5 // pred_check_branch
        %128 = sbr.rel (%p125) target = $region12
      $region11: #{tpu_custom_call.1} parent=5 // pred_region
        %s129 = ssub.s32 %s16, 1
        // Predicated region
        $region13: #{tpu_custom_call.1} parent=11 // pred_check
          %p130 = pneg %p63
        $region14: #{tpu_custom_call.1} parent=11 // pred_check_branch
          %132 = sbr.rel (%p130) target = $region16
        $region15: #{tpu_custom_call.1} parent=11 // pred_region
          _
        $region16: #{tpu_custom_call.1} parent=11 // pred_fallthru
          _
      $region12: #{tpu_custom_call.1} parent=5 // pred_fallthru
        _
      %p133 = scmp.lt.s32.totalorder %s16, 2
      // Predicated region
      $region17: #{tpu_custom_call.1} parent=5 // pred_check
        %p134 = pneg %p133
      $region18: #{tpu_custom_call.1} parent=5 // pred_check_branch
        %136 = sbr.rel (%p134) target = $region20
      $region19: #{tpu_custom_call.1} parent=5 // pred_region
        // Predicated region
        $region21: #{tpu_custom_call.1} parent=19 // pred_check
          %p137 = pneg %p36
        $region22: #{tpu_custom_call.1} parent=19 // pred_check_branch
          %139 = sbr.rel (%p137) target = $region24
        $region23: #{tpu_custom_call.1} parent=19 // pred_region
          %s140 = smul.u32 32, %s16
          %p141 = scmp.lt.s32.totalorder %s140, 63
          %s142 = scalar_select %p141, %s140, 63
          %s143 = smul.addr %s142, 8
          %s144 = scalar_lea.vmem %s0, %s143
          %s145 = smul.u32 32, %s16
        $region24: #{tpu_custom_call.1} parent=19 // pred_fallthru
          _
      $region20: #{tpu_custom_call.1} parent=5 // pred_fallthru
        _
      %p146 = scmp.le.s32.totalorder 1, %s16
      %p147 = scmp.lt.s32.totalorder %s16, 3
      %p148 = pnand %p146, %p147
      %p149 = pneg %p148
      // Predicated region
      $region25: #{tpu_custom_call.1} parent=5 // pred_check
        _
      $region26: #{tpu_custom_call.1} parent=5 // pred_check_branch
        %151 = sbr.rel (%p148) target = $region28
      $region27: #{tpu_custom_call.1} parent=5 // pred_region
        %s152 = ssub.s32 %s16, 1
        %s153 = smul.u32 32, %s21
        %p154 = scmp.lt.s32.totalorder %s153, 63
        %s155 = scalar_select %p154, %s153, 63
        %s156 = smul.addr %s155, 8
        %s157 = scalar_lea.vmem %s0, %s156
        %p158 = pneg %p42
        %p159 = pneg %p39
        %p160 = pneg %p63
        %p161 = pneg %p60
        %p162 = pneg %p89
        %p163 = pneg %p86
        %s164 = sand.u32 %s76, 1
        %s165 = scalar_lea.sflag [#allocation3], %s164
        %s166 = sand.u32 %s76, 1
        %s167 = smul.addr %s166, 256
        %s168 = scalar_lea.vmem [#allocation2], %s167
        %p169 = pneg %p115
        %p170 = pneg %p112
        %s171 = sand.u32 %s102, 1
        %s172 = scalar_lea.sflag [#allocation5], %s171
        %s173 = sand.u32 %s102, 1
        %s174 = smul.addr %s173, 256
        %s175 = scalar_lea.vmem [#allocation4], %s174
        %s176 = smul.u32 32, %s21
        %p177 = scmp.lt.s32.totalorder %s176, 63
        %s178 = scalar_select %p177, %s176, 63
        %s179 = smul.addr %s178, 8
        %s180 = scalar_lea.vmem %s0, %s179
        %s181 = smul.u32 32, %s21
        %s182 = smul.u32 32, %s21
        %s183 = smul.u32 32, %s21
        %v184 = vld [vmem:[%s180] sm:$0xff]
        %v185 = vld [vmem:[%s180 + $0x8] sm:$0xff]
        %v186 = vld [vmem:[%s180 + $0x10] sm:$0xff]
        %v187 = vld [vmem:[%s180 + $0x18] sm:$0xff]
        %v188 = vld [vmem:[%s180 + $0x20] sm:$0xff]
        %v189 = vld [vmem:[%s180 + $0x28] sm:$0xff]
        %v190 = vld [vmem:[%s180 + $0x30] sm:$0xff]
        %v191 = vld [vmem:[%s180 + $0x38] sm:$0xff]
        %v192 = vld [vmem:[%s180 + $0x40] sm:$0xff]
        %v193 = vld [vmem:[%s180 + $0x48] sm:$0xff]
        %v194 = vld [vmem:[%s180 + $0x50] sm:$0xff]
        %v195 = vld [vmem:[%s180 + $0x58] sm:$0xff]
        %v196 = vld [vmem:[%s180 + $0x60] sm:$0xff]
        %v197 = vld [vmem:[%s180 + $0x68] sm:$0xff]
        %v198 = vld [vmem:[%s180 + $0x70] sm:$0xff]
        %v199 = vld [vmem:[%s180 + $0x78] sm:$0xff]
        %v200 = vld [vmem:[%s180 + $0x80] sm:$0xff]
        %v201 = vld [vmem:[%s180 + $0x88] sm:$0xff]
        %v202 = vld [vmem:[%s180 + $0x90] sm:$0xff]
        %v203 = vld [vmem:[%s180 + $0x98] sm:$0xff]
        %v204 = vld [vmem:[%s180 + $0xa0] sm:$0xff]
        %v205 = vld [vmem:[%s180 + $0xa8] sm:$0xff]
        %v206 = vld [vmem:[%s180 + $0xb0] sm:$0xff]
        %v207 = vld [vmem:[%s180 + $0xb8] sm:$0xff]
        %v208 = vld [vmem:[%s180 + $0xc0] sm:$0xff]
        %v209 = vld [vmem:[%s180 + $0xc8] sm:$0xff]
        %v210 = vld [vmem:[%s180 + $0xd0] sm:$0xff]
        %v211 = vld [vmem:[%s180 + $0xd8] sm:$0xff]
        %v212 = vld [vmem:[%s180 + $0xe0] sm:$0xff]
        %v213 = vld [vmem:[%s180 + $0xe8] sm:$0xff]
        %v214 = vld [vmem:[%s180 + $0xf0] sm:$0xff]
        %v215 = vld [vmem:[%s180 + $0xf8] sm:$0xff]
        %v216 = vcvt.s32.f32 %v184
        %v217 = vcvt.s32.f32 %v185
        %v218 = vcvt.s32.f32 %v186
        %v219 = vcvt.s32.f32 %v187
        %v220 = vcvt.s32.f32 %v188
        %v221 = vcvt.s32.f32 %v189
        %v222 = vcvt.s32.f32 %v190
        %v223 = vcvt.s32.f32 %v191
        %v224 = vcvt.s32.f32 %v192
        %v225 = vcvt.s32.f32 %v193
        %v226 = vcvt.s32.f32 %v194
        %v227 = vcvt.s32.f32 %v195
        %v228 = vcvt.s32.f32 %v196
        %v229 = vcvt.s32.f32 %v197
        %v230 = vcvt.s32.f32 %v198
        %v231 = vcvt.s32.f32 %v199
        %v232 = vcvt.s32.f32 %v200
        %v233 = vcvt.s32.f32 %v201
        %v234 = vcvt.s32.f32 %v202
        %v235 = vcvt.s32.f32 %v203
        %v236 = vcvt.s32.f32 %v204
        %v237 = vcvt.s32.f32 %v205
        %v238 = vcvt.s32.f32 %v206
        %v239 = vcvt.s32.f32 %v207
        %v240 = vcvt.s32.f32 %v208
        %v241 = vcvt.s32.f32 %v209
        %v242 = vcvt.s32.f32 %v210
        %v243 = vcvt.s32.f32 %v211
        %v244 = vcvt.s32.f32 %v212
        %v245 = vcvt.s32.f32 %v213
        %v246 = vcvt.s32.f32 %v214
        %v247 = vcvt.s32.f32 %v215
        %v248 = vld [vmem:[%s1] sm:$0x1]
        %250 = vset.pattern.permute.xlu0 0
        %251 = vperm.xlu0 %250, %v216
        %v252 = vpop.permute.xlu0 %251
        %255 = vset.pattern.permute.xlu0 0
        %256 = vperm.xlu0 %255, %v217
        %v257 = vpop.permute.xlu0 %256
        %260 = vset.pattern.permute.xlu0 0
        %261 = vperm.xlu0 %260, %v218
        %v262 = vpop.permute.xlu0 %261
        %265 = vset.pattern.permute.xlu0 0
        %266 = vperm.xlu0 %265, %v219
        %v267 = vpop.permute.xlu0 %266
        %270 = vset.pattern.permute.xlu0 0
        %271 = vperm.xlu0 %270, %v220
        %v272 = vpop.permute.xlu0 %271
        %275 = vset.pattern.permute.xlu0 0
        %276 = vperm.xlu0 %275, %v221
        %v277 = vpop.permute.xlu0 %276
        %280 = vset.pattern.permute.xlu0 0
        %281 = vperm.xlu0 %280, %v222
        %v282 = vpop.permute.xlu0 %281
        %285 = vset.pattern.permute.xlu0 0
        %286 = vperm.xlu0 %285, %v223
        %v287 = vpop.permute.xlu0 %286
        %290 = vset.pattern.permute.xlu0 0
        %291 = vperm.xlu0 %290, %v224
        %v292 = vpop.permute.xlu0 %291
        %295 = vset.pattern.permute.xlu0 0
        %296 = vperm.xlu0 %295, %v225
        %v297 = vpop.permute.xlu0 %296
        %300 = vset.pattern.permute.xlu0 0
        %301 = vperm.xlu0 %300, %v226
        %v302 = vpop.permute.xlu0 %301
        %305 = vset.pattern.permute.xlu0 0
        %306 = vperm.xlu0 %305, %v227
        %v307 = vpop.permute.xlu0 %306
        %310 = vset.pattern.permute.xlu0 0
        %311 = vperm.xlu0 %310, %v228
        %v312 = vpop.permute.xlu0 %311
        %315 = vset.pattern.permute.xlu0 0
        %316 = vperm.xlu0 %315, %v229
        %v317 = vpop.permute.xlu0 %316
        %320 = vset.pattern.permute.xlu0 0
        %321 = vperm.xlu0 %320, %v230
        %v322 = vpop.permute.xlu0 %321
        %325 = vset.pattern.permute.xlu0 0
        %326 = vperm.xlu0 %325, %v231
        %v327 = vpop.permute.xlu0 %326
        %330 = vset.pattern.permute.xlu0 0
        %331 = vperm.xlu0 %330, %v232
        %v332 = vpop.permute.xlu0 %331
        %335 = vset.pattern.permute.xlu0 0
        %336 = vperm.xlu0 %335, %v233
        %v337 = vpop.permute.xlu0 %336
        %340 = vset.pattern.permute.xlu0 0
        %341 = vperm.xlu0 %340, %v234
        %v342 = vpop.permute.xlu0 %341
        %345 = vset.pattern.permute.xlu0 0
        %346 = vperm.xlu0 %345, %v235
        %v347 = vpop.permute.xlu0 %346
        %350 = vset.pattern.permute.xlu0 0
        %351 = vperm.xlu0 %350, %v236
        %v352 = vpop.permute.xlu0 %351
        %355 = vset.pattern.permute.xlu0 0
        %356 = vperm.xlu0 %355, %v237
        %v357 = vpop.permute.xlu0 %356
        %360 = vset.pattern.permute.xlu0 0
        %361 = vperm.xlu0 %360, %v238
        %v362 = vpop.permute.xlu0 %361
        %365 = vset.pattern.permute.xlu0 0
        %366 = vperm.xlu0 %365, %v239
        %v367 = vpop.permute.xlu0 %366
        %370 = vset.pattern.permute.xlu0 0
        %371 = vperm.xlu0 %370, %v240
        %v372 = vpop.permute.xlu0 %371
        %375 = vset.pattern.permute.xlu0 0
        %376 = vperm.xlu0 %375, %v241
        %v377 = vpop.permute.xlu0 %376
        %380 = vset.pattern.permute.xlu0 0
        %381 = vperm.xlu0 %380, %v242
        %v382 = vpop.permute.xlu0 %381
        %385 = vset.pattern.permute.xlu0 0
        %386 = vperm.xlu0 %385, %v243
        %v387 = vpop.permute.xlu0 %386
        %390 = vset.pattern.permute.xlu0 0
        %391 = vperm.xlu0 %390, %v244
        %v392 = vpop.permute.xlu0 %391
        %395 = vset.pattern.permute.xlu0 0
        %396 = vperm.xlu0 %395, %v245
        %v397 = vpop.permute.xlu0 %396
        %400 = vset.pattern.permute.xlu0 0
        %401 = vperm.xlu0 %400, %v246
        %v402 = vpop.permute.xlu0 %401
        %405 = vset.pattern.permute.xlu0 0
        %406 = vperm.xlu0 %405, %v247
        %v407 = vpop.permute.xlu0 %406
        %v409 = vlaneseq
        %v410 = vshrl.u32 %v409, 7
        %v411 = vsub.s32 0, %v410
        %v412 = vrot.slane %v248, %v411
        %v413 = vmul.f32 %v252, %v412
        %v414 = vmul.f32 %v257, %v412
        %v415 = vmul.f32 %v262, %v412
        %v416 = vmul.f32 %v267, %v412
        %v417 = vmul.f32 %v272, %v412
        %v418 = vmul.f32 %v277, %v412
        %v419 = vmul.f32 %v282, %v412
        %v420 = vmul.f32 %v287, %v412
        %v421 = vmul.f32 %v292, %v412
        %v422 = vmul.f32 %v297, %v412
        %v423 = vmul.f32 %v302, %v412
        %v424 = vmul.f32 %v307, %v412
        %v425 = vmul.f32 %v312, %v412
        %v426 = vmul.f32 %v317, %v412
        %v427 = vmul.f32 %v322, %v412
        %v428 = vmul.f32 %v327, %v412
        %v429 = vmul.f32 %v332, %v412
        %v430 = vmul.f32 %v337, %v412
        %v431 = vmul.f32 %v342, %v412
        %v432 = vmul.f32 %v347, %v412
        %v433 = vmul.f32 %v352, %v412
        %v434 = vmul.f32 %v357, %v412
        %v435 = vmul.f32 %v362, %v412
        %v436 = vmul.f32 %v367, %v412
        %v437 = vmul.f32 %v372, %v412
        %v438 = vmul.f32 %v377, %v412
        %v439 = vmul.f32 %v382, %v412
        %v440 = vmul.f32 %v387, %v412
        %v441 = vmul.f32 %v392, %v412
        %v442 = vmul.f32 %v397, %v412
        %v443 = vmul.f32 %v402, %v412
        %v444 = vmul.f32 %v407, %v412
        %v445 = vld [vmem:[%s1 + $0x1] sm:$0x1]
        %446 = vset.pattern.permute.xlu0 1
        %447 = vperm.xlu0 %446, %v216
        %v448 = vpop.permute.xlu0 %447
        %450 = vset.pattern.permute.xlu0 1
        %451 = vperm.xlu0 %450, %v217
        %v452 = vpop.permute.xlu0 %451
        %454 = vset.pattern.permute.xlu0 1
        %455 = vperm.xlu0 %454, %v218
        %v456 = vpop.permute.xlu0 %455
        %458 = vset.pattern.permute.xlu0 1
        %459 = vperm.xlu0 %458, %v219
        %v460 = vpop.permute.xlu0 %459
        %462 = vset.pattern.permute.xlu0 1
        %463 = vperm.xlu0 %462, %v220
        %v464 = vpop.permute.xlu0 %463
        %466 = vset.pattern.permute.xlu0 1
        %467 = vperm.xlu0 %466, %v221
        %v468 = vpop.permute.xlu0 %467
        %470 = vset.pattern.permute.xlu0 1
        %471 = vperm.xlu0 %470, %v222
        %v472 = vpop.permute.xlu0 %471
        %474 = vset.pattern.permute.xlu0 1
        %475 = vperm.xlu0 %474, %v223
        %v476 = vpop.permute.xlu0 %475
        %478 = vset.pattern.permute.xlu0 1
        %479 = vperm.xlu0 %478, %v224
        %v480 = vpop.permute.xlu0 %479
        %482 = vset.pattern.permute.xlu0 1
        %483 = vperm.xlu0 %482, %v225
        %v484 = vpop.permute.xlu0 %483
        %486 = vset.pattern.permute.xlu0 1
        %487 = vperm.xlu0 %486, %v226
        %v488 = vpop.permute.xlu0 %487
        %490 = vset.pattern.permute.xlu0 1
        %491 = vperm.xlu0 %490, %v227
        %v492 = vpop.permute.xlu0 %491
        %494 = vset.pattern.permute.xlu0 1
        %495 = vperm.xlu0 %494, %v228
        %v496 = vpop.permute.xlu0 %495
        %498 = vset.pattern.permute.xlu0 1
        %499 = vperm.xlu0 %498, %v229
        %v500 = vpop.permute.xlu0 %499
        %502 = vset.pattern.permute.xlu0 1
        %503 = vperm.xlu0 %502, %v230
        %v504 = vpop.permute.xlu0 %503
        %506 = vset.pattern.permute.xlu0 1
        %507 = vperm.xlu0 %506, %v231
        %v508 = vpop.permute.xlu0 %507
        %510 = vset.pattern.permute.xlu0 1
        %511 = vperm.xlu0 %510, %v232
        %v512 = vpop.permute.xlu0 %511
        %514 = vset.pattern.permute.xlu0 1
        %515 = vperm.xlu0 %514, %v233
        %v516 = vpop.permute.xlu0 %515
        %518 = vset.pattern.permute.xlu0 1
        %519 = vperm.xlu0 %518, %v234
        %v520 = vpop.permute.xlu0 %519
        %522 = vset.pattern.permute.xlu0 1
        %523 = vperm.xlu0 %522, %v235
        %v524 = vpop.permute.xlu0 %523
        %526 = vset.pattern.permute.xlu0 1
        %527 = vperm.xlu0 %526, %v236
        %v528 = vpop.permute.xlu0 %527
        %530 = vset.pattern.permute.xlu0 1
        %531 = vperm.xlu0 %530, %v237
        %v532 = vpop.permute.xlu0 %531
        %534 = vset.pattern.permute.xlu0 1
        %535 = vperm.xlu0 %534, %v238
        %v536 = vpop.permute.xlu0 %535
        %538 = vset.pattern.permute.xlu0 1
        %539 = vperm.xlu0 %538, %v239
        %v540 = vpop.permute.xlu0 %539
        %542 = vset.pattern.permute.xlu0 1
        %543 = vperm.xlu0 %542, %v240
        %v544 = vpop.permute.xlu0 %543
        %546 = vset.pattern.permute.xlu0 1
        %547 = vperm.xlu0 %546, %v241
        %v548 = vpop.permute.xlu0 %547
        %550 = vset.pattern.permute.xlu0 1
        %551 = vperm.xlu0 %550, %v242
        %v552 = vpop.permute.xlu0 %551
        %554 = vset.pattern.permute.xlu0 1
        %555 = vperm.xlu0 %554, %v243
        %v556 = vpop.permute.xlu0 %555
        %558 = vset.pattern.permute.xlu0 1
        %559 = vperm.xlu0 %558, %v244
        %v560 = vpop.permute.xlu0 %559
        %562 = vset.pattern.permute.xlu0 1
        %563 = vperm.xlu0 %562, %v245
        %v564 = vpop.permute.xlu0 %563
        %566 = vset.pattern.permute.xlu0 1
        %567 = vperm.xlu0 %566, %v246
        %v568 = vpop.permute.xlu0 %567
        %570 = vset.pattern.permute.xlu0 1
        %571 = vperm.xlu0 %570, %v247
        %v572 = vpop.permute.xlu0 %571
        %v574 = vlaneseq
        %v575 = vshrl.u32 %v574, 7
        %v576 = vsub.s32 0, %v575
        %v577 = vrot.slane %v445, %v576
        %v578 = vmul.f32 %v448, %v577
        %v579 = vmul.f32 %v452, %v577
        %v580 = vmul.f32 %v456, %v577
        %v581 = vmul.f32 %v460, %v577
        %v582 = vmul.f32 %v464, %v577
        %v583 = vmul.f32 %v468, %v577
        %v584 = vmul.f32 %v472, %v577
        %v585 = vmul.f32 %v476, %v577
        %v586 = vmul.f32 %v480, %v577
        %v587 = vmul.f32 %v484, %v577
        %v588 = vmul.f32 %v488, %v577
        %v589 = vmul.f32 %v492, %v577
        %v590 = vmul.f32 %v496, %v577
        %v591 = vmul.f32 %v500, %v577
        %v592 = vmul.f32 %v504, %v577
        %v593 = vmul.f32 %v508, %v577
        %v594 = vmul.f32 %v512, %v577
        %v595 = vmul.f32 %v516, %v577
        %v596 = vmul.f32 %v520, %v577
        %v597 = vmul.f32 %v524, %v577
        %v598 = vmul.f32 %v528, %v577
        %v599 = vmul.f32 %v532, %v577
        %v600 = vmul.f32 %v536, %v577
        %v601 = vmul.f32 %v540, %v577
        %v602 = vmul.f32 %v544, %v577
        %v603 = vmul.f32 %v548, %v577
        %v604 = vmul.f32 %v552, %v577
        %v605 = vmul.f32 %v556, %v577
        %v606 = vmul.f32 %v560, %v577
        %v607 = vmul.f32 %v564, %v577
        %v608 = vmul.f32 %v568, %v577
        %v609 = vmul.f32 %v572, %v577
        %v610 = vadd.f32 %v413, %v578
        %v611 = vadd.f32 %v414, %v579
        %v612 = vadd.f32 %v415, %v580
        %v613 = vadd.f32 %v416, %v581
        %v614 = vadd.f32 %v417, %v582
        %v615 = vadd.f32 %v418, %v583
        %v616 = vadd.f32 %v419, %v584
        %v617 = vadd.f32 %v420, %v585
        %v618 = vadd.f32 %v421, %v586
        %v619 = vadd.f32 %v422, %v587
        %v620 = vadd.f32 %v423, %v588
        %v621 = vadd.f32 %v424, %v589
        %v622 = vadd.f32 %v425, %v590
        %v623 = vadd.f32 %v426, %v591
        %v624 = vadd.f32 %v427, %v592
        %v625 = vadd.f32 %v428, %v593
        %v626 = vadd.f32 %v429, %v594
        %v627 = vadd.f32 %v430, %v595
        %v628 = vadd.f32 %v431, %v596
        %v629 = vadd.f32 %v432, %v597
        %v630 = vadd.f32 %v433, %v598
        %v631 = vadd.f32 %v434, %v599
        %v632 = vadd.f32 %v435, %v600
        %v633 = vadd.f32 %v436, %v601
        %v634 = vadd.f32 %v437, %v602
        %v635 = vadd.f32 %v438, %v603
        %v636 = vadd.f32 %v439, %v604
        %v637 = vadd.f32 %v440, %v605
        %v638 = vadd.f32 %v441, %v606
        %v639 = vadd.f32 %v442, %v607
        %v640 = vadd.f32 %v443, %v608
        %v641 = vadd.f32 %v444, %v609
        %v642 = vand.u32 2147483647, %v610
        %vm643 = vcmp.le.f32.partialorder %v642, 0.7853982
        %vm644 = vcmp.lt.s32.totalorder %v610, 0
        %v645 = vand.u32 %v610, 2139095040
        %v646 = vshrl.u32 %v645, 23
        %v647 = vsub.s32 %v646, 127
        %v648 = vand.u32 2147483647, %v610
        %v649 = vand.u32 %v648, 8388607
        %v650 = vor.u32 %v649, 8388608
        %v651 = vsub.s32 0, %v650
        %v652 = vadd.s32 %v647, 1
        %vm653 = vcmp.gt.s32.totalorder %v652, 0
        %v654 = vsel %vm653, %v652, 0
        %v655 = vshrl.u32 %v654, 5
        %v656 = vand.u32 %v654, 31
        %v657 = vsub.s32 32, %v656
        %v658 = vshrl.u32 683565275, %v657
        %v659 = vshll.u32 683565275, %v656
        %v660 = vshrl.u32 2475754826, %v657
        %v661 = vor.u32 %v659, %v660
        %v662 = vshll.u32 2475754826, %v656
        %v663 = vshrl.u32 2131351028, %v657
        %v664 = vor.u32 %v662, %v663
        %v665 = vshll.u32 2131351028, %v656
        %v666 = vshrl.u32 2102212464, %v657
        %v667 = vor.u32 %v665, %v666
        %v668 = vshll.u32 2102212464, %v656
        %v669 = vshrl.u32 920167782, %v657
        %v670 = vor.u32 %v668, %v669
        %v671 = vshll.u32 920167782, %v656
        %v672 = vshrl.u32 1326507024, %v657
        %v673 = vor.u32 %v671, %v672
        %vm674 = vcmp.lt.s32.totalorder %v655, 1
        %vm675 = vcmp.lt.s32.totalorder %v655, 2
        %vm676 = vcmp.lt.s32.totalorder %v655, 3
        %vm677 = vcmp.lt.s32.totalorder %v655, 4
        %v678 = vsel %vm674, %v658, %v661
        %v679 = vsel %vm677, %v667, 2102212464
        %v680 = vsel %vm676, %v664, %v679
        %v681 = vsel %vm675, %v678, %v680
        %v682 = vsel %vm674, %v661, %v664
        %v683 = vsel %vm677, %v670, 920167782
        %v684 = vsel %vm676, %v667, %v683
        %v685 = vsel %vm675, %v682, %v684
        %v686 = vsel %vm674, %v664, %v667
        %v687 = vsel %vm677, %v673, 1326507024
        %v688 = vsel %vm676, %v670, %v687
        %v689 = vsel %vm675, %v686, %v688
        %v690 = vshll.u32 %v650, 8
        %v691 = vmul.u32.u64.compose %v690, %v689
        %v692 = vextract.low.u32 %v691
        %v693 = vextract.high.u32 %v691
        %v694 = vmul.u32.u64.compose %v690, %v685
        %v695 = vextract.low.u32 %v694
        %v696 = vextract.high.u32 %v694
        %v697 = vmul.u32 %v690, %v681
        %v698 = vadd.s32 %v693, %v695
        %vm699 = vc.u32 %v693, %v695
        %v700 = vadd.s32 %v696, 1
        %v701 = vsel %vm699, %v700, %v696
        %v702 = vadd.s32 %v697, %v701
        %v703 = vadd.s32 %v702, 536870912
        %v704 = vshrl.u32 %v703, 30
        %v705 = vshll.u32 %v704, 30
        %v706 = vsub.s32 %v702, %v705
        %vm707 = vcmp.lt.s32.totalorder %v706, 0
        %v708 = vsub.s32 0, %v706
        %v709 = vsel %vm707, %v708, %v706
        %v710 = vclz %v709
        %v711 = vsub.s32 %v710, 2
        %vm712 = vcmp.gt.s32.totalorder 0, %v711
        %v713 = vsel %vm712, 0, %v711
        %v714 = vsub.s32 32, %v713
        %v715 = vshll.u32 %v706, %v713
        %v716 = vshrl.u32 %v698, %v714
        %v717 = vor.u32 %v715, %v716
        %v718 = vsub.s32 4294967266, %v713
        %v719 = vadd.s32 %v718, 127
        %v720 = vshll.u32 %v719, 23
        %v721 = vor.u32 4788187, %v720
        %v722 = vand.u32 2147483647, %v721
        %v724 = vcvt.s32.f32 %v717
        %v725 = vmul.f32 %v724, %v722
        %v726 = vxor.u32 %v725, 2147483648
        %v727 = vsel %vm644, %v726, %v725
        %v728 = vsub.s32 4, %v704
        %v729 = vsel %vm644, %v728, %v704
        %v730 = vsel %vm643, %v610, %v727
        %v731 = vsel %vm643, 0, %v729
        %v732 = vcosq.f32.pop %v730
        %v733 = vsinq.f32.pop %v730
        %vm734 = vweird.f32 %v610
        %v735 = vand.u32 %v731, 3
        %vm736 = vcmp.lt.s32.totalorder %v735, 2
        %vm737 = vcmp.eq.s32.totalorder %v735, 0
        %v738 = vxor.u32 %v733, 2147483648
        %v739 = vsel %vm737, %v732, %v738
        %vm740 = vcmp.eq.s32.totalorder %v735, 2
        %v741 = vxor.u32 %v732, 2147483648
        %v742 = vsel %vm740, %v741, %v733
        %v743 = vsel %vm736, %v739, %v742
        %v744 = vsel %vm734, nan, %v743
        %v745 = vand.u32 2147483647, %v611
        %vm746 = vcmp.le.f32.partialorder %v745, 0.7853982
        %vm747 = vcmp.lt.s32.totalorder %v611, 0
        %v748 = vand.u32 %v611, 2139095040
        %v749 = vshrl.u32 %v748, 23
        %v750 = vsub.s32 %v749, 127
        %v751 = vand.u32 2147483647, %v611
        %v752 = vand.u32 %v751, 8388607
        %v753 = vor.u32 %v752, 8388608
        %v754 = vsub.s32 0, %v753
        %v755 = vadd.s32 %v750, 1
        %vm756 = vcmp.gt.s32.totalorder %v755, 0
        %v757 = vsel %vm756, %v755, 0
        %v758 = vshrl.u32 %v757, 5
        %v759 = vand.u32 %v757, 31
        %v760 = vsub.s32 32, %v759
        %v761 = vshrl.u32 683565275, %v760
        %v762 = vshll.u32 683565275, %v759
        %v763 = vshrl.u32 2475754826, %v760
        %v764 = vor.u32 %v762, %v763
        %v765 = vshll.u32 2475754826, %v759
        %v766 = vshrl.u32 2131351028, %v760
        %v767 = vor.u32 %v765, %v766
        %v768 = vshll.u32 2131351028, %v759
        %v769 = vshrl.u32 2102212464, %v760
        %v770 = vor.u32 %v768, %v769
        %v771 = vshll.u32 2102212464, %v759
        %v772 = vshrl.u32 920167782, %v760
        %v773 = vor.u32 %v771, %v772
        %v774 = vshll.u32 920167782, %v759
        %v775 = vshrl.u32 1326507024, %v760
        %v776 = vor.u32 %v774, %v775
        %vm777 = vcmp.lt.s32.totalorder %v758, 1
        %vm778 = vcmp.lt.s32.totalorder %v758, 2
        %vm779 = vcmp.lt.s32.totalorder %v758, 3
        %vm780 = vcmp.lt.s32.totalorder %v758, 4
        %v781 = vsel %vm777, %v761, %v764
        %v782 = vsel %vm780, %v770, 2102212464
        %v783 = vsel %vm779, %v767, %v782
        %v784 = vsel %vm778, %v781, %v783
        %v785 = vsel %vm777, %v764, %v767
        %v786 = vsel %vm780, %v773, 920167782
        %v787 = vsel %vm779, %v770, %v786
        %v788 = vsel %vm778, %v785, %v787
        %v789 = vsel %vm777, %v767, %v770
        %v790 = vsel %vm780, %v776, 1326507024
        %v791 = vsel %vm779, %v773, %v790
        %v792 = vsel %vm778, %v789, %v791
        %v793 = vshll.u32 %v753, 8
        %v794 = vmul.u32.u64.compose %v793, %v792
        %v795 = vextract.low.u32 %v794
        %v796 = vextract.high.u32 %v794
        %v797 = vmul.u32.u64.compose %v793, %v788
        %v798 = vextract.low.u32 %v797
        %v799 = vextract.high.u32 %v797
        %v800 = vmul.u32 %v793, %v784
        %v801 = vadd.s32 %v796, %v798
        %vm802 = vc.u32 %v796, %v798
        %v803 = vadd.s32 %v799, 1
        %v804 = vsel %vm802, %v803, %v799
        %v805 = vadd.s32 %v800, %v804
        %v806 = vadd.s32 %v805, 536870912
        %v807 = vshrl.u32 %v806, 30
        %v808 = vshll.u32 %v807, 30
        %v809 = vsub.s32 %v805, %v808
        %vm810 = vcmp.lt.s32.totalorder %v809, 0
        %v811 = vsub.s32 0, %v809
        %v812 = vsel %vm810, %v811, %v809
        %v813 = vclz %v812
        %v814 = vsub.s32 %v813, 2
        %vm815 = vcmp.gt.s32.totalorder 0, %v814
        %v816 = vsel %vm815, 0, %v814
        %v817 = vsub.s32 32, %v816
        %v818 = vshll.u32 %v809, %v816
        %v819 = vshrl.u32 %v801, %v817
        %v820 = vor.u32 %v818, %v819
        %v821 = vsub.s32 4294967266, %v816
        %v822 = vadd.s32 %v821, 127
        %v823 = vshll.u32 %v822, 23
        %v824 = vor.u32 4788187, %v823
        %v825 = vand.u32 2147483647, %v824
        %v827 = vcvt.s32.f32 %v820
        %v828 = vmul.f32 %v827, %v825
        %v829 = vxor.u32 %v828, 2147483648
        %v830 = vsel %vm747, %v829, %v828
        %v831 = vsub.s32 4, %v807
        %v832 = vsel %vm747, %v831, %v807
        %v833 = vsel %vm746, %v611, %v830
        %v834 = vsel %vm746, 0, %v832
        %v835 = vcosq.f32.pop %v833
        %v836 = vsinq.f32.pop %v833
        %vm837 = vweird.f32 %v611
        %v838 = vand.u32 %v834, 3
        %vm839 = vcmp.lt.s32.totalorder %v838, 2
        %vm840 = vcmp.eq.s32.totalorder %v838, 0
        %v841 = vxor.u32 %v836, 2147483648
        %v842 = vsel %vm840, %v835, %v841
        %vm843 = vcmp.eq.s32.totalorder %v838, 2
        %v844 = vxor.u32 %v835, 2147483648
        %v845 = vsel %vm843, %v844, %v836
        %v846 = vsel %vm839, %v842, %v845
        %v847 = vsel %vm837, nan, %v846
        %v848 = vand.u32 2147483647, %v612
        %vm849 = vcmp.le.f32.partialorder %v848, 0.7853982
        %vm850 = vcmp.lt.s32.totalorder %v612, 0
        %v851 = vand.u32 %v612, 2139095040
        %v852 = vshrl.u32 %v851, 23
        %v853 = vsub.s32 %v852, 127
        %v854 = vand.u32 2147483647, %v612
        %v855 = vand.u32 %v854, 8388607
        %v856 = vor.u32 %v855, 8388608
        %v857 = vsub.s32 0, %v856
        %v858 = vadd.s32 %v853, 1
        %vm859 = vcmp.gt.s32.totalorder %v858, 0
        %v860 = vsel %vm859, %v858, 0
        %v861 = vshrl.u32 %v860, 5
        %v862 = vand.u32 %v860, 31
        %v863 = vsub.s32 32, %v862
        %v864 = vshrl.u32 683565275, %v863
        %v865 = vshll.u32 683565275, %v862
        %v866 = vshrl.u32 2475754826, %v863
        %v867 = vor.u32 %v865, %v866
        %v868 = vshll.u32 2475754826, %v862
        %v869 = vshrl.u32 2131351028, %v863
        %v870 = vor.u32 %v868, %v869
        %v871 = vshll.u32 2131351028, %v862
        %v872 = vshrl.u32 2102212464, %v863
        %v873 = vor.u32 %v871, %v872
        %v874 = vshll.u32 2102212464, %v862
        %v875 = vshrl.u32 920167782, %v863
        %v876 = vor.u32 %v874, %v875
        %v877 = vshll.u32 920167782, %v862
        %v878 = vshrl.u32 1326507024, %v863
        %v879 = vor.u32 %v877, %v878
        %vm880 = vcmp.lt.s32.totalorder %v861, 1
        %vm881 = vcmp.lt.s32.totalorder %v861, 2
        %vm882 = vcmp.lt.s32.totalorder %v861, 3
        %vm883 = vcmp.lt.s32.totalorder %v861, 4
        %v884 = vsel %vm880, %v864, %v867
        %v885 = vsel %vm883, %v873, 2102212464
        %v886 = vsel %vm882, %v870, %v885
        %v887 = vsel %vm881, %v884, %v886
        %v888 = vsel %vm880, %v867, %v870
        %v889 = vsel %vm883, %v876, 920167782
        %v890 = vsel %vm882, %v873, %v889
        %v891 = vsel %vm881, %v888, %v890
        %v892 = vsel %vm880, %v870, %v873
        %v893 = vsel %vm883, %v879, 1326507024
        %v894 = vsel %vm882, %v876, %v893
        %v895 = vsel %vm881, %v892, %v894
        %v896 = vshll.u32 %v856, 8
        %v897 = vmul.u32.u64.compose %v896, %v895
        %v898 = vextract.low.u32 %v897
        %v899 = vextract.high.u32 %v897
        %v900 = vmul.u32.u64.compose %v896, %v891
        %v901 = vextract.low.u32 %v900
        %v902 = vextract.high.u32 %v900
        %v903 = vmul.u32 %v896, %v887
        %v904 = vadd.s32 %v899, %v901
        %vm905 = vc.u32 %v899, %v901
        %v906 = vadd.s32 %v902, 1
        %v907 = vsel %vm905, %v906, %v902
        %v908 = vadd.s32 %v903, %v907
        %v909 = vadd.s32 %v908, 536870912
        %v910 = vshrl.u32 %v909, 30
        %v911 = vshll.u32 %v910, 30
        %v912 = vsub.s32 %v908, %v911
        %vm913 = vcmp.lt.s32.totalorder %v912, 0
        %v914 = vsub.s32 0, %v912
        %v915 = vsel %vm913, %v914, %v912
        %v916 = vclz %v915
        %v917 = vsub.s32 %v916, 2
        %vm918 = vcmp.gt.s32.totalorder 0, %v917
        %v919 = vsel %vm918, 0, %v917
        %v920 = vsub.s32 32, %v919
        %v921 = vshll.u32 %v912, %v919
        %v922 = vshrl.u32 %v904, %v920
        %v923 = vor.u32 %v921, %v922
        %v924 = vsub.s32 4294967266, %v919
        %v925 = vadd.s32 %v924, 127
        %v926 = vshll.u32 %v925, 23
        %v927 = vor.u32 4788187, %v926
        %v928 = vand.u32 2147483647, %v927
        %v930 = vcvt.s32.f32 %v923
        %v931 = vmul.f32 %v930, %v928
        %v932 = vxor.u32 %v931, 2147483648
        %v933 = vsel %vm850, %v932, %v931
        %v934 = vsub.s32 4, %v910
        %v935 = vsel %vm850, %v934, %v910
        %v936 = vsel %vm849, %v612, %v933
        %v937 = vsel %vm849, 0, %v935
        %v938 = vcosq.f32.pop %v936
        %v939 = vsinq.f32.pop %v936
        %vm940 = vweird.f32 %v612
        %v941 = vand.u32 %v937, 3
        %vm942 = vcmp.lt.s32.totalorder %v941, 2
        %vm943 = vcmp.eq.s32.totalorder %v941, 0
        %v944 = vxor.u32 %v939, 2147483648
        %v945 = vsel %vm943, %v938, %v944
        %vm946 = vcmp.eq.s32.totalorder %v941, 2
        %v947 = vxor.u32 %v938, 2147483648
        %v948 = vsel %vm946, %v947, %v939
        %v949 = vsel %vm942, %v945, %v948
        %v950 = vsel %vm940, nan, %v949
        %v951 = vand.u32 2147483647, %v613
        %vm952 = vcmp.le.f32.partialorder %v951, 0.7853982
        %vm953 = vcmp.lt.s32.totalorder %v613, 0
        %v954 = vand.u32 %v613, 2139095040
        %v955 = vshrl.u32 %v954, 23
        %v956 = vsub.s32 %v955, 127
        %v957 = vand.u32 2147483647, %v613
        %v958 = vand.u32 %v957, 8388607
        %v959 = vor.u32 %v958, 8388608
        %v960 = vsub.s32 0, %v959
        %v961 = vadd.s32 %v956, 1
        %vm962 = vcmp.gt.s32.totalorder %v961, 0
        %v963 = vsel %vm962, %v961, 0
        %v964 = vshrl.u32 %v963, 5
        %v965 = vand.u32 %v963, 31
        %v966 = vsub.s32 32, %v965
        %v967 = vshrl.u32 683565275, %v966
        %v968 = vshll.u32 683565275, %v965
        %v969 = vshrl.u32 2475754826, %v966
        %v970 = vor.u32 %v968, %v969
        %v971 = vshll.u32 2475754826, %v965
        %v972 = vshrl.u32 2131351028, %v966
        %v973 = vor.u32 %v971, %v972
        %v974 = vshll.u32 2131351028, %v965
        %v975 = vshrl.u32 2102212464, %v966
        %v976 = vor.u32 %v974, %v975
        %v977 = vshll.u32 2102212464, %v965
        %v978 = vshrl.u32 920167782, %v966
        %v979 = vor.u32 %v977, %v978
        %v980 = vshll.u32 920167782, %v965
        %v981 = vshrl.u32 1326507024, %v966
        %v982 = vor.u32 %v980, %v981
        %vm983 = vcmp.lt.s32.totalorder %v964, 1
        %vm984 = vcmp.lt.s32.totalorder %v964, 2
        %vm985 = vcmp.lt.s32.totalorder %v964, 3
        %vm986 = vcmp.lt.s32.totalorder %v964, 4
        %v987 = vsel %vm983, %v967, %v970
        %v988 = vsel %vm986, %v976, 2102212464
        %v989 = vsel %vm985, %v973, %v988
        %v990 = vsel %vm984, %v987, %v989
        %v991 = vsel %vm983, %v970, %v973
        %v992 = vsel %vm986, %v979, 920167782
        %v993 = vsel %vm985, %v976, %v992
        %v994 = vsel %vm984, %v991, %v993
        %v995 = vsel %vm983, %v973, %v976
        %v996 = vsel %vm986, %v982, 1326507024
        %v997 = vsel %vm985, %v979, %v996
        %v998 = vsel %vm984, %v995, %v997
        %v999 = vshll.u32 %v959, 8
        %v1000 = vmul.u32.u64.compose %v999, %v998
        %v1001 = vextract.low.u32 %v1000
        %v1002 = vextract.high.u32 %v1000
        %v1003 = vmul.u32.u64.compose %v999, %v994
        %v1004 = vextract.low.u32 %v1003
        %v1005 = vextract.high.u32 %v1003
        %v1006 = vmul.u32 %v999, %v990
        %v1007 = vadd.s32 %v1002, %v1004
        %vm1008 = vc.u32 %v1002, %v1004
        %v1009 = vadd.s32 %v1005, 1
        %v1010 = vsel %vm1008, %v1009, %v1005
        %v1011 = vadd.s32 %v1006, %v1010
        %v1012 = vadd.s32 %v1011, 536870912
        %v1013 = vshrl.u32 %v1012, 30
        %v1014 = vshll.u32 %v1013, 30
        %v1015 = vsub.s32 %v1011, %v1014
        %vm1016 = vcmp.lt.s32.totalorder %v1015, 0
        %v1017 = vsub.s32 0, %v1015
        %v1018 = vsel %vm1016, %v1017, %v1015
        %v1019 = vclz %v1018
        %v1020 = vsub.s32 %v1019, 2
        %vm1021 = vcmp.gt.s32.totalorder 0, %v1020
        %v1022 = vsel %vm1021, 0, %v1020
        %v1023 = vsub.s32 32, %v1022
        %v1024 = vshll.u32 %v1015, %v1022
        %v1025 = vshrl.u32 %v1007, %v1023
        %v1026 = vor.u32 %v1024, %v1025
        %v1027 = vsub.s32 4294967266, %v1022
        %v1028 = vadd.s32 %v1027, 127
        %v1029 = vshll.u32 %v1028, 23
        %v1030 = vor.u32 4788187, %v1029
        %v1031 = vand.u32 2147483647, %v1030
        %v1033 = vcvt.s32.f32 %v1026
        %v1034 = vmul.f32 %v1033, %v1031
        %v1035 = vxor.u32 %v1034, 2147483648
        %v1036 = vsel %vm953, %v1035, %v1034
        %v1037 = vsub.s32 4, %v1013
        %v1038 = vsel %vm953, %v1037, %v1013
        %v1039 = vsel %vm952, %v613, %v1036
        %v1040 = vsel %vm952, 0, %v1038
        %v1041 = vcosq.f32.pop %v1039
        %v1042 = vsinq.f32.pop %v1039
        %vm1043 = vweird.f32 %v613
        %v1044 = vand.u32 %v1040, 3
        %vm1045 = vcmp.lt.s32.totalorder %v1044, 2
        %vm1046 = vcmp.eq.s32.totalorder %v1044, 0
        %v1047 = vxor.u32 %v1042, 2147483648
        %v1048 = vsel %vm1046, %v1041, %v1047
        %vm1049 = vcmp.eq.s32.totalorder %v1044, 2
        %v1050 = vxor.u32 %v1041, 2147483648
        %v1051 = vsel %vm1049, %v1050, %v1042
        %v1052 = vsel %vm1045, %v1048, %v1051
        %v1053 = vsel %vm1043, nan, %v1052
        %v1054 = vand.u32 2147483647, %v614
        %vm1055 = vcmp.le.f32.partialorder %v1054, 0.7853982
        %vm1056 = vcmp.lt.s32.totalorder %v614, 0
        %v1057 = vand.u32 %v614, 2139095040
        %v1058 = vshrl.u32 %v1057, 23
        %v1059 = vsub.s32 %v1058, 127
        %v1060 = vand.u32 2147483647, %v614
        %v1061 = vand.u32 %v1060, 8388607
        %v1062 = vor.u32 %v1061, 8388608
        %v1063 = vsub.s32 0, %v1062
        %v1064 = vadd.s32 %v1059, 1
        %vm1065 = vcmp.gt.s32.totalorder %v1064, 0
        %v1066 = vsel %vm1065, %v1064, 0
        %v1067 = vshrl.u32 %v1066, 5
        %v1068 = vand.u32 %v1066, 31
        %v1069 = vsub.s32 32, %v1068
        %v1070 = vshrl.u32 683565275, %v1069
        %v1071 = vshll.u32 683565275, %v1068
        %v1072 = vshrl.u32 2475754826, %v1069
        %v1073 = vor.u32 %v1071, %v1072
        %v1074 = vshll.u32 2475754826, %v1068
        %v1075 = vshrl.u32 2131351028, %v1069
        %v1076 = vor.u32 %v1074, %v1075
        %v1077 = vshll.u32 2131351028, %v1068
        %v1078 = vshrl.u32 2102212464, %v1069
        %v1079 = vor.u32 %v1077, %v1078
        %v1080 = vshll.u32 2102212464, %v1068
        %v1081 = vshrl.u32 920167782, %v1069
        %v1082 = vor.u32 %v1080, %v1081
        %v1083 = vshll.u32 920167782, %v1068
        %v1084 = vshrl.u32 1326507024, %v1069
        %v1085 = vor.u32 %v1083, %v1084
        %vm1086 = vcmp.lt.s32.totalorder %v1067, 1
        %vm1087 = vcmp.lt.s32.totalorder %v1067, 2
        %vm1088 = vcmp.lt.s32.totalorder %v1067, 3
        %vm1089 = vcmp.lt.s32.totalorder %v1067, 4
        %v1090 = vsel %vm1086, %v1070, %v1073
        %v1091 = vsel %vm1089, %v1079, 2102212464
        %v1092 = vsel %vm1088, %v1076, %v1091
        %v1093 = vsel %vm1087, %v1090, %v1092
        %v1094 = vsel %vm1086, %v1073, %v1076
        %v1095 = vsel %vm1089, %v1082, 920167782
        %v1096 = vsel %vm1088, %v1079, %v1095
        %v1097 = vsel %vm1087, %v1094, %v1096
        %v1098 = vsel %vm1086, %v1076, %v1079
        %v1099 = vsel %vm1089, %v1085, 1326507024
        %v1100 = vsel %vm1088, %v1082, %v1099
        %v1101 = vsel %vm1087, %v1098, %v1100
        %v1102 = vshll.u32 %v1062, 8
        %v1103 = vmul.u32.u64.compose %v1102, %v1101
        %v1104 = vextract.low.u32 %v1103
        %v1105 = vextract.high.u32 %v1103
        %v1106 = vmul.u32.u64.compose %v1102, %v1097
        %v1107 = vextract.low.u32 %v1106
        %v1108 = vextract.high.u32 %v1106
        %v1109 = vmul.u32 %v1102, %v1093
        %v1110 = vadd.s32 %v1105, %v1107
        %vm1111 = vc.u32 %v1105, %v1107
        %v1112 = vadd.s32 %v1108, 1
        %v1113 = vsel %vm1111, %v1112, %v1108
        %v1114 = vadd.s32 %v1109, %v1113
        %v1115 = vadd.s32 %v1114, 536870912
        %v1116 = vshrl.u32 %v1115, 30
        %v1117 = vshll.u32 %v1116, 30
        %v1118 = vsub.s32 %v1114, %v1117
        %vm1119 = vcmp.lt.s32.totalorder %v1118, 0
        %v1120 = vsub.s32 0, %v1118
        %v1121 = vsel %vm1119, %v1120, %v1118
        %v1122 = vclz %v1121
        %v1123 = vsub.s32 %v1122, 2
        %vm1124 = vcmp.gt.s32.totalorder 0, %v1123
        %v1125 = vsel %vm1124, 0, %v1123
        %v1126 = vsub.s32 32, %v1125
        %v1127 = vshll.u32 %v1118, %v1125
        %v1128 = vshrl.u32 %v1110, %v1126
        %v1129 = vor.u32 %v1127, %v1128
        %v1130 = vsub.s32 4294967266, %v1125
        %v1131 = vadd.s32 %v1130, 127
        %v1132 = vshll.u32 %v1131, 23
        %v1133 = vor.u32 4788187, %v1132
        %v1134 = vand.u32 2147483647, %v1133
        %v1136 = vcvt.s32.f32 %v1129
        %v1137 = vmul.f32 %v1136, %v1134
        %v1138 = vxor.u32 %v1137, 2147483648
        %v1139 = vsel %vm1056, %v1138, %v1137
        %v1140 = vsub.s32 4, %v1116
        %v1141 = vsel %vm1056, %v1140, %v1116
        %v1142 = vsel %vm1055, %v614, %v1139
        %v1143 = vsel %vm1055, 0, %v1141
        %v1144 = vcosq.f32.pop %v1142
        %v1145 = vsinq.f32.pop %v1142
        %vm1146 = vweird.f32 %v614
        %v1147 = vand.u32 %v1143, 3
        %vm1148 = vcmp.lt.s32.totalorder %v1147, 2
        %vm1149 = vcmp.eq.s32.totalorder %v1147, 0
        %v1150 = vxor.u32 %v1145, 2147483648
        %v1151 = vsel %vm1149, %v1144, %v1150
        %vm1152 = vcmp.eq.s32.totalorder %v1147, 2
        %v1153 = vxor.u32 %v1144, 2147483648
        %v1154 = vsel %vm1152, %v1153, %v1145
        %v1155 = vsel %vm1148, %v1151, %v1154
        %v1156 = vsel %vm1146, nan, %v1155
        %v1157 = vand.u32 2147483647, %v615
        %vm1158 = vcmp.le.f32.partialorder %v1157, 0.7853982
        %vm1159 = vcmp.lt.s32.totalorder %v615, 0
        %v1160 = vand.u32 %v615, 2139095040
        %v1161 = vshrl.u32 %v1160, 23
        %v1162 = vsub.s32 %v1161, 127
        %v1163 = vand.u32 2147483647, %v615
        %v1164 = vand.u32 %v1163, 8388607
        %v1165 = vor.u32 %v1164, 8388608
        %v1166 = vsub.s32 0, %v1165
        %v1167 = vadd.s32 %v1162, 1
        %vm1168 = vcmp.gt.s32.totalorder %v1167, 0
        %v1169 = vsel %vm1168, %v1167, 0
        %v1170 = vshrl.u32 %v1169, 5
        %v1171 = vand.u32 %v1169, 31
        %v1172 = vsub.s32 32, %v1171
        %v1173 = vshrl.u32 683565275, %v1172
        %v1174 = vshll.u32 683565275, %v1171
        %v1175 = vshrl.u32 2475754826, %v1172
        %v1176 = vor.u32 %v1174, %v1175
        %v1177 = vshll.u32 2475754826, %v1171
        %v1178 = vshrl.u32 2131351028, %v1172
        %v1179 = vor.u32 %v1177, %v1178
        %v1180 = vshll.u32 2131351028, %v1171
        %v1181 = vshrl.u32 2102212464, %v1172
        %v1182 = vor.u32 %v1180, %v1181
        %v1183 = vshll.u32 2102212464, %v1171
        %v1184 = vshrl.u32 920167782, %v1172
        %v1185 = vor.u32 %v1183, %v1184
        %v1186 = vshll.u32 920167782, %v1171
        %v1187 = vshrl.u32 1326507024, %v1172
        %v1188 = vor.u32 %v1186, %v1187
        %vm1189 = vcmp.lt.s32.totalorder %v1170, 1
        %vm1190 = vcmp.lt.s32.totalorder %v1170, 2
        %vm1191 = vcmp.lt.s32.totalorder %v1170, 3
        %vm1192 = vcmp.lt.s32.totalorder %v1170, 4
        %v1193 = vsel %vm1189, %v1173, %v1176
        %v1194 = vsel %vm1192, %v1182, 2102212464
        %v1195 = vsel %vm1191, %v1179, %v1194
        %v1196 = vsel %vm1190, %v1193, %v1195
        %v1197 = vsel %vm1189, %v1176, %v1179
        %v1198 = vsel %vm1192, %v1185, 920167782
        %v1199 = vsel %vm1191, %v1182, %v1198
        %v1200 = vsel %vm1190, %v1197, %v1199
        %v1201 = vsel %vm1189, %v1179, %v1182
        %v1202 = vsel %vm1192, %v1188, 1326507024
        %v1203 = vsel %vm1191, %v1185, %v1202
        %v1204 = vsel %vm1190, %v1201, %v1203
        %v1205 = vshll.u32 %v1165, 8
        %v1206 = vmul.u32.u64.compose %v1205, %v1204
        %v1207 = vextract.low.u32 %v1206
        %v1208 = vextract.high.u32 %v1206
        %v1209 = vmul.u32.u64.compose %v1205, %v1200
        %v1210 = vextract.low.u32 %v1209
        %v1211 = vextract.high.u32 %v1209
        %v1212 = vmul.u32 %v1205, %v1196
        %v1213 = vadd.s32 %v1208, %v1210
        %vm1214 = vc.u32 %v1208, %v1210
        %v1215 = vadd.s32 %v1211, 1
        %v1216 = vsel %vm1214, %v1215, %v1211
        %v1217 = vadd.s32 %v1212, %v1216
        %v1218 = vadd.s32 %v1217, 536870912
        %v1219 = vshrl.u32 %v1218, 30
        %v1220 = vshll.u32 %v1219, 30
        %v1221 = vsub.s32 %v1217, %v1220
        %vm1222 = vcmp.lt.s32.totalorder %v1221, 0
        %v1223 = vsub.s32 0, %v1221
        %v1224 = vsel %vm1222, %v1223, %v1221
        %v1225 = vclz %v1224
        %v1226 = vsub.s32 %v1225, 2
        %vm1227 = vcmp.gt.s32.totalorder 0, %v1226
        %v1228 = vsel %vm1227, 0, %v1226
        %v1229 = vsub.s32 32, %v1228
        %v1230 = vshll.u32 %v1221, %v1228
        %v1231 = vshrl.u32 %v1213, %v1229
        %v1232 = vor.u32 %v1230, %v1231
        %v1233 = vsub.s32 4294967266, %v1228
        %v1234 = vadd.s32 %v1233, 127
        %v1235 = vshll.u32 %v1234, 23
        %v1236 = vor.u32 4788187, %v1235
        %v1237 = vand.u32 2147483647, %v1236
        %v1239 = vcvt.s32.f32 %v1232
        %v1240 = vmul.f32 %v1239, %v1237
        %v1241 = vxor.u32 %v1240, 2147483648
        %v1242 = vsel %vm1159, %v1241, %v1240
        %v1243 = vsub.s32 4, %v1219
        %v1244 = vsel %vm1159, %v1243, %v1219
        %v1245 = vsel %vm1158, %v615, %v1242
        %v1246 = vsel %vm1158, 0, %v1244
        %v1247 = vcosq.f32.pop %v1245
        %v1248 = vsinq.f32.pop %v1245
        %vm1249 = vweird.f32 %v615
        %v1250 = vand.u32 %v1246, 3
        %vm1251 = vcmp.lt.s32.totalorder %v1250, 2
        %vm1252 = vcmp.eq.s32.totalorder %v1250, 0
        %v1253 = vxor.u32 %v1248, 2147483648
        %v1254 = vsel %vm1252, %v1247, %v1253
        %vm1255 = vcmp.eq.s32.totalorder %v1250, 2
        %v1256 = vxor.u32 %v1247, 2147483648
        %v1257 = vsel %vm1255, %v1256, %v1248
        %v1258 = vsel %vm1251, %v1254, %v1257
        %v1259 = vsel %vm1249, nan, %v1258
        %v1260 = vand.u32 2147483647, %v616
        %vm1261 = vcmp.le.f32.partialorder %v1260, 0.7853982
        %vm1262 = vcmp.lt.s32.totalorder %v616, 0
        %v1263 = vand.u32 %v616, 2139095040
        %v1264 = vshrl.u32 %v1263, 23
        %v1265 = vsub.s32 %v1264, 127
        %v1266 = vand.u32 2147483647, %v616
        %v1267 = vand.u32 %v1266, 8388607
        %v1268 = vor.u32 %v1267, 8388608
        %v1269 = vsub.s32 0, %v1268
        %v1270 = vadd.s32 %v1265, 1
        %vm1271 = vcmp.gt.s32.totalorder %v1270, 0
        %v1272 = vsel %vm1271, %v1270, 0
        %v1273 = vshrl.u32 %v1272, 5
        %v1274 = vand.u32 %v1272, 31
        %v1275 = vsub.s32 32, %v1274
        %v1276 = vshrl.u32 683565275, %v1275
        %v1277 = vshll.u32 683565275, %v1274
        %v1278 = vshrl.u32 2475754826, %v1275
        %v1279 = vor.u32 %v1277, %v1278
        %v1280 = vshll.u32 2475754826, %v1274
        %v1281 = vshrl.u32 2131351028, %v1275
        %v1282 = vor.u32 %v1280, %v1281
        %v1283 = vshll.u32 2131351028, %v1274
        %v1284 = vshrl.u32 2102212464, %v1275
        %v1285 = vor.u32 %v1283, %v1284
        %v1286 = vshll.u32 2102212464, %v1274
        %v1287 = vshrl.u32 920167782, %v1275
        %v1288 = vor.u32 %v1286, %v1287
        %v1289 = vshll.u32 920167782, %v1274
        %v1290 = vshrl.u32 1326507024, %v1275
        %v1291 = vor.u32 %v1289, %v1290
        %vm1292 = vcmp.lt.s32.totalorder %v1273, 1
        %vm1293 = vcmp.lt.s32.totalorder %v1273, 2
        %vm1294 = vcmp.lt.s32.totalorder %v1273, 3
        %vm1295 = vcmp.lt.s32.totalorder %v1273, 4
        %v1296 = vsel %vm1292, %v1276, %v1279
        %v1297 = vsel %vm1295, %v1285, 2102212464
        %v1298 = vsel %vm1294, %v1282, %v1297
        %v1299 = vsel %vm1293, %v1296, %v1298
        %v1300 = vsel %vm1292, %v1279, %v1282
        %v1301 = vsel %vm1295, %v1288, 920167782
        %v1302 = vsel %vm1294, %v1285, %v1301
        %v1303 = vsel %vm1293, %v1300, %v1302
        %v1304 = vsel %vm1292, %v1282, %v1285
        %v1305 = vsel %vm1295, %v1291, 1326507024
        %v1306 = vsel %vm1294, %v1288, %v1305
        %v1307 = vsel %vm1293, %v1304, %v1306
        %v1308 = vshll.u32 %v1268, 8
        %v1309 = vmul.u32.u64.compose %v1308, %v1307
        %v1310 = vextract.low.u32 %v1309
        %v1311 = vextract.high.u32 %v1309
        %v1312 = vmul.u32.u64.compose %v1308, %v1303
        %v1313 = vextract.low.u32 %v1312
        %v1314 = vextract.high.u32 %v1312
        %v1315 = vmul.u32 %v1308, %v1299
        %v1316 = vadd.s32 %v1311, %v1313
        %vm1317 = vc.u32 %v1311, %v1313
        %v1318 = vadd.s32 %v1314, 1
        %v1319 = vsel %vm1317, %v1318, %v1314
        %v1320 = vadd.s32 %v1315, %v1319
        %v1321 = vadd.s32 %v1320, 536870912
        %v1322 = vshrl.u32 %v1321, 30
        %v1323 = vshll.u32 %v1322, 30
        %v1324 = vsub.s32 %v1320, %v1323
        %vm1325 = vcmp.lt.s32.totalorder %v1324, 0
        %v1326 = vsub.s32 0, %v1324
        %v1327 = vsel %vm1325, %v1326, %v1324
        %v1328 = vclz %v1327
        %v1329 = vsub.s32 %v1328, 2
        %vm1330 = vcmp.gt.s32.totalorder 0, %v1329
        %v1331 = vsel %vm1330, 0, %v1329
        %v1332 = vsub.s32 32, %v1331
        %v1333 = vshll.u32 %v1324, %v1331
        %v1334 = vshrl.u32 %v1316, %v1332
        %v1335 = vor.u32 %v1333, %v1334
        %v1336 = vsub.s32 4294967266, %v1331
        %v1337 = vadd.s32 %v1336, 127
        %v1338 = vshll.u32 %v1337, 23
        %v1339 = vor.u32 4788187, %v1338
        %v1340 = vand.u32 2147483647, %v1339
        %v1342 = vcvt.s32.f32 %v1335
        %v1343 = vmul.f32 %v1342, %v1340
        %v1344 = vxor.u32 %v1343, 2147483648
        %v1345 = vsel %vm1262, %v1344, %v1343
        %v1346 = vsub.s32 4, %v1322
        %v1347 = vsel %vm1262, %v1346, %v1322
        %v1348 = vsel %vm1261, %v616, %v1345
        %v1349 = vsel %vm1261, 0, %v1347
        %v1350 = vcosq.f32.pop %v1348
        %v1351 = vsinq.f32.pop %v1348
        %vm1352 = vweird.f32 %v616
        %v1353 = vand.u32 %v1349, 3
        %vm1354 = vcmp.lt.s32.totalorder %v1353, 2
        %vm1355 = vcmp.eq.s32.totalorder %v1353, 0
        %v1356 = vxor.u32 %v1351, 2147483648
        %v1357 = vsel %vm1355, %v1350, %v1356
        %vm1358 = vcmp.eq.s32.totalorder %v1353, 2
        %v1359 = vxor.u32 %v1350, 2147483648
        %v1360 = vsel %vm1358, %v1359, %v1351
        %v1361 = vsel %vm1354, %v1357, %v1360
        %v1362 = vsel %vm1352, nan, %v1361
        %v1363 = vand.u32 2147483647, %v617
        %vm1364 = vcmp.le.f32.partialorder %v1363, 0.7853982
        %vm1365 = vcmp.lt.s32.totalorder %v617, 0
        %v1366 = vand.u32 %v617, 2139095040
        %v1367 = vshrl.u32 %v1366, 23
        %v1368 = vsub.s32 %v1367, 127
        %v1369 = vand.u32 2147483647, %v617
        %v1370 = vand.u32 %v1369, 8388607
        %v1371 = vor.u32 %v1370, 8388608
        %v1372 = vsub.s32 0, %v1371
        %v1373 = vadd.s32 %v1368, 1
        %vm1374 = vcmp.gt.s32.totalorder %v1373, 0
        %v1375 = vsel %vm1374, %v1373, 0
        %v1376 = vshrl.u32 %v1375, 5
        %v1377 = vand.u32 %v1375, 31
        %v1378 = vsub.s32 32, %v1377
        %v1379 = vshrl.u32 683565275, %v1378
        %v1380 = vshll.u32 683565275, %v1377
        %v1381 = vshrl.u32 2475754826, %v1378
        %v1382 = vor.u32 %v1380, %v1381
        %v1383 = vshll.u32 2475754826, %v1377
        %v1384 = vshrl.u32 2131351028, %v1378
        %v1385 = vor.u32 %v1383, %v1384
        %v1386 = vshll.u32 2131351028, %v1377
        %v1387 = vshrl.u32 2102212464, %v1378
        %v1388 = vor.u32 %v1386, %v1387
        %v1389 = vshll.u32 2102212464, %v1377
        %v1390 = vshrl.u32 920167782, %v1378
        %v1391 = vor.u32 %v1389, %v1390
        %v1392 = vshll.u32 920167782, %v1377
        %v1393 = vshrl.u32 1326507024, %v1378
        %v1394 = vor.u32 %v1392, %v1393
        %vm1395 = vcmp.lt.s32.totalorder %v1376, 1
        %vm1396 = vcmp.lt.s32.totalorder %v1376, 2
        %vm1397 = vcmp.lt.s32.totalorder %v1376, 3
        %vm1398 = vcmp.lt.s32.totalorder %v1376, 4
        %v1399 = vsel %vm1395, %v1379, %v1382
        %v1400 = vsel %vm1398, %v1388, 2102212464
        %v1401 = vsel %vm1397, %v1385, %v1400
        %v1402 = vsel %vm1396, %v1399, %v1401
        %v1403 = vsel %vm1395, %v1382, %v1385
        %v1404 = vsel %vm1398, %v1391, 920167782
        %v1405 = vsel %vm1397, %v1388, %v1404
        %v1406 = vsel %vm1396, %v1403, %v1405
        %v1407 = vsel %vm1395, %v1385, %v1388
        %v1408 = vsel %vm1398, %v1394, 1326507024
        %v1409 = vsel %vm1397, %v1391, %v1408
        %v1410 = vsel %vm1396, %v1407, %v1409
        %v1411 = vshll.u32 %v1371, 8
        %v1412 = vmul.u32.u64.compose %v1411, %v1410
        %v1413 = vextract.low.u32 %v1412
        %v1414 = vextract.high.u32 %v1412
        %v1415 = vmul.u32.u64.compose %v1411, %v1406
        %v1416 = vextract.low.u32 %v1415
        %v1417 = vextract.high.u32 %v1415
        %v1418 = vmul.u32 %v1411, %v1402
        %v1419 = vadd.s32 %v1414, %v1416
        %vm1420 = vc.u32 %v1414, %v1416
        %v1421 = vadd.s32 %v1417, 1
        %v1422 = vsel %vm1420, %v1421, %v1417
        %v1423 = vadd.s32 %v1418, %v1422
        %v1424 = vadd.s32 %v1423, 536870912
        %v1425 = vshrl.u32 %v1424, 30
        %v1426 = vshll.u32 %v1425, 30
        %v1427 = vsub.s32 %v1423, %v1426
        %vm1428 = vcmp.lt.s32.totalorder %v1427, 0
        %v1429 = vsub.s32 0, %v1427
        %v1430 = vsel %vm1428, %v1429, %v1427
        %v1431 = vclz %v1430
        %v1432 = vsub.s32 %v1431, 2
        %vm1433 = vcmp.gt.s32.totalorder 0, %v1432
        %v1434 = vsel %vm1433, 0, %v1432
        %v1435 = vsub.s32 32, %v1434
        %v1436 = vshll.u32 %v1427, %v1434
        %v1437 = vshrl.u32 %v1419, %v1435
        %v1438 = vor.u32 %v1436, %v1437
        %v1439 = vsub.s32 4294967266, %v1434
        %v1440 = vadd.s32 %v1439, 127
        %v1441 = vshll.u32 %v1440, 23
        %v1442 = vor.u32 4788187, %v1441
        %v1443 = vand.u32 2147483647, %v1442
        %v1445 = vcvt.s32.f32 %v1438
        %v1446 = vmul.f32 %v1445, %v1443
        %v1447 = vxor.u32 %v1446, 2147483648
        %v1448 = vsel %vm1365, %v1447, %v1446
        %v1449 = vsub.s32 4, %v1425
        %v1450 = vsel %vm1365, %v1449, %v1425
        %v1451 = vsel %vm1364, %v617, %v1448
        %v1452 = vsel %vm1364, 0, %v1450
        %v1453 = vcosq.f32.pop %v1451
        %v1454 = vsinq.f32.pop %v1451
        %vm1455 = vweird.f32 %v617
        %v1456 = vand.u32 %v1452, 3
        %vm1457 = vcmp.lt.s32.totalorder %v1456, 2
        %vm1458 = vcmp.eq.s32.totalorder %v1456, 0
        %v1459 = vxor.u32 %v1454, 2147483648
        %v1460 = vsel %vm1458, %v1453, %v1459
        %vm1461 = vcmp.eq.s32.totalorder %v1456, 2
        %v1462 = vxor.u32 %v1453, 2147483648
        %v1463 = vsel %vm1461, %v1462, %v1454
        %v1464 = vsel %vm1457, %v1460, %v1463
        %v1465 = vsel %vm1455, nan, %v1464
        %v1466 = vand.u32 2147483647, %v618
        %vm1467 = vcmp.le.f32.partialorder %v1466, 0.7853982
        %vm1468 = vcmp.lt.s32.totalorder %v618, 0
        %v1469 = vand.u32 %v618, 2139095040
        %v1470 = vshrl.u32 %v1469, 23
        %v1471 = vsub.s32 %v1470, 127
        %v1472 = vand.u32 2147483647, %v618
        %v1473 = vand.u32 %v1472, 8388607
        %v1474 = vor.u32 %v1473, 8388608
        %v1475 = vsub.s32 0, %v1474
        %v1476 = vadd.s32 %v1471, 1
        %vm1477 = vcmp.gt.s32.totalorder %v1476, 0
        %v1478 = vsel %vm1477, %v1476, 0
        %v1479 = vshrl.u32 %v1478, 5
        %v1480 = vand.u32 %v1478, 31
        %v1481 = vsub.s32 32, %v1480
        %v1482 = vshrl.u32 683565275, %v1481
        %v1483 = vshll.u32 683565275, %v1480
        %v1484 = vshrl.u32 2475754826, %v1481
        %v1485 = vor.u32 %v1483, %v1484
        %v1486 = vshll.u32 2475754826, %v1480
        %v1487 = vshrl.u32 2131351028, %v1481
        %v1488 = vor.u32 %v1486, %v1487
        %v1489 = vshll.u32 2131351028, %v1480
        %v1490 = vshrl.u32 2102212464, %v1481
        %v1491 = vor.u32 %v1489, %v1490
        %v1492 = vshll.u32 2102212464, %v1480
        %v1493 = vshrl.u32 920167782, %v1481
        %v1494 = vor.u32 %v1492, %v1493
        %v1495 = vshll.u32 920167782, %v1480
        %v1496 = vshrl.u32 1326507024, %v1481
        %v1497 = vor.u32 %v1495, %v1496
        %vm1498 = vcmp.lt.s32.totalorder %v1479, 1
        %vm1499 = vcmp.lt.s32.totalorder %v1479, 2
        %vm1500 = vcmp.lt.s32.totalorder %v1479, 3
        %vm1501 = vcmp.lt.s32.totalorder %v1479, 4
        %v1502 = vsel %vm1498, %v1482, %v1485
        %v1503 = vsel %vm1501, %v1491, 2102212464
        %v1504 = vsel %vm1500, %v1488, %v1503
        %v1505 = vsel %vm1499, %v1502, %v1504
        %v1506 = vsel %vm1498, %v1485, %v1488
        %v1507 = vsel %vm1501, %v1494, 920167782
        %v1508 = vsel %vm1500, %v1491, %v1507
        %v1509 = vsel %vm1499, %v1506, %v1508
        %v1510 = vsel %vm1498, %v1488, %v1491
        %v1511 = vsel %vm1501, %v1497, 1326507024
        %v1512 = vsel %vm1500, %v1494, %v1511
        %v1513 = vsel %vm1499, %v1510, %v1512
        %v1514 = vshll.u32 %v1474, 8
        %v1515 = vmul.u32.u64.compose %v1514, %v1513
        %v1516 = vextract.low.u32 %v1515
        %v1517 = vextract.high.u32 %v1515
        %v1518 = vmul.u32.u64.compose %v1514, %v1509
        %v1519 = vextract.low.u32 %v1518
        %v1520 = vextract.high.u32 %v1518
        %v1521 = vmul.u32 %v1514, %v1505
        %v1522 = vadd.s32 %v1517, %v1519
        %vm1523 = vc.u32 %v1517, %v1519
        %v1524 = vadd.s32 %v1520, 1
        %v1525 = vsel %vm1523, %v1524, %v1520
        %v1526 = vadd.s32 %v1521, %v1525
        %v1527 = vadd.s32 %v1526, 536870912
        %v1528 = vshrl.u32 %v1527, 30
        %v1529 = vshll.u32 %v1528, 30
        %v1530 = vsub.s32 %v1526, %v1529
        %vm1531 = vcmp.lt.s32.totalorder %v1530, 0
        %v1532 = vsub.s32 0, %v1530
        %v1533 = vsel %vm1531, %v1532, %v1530
        %v1534 = vclz %v1533
        %v1535 = vsub.s32 %v1534, 2
        %vm1536 = vcmp.gt.s32.totalorder 0, %v1535
        %v1537 = vsel %vm1536, 0, %v1535
        %v1538 = vsub.s32 32, %v1537
        %v1539 = vshll.u32 %v1530, %v1537
        %v1540 = vshrl.u32 %v1522, %v1538
        %v1541 = vor.u32 %v1539, %v1540
        %v1542 = vsub.s32 4294967266, %v1537
        %v1543 = vadd.s32 %v1542, 127
        %v1544 = vshll.u32 %v1543, 23
        %v1545 = vor.u32 4788187, %v1544
        %v1546 = vand.u32 2147483647, %v1545
        %v1548 = vcvt.s32.f32 %v1541
        %v1549 = vmul.f32 %v1548, %v1546
        %v1550 = vxor.u32 %v1549, 2147483648
        %v1551 = vsel %vm1468, %v1550, %v1549
        %v1552 = vsub.s32 4, %v1528
        %v1553 = vsel %vm1468, %v1552, %v1528
        %v1554 = vsel %vm1467, %v618, %v1551
        %v1555 = vsel %vm1467, 0, %v1553
        %v1556 = vcosq.f32.pop %v1554
        %v1557 = vsinq.f32.pop %v1554
        %vm1558 = vweird.f32 %v618
        %v1559 = vand.u32 %v1555, 3
        %vm1560 = vcmp.lt.s32.totalorder %v1559, 2
        %vm1561 = vcmp.eq.s32.totalorder %v1559, 0
        %v1562 = vxor.u32 %v1557, 2147483648
        %v1563 = vsel %vm1561, %v1556, %v1562
        %vm1564 = vcmp.eq.s32.totalorder %v1559, 2
        %v1565 = vxor.u32 %v1556, 2147483648
        %v1566 = vsel %vm1564, %v1565, %v1557
        %v1567 = vsel %vm1560, %v1563, %v1566
        %v1568 = vsel %vm1558, nan, %v1567
        %v1569 = vand.u32 2147483647, %v619
        %vm1570 = vcmp.le.f32.partialorder %v1569, 0.7853982
        %vm1571 = vcmp.lt.s32.totalorder %v619, 0
        %v1572 = vand.u32 %v619, 2139095040
        %v1573 = vshrl.u32 %v1572, 23
        %v1574 = vsub.s32 %v1573, 127
        %v1575 = vand.u32 2147483647, %v619
        %v1576 = vand.u32 %v1575, 8388607
        %v1577 = vor.u32 %v1576, 8388608
        %v1578 = vsub.s32 0, %v1577
        %v1579 = vadd.s32 %v1574, 1
        %vm1580 = vcmp.gt.s32.totalorder %v1579, 0
        %v1581 = vsel %vm1580, %v1579, 0
        %v1582 = vshrl.u32 %v1581, 5
        %v1583 = vand.u32 %v1581, 31
        %v1584 = vsub.s32 32, %v1583
        %v1585 = vshrl.u32 683565275, %v1584
        %v1586 = vshll.u32 683565275, %v1583
        %v1587 = vshrl.u32 2475754826, %v1584
        %v1588 = vor.u32 %v1586, %v1587
        %v1589 = vshll.u32 2475754826, %v1583
        %v1590 = vshrl.u32 2131351028, %v1584
        %v1591 = vor.u32 %v1589, %v1590
        %v1592 = vshll.u32 2131351028, %v1583
        %v1593 = vshrl.u32 2102212464, %v1584
        %v1594 = vor.u32 %v1592, %v1593
        %v1595 = vshll.u32 2102212464, %v1583
        %v1596 = vshrl.u32 920167782, %v1584
        %v1597 = vor.u32 %v1595, %v1596
        %v1598 = vshll.u32 920167782, %v1583
        %v1599 = vshrl.u32 1326507024, %v1584
        %v1600 = vor.u32 %v1598, %v1599
        %vm1601 = vcmp.lt.s32.totalorder %v1582, 1
        %vm1602 = vcmp.lt.s32.totalorder %v1582, 2
        %vm1603 = vcmp.lt.s32.totalorder %v1582, 3
        %vm1604 = vcmp.lt.s32.totalorder %v1582, 4
        %v1605 = vsel %vm1601, %v1585, %v1588
        %v1606 = vsel %vm1604, %v1594, 2102212464
        %v1607 = vsel %vm1603, %v1591, %v1606
        %v1608 = vsel %vm1602, %v1605, %v1607
        %v1609 = vsel %vm1601, %v1588, %v1591
        %v1610 = vsel %vm1604, %v1597, 920167782
        %v1611 = vsel %vm1603, %v1594, %v1610
        %v1612 = vsel %vm1602, %v1609, %v1611
        %v1613 = vsel %vm1601, %v1591, %v1594
        %v1614 = vsel %vm1604, %v1600, 1326507024
        %v1615 = vsel %vm1603, %v1597, %v1614
        %v1616 = vsel %vm1602, %v1613, %v1615
        %v1617 = vshll.u32 %v1577, 8
        %v1618 = vmul.u32.u64.compose %v1617, %v1616
        %v1619 = vextract.low.u32 %v1618
        %v1620 = vextract.high.u32 %v1618
        %v1621 = vmul.u32.u64.compose %v1617, %v1612
        %v1622 = vextract.low.u32 %v1621
        %v1623 = vextract.high.u32 %v1621
        %v1624 = vmul.u32 %v1617, %v1608
        %v1625 = vadd.s32 %v1620, %v1622
        %vm1626 = vc.u32 %v1620, %v1622
        %v1627 = vadd.s32 %v1623, 1
        %v1628 = vsel %vm1626, %v1627, %v1623
        %v1629 = vadd.s32 %v1624, %v1628
        %v1630 = vadd.s32 %v1629, 536870912
        %v1631 = vshrl.u32 %v1630, 30
        %v1632 = vshll.u32 %v1631, 30
        %v1633 = vsub.s32 %v1629, %v1632
        %vm1634 = vcmp.lt.s32.totalorder %v1633, 0
        %v1635 = vsub.s32 0, %v1633
        %v1636 = vsel %vm1634, %v1635, %v1633
        %v1637 = vclz %v1636
        %v1638 = vsub.s32 %v1637, 2
        %vm1639 = vcmp.gt.s32.totalorder 0, %v1638
        %v1640 = vsel %vm1639, 0, %v1638
        %v1641 = vsub.s32 32, %v1640
        %v1642 = vshll.u32 %v1633, %v1640
        %v1643 = vshrl.u32 %v1625, %v1641
        %v1644 = vor.u32 %v1642, %v1643
        %v1645 = vsub.s32 4294967266, %v1640
        %v1646 = vadd.s32 %v1645, 127
        %v1647 = vshll.u32 %v1646, 23
        %v1648 = vor.u32 4788187, %v1647
        %v1649 = vand.u32 2147483647, %v1648
        %v1651 = vcvt.s32.f32 %v1644
        %v1652 = vmul.f32 %v1651, %v1649
        %v1653 = vxor.u32 %v1652, 2147483648
        %v1654 = vsel %vm1571, %v1653, %v1652
        %v1655 = vsub.s32 4, %v1631
        %v1656 = vsel %vm1571, %v1655, %v1631
        %v1657 = vsel %vm1570, %v619, %v1654
        %v1658 = vsel %vm1570, 0, %v1656
        %v1659 = vcosq.f32.pop %v1657
        %v1660 = vsinq.f32.pop %v1657
        %vm1661 = vweird.f32 %v619
        %v1662 = vand.u32 %v1658, 3
        %vm1663 = vcmp.lt.s32.totalorder %v1662, 2
        %vm1664 = vcmp.eq.s32.totalorder %v1662, 0
        %v1665 = vxor.u32 %v1660, 2147483648
        %v1666 = vsel %vm1664, %v1659, %v1665
        %vm1667 = vcmp.eq.s32.totalorder %v1662, 2
        %v1668 = vxor.u32 %v1659, 2147483648
        %v1669 = vsel %vm1667, %v1668, %v1660
        %v1670 = vsel %vm1663, %v1666, %v1669
        %v1671 = vsel %vm1661, nan, %v1670
        %v1672 = vand.u32 2147483647, %v620
        %vm1673 = vcmp.le.f32.partialorder %v1672, 0.7853982
        %vm1674 = vcmp.lt.s32.totalorder %v620, 0
        %v1675 = vand.u32 %v620, 2139095040
        %v1676 = vshrl.u32 %v1675, 23
        %v1677 = vsub.s32 %v1676, 127
        %v1678 = vand.u32 2147483647, %v620
        %v1679 = vand.u32 %v1678, 8388607
        %v1680 = vor.u32 %v1679, 8388608
        %v1681 = vsub.s32 0, %v1680
        %v1682 = vadd.s32 %v1677, 1
        %vm1683 = vcmp.gt.s32.totalorder %v1682, 0
        %v1684 = vsel %vm1683, %v1682, 0
        %v1685 = vshrl.u32 %v1684, 5
        %v1686 = vand.u32 %v1684, 31
        %v1687 = vsub.s32 32, %v1686
        %v1688 = vshrl.u32 683565275, %v1687
        %v1689 = vshll.u32 683565275, %v1686
        %v1690 = vshrl.u32 2475754826, %v1687
        %v1691 = vor.u32 %v1689, %v1690
        %v1692 = vshll.u32 2475754826, %v1686
        %v1693 = vshrl.u32 2131351028, %v1687
        %v1694 = vor.u32 %v1692, %v1693
        %v1695 = vshll.u32 2131351028, %v1686
        %v1696 = vshrl.u32 2102212464, %v1687
        %v1697 = vor.u32 %v1695, %v1696
        %v1698 = vshll.u32 2102212464, %v1686
        %v1699 = vshrl.u32 920167782, %v1687
        %v1700 = vor.u32 %v1698, %v1699
        %v1701 = vshll.u32 920167782, %v1686
        %v1702 = vshrl.u32 1326507024, %v1687
        %v1703 = vor.u32 %v1701, %v1702
        %vm1704 = vcmp.lt.s32.totalorder %v1685, 1
        %vm1705 = vcmp.lt.s32.totalorder %v1685, 2
        %vm1706 = vcmp.lt.s32.totalorder %v1685, 3
        %vm1707 = vcmp.lt.s32.totalorder %v1685, 4
        %v1708 = vsel %vm1704, %v1688, %v1691
        %v1709 = vsel %vm1707, %v1697, 2102212464
        %v1710 = vsel %vm1706, %v1694, %v1709
        %v1711 = vsel %vm1705, %v1708, %v1710
        %v1712 = vsel %vm1704, %v1691, %v1694
        %v1713 = vsel %vm1707, %v1700, 920167782
        %v1714 = vsel %vm1706, %v1697, %v1713
        %v1715 = vsel %vm1705, %v1712, %v1714
        %v1716 = vsel %vm1704, %v1694, %v1697
        %v1717 = vsel %vm1707, %v1703, 1326507024
        %v1718 = vsel %vm1706, %v1700, %v1717
        %v1719 = vsel %vm1705, %v1716, %v1718
        %v1720 = vshll.u32 %v1680, 8
        %v1721 = vmul.u32.u64.compose %v1720, %v1719
        %v1722 = vextract.low.u32 %v1721
        %v1723 = vextract.high.u32 %v1721
        %v1724 = vmul.u32.u64.compose %v1720, %v1715
        %v1725 = vextract.low.u32 %v1724
        %v1726 = vextract.high.u32 %v1724
        %v1727 = vmul.u32 %v1720, %v1711
        %v1728 = vadd.s32 %v1723, %v1725
        %vm1729 = vc.u32 %v1723, %v1725
        %v1730 = vadd.s32 %v1726, 1
        %v1731 = vsel %vm1729, %v1730, %v1726
        %v1732 = vadd.s32 %v1727, %v1731
        %v1733 = vadd.s32 %v1732, 536870912
        %v1734 = vshrl.u32 %v1733, 30
        %v1735 = vshll.u32 %v1734, 30
        %v1736 = vsub.s32 %v1732, %v1735
        %vm1737 = vcmp.lt.s32.totalorder %v1736, 0
        %v1738 = vsub.s32 0, %v1736
        %v1739 = vsel %vm1737, %v1738, %v1736
        %v1740 = vclz %v1739
        %v1741 = vsub.s32 %v1740, 2
        %vm1742 = vcmp.gt.s32.totalorder 0, %v1741
        %v1743 = vsel %vm1742, 0, %v1741
        %v1744 = vsub.s32 32, %v1743
        %v1745 = vshll.u32 %v1736, %v1743
        %v1746 = vshrl.u32 %v1728, %v1744
        %v1747 = vor.u32 %v1745, %v1746
        %v1748 = vsub.s32 4294967266, %v1743
        %v1749 = vadd.s32 %v1748, 127
        %v1750 = vshll.u32 %v1749, 23
        %v1751 = vor.u32 4788187, %v1750
        %v1752 = vand.u32 2147483647, %v1751
        %v1754 = vcvt.s32.f32 %v1747
        %v1755 = vmul.f32 %v1754, %v1752
        %v1756 = vxor.u32 %v1755, 2147483648
        %v1757 = vsel %vm1674, %v1756, %v1755
        %v1758 = vsub.s32 4, %v1734
        %v1759 = vsel %vm1674, %v1758, %v1734
        %v1760 = vsel %vm1673, %v620, %v1757
        %v1761 = vsel %vm1673, 0, %v1759
        %v1762 = vcosq.f32.pop %v1760
        %v1763 = vsinq.f32.pop %v1760
        %vm1764 = vweird.f32 %v620
        %v1765 = vand.u32 %v1761, 3
        %vm1766 = vcmp.lt.s32.totalorder %v1765, 2
        %vm1767 = vcmp.eq.s32.totalorder %v1765, 0
        %v1768 = vxor.u32 %v1763, 2147483648
        %v1769 = vsel %vm1767, %v1762, %v1768
        %vm1770 = vcmp.eq.s32.totalorder %v1765, 2
        %v1771 = vxor.u32 %v1762, 2147483648
        %v1772 = vsel %vm1770, %v1771, %v1763
        %v1773 = vsel %vm1766, %v1769, %v1772
        %v1774 = vsel %vm1764, nan, %v1773
        %v1775 = vand.u32 2147483647, %v621
        %vm1776 = vcmp.le.f32.partialorder %v1775, 0.7853982
        %vm1777 = vcmp.lt.s32.totalorder %v621, 0
        %v1778 = vand.u32 %v621, 2139095040
        %v1779 = vshrl.u32 %v1778, 23
        %v1780 = vsub.s32 %v1779, 127
        %v1781 = vand.u32 2147483647, %v621
        %v1782 = vand.u32 %v1781, 8388607
        %v1783 = vor.u32 %v1782, 8388608
        %v1784 = vsub.s32 0, %v1783
        %v1785 = vadd.s32 %v1780, 1
        %vm1786 = vcmp.gt.s32.totalorder %v1785, 0
        %v1787 = vsel %vm1786, %v1785, 0
        %v1788 = vshrl.u32 %v1787, 5
        %v1789 = vand.u32 %v1787, 31
        %v1790 = vsub.s32 32, %v1789
        %v1791 = vshrl.u32 683565275, %v1790
        %v1792 = vshll.u32 683565275, %v1789
        %v1793 = vshrl.u32 2475754826, %v1790
        %v1794 = vor.u32 %v1792, %v1793
        %v1795 = vshll.u32 2475754826, %v1789
        %v1796 = vshrl.u32 2131351028, %v1790
        %v1797 = vor.u32 %v1795, %v1796
        %v1798 = vshll.u32 2131351028, %v1789
        %v1799 = vshrl.u32 2102212464, %v1790
        %v1800 = vor.u32 %v1798, %v1799
        %v1801 = vshll.u32 2102212464, %v1789
        %v1802 = vshrl.u32 920167782, %v1790
        %v1803 = vor.u32 %v1801, %v1802
        %v1804 = vshll.u32 920167782, %v1789
        %v1805 = vshrl.u32 1326507024, %v1790
        %v1806 = vor.u32 %v1804, %v1805
        %vm1807 = vcmp.lt.s32.totalorder %v1788, 1
        %vm1808 = vcmp.lt.s32.totalorder %v1788, 2
        %vm1809 = vcmp.lt.s32.totalorder %v1788, 3
        %vm1810 = vcmp.lt.s32.totalorder %v1788, 4
        %v1811 = vsel %vm1807, %v1791, %v1794
        %v1812 = vsel %vm1810, %v1800, 2102212464
        %v1813 = vsel %vm1809, %v1797, %v1812
        %v1814 = vsel %vm1808, %v1811, %v1813
        %v1815 = vsel %vm1807, %v1794, %v1797
        %v1816 = vsel %vm1810, %v1803, 920167782
        %v1817 = vsel %vm1809, %v1800, %v1816
        %v1818 = vsel %vm1808, %v1815, %v1817
        %v1819 = vsel %vm1807, %v1797, %v1800
        %v1820 = vsel %vm1810, %v1806, 1326507024
        %v1821 = vsel %vm1809, %v1803, %v1820
        %v1822 = vsel %vm1808, %v1819, %v1821
        %v1823 = vshll.u32 %v1783, 8
        %v1824 = vmul.u32.u64.compose %v1823, %v1822
        %v1825 = vextract.low.u32 %v1824
        %v1826 = vextract.high.u32 %v1824
        %v1827 = vmul.u32.u64.compose %v1823, %v1818
        %v1828 = vextract.low.u32 %v1827
        %v1829 = vextract.high.u32 %v1827
        %v1830 = vmul.u32 %v1823, %v1814
        %v1831 = vadd.s32 %v1826, %v1828
        %vm1832 = vc.u32 %v1826, %v1828
        %v1833 = vadd.s32 %v1829, 1
        %v1834 = vsel %vm1832, %v1833, %v1829
        %v1835 = vadd.s32 %v1830, %v1834
        %v1836 = vadd.s32 %v1835, 536870912
        %v1837 = vshrl.u32 %v1836, 30
        %v1838 = vshll.u32 %v1837, 30
        %v1839 = vsub.s32 %v1835, %v1838
        %vm1840 = vcmp.lt.s32.totalorder %v1839, 0
        %v1841 = vsub.s32 0, %v1839
        %v1842 = vsel %vm1840, %v1841, %v1839
        %v1843 = vclz %v1842
        %v1844 = vsub.s32 %v1843, 2
        %vm1845 = vcmp.gt.s32.totalorder 0, %v1844
        %v1846 = vsel %vm1845, 0, %v1844
        %v1847 = vsub.s32 32, %v1846
        %v1848 = vshll.u32 %v1839, %v1846
        %v1849 = vshrl.u32 %v1831, %v1847
        %v1850 = vor.u32 %v1848, %v1849
        %v1851 = vsub.s32 4294967266, %v1846
        %v1852 = vadd.s32 %v1851, 127
        %v1853 = vshll.u32 %v1852, 23
        %v1854 = vor.u32 4788187, %v1853
        %v1855 = vand.u32 2147483647, %v1854
        %v1857 = vcvt.s32.f32 %v1850
        %v1858 = vmul.f32 %v1857, %v1855
        %v1859 = vxor.u32 %v1858, 2147483648
        %v1860 = vsel %vm1777, %v1859, %v1858
        %v1861 = vsub.s32 4, %v1837
        %v1862 = vsel %vm1777, %v1861, %v1837
        %v1863 = vsel %vm1776, %v621, %v1860
        %v1864 = vsel %vm1776, 0, %v1862
        %v1865 = vcosq.f32.pop %v1863
        %v1866 = vsinq.f32.pop %v1863
        %vm1867 = vweird.f32 %v621
        %v1868 = vand.u32 %v1864, 3
        %vm1869 = vcmp.lt.s32.totalorder %v1868, 2
        %vm1870 = vcmp.eq.s32.totalorder %v1868, 0
        %v1871 = vxor.u32 %v1866, 2147483648
        %v1872 = vsel %vm1870, %v1865, %v1871
        %vm1873 = vcmp.eq.s32.totalorder %v1868, 2
        %v1874 = vxor.u32 %v1865, 2147483648
        %v1875 = vsel %vm1873, %v1874, %v1866
        %v1876 = vsel %vm1869, %v1872, %v1875
        %v1877 = vsel %vm1867, nan, %v1876
        %v1878 = vand.u32 2147483647, %v622
        %vm1879 = vcmp.le.f32.partialorder %v1878, 0.7853982
        %vm1880 = vcmp.lt.s32.totalorder %v622, 0
        %v1881 = vand.u32 %v622, 2139095040
        %v1882 = vshrl.u32 %v1881, 23
        %v1883 = vsub.s32 %v1882, 127
        %v1884 = vand.u32 2147483647, %v622
        %v1885 = vand.u32 %v1884, 8388607
        %v1886 = vor.u32 %v1885, 8388608
        %v1887 = vsub.s32 0, %v1886
        %v1888 = vadd.s32 %v1883, 1
        %vm1889 = vcmp.gt.s32.totalorder %v1888, 0
        %v1890 = vsel %vm1889, %v1888, 0
        %v1891 = vshrl.u32 %v1890, 5
        %v1892 = vand.u32 %v1890, 31
        %v1893 = vsub.s32 32, %v1892
        %v1894 = vshrl.u32 683565275, %v1893
        %v1895 = vshll.u32 683565275, %v1892
        %v1896 = vshrl.u32 2475754826, %v1893
        %v1897 = vor.u32 %v1895, %v1896
        %v1898 = vshll.u32 2475754826, %v1892
        %v1899 = vshrl.u32 2131351028, %v1893
        %v1900 = vor.u32 %v1898, %v1899
        %v1901 = vshll.u32 2131351028, %v1892
        %v1902 = vshrl.u32 2102212464, %v1893
        %v1903 = vor.u32 %v1901, %v1902
        %v1904 = vshll.u32 2102212464, %v1892
        %v1905 = vshrl.u32 920167782, %v1893
        %v1906 = vor.u32 %v1904, %v1905
        %v1907 = vshll.u32 920167782, %v1892
        %v1908 = vshrl.u32 1326507024, %v1893
        %v1909 = vor.u32 %v1907, %v1908
        %vm1910 = vcmp.lt.s32.totalorder %v1891, 1
        %vm1911 = vcmp.lt.s32.totalorder %v1891, 2
        %vm1912 = vcmp.lt.s32.totalorder %v1891, 3
        %vm1913 = vcmp.lt.s32.totalorder %v1891, 4
        %v1914 = vsel %vm1910, %v1894, %v1897
        %v1915 = vsel %vm1913, %v1903, 2102212464
        %v1916 = vsel %vm1912, %v1900, %v1915
        %v1917 = vsel %vm1911, %v1914, %v1916
        %v1918 = vsel %vm1910, %v1897, %v1900
        %v1919 = vsel %vm1913, %v1906, 920167782
        %v1920 = vsel %vm1912, %v1903, %v1919
        %v1921 = vsel %vm1911, %v1918, %v1920
        %v1922 = vsel %vm1910, %v1900, %v1903
        %v1923 = vsel %vm1913, %v1909, 1326507024
        %v1924 = vsel %vm1912, %v1906, %v1923
        %v1925 = vsel %vm1911, %v1922, %v1924
        %v1926 = vshll.u32 %v1886, 8
        %v1927 = vmul.u32.u64.compose %v1926, %v1925
        %v1928 = vextract.low.u32 %v1927
        %v1929 = vextract.high.u32 %v1927
        %v1930 = vmul.u32.u64.compose %v1926, %v1921
        %v1931 = vextract.low.u32 %v1930
        %v1932 = vextract.high.u32 %v1930
        %v1933 = vmul.u32 %v1926, %v1917
        %v1934 = vadd.s32 %v1929, %v1931
        %vm1935 = vc.u32 %v1929, %v1931
        %v1936 = vadd.s32 %v1932, 1
        %v1937 = vsel %vm1935, %v1936, %v1932
        %v1938 = vadd.s32 %v1933, %v1937
        %v1939 = vadd.s32 %v1938, 536870912
        %v1940 = vshrl.u32 %v1939, 30
        %v1941 = vshll.u32 %v1940, 30
        %v1942 = vsub.s32 %v1938, %v1941
        %vm1943 = vcmp.lt.s32.totalorder %v1942, 0
        %v1944 = vsub.s32 0, %v1942
        %v1945 = vsel %vm1943, %v1944, %v1942
        %v1946 = vclz %v1945
        %v1947 = vsub.s32 %v1946, 2
        %vm1948 = vcmp.gt.s32.totalorder 0, %v1947
        %v1949 = vsel %vm1948, 0, %v1947
        %v1950 = vsub.s32 32, %v1949
        %v1951 = vshll.u32 %v1942, %v1949
        %v1952 = vshrl.u32 %v1934, %v1950
        %v1953 = vor.u32 %v1951, %v1952
        %v1954 = vsub.s32 4294967266, %v1949
        %v1955 = vadd.s32 %v1954, 127
        %v1956 = vshll.u32 %v1955, 23
        %v1957 = vor.u32 4788187, %v1956
        %v1958 = vand.u32 2147483647, %v1957
        %v1960 = vcvt.s32.f32 %v1953
        %v1961 = vmul.f32 %v1960, %v1958
        %v1962 = vxor.u32 %v1961, 2147483648
        %v1963 = vsel %vm1880, %v1962, %v1961
        %v1964 = vsub.s32 4, %v1940
        %v1965 = vsel %vm1880, %v1964, %v1940
        %v1966 = vsel %vm1879, %v622, %v1963
        %v1967 = vsel %vm1879, 0, %v1965
        %v1968 = vcosq.f32.pop %v1966
        %v1969 = vsinq.f32.pop %v1966
        %vm1970 = vweird.f32 %v622
        %v1971 = vand.u32 %v1967, 3
        %vm1972 = vcmp.lt.s32.totalorder %v1971, 2
        %vm1973 = vcmp.eq.s32.totalorder %v1971, 0
        %v1974 = vxor.u32 %v1969, 2147483648
        %v1975 = vsel %vm1973, %v1968, %v1974
        %vm1976 = vcmp.eq.s32.totalorder %v1971, 2
        %v1977 = vxor.u32 %v1968, 2147483648
        %v1978 = vsel %vm1976, %v1977, %v1969
        %v1979 = vsel %vm1972, %v1975, %v1978
        %v1980 = vsel %vm1970, nan, %v1979
        %v1981 = vand.u32 2147483647, %v623
        %vm1982 = vcmp.le.f32.partialorder %v1981, 0.7853982
        %vm1983 = vcmp.lt.s32.totalorder %v623, 0
        %v1984 = vand.u32 %v623, 2139095040
        %v1985 = vshrl.u32 %v1984, 23
        %v1986 = vsub.s32 %v1985, 127
        %v1987 = vand.u32 2147483647, %v623
        %v1988 = vand.u32 %v1987, 8388607
        %v1989 = vor.u32 %v1988, 8388608
        %v1990 = vsub.s32 0, %v1989
        %v1991 = vadd.s32 %v1986, 1
        %vm1992 = vcmp.gt.s32.totalorder %v1991, 0
        %v1993 = vsel %vm1992, %v1991, 0
        %v1994 = vshrl.u32 %v1993, 5
        %v1995 = vand.u32 %v1993, 31
        %v1996 = vsub.s32 32, %v1995
        %v1997 = vshrl.u32 683565275, %v1996
        %v1998 = vshll.u32 683565275, %v1995
        %v1999 = vshrl.u32 2475754826, %v1996
        %v2000 = vor.u32 %v1998, %v1999
        %v2001 = vshll.u32 2475754826, %v1995
        %v2002 = vshrl.u32 2131351028, %v1996
        %v2003 = vor.u32 %v2001, %v2002
        %v2004 = vshll.u32 2131351028, %v1995
        %v2005 = vshrl.u32 2102212464, %v1996
        %v2006 = vor.u32 %v2004, %v2005
        %v2007 = vshll.u32 2102212464, %v1995
        %v2008 = vshrl.u32 920167782, %v1996
        %v2009 = vor.u32 %v2007, %v2008
        %v2010 = vshll.u32 920167782, %v1995
        %v2011 = vshrl.u32 1326507024, %v1996
        %v2012 = vor.u32 %v2010, %v2011
        %vm2013 = vcmp.lt.s32.totalorder %v1994, 1
        %vm2014 = vcmp.lt.s32.totalorder %v1994, 2
        %vm2015 = vcmp.lt.s32.totalorder %v1994, 3
        %vm2016 = vcmp.lt.s32.totalorder %v1994, 4
        %v2017 = vsel %vm2013, %v1997, %v2000
        %v2018 = vsel %vm2016, %v2006, 2102212464
        %v2019 = vsel %vm2015, %v2003, %v2018
        %v2020 = vsel %vm2014, %v2017, %v2019
        %v2021 = vsel %vm2013, %v2000, %v2003
        %v2022 = vsel %vm2016, %v2009, 920167782
        %v2023 = vsel %vm2015, %v2006, %v2022
        %v2024 = vsel %vm2014, %v2021, %v2023
        %v2025 = vsel %vm2013, %v2003, %v2006
        %v2026 = vsel %vm2016, %v2012, 1326507024
        %v2027 = vsel %vm2015, %v2009, %v2026
        %v2028 = vsel %vm2014, %v2025, %v2027
        %v2029 = vshll.u32 %v1989, 8
        %v2030 = vmul.u32.u64.compose %v2029, %v2028
        %v2031 = vextract.low.u32 %v2030
        %v2032 = vextract.high.u32 %v2030
        %v2033 = vmul.u32.u64.compose %v2029, %v2024
        %v2034 = vextract.low.u32 %v2033
        %v2035 = vextract.high.u32 %v2033
        %v2036 = vmul.u32 %v2029, %v2020
        %v2037 = vadd.s32 %v2032, %v2034
        %vm2038 = vc.u32 %v2032, %v2034
        %v2039 = vadd.s32 %v2035, 1
        %v2040 = vsel %vm2038, %v2039, %v2035
        %v2041 = vadd.s32 %v2036, %v2040
        %v2042 = vadd.s32 %v2041, 536870912
        %v2043 = vshrl.u32 %v2042, 30
        %v2044 = vshll.u32 %v2043, 30
        %v2045 = vsub.s32 %v2041, %v2044
        %vm2046 = vcmp.lt.s32.totalorder %v2045, 0
        %v2047 = vsub.s32 0, %v2045
        %v2048 = vsel %vm2046, %v2047, %v2045
        %v2049 = vclz %v2048
        %v2050 = vsub.s32 %v2049, 2
        %vm2051 = vcmp.gt.s32.totalorder 0, %v2050
        %v2052 = vsel %vm2051, 0, %v2050
        %v2053 = vsub.s32 32, %v2052
        %v2054 = vshll.u32 %v2045, %v2052
        %v2055 = vshrl.u32 %v2037, %v2053
        %v2056 = vor.u32 %v2054, %v2055
        %v2057 = vsub.s32 4294967266, %v2052
        %v2058 = vadd.s32 %v2057, 127
        %v2059 = vshll.u32 %v2058, 23
        %v2060 = vor.u32 4788187, %v2059
        %v2061 = vand.u32 2147483647, %v2060
        %v2063 = vcvt.s32.f32 %v2056
        %v2064 = vmul.f32 %v2063, %v2061
        %v2065 = vxor.u32 %v2064, 2147483648
        %v2066 = vsel %vm1983, %v2065, %v2064
        %v2067 = vsub.s32 4, %v2043
        %v2068 = vsel %vm1983, %v2067, %v2043
        %v2069 = vsel %vm1982, %v623, %v2066
        %v2070 = vsel %vm1982, 0, %v2068
        %v2071 = vcosq.f32.pop %v2069
        %v2072 = vsinq.f32.pop %v2069
        %vm2073 = vweird.f32 %v623
        %v2074 = vand.u32 %v2070, 3
        %vm2075 = vcmp.lt.s32.totalorder %v2074, 2
        %vm2076 = vcmp.eq.s32.totalorder %v2074, 0
        %v2077 = vxor.u32 %v2072, 2147483648
        %v2078 = vsel %vm2076, %v2071, %v2077
        %vm2079 = vcmp.eq.s32.totalorder %v2074, 2
        %v2080 = vxor.u32 %v2071, 2147483648
        %v2081 = vsel %vm2079, %v2080, %v2072
        %v2082 = vsel %vm2075, %v2078, %v2081
        %v2083 = vsel %vm2073, nan, %v2082
        %v2084 = vand.u32 2147483647, %v624
        %vm2085 = vcmp.le.f32.partialorder %v2084, 0.7853982
        %vm2086 = vcmp.lt.s32.totalorder %v624, 0
        %v2087 = vand.u32 %v624, 2139095040
        %v2088 = vshrl.u32 %v2087, 23
        %v2089 = vsub.s32 %v2088, 127
        %v2090 = vand.u32 2147483647, %v624
        %v2091 = vand.u32 %v2090, 8388607
        %v2092 = vor.u32 %v2091, 8388608
        %v2093 = vsub.s32 0, %v2092
        %v2094 = vadd.s32 %v2089, 1
        %vm2095 = vcmp.gt.s32.totalorder %v2094, 0
        %v2096 = vsel %vm2095, %v2094, 0
        %v2097 = vshrl.u32 %v2096, 5
        %v2098 = vand.u32 %v2096, 31
        %v2099 = vsub.s32 32, %v2098
        %v2100 = vshrl.u32 683565275, %v2099
        %v2101 = vshll.u32 683565275, %v2098
        %v2102 = vshrl.u32 2475754826, %v2099
        %v2103 = vor.u32 %v2101, %v2102
        %v2104 = vshll.u32 2475754826, %v2098
        %v2105 = vshrl.u32 2131351028, %v2099
        %v2106 = vor.u32 %v2104, %v2105
        %v2107 = vshll.u32 2131351028, %v2098
        %v2108 = vshrl.u32 2102212464, %v2099
        %v2109 = vor.u32 %v2107, %v2108
        %v2110 = vshll.u32 2102212464, %v2098
        %v2111 = vshrl.u32 920167782, %v2099
        %v2112 = vor.u32 %v2110, %v2111
        %v2113 = vshll.u32 920167782, %v2098
        %v2114 = vshrl.u32 1326507024, %v2099
        %v2115 = vor.u32 %v2113, %v2114
        %vm2116 = vcmp.lt.s32.totalorder %v2097, 1
        %vm2117 = vcmp.lt.s32.totalorder %v2097, 2
        %vm2118 = vcmp.lt.s32.totalorder %v2097, 3
        %vm2119 = vcmp.lt.s32.totalorder %v2097, 4
        %v2120 = vsel %vm2116, %v2100, %v2103
        %v2121 = vsel %vm2119, %v2109, 2102212464
        %v2122 = vsel %vm2118, %v2106, %v2121
        %v2123 = vsel %vm2117, %v2120, %v2122
        %v2124 = vsel %vm2116, %v2103, %v2106
        %v2125 = vsel %vm2119, %v2112, 920167782
        %v2126 = vsel %vm2118, %v2109, %v2125
        %v2127 = vsel %vm2117, %v2124, %v2126
        %v2128 = vsel %vm2116, %v2106, %v2109
        %v2129 = vsel %vm2119, %v2115, 1326507024
        %v2130 = vsel %vm2118, %v2112, %v2129
        %v2131 = vsel %vm2117, %v2128, %v2130
        %v2132 = vshll.u32 %v2092, 8
        %v2133 = vmul.u32.u64.compose %v2132, %v2131
        %v2134 = vextract.low.u32 %v2133
        %v2135 = vextract.high.u32 %v2133
        %v2136 = vmul.u32.u64.compose %v2132, %v2127
        %v2137 = vextract.low.u32 %v2136
        %v2138 = vextract.high.u32 %v2136
        %v2139 = vmul.u32 %v2132, %v2123
        %v2140 = vadd.s32 %v2135, %v2137
        %vm2141 = vc.u32 %v2135, %v2137
        %v2142 = vadd.s32 %v2138, 1
        %v2143 = vsel %vm2141, %v2142, %v2138
        %v2144 = vadd.s32 %v2139, %v2143
        %v2145 = vadd.s32 %v2144, 536870912
        %v2146 = vshrl.u32 %v2145, 30
        %v2147 = vshll.u32 %v2146, 30
        %v2148 = vsub.s32 %v2144, %v2147
        %vm2149 = vcmp.lt.s32.totalorder %v2148, 0
        %v2150 = vsub.s32 0, %v2148
        %v2151 = vsel %vm2149, %v2150, %v2148
        %v2152 = vclz %v2151
        %v2153 = vsub.s32 %v2152, 2
        %vm2154 = vcmp.gt.s32.totalorder 0, %v2153
        %v2155 = vsel %vm2154, 0, %v2153
        %v2156 = vsub.s32 32, %v2155
        %v2157 = vshll.u32 %v2148, %v2155
        %v2158 = vshrl.u32 %v2140, %v2156
        %v2159 = vor.u32 %v2157, %v2158
        %v2160 = vsub.s32 4294967266, %v2155
        %v2161 = vadd.s32 %v2160, 127
        %v2162 = vshll.u32 %v2161, 23
        %v2163 = vor.u32 4788187, %v2162
        %v2164 = vand.u32 2147483647, %v2163
        %v2166 = vcvt.s32.f32 %v2159
        %v2167 = vmul.f32 %v2166, %v2164
        %v2168 = vxor.u32 %v2167, 2147483648
        %v2169 = vsel %vm2086, %v2168, %v2167
        %v2170 = vsub.s32 4, %v2146
        %v2171 = vsel %vm2086, %v2170, %v2146
        %v2172 = vsel %vm2085, %v624, %v2169
        %v2173 = vsel %vm2085, 0, %v2171
        %v2174 = vcosq.f32.pop %v2172
        %v2175 = vsinq.f32.pop %v2172
        %vm2176 = vweird.f32 %v624
        %v2177 = vand.u32 %v2173, 3
        %vm2178 = vcmp.lt.s32.totalorder %v2177, 2
        %vm2179 = vcmp.eq.s32.totalorder %v2177, 0
        %v2180 = vxor.u32 %v2175, 2147483648
        %v2181 = vsel %vm2179, %v2174, %v2180
        %vm2182 = vcmp.eq.s32.totalorder %v2177, 2
        %v2183 = vxor.u32 %v2174, 2147483648
        %v2184 = vsel %vm2182, %v2183, %v2175
        %v2185 = vsel %vm2178, %v2181, %v2184
        %v2186 = vsel %vm2176, nan, %v2185
        %v2187 = vand.u32 2147483647, %v625
        %vm2188 = vcmp.le.f32.partialorder %v2187, 0.7853982
        %vm2189 = vcmp.lt.s32.totalorder %v625, 0
        %v2190 = vand.u32 %v625, 2139095040
        %v2191 = vshrl.u32 %v2190, 23
        %v2192 = vsub.s32 %v2191, 127
        %v2193 = vand.u32 2147483647, %v625
        %v2194 = vand.u32 %v2193, 8388607
        %v2195 = vor.u32 %v2194, 8388608
        %v2196 = vsub.s32 0, %v2195
        %v2197 = vadd.s32 %v2192, 1
        %vm2198 = vcmp.gt.s32.totalorder %v2197, 0
        %v2199 = vsel %vm2198, %v2197, 0
        %v2200 = vshrl.u32 %v2199, 5
        %v2201 = vand.u32 %v2199, 31
        %v2202 = vsub.s32 32, %v2201
        %v2203 = vshrl.u32 683565275, %v2202
        %v2204 = vshll.u32 683565275, %v2201
        %v2205 = vshrl.u32 2475754826, %v2202
        %v2206 = vor.u32 %v2204, %v2205
        %v2207 = vshll.u32 2475754826, %v2201
        %v2208 = vshrl.u32 2131351028, %v2202
        %v2209 = vor.u32 %v2207, %v2208
        %v2210 = vshll.u32 2131351028, %v2201
        %v2211 = vshrl.u32 2102212464, %v2202
        %v2212 = vor.u32 %v2210, %v2211
        %v2213 = vshll.u32 2102212464, %v2201
        %v2214 = vshrl.u32 920167782, %v2202
        %v2215 = vor.u32 %v2213, %v2214
        %v2216 = vshll.u32 920167782, %v2201
        %v2217 = vshrl.u32 1326507024, %v2202
        %v2218 = vor.u32 %v2216, %v2217
        %vm2219 = vcmp.lt.s32.totalorder %v2200, 1
        %vm2220 = vcmp.lt.s32.totalorder %v2200, 2
        %vm2221 = vcmp.lt.s32.totalorder %v2200, 3
        %vm2222 = vcmp.lt.s32.totalorder %v2200, 4
        %v2223 = vsel %vm2219, %v2203, %v2206
        %v2224 = vsel %vm2222, %v2212, 2102212464
        %v2225 = vsel %vm2221, %v2209, %v2224
        %v2226 = vsel %vm2220, %v2223, %v2225
        %v2227 = vsel %vm2219, %v2206, %v2209
        %v2228 = vsel %vm2222, %v2215, 920167782
        %v2229 = vsel %vm2221, %v2212, %v2228
        %v2230 = vsel %vm2220, %v2227, %v2229
        %v2231 = vsel %vm2219, %v2209, %v2212
        %v2232 = vsel %vm2222, %v2218, 1326507024
        %v2233 = vsel %vm2221, %v2215, %v2232
        %v2234 = vsel %vm2220, %v2231, %v2233
        %v2235 = vshll.u32 %v2195, 8
        %v2236 = vmul.u32.u64.compose %v2235, %v2234
        %v2237 = vextract.low.u32 %v2236
        %v2238 = vextract.high.u32 %v2236
        %v2239 = vmul.u32.u64.compose %v2235, %v2230
        %v2240 = vextract.low.u32 %v2239
        %v2241 = vextract.high.u32 %v2239
        %v2242 = vmul.u32 %v2235, %v2226
        %v2243 = vadd.s32 %v2238, %v2240
        %vm2244 = vc.u32 %v2238, %v2240
        %v2245 = vadd.s32 %v2241, 1
        %v2246 = vsel %vm2244, %v2245, %v2241
        %v2247 = vadd.s32 %v2242, %v2246
        %v2248 = vadd.s32 %v2247, 536870912
        %v2249 = vshrl.u32 %v2248, 30
        %v2250 = vshll.u32 %v2249, 30
        %v2251 = vsub.s32 %v2247, %v2250
        %vm2252 = vcmp.lt.s32.totalorder %v2251, 0
        %v2253 = vsub.s32 0, %v2251
        %v2254 = vsel %vm2252, %v2253, %v2251
        %v2255 = vclz %v2254
        %v2256 = vsub.s32 %v2255, 2
        %vm2257 = vcmp.gt.s32.totalorder 0, %v2256
        %v2258 = vsel %vm2257, 0, %v2256
        %v2259 = vsub.s32 32, %v2258
        %v2260 = vshll.u32 %v2251, %v2258
        %v2261 = vshrl.u32 %v2243, %v2259
        %v2262 = vor.u32 %v2260, %v2261
        %v2263 = vsub.s32 4294967266, %v2258
        %v2264 = vadd.s32 %v2263, 127
        %v2265 = vshll.u32 %v2264, 23
        %v2266 = vor.u32 4788187, %v2265
        %v2267 = vand.u32 2147483647, %v2266
        %v2269 = vcvt.s32.f32 %v2262
        %v2270 = vmul.f32 %v2269, %v2267
        %v2271 = vxor.u32 %v2270, 2147483648
        %v2272 = vsel %vm2189, %v2271, %v2270
        %v2273 = vsub.s32 4, %v2249
        %v2274 = vsel %vm2189, %v2273, %v2249
        %v2275 = vsel %vm2188, %v625, %v2272
        %v2276 = vsel %vm2188, 0, %v2274
        %v2277 = vcosq.f32.pop %v2275
        %v2278 = vsinq.f32.pop %v2275
        %vm2279 = vweird.f32 %v625
        %v2280 = vand.u32 %v2276, 3
        %vm2281 = vcmp.lt.s32.totalorder %v2280, 2
        %vm2282 = vcmp.eq.s32.totalorder %v2280, 0
        %v2283 = vxor.u32 %v2278, 2147483648
        %v2284 = vsel %vm2282, %v2277, %v2283
        %vm2285 = vcmp.eq.s32.totalorder %v2280, 2
        %v2286 = vxor.u32 %v2277, 2147483648
        %v2287 = vsel %vm2285, %v2286, %v2278
        %v2288 = vsel %vm2281, %v2284, %v2287
        %v2289 = vsel %vm2279, nan, %v2288
        %v2290 = vand.u32 2147483647, %v626
        %vm2291 = vcmp.le.f32.partialorder %v2290, 0.7853982
        %vm2292 = vcmp.lt.s32.totalorder %v626, 0
        %v2293 = vand.u32 %v626, 2139095040
        %v2294 = vshrl.u32 %v2293, 23
        %v2295 = vsub.s32 %v2294, 127
        %v2296 = vand.u32 2147483647, %v626
        %v2297 = vand.u32 %v2296, 8388607
        %v2298 = vor.u32 %v2297, 8388608
        %v2299 = vsub.s32 0, %v2298
        %v2300 = vadd.s32 %v2295, 1
        %vm2301 = vcmp.gt.s32.totalorder %v2300, 0
        %v2302 = vsel %vm2301, %v2300, 0
        %v2303 = vshrl.u32 %v2302, 5
        %v2304 = vand.u32 %v2302, 31
        %v2305 = vsub.s32 32, %v2304
        %v2306 = vshrl.u32 683565275, %v2305
        %v2307 = vshll.u32 683565275, %v2304
        %v2308 = vshrl.u32 2475754826, %v2305
        %v2309 = vor.u32 %v2307, %v2308
        %v2310 = vshll.u32 2475754826, %v2304
        %v2311 = vshrl.u32 2131351028, %v2305
        %v2312 = vor.u32 %v2310, %v2311
        %v2313 = vshll.u32 2131351028, %v2304
        %v2314 = vshrl.u32 2102212464, %v2305
        %v2315 = vor.u32 %v2313, %v2314
        %v2316 = vshll.u32 2102212464, %v2304
        %v2317 = vshrl.u32 920167782, %v2305
        %v2318 = vor.u32 %v2316, %v2317
        %v2319 = vshll.u32 920167782, %v2304
        %v2320 = vshrl.u32 1326507024, %v2305
        %v2321 = vor.u32 %v2319, %v2320
        %vm2322 = vcmp.lt.s32.totalorder %v2303, 1
        %vm2323 = vcmp.lt.s32.totalorder %v2303, 2
        %vm2324 = vcmp.lt.s32.totalorder %v2303, 3
        %vm2325 = vcmp.lt.s32.totalorder %v2303, 4
        %v2326 = vsel %vm2322, %v2306, %v2309
        %v2327 = vsel %vm2325, %v2315, 2102212464
        %v2328 = vsel %vm2324, %v2312, %v2327
        %v2329 = vsel %vm2323, %v2326, %v2328
        %v2330 = vsel %vm2322, %v2309, %v2312
        %v2331 = vsel %vm2325, %v2318, 920167782
        %v2332 = vsel %vm2324, %v2315, %v2331
        %v2333 = vsel %vm2323, %v2330, %v2332
        %v2334 = vsel %vm2322, %v2312, %v2315
        %v2335 = vsel %vm2325, %v2321, 1326507024
        %v2336 = vsel %vm2324, %v2318, %v2335
        %v2337 = vsel %vm2323, %v2334, %v2336
        %v2338 = vshll.u32 %v2298, 8
        %v2339 = vmul.u32.u64.compose %v2338, %v2337
        %v2340 = vextract.low.u32 %v2339
        %v2341 = vextract.high.u32 %v2339
        %v2342 = vmul.u32.u64.compose %v2338, %v2333
        %v2343 = vextract.low.u32 %v2342
        %v2344 = vextract.high.u32 %v2342
        %v2345 = vmul.u32 %v2338, %v2329
        %v2346 = vadd.s32 %v2341, %v2343
        %vm2347 = vc.u32 %v2341, %v2343
        %v2348 = vadd.s32 %v2344, 1
        %v2349 = vsel %vm2347, %v2348, %v2344
        %v2350 = vadd.s32 %v2345, %v2349
        %v2351 = vadd.s32 %v2350, 536870912
        %v2352 = vshrl.u32 %v2351, 30
        %v2353 = vshll.u32 %v2352, 30
        %v2354 = vsub.s32 %v2350, %v2353
        %vm2355 = vcmp.lt.s32.totalorder %v2354, 0
        %v2356 = vsub.s32 0, %v2354
        %v2357 = vsel %vm2355, %v2356, %v2354
        %v2358 = vclz %v2357
        %v2359 = vsub.s32 %v2358, 2
        %vm2360 = vcmp.gt.s32.totalorder 0, %v2359
        %v2361 = vsel %vm2360, 0, %v2359
        %v2362 = vsub.s32 32, %v2361
        %v2363 = vshll.u32 %v2354, %v2361
        %v2364 = vshrl.u32 %v2346, %v2362
        %v2365 = vor.u32 %v2363, %v2364
        %v2366 = vsub.s32 4294967266, %v2361
        %v2367 = vadd.s32 %v2366, 127
        %v2368 = vshll.u32 %v2367, 23
        %v2369 = vor.u32 4788187, %v2368
        %v2370 = vand.u32 2147483647, %v2369
        %v2372 = vcvt.s32.f32 %v2365
        %v2373 = vmul.f32 %v2372, %v2370
        %v2374 = vxor.u32 %v2373, 2147483648
        %v2375 = vsel %vm2292, %v2374, %v2373
        %v2376 = vsub.s32 4, %v2352
        %v2377 = vsel %vm2292, %v2376, %v2352
        %v2378 = vsel %vm2291, %v626, %v2375
        %v2379 = vsel %vm2291, 0, %v2377
        %v2380 = vcosq.f32.pop %v2378
        %v2381 = vsinq.f32.pop %v2378
        %vm2382 = vweird.f32 %v626
        %v2383 = vand.u32 %v2379, 3
        %vm2384 = vcmp.lt.s32.totalorder %v2383, 2
        %vm2385 = vcmp.eq.s32.totalorder %v2383, 0
        %v2386 = vxor.u32 %v2381, 2147483648
        %v2387 = vsel %vm2385, %v2380, %v2386
        %vm2388 = vcmp.eq.s32.totalorder %v2383, 2
        %v2389 = vxor.u32 %v2380, 2147483648
        %v2390 = vsel %vm2388, %v2389, %v2381
        %v2391 = vsel %vm2384, %v2387, %v2390
        %v2392 = vsel %vm2382, nan, %v2391
        %v2393 = vand.u32 2147483647, %v627
        %vm2394 = vcmp.le.f32.partialorder %v2393, 0.7853982
        %vm2395 = vcmp.lt.s32.totalorder %v627, 0
        %v2396 = vand.u32 %v627, 2139095040
        %v2397 = vshrl.u32 %v2396, 23
        %v2398 = vsub.s32 %v2397, 127
        %v2399 = vand.u32 2147483647, %v627
        %v2400 = vand.u32 %v2399, 8388607
        %v2401 = vor.u32 %v2400, 8388608
        %v2402 = vsub.s32 0, %v2401
        %v2403 = vadd.s32 %v2398, 1
        %vm2404 = vcmp.gt.s32.totalorder %v2403, 0
        %v2405 = vsel %vm2404, %v2403, 0
        %v2406 = vshrl.u32 %v2405, 5
        %v2407 = vand.u32 %v2405, 31
        %v2408 = vsub.s32 32, %v2407
        %v2409 = vshrl.u32 683565275, %v2408
        %v2410 = vshll.u32 683565275, %v2407
        %v2411 = vshrl.u32 2475754826, %v2408
        %v2412 = vor.u32 %v2410, %v2411
        %v2413 = vshll.u32 2475754826, %v2407
        %v2414 = vshrl.u32 2131351028, %v2408
        %v2415 = vor.u32 %v2413, %v2414
        %v2416 = vshll.u32 2131351028, %v2407
        %v2417 = vshrl.u32 2102212464, %v2408
        %v2418 = vor.u32 %v2416, %v2417
        %v2419 = vshll.u32 2102212464, %v2407
        %v2420 = vshrl.u32 920167782, %v2408
        %v2421 = vor.u32 %v2419, %v2420
        %v2422 = vshll.u32 920167782, %v2407
        %v2423 = vshrl.u32 1326507024, %v2408
        %v2424 = vor.u32 %v2422, %v2423
        %vm2425 = vcmp.lt.s32.totalorder %v2406, 1
        %vm2426 = vcmp.lt.s32.totalorder %v2406, 2
        %vm2427 = vcmp.lt.s32.totalorder %v2406, 3
        %vm2428 = vcmp.lt.s32.totalorder %v2406, 4
        %v2429 = vsel %vm2425, %v2409, %v2412
        %v2430 = vsel %vm2428, %v2418, 2102212464
        %v2431 = vsel %vm2427, %v2415, %v2430
        %v2432 = vsel %vm2426, %v2429, %v2431
        %v2433 = vsel %vm2425, %v2412, %v2415
        %v2434 = vsel %vm2428, %v2421, 920167782
        %v2435 = vsel %vm2427, %v2418, %v2434
        %v2436 = vsel %vm2426, %v2433, %v2435
        %v2437 = vsel %vm2425, %v2415, %v2418
        %v2438 = vsel %vm2428, %v2424, 1326507024
        %v2439 = vsel %vm2427, %v2421, %v2438
        %v2440 = vsel %vm2426, %v2437, %v2439
        %v2441 = vshll.u32 %v2401, 8
        %v2442 = vmul.u32.u64.compose %v2441, %v2440
        %v2443 = vextract.low.u32 %v2442
        %v2444 = vextract.high.u32 %v2442
        %v2445 = vmul.u32.u64.compose %v2441, %v2436
        %v2446 = vextract.low.u32 %v2445
        %v2447 = vextract.high.u32 %v2445
        %v2448 = vmul.u32 %v2441, %v2432
        %v2449 = vadd.s32 %v2444, %v2446
        %vm2450 = vc.u32 %v2444, %v2446
        %v2451 = vadd.s32 %v2447, 1
        %v2452 = vsel %vm2450, %v2451, %v2447
        %v2453 = vadd.s32 %v2448, %v2452
        %v2454 = vadd.s32 %v2453, 536870912
        %v2455 = vshrl.u32 %v2454, 30
        %v2456 = vshll.u32 %v2455, 30
        %v2457 = vsub.s32 %v2453, %v2456
        %vm2458 = vcmp.lt.s32.totalorder %v2457, 0
        %v2459 = vsub.s32 0, %v2457
        %v2460 = vsel %vm2458, %v2459, %v2457
        %v2461 = vclz %v2460
        %v2462 = vsub.s32 %v2461, 2
        %vm2463 = vcmp.gt.s32.totalorder 0, %v2462
        %v2464 = vsel %vm2463, 0, %v2462
        %v2465 = vsub.s32 32, %v2464
        %v2466 = vshll.u32 %v2457, %v2464
        %v2467 = vshrl.u32 %v2449, %v2465
        %v2468 = vor.u32 %v2466, %v2467
        %v2469 = vsub.s32 4294967266, %v2464
        %v2470 = vadd.s32 %v2469, 127
        %v2471 = vshll.u32 %v2470, 23
        %v2472 = vor.u32 4788187, %v2471
        %v2473 = vand.u32 2147483647, %v2472
        %v2475 = vcvt.s32.f32 %v2468
        %v2476 = vmul.f32 %v2475, %v2473
        %v2477 = vxor.u32 %v2476, 2147483648
        %v2478 = vsel %vm2395, %v2477, %v2476
        %v2479 = vsub.s32 4, %v2455
        %v2480 = vsel %vm2395, %v2479, %v2455
        %v2481 = vsel %vm2394, %v627, %v2478
        %v2482 = vsel %vm2394, 0, %v2480
        %v2483 = vcosq.f32.pop %v2481
        %v2484 = vsinq.f32.pop %v2481
        %vm2485 = vweird.f32 %v627
        %v2486 = vand.u32 %v2482, 3
        %vm2487 = vcmp.lt.s32.totalorder %v2486, 2
        %vm2488 = vcmp.eq.s32.totalorder %v2486, 0
        %v2489 = vxor.u32 %v2484, 2147483648
        %v2490 = vsel %vm2488, %v2483, %v2489
        %vm2491 = vcmp.eq.s32.totalorder %v2486, 2
        %v2492 = vxor.u32 %v2483, 2147483648
        %v2493 = vsel %vm2491, %v2492, %v2484
        %v2494 = vsel %vm2487, %v2490, %v2493
        %v2495 = vsel %vm2485, nan, %v2494
        %v2496 = vand.u32 2147483647, %v628
        %vm2497 = vcmp.le.f32.partialorder %v2496, 0.7853982
        %vm2498 = vcmp.lt.s32.totalorder %v628, 0
        %v2499 = vand.u32 %v628, 2139095040
        %v2500 = vshrl.u32 %v2499, 23
        %v2501 = vsub.s32 %v2500, 127
        %v2502 = vand.u32 2147483647, %v628
        %v2503 = vand.u32 %v2502, 8388607
        %v2504 = vor.u32 %v2503, 8388608
        %v2505 = vsub.s32 0, %v2504
        %v2506 = vadd.s32 %v2501, 1
        %vm2507 = vcmp.gt.s32.totalorder %v2506, 0
        %v2508 = vsel %vm2507, %v2506, 0
        %v2509 = vshrl.u32 %v2508, 5
        %v2510 = vand.u32 %v2508, 31
        %v2511 = vsub.s32 32, %v2510
        %v2512 = vshrl.u32 683565275, %v2511
        %v2513 = vshll.u32 683565275, %v2510
        %v2514 = vshrl.u32 2475754826, %v2511
        %v2515 = vor.u32 %v2513, %v2514
        %v2516 = vshll.u32 2475754826, %v2510
        %v2517 = vshrl.u32 2131351028, %v2511
        %v2518 = vor.u32 %v2516, %v2517
        %v2519 = vshll.u32 2131351028, %v2510
        %v2520 = vshrl.u32 2102212464, %v2511
        %v2521 = vor.u32 %v2519, %v2520
        %v2522 = vshll.u32 2102212464, %v2510
        %v2523 = vshrl.u32 920167782, %v2511
        %v2524 = vor.u32 %v2522, %v2523
        %v2525 = vshll.u32 920167782, %v2510
        %v2526 = vshrl.u32 1326507024, %v2511
        %v2527 = vor.u32 %v2525, %v2526
        %vm2528 = vcmp.lt.s32.totalorder %v2509, 1
        %vm2529 = vcmp.lt.s32.totalorder %v2509, 2
        %vm2530 = vcmp.lt.s32.totalorder %v2509, 3
        %vm2531 = vcmp.lt.s32.totalorder %v2509, 4
        %v2532 = vsel %vm2528, %v2512, %v2515
        %v2533 = vsel %vm2531, %v2521, 2102212464
        %v2534 = vsel %vm2530, %v2518, %v2533
        %v2535 = vsel %vm2529, %v2532, %v2534
        %v2536 = vsel %vm2528, %v2515, %v2518
        %v2537 = vsel %vm2531, %v2524, 920167782
        %v2538 = vsel %vm2530, %v2521, %v2537
        %v2539 = vsel %vm2529, %v2536, %v2538
        %v2540 = vsel %vm2528, %v2518, %v2521
        %v2541 = vsel %vm2531, %v2527, 1326507024
        %v2542 = vsel %vm2530, %v2524, %v2541
        %v2543 = vsel %vm2529, %v2540, %v2542
        %v2544 = vshll.u32 %v2504, 8
        %v2545 = vmul.u32.u64.compose %v2544, %v2543
        %v2546 = vextract.low.u32 %v2545
        %v2547 = vextract.high.u32 %v2545
        %v2548 = vmul.u32.u64.compose %v2544, %v2539
        %v2549 = vextract.low.u32 %v2548
        %v2550 = vextract.high.u32 %v2548
        %v2551 = vmul.u32 %v2544, %v2535
        %v2552 = vadd.s32 %v2547, %v2549
        %vm2553 = vc.u32 %v2547, %v2549
        %v2554 = vadd.s32 %v2550, 1
        %v2555 = vsel %vm2553, %v2554, %v2550
        %v2556 = vadd.s32 %v2551, %v2555
        %v2557 = vadd.s32 %v2556, 536870912
        %v2558 = vshrl.u32 %v2557, 30
        %v2559 = vshll.u32 %v2558, 30
        %v2560 = vsub.s32 %v2556, %v2559
        %vm2561 = vcmp.lt.s32.totalorder %v2560, 0
        %v2562 = vsub.s32 0, %v2560
        %v2563 = vsel %vm2561, %v2562, %v2560
        %v2564 = vclz %v2563
        %v2565 = vsub.s32 %v2564, 2
        %vm2566 = vcmp.gt.s32.totalorder 0, %v2565
        %v2567 = vsel %vm2566, 0, %v2565
        %v2568 = vsub.s32 32, %v2567
        %v2569 = vshll.u32 %v2560, %v2567
        %v2570 = vshrl.u32 %v2552, %v2568
        %v2571 = vor.u32 %v2569, %v2570
        %v2572 = vsub.s32 4294967266, %v2567
        %v2573 = vadd.s32 %v2572, 127
        %v2574 = vshll.u32 %v2573, 23
        %v2575 = vor.u32 4788187, %v2574
        %v2576 = vand.u32 2147483647, %v2575
        %v2578 = vcvt.s32.f32 %v2571
        %v2579 = vmul.f32 %v2578, %v2576
        %v2580 = vxor.u32 %v2579, 2147483648
        %v2581 = vsel %vm2498, %v2580, %v2579
        %v2582 = vsub.s32 4, %v2558
        %v2583 = vsel %vm2498, %v2582, %v2558
        %v2584 = vsel %vm2497, %v628, %v2581
        %v2585 = vsel %vm2497, 0, %v2583
        %v2586 = vcosq.f32.pop %v2584
        %v2587 = vsinq.f32.pop %v2584
        %vm2588 = vweird.f32 %v628
        %v2589 = vand.u32 %v2585, 3
        %vm2590 = vcmp.lt.s32.totalorder %v2589, 2
        %vm2591 = vcmp.eq.s32.totalorder %v2589, 0
        %v2592 = vxor.u32 %v2587, 2147483648
        %v2593 = vsel %vm2591, %v2586, %v2592
        %vm2594 = vcmp.eq.s32.totalorder %v2589, 2
        %v2595 = vxor.u32 %v2586, 2147483648
        %v2596 = vsel %vm2594, %v2595, %v2587
        %v2597 = vsel %vm2590, %v2593, %v2596
        %v2598 = vsel %vm2588, nan, %v2597
        %v2599 = vand.u32 2147483647, %v629
        %vm2600 = vcmp.le.f32.partialorder %v2599, 0.7853982
        %vm2601 = vcmp.lt.s32.totalorder %v629, 0
        %v2602 = vand.u32 %v629, 2139095040
        %v2603 = vshrl.u32 %v2602, 23
        %v2604 = vsub.s32 %v2603, 127
        %v2605 = vand.u32 2147483647, %v629
        %v2606 = vand.u32 %v2605, 8388607
        %v2607 = vor.u32 %v2606, 8388608
        %v2608 = vsub.s32 0, %v2607
        %v2609 = vadd.s32 %v2604, 1
        %vm2610 = vcmp.gt.s32.totalorder %v2609, 0
        %v2611 = vsel %vm2610, %v2609, 0
        %v2612 = vshrl.u32 %v2611, 5
        %v2613 = vand.u32 %v2611, 31
        %v2614 = vsub.s32 32, %v2613
        %v2615 = vshrl.u32 683565275, %v2614
        %v2616 = vshll.u32 683565275, %v2613
        %v2617 = vshrl.u32 2475754826, %v2614
        %v2618 = vor.u32 %v2616, %v2617
        %v2619 = vshll.u32 2475754826, %v2613
        %v2620 = vshrl.u32 2131351028, %v2614
        %v2621 = vor.u32 %v2619, %v2620
        %v2622 = vshll.u32 2131351028, %v2613
        %v2623 = vshrl.u32 2102212464, %v2614
        %v2624 = vor.u32 %v2622, %v2623
        %v2625 = vshll.u32 2102212464, %v2613
        %v2626 = vshrl.u32 920167782, %v2614
        %v2627 = vor.u32 %v2625, %v2626
        %v2628 = vshll.u32 920167782, %v2613
        %v2629 = vshrl.u32 1326507024, %v2614
        %v2630 = vor.u32 %v2628, %v2629
        %vm2631 = vcmp.lt.s32.totalorder %v2612, 1
        %vm2632 = vcmp.lt.s32.totalorder %v2612, 2
        %vm2633 = vcmp.lt.s32.totalorder %v2612, 3
        %vm2634 = vcmp.lt.s32.totalorder %v2612, 4
        %v2635 = vsel %vm2631, %v2615, %v2618
        %v2636 = vsel %vm2634, %v2624, 2102212464
        %v2637 = vsel %vm2633, %v2621, %v2636
        %v2638 = vsel %vm2632, %v2635, %v2637
        %v2639 = vsel %vm2631, %v2618, %v2621
        %v2640 = vsel %vm2634, %v2627, 920167782
        %v2641 = vsel %vm2633, %v2624, %v2640
        %v2642 = vsel %vm2632, %v2639, %v2641
        %v2643 = vsel %vm2631, %v2621, %v2624
        %v2644 = vsel %vm2634, %v2630, 1326507024
        %v2645 = vsel %vm2633, %v2627, %v2644
        %v2646 = vsel %vm2632, %v2643, %v2645
        %v2647 = vshll.u32 %v2607, 8
        %v2648 = vmul.u32.u64.compose %v2647, %v2646
        %v2649 = vextract.low.u32 %v2648
        %v2650 = vextract.high.u32 %v2648
        %v2651 = vmul.u32.u64.compose %v2647, %v2642
        %v2652 = vextract.low.u32 %v2651
        %v2653 = vextract.high.u32 %v2651
        %v2654 = vmul.u32 %v2647, %v2638
        %v2655 = vadd.s32 %v2650, %v2652
        %vm2656 = vc.u32 %v2650, %v2652
        %v2657 = vadd.s32 %v2653, 1
        %v2658 = vsel %vm2656, %v2657, %v2653
        %v2659 = vadd.s32 %v2654, %v2658
        %v2660 = vadd.s32 %v2659, 536870912
        %v2661 = vshrl.u32 %v2660, 30
        %v2662 = vshll.u32 %v2661, 30
        %v2663 = vsub.s32 %v2659, %v2662
        %vm2664 = vcmp.lt.s32.totalorder %v2663, 0
        %v2665 = vsub.s32 0, %v2663
        %v2666 = vsel %vm2664, %v2665, %v2663
        %v2667 = vclz %v2666
        %v2668 = vsub.s32 %v2667, 2
        %vm2669 = vcmp.gt.s32.totalorder 0, %v2668
        %v2670 = vsel %vm2669, 0, %v2668
        %v2671 = vsub.s32 32, %v2670
        %v2672 = vshll.u32 %v2663, %v2670
        %v2673 = vshrl.u32 %v2655, %v2671
        %v2674 = vor.u32 %v2672, %v2673
        %v2675 = vsub.s32 4294967266, %v2670
        %v2676 = vadd.s32 %v2675, 127
        %v2677 = vshll.u32 %v2676, 23
        %v2678 = vor.u32 4788187, %v2677
        %v2679 = vand.u32 2147483647, %v2678
        %v2681 = vcvt.s32.f32 %v2674
        %v2682 = vmul.f32 %v2681, %v2679
        %v2683 = vxor.u32 %v2682, 2147483648
        %v2684 = vsel %vm2601, %v2683, %v2682
        %v2685 = vsub.s32 4, %v2661
        %v2686 = vsel %vm2601, %v2685, %v2661
        %v2687 = vsel %vm2600, %v629, %v2684
        %v2688 = vsel %vm2600, 0, %v2686
        %v2689 = vcosq.f32.pop %v2687
        %v2690 = vsinq.f32.pop %v2687
        %vm2691 = vweird.f32 %v629
        %v2692 = vand.u32 %v2688, 3
        %vm2693 = vcmp.lt.s32.totalorder %v2692, 2
        %vm2694 = vcmp.eq.s32.totalorder %v2692, 0
        %v2695 = vxor.u32 %v2690, 2147483648
        %v2696 = vsel %vm2694, %v2689, %v2695
        %vm2697 = vcmp.eq.s32.totalorder %v2692, 2
        %v2698 = vxor.u32 %v2689, 2147483648
        %v2699 = vsel %vm2697, %v2698, %v2690
        %v2700 = vsel %vm2693, %v2696, %v2699
        %v2701 = vsel %vm2691, nan, %v2700
        %v2702 = vand.u32 2147483647, %v630
        %vm2703 = vcmp.le.f32.partialorder %v2702, 0.7853982
        %vm2704 = vcmp.lt.s32.totalorder %v630, 0
        %v2705 = vand.u32 %v630, 2139095040
        %v2706 = vshrl.u32 %v2705, 23
        %v2707 = vsub.s32 %v2706, 127
        %v2708 = vand.u32 2147483647, %v630
        %v2709 = vand.u32 %v2708, 8388607
        %v2710 = vor.u32 %v2709, 8388608
        %v2711 = vsub.s32 0, %v2710
        %v2712 = vadd.s32 %v2707, 1
        %vm2713 = vcmp.gt.s32.totalorder %v2712, 0
        %v2714 = vsel %vm2713, %v2712, 0
        %v2715 = vshrl.u32 %v2714, 5
        %v2716 = vand.u32 %v2714, 31
        %v2717 = vsub.s32 32, %v2716
        %v2718 = vshrl.u32 683565275, %v2717
        %v2719 = vshll.u32 683565275, %v2716
        %v2720 = vshrl.u32 2475754826, %v2717
        %v2721 = vor.u32 %v2719, %v2720
        %v2722 = vshll.u32 2475754826, %v2716
        %v2723 = vshrl.u32 2131351028, %v2717
        %v2724 = vor.u32 %v2722, %v2723
        %v2725 = vshll.u32 2131351028, %v2716
        %v2726 = vshrl.u32 2102212464, %v2717
        %v2727 = vor.u32 %v2725, %v2726
        %v2728 = vshll.u32 2102212464, %v2716
        %v2729 = vshrl.u32 920167782, %v2717
        %v2730 = vor.u32 %v2728, %v2729
        %v2731 = vshll.u32 920167782, %v2716
        %v2732 = vshrl.u32 1326507024, %v2717
        %v2733 = vor.u32 %v2731, %v2732
        %vm2734 = vcmp.lt.s32.totalorder %v2715, 1
        %vm2735 = vcmp.lt.s32.totalorder %v2715, 2
        %vm2736 = vcmp.lt.s32.totalorder %v2715, 3
        %vm2737 = vcmp.lt.s32.totalorder %v2715, 4
        %v2738 = vsel %vm2734, %v2718, %v2721
        %v2739 = vsel %vm2737, %v2727, 2102212464
        %v2740 = vsel %vm2736, %v2724, %v2739
        %v2741 = vsel %vm2735, %v2738, %v2740
        %v2742 = vsel %vm2734, %v2721, %v2724
        %v2743 = vsel %vm2737, %v2730, 920167782
        %v2744 = vsel %vm2736, %v2727, %v2743
        %v2745 = vsel %vm2735, %v2742, %v2744
        %v2746 = vsel %vm2734, %v2724, %v2727
        %v2747 = vsel %vm2737, %v2733, 1326507024
        %v2748 = vsel %vm2736, %v2730, %v2747
        %v2749 = vsel %vm2735, %v2746, %v2748
        %v2750 = vshll.u32 %v2710, 8
        %v2751 = vmul.u32.u64.compose %v2750, %v2749
        %v2752 = vextract.low.u32 %v2751
        %v2753 = vextract.high.u32 %v2751
        %v2754 = vmul.u32.u64.compose %v2750, %v2745
        %v2755 = vextract.low.u32 %v2754
        %v2756 = vextract.high.u32 %v2754
        %v2757 = vmul.u32 %v2750, %v2741
        %v2758 = vadd.s32 %v2753, %v2755
        %vm2759 = vc.u32 %v2753, %v2755
        %v2760 = vadd.s32 %v2756, 1
        %v2761 = vsel %vm2759, %v2760, %v2756
        %v2762 = vadd.s32 %v2757, %v2761
        %v2763 = vadd.s32 %v2762, 536870912
        %v2764 = vshrl.u32 %v2763, 30
        %v2765 = vshll.u32 %v2764, 30
        %v2766 = vsub.s32 %v2762, %v2765
        %vm2767 = vcmp.lt.s32.totalorder %v2766, 0
        %v2768 = vsub.s32 0, %v2766
        %v2769 = vsel %vm2767, %v2768, %v2766
        %v2770 = vclz %v2769
        %v2771 = vsub.s32 %v2770, 2
        %vm2772 = vcmp.gt.s32.totalorder 0, %v2771
        %v2773 = vsel %vm2772, 0, %v2771
        %v2774 = vsub.s32 32, %v2773
        %v2775 = vshll.u32 %v2766, %v2773
        %v2776 = vshrl.u32 %v2758, %v2774
        %v2777 = vor.u32 %v2775, %v2776
        %v2778 = vsub.s32 4294967266, %v2773
        %v2779 = vadd.s32 %v2778, 127
        %v2780 = vshll.u32 %v2779, 23
        %v2781 = vor.u32 4788187, %v2780
        %v2782 = vand.u32 2147483647, %v2781
        %v2784 = vcvt.s32.f32 %v2777
        %v2785 = vmul.f32 %v2784, %v2782
        %v2786 = vxor.u32 %v2785, 2147483648
        %v2787 = vsel %vm2704, %v2786, %v2785
        %v2788 = vsub.s32 4, %v2764
        %v2789 = vsel %vm2704, %v2788, %v2764
        %v2790 = vsel %vm2703, %v630, %v2787
        %v2791 = vsel %vm2703, 0, %v2789
        %v2792 = vcosq.f32.pop %v2790
        %v2793 = vsinq.f32.pop %v2790
        %vm2794 = vweird.f32 %v630
        %v2795 = vand.u32 %v2791, 3
        %vm2796 = vcmp.lt.s32.totalorder %v2795, 2
        %vm2797 = vcmp.eq.s32.totalorder %v2795, 0
        %v2798 = vxor.u32 %v2793, 2147483648
        %v2799 = vsel %vm2797, %v2792, %v2798
        %vm2800 = vcmp.eq.s32.totalorder %v2795, 2
        %v2801 = vxor.u32 %v2792, 2147483648
        %v2802 = vsel %vm2800, %v2801, %v2793
        %v2803 = vsel %vm2796, %v2799, %v2802
        %v2804 = vsel %vm2794, nan, %v2803
        %v2805 = vand.u32 2147483647, %v631
        %vm2806 = vcmp.le.f32.partialorder %v2805, 0.7853982
        %vm2807 = vcmp.lt.s32.totalorder %v631, 0
        %v2808 = vand.u32 %v631, 2139095040
        %v2809 = vshrl.u32 %v2808, 23
        %v2810 = vsub.s32 %v2809, 127
        %v2811 = vand.u32 2147483647, %v631
        %v2812 = vand.u32 %v2811, 8388607
        %v2813 = vor.u32 %v2812, 8388608
        %v2814 = vsub.s32 0, %v2813
        %v2815 = vadd.s32 %v2810, 1
        %vm2816 = vcmp.gt.s32.totalorder %v2815, 0
        %v2817 = vsel %vm2816, %v2815, 0
        %v2818 = vshrl.u32 %v2817, 5
        %v2819 = vand.u32 %v2817, 31
        %v2820 = vsub.s32 32, %v2819
        %v2821 = vshrl.u32 683565275, %v2820
        %v2822 = vshll.u32 683565275, %v2819
        %v2823 = vshrl.u32 2475754826, %v2820
        %v2824 = vor.u32 %v2822, %v2823
        %v2825 = vshll.u32 2475754826, %v2819
        %v2826 = vshrl.u32 2131351028, %v2820
        %v2827 = vor.u32 %v2825, %v2826
        %v2828 = vshll.u32 2131351028, %v2819
        %v2829 = vshrl.u32 2102212464, %v2820
        %v2830 = vor.u32 %v2828, %v2829
        %v2831 = vshll.u32 2102212464, %v2819
        %v2832 = vshrl.u32 920167782, %v2820
        %v2833 = vor.u32 %v2831, %v2832
        %v2834 = vshll.u32 920167782, %v2819
        %v2835 = vshrl.u32 1326507024, %v2820
        %v2836 = vor.u32 %v2834, %v2835
        %vm2837 = vcmp.lt.s32.totalorder %v2818, 1
        %vm2838 = vcmp.lt.s32.totalorder %v2818, 2
        %vm2839 = vcmp.lt.s32.totalorder %v2818, 3
        %vm2840 = vcmp.lt.s32.totalorder %v2818, 4
        %v2841 = vsel %vm2837, %v2821, %v2824
        %v2842 = vsel %vm2840, %v2830, 2102212464
        %v2843 = vsel %vm2839, %v2827, %v2842
        %v2844 = vsel %vm2838, %v2841, %v2843
        %v2845 = vsel %vm2837, %v2824, %v2827
        %v2846 = vsel %vm2840, %v2833, 920167782
        %v2847 = vsel %vm2839, %v2830, %v2846
        %v2848 = vsel %vm2838, %v2845, %v2847
        %v2849 = vsel %vm2837, %v2827, %v2830
        %v2850 = vsel %vm2840, %v2836, 1326507024
        %v2851 = vsel %vm2839, %v2833, %v2850
        %v2852 = vsel %vm2838, %v2849, %v2851
        %v2853 = vshll.u32 %v2813, 8
        %v2854 = vmul.u32.u64.compose %v2853, %v2852
        %v2855 = vextract.low.u32 %v2854
        %v2856 = vextract.high.u32 %v2854
        %v2857 = vmul.u32.u64.compose %v2853, %v2848
        %v2858 = vextract.low.u32 %v2857
        %v2859 = vextract.high.u32 %v2857
        %v2860 = vmul.u32 %v2853, %v2844
        %v2861 = vadd.s32 %v2856, %v2858
        %vm2862 = vc.u32 %v2856, %v2858
        %v2863 = vadd.s32 %v2859, 1
        %v2864 = vsel %vm2862, %v2863, %v2859
        %v2865 = vadd.s32 %v2860, %v2864
        %v2866 = vadd.s32 %v2865, 536870912
        %v2867 = vshrl.u32 %v2866, 30
        %v2868 = vshll.u32 %v2867, 30
        %v2869 = vsub.s32 %v2865, %v2868
        %vm2870 = vcmp.lt.s32.totalorder %v2869, 0
        %v2871 = vsub.s32 0, %v2869
        %v2872 = vsel %vm2870, %v2871, %v2869
        %v2873 = vclz %v2872
        %v2874 = vsub.s32 %v2873, 2
        %vm2875 = vcmp.gt.s32.totalorder 0, %v2874
        %v2876 = vsel %vm2875, 0, %v2874
        %v2877 = vsub.s32 32, %v2876
        %v2878 = vshll.u32 %v2869, %v2876
        %v2879 = vshrl.u32 %v2861, %v2877
        %v2880 = vor.u32 %v2878, %v2879
        %v2881 = vsub.s32 4294967266, %v2876
        %v2882 = vadd.s32 %v2881, 127
        %v2883 = vshll.u32 %v2882, 23
        %v2884 = vor.u32 4788187, %v2883
        %v2885 = vand.u32 2147483647, %v2884
        %v2887 = vcvt.s32.f32 %v2880
        %v2888 = vmul.f32 %v2887, %v2885
        %v2889 = vxor.u32 %v2888, 2147483648
        %v2890 = vsel %vm2807, %v2889, %v2888
        %v2891 = vsub.s32 4, %v2867
        %v2892 = vsel %vm2807, %v2891, %v2867
        %v2893 = vsel %vm2806, %v631, %v2890
        %v2894 = vsel %vm2806, 0, %v2892
        %v2895 = vcosq.f32.pop %v2893
        %v2896 = vsinq.f32.pop %v2893
        %vm2897 = vweird.f32 %v631
        %v2898 = vand.u32 %v2894, 3
        %vm2899 = vcmp.lt.s32.totalorder %v2898, 2
        %vm2900 = vcmp.eq.s32.totalorder %v2898, 0
        %v2901 = vxor.u32 %v2896, 2147483648
        %v2902 = vsel %vm2900, %v2895, %v2901
        %vm2903 = vcmp.eq.s32.totalorder %v2898, 2
        %v2904 = vxor.u32 %v2895, 2147483648
        %v2905 = vsel %vm2903, %v2904, %v2896
        %v2906 = vsel %vm2899, %v2902, %v2905
        %v2907 = vsel %vm2897, nan, %v2906
        %v2908 = vand.u32 2147483647, %v632
        %vm2909 = vcmp.le.f32.partialorder %v2908, 0.7853982
        %vm2910 = vcmp.lt.s32.totalorder %v632, 0
        %v2911 = vand.u32 %v632, 2139095040
        %v2912 = vshrl.u32 %v2911, 23
        %v2913 = vsub.s32 %v2912, 127
        %v2914 = vand.u32 2147483647, %v632
        %v2915 = vand.u32 %v2914, 8388607
        %v2916 = vor.u32 %v2915, 8388608
        %v2917 = vsub.s32 0, %v2916
        %v2918 = vadd.s32 %v2913, 1
        %vm2919 = vcmp.gt.s32.totalorder %v2918, 0
        %v2920 = vsel %vm2919, %v2918, 0
        %v2921 = vshrl.u32 %v2920, 5
        %v2922 = vand.u32 %v2920, 31
        %v2923 = vsub.s32 32, %v2922
        %v2924 = vshrl.u32 683565275, %v2923
        %v2925 = vshll.u32 683565275, %v2922
        %v2926 = vshrl.u32 2475754826, %v2923
        %v2927 = vor.u32 %v2925, %v2926
        %v2928 = vshll.u32 2475754826, %v2922
        %v2929 = vshrl.u32 2131351028, %v2923
        %v2930 = vor.u32 %v2928, %v2929
        %v2931 = vshll.u32 2131351028, %v2922
        %v2932 = vshrl.u32 2102212464, %v2923
        %v2933 = vor.u32 %v2931, %v2932
        %v2934 = vshll.u32 2102212464, %v2922
        %v2935 = vshrl.u32 920167782, %v2923
        %v2936 = vor.u32 %v2934, %v2935
        %v2937 = vshll.u32 920167782, %v2922
        %v2938 = vshrl.u32 1326507024, %v2923
        %v2939 = vor.u32 %v2937, %v2938
        %vm2940 = vcmp.lt.s32.totalorder %v2921, 1
        %vm2941 = vcmp.lt.s32.totalorder %v2921, 2
        %vm2942 = vcmp.lt.s32.totalorder %v2921, 3
        %vm2943 = vcmp.lt.s32.totalorder %v2921, 4
        %v2944 = vsel %vm2940, %v2924, %v2927
        %v2945 = vsel %vm2943, %v2933, 2102212464
        %v2946 = vsel %vm2942, %v2930, %v2945
        %v2947 = vsel %vm2941, %v2944, %v2946
        %v2948 = vsel %vm2940, %v2927, %v2930
        %v2949 = vsel %vm2943, %v2936, 920167782
        %v2950 = vsel %vm2942, %v2933, %v2949
        %v2951 = vsel %vm2941, %v2948, %v2950
        %v2952 = vsel %vm2940, %v2930, %v2933
        %v2953 = vsel %vm2943, %v2939, 1326507024
        %v2954 = vsel %vm2942, %v2936, %v2953
        %v2955 = vsel %vm2941, %v2952, %v2954
        %v2956 = vshll.u32 %v2916, 8
        %v2957 = vmul.u32.u64.compose %v2956, %v2955
        %v2958 = vextract.low.u32 %v2957
        %v2959 = vextract.high.u32 %v2957
        %v2960 = vmul.u32.u64.compose %v2956, %v2951
        %v2961 = vextract.low.u32 %v2960
        %v2962 = vextract.high.u32 %v2960
        %v2963 = vmul.u32 %v2956, %v2947
        %v2964 = vadd.s32 %v2959, %v2961
        %vm2965 = vc.u32 %v2959, %v2961
        %v2966 = vadd.s32 %v2962, 1
        %v2967 = vsel %vm2965, %v2966, %v2962
        %v2968 = vadd.s32 %v2963, %v2967
        %v2969 = vadd.s32 %v2968, 536870912
        %v2970 = vshrl.u32 %v2969, 30
        %v2971 = vshll.u32 %v2970, 30
        %v2972 = vsub.s32 %v2968, %v2971
        %vm2973 = vcmp.lt.s32.totalorder %v2972, 0
        %v2974 = vsub.s32 0, %v2972
        %v2975 = vsel %vm2973, %v2974, %v2972
        %v2976 = vclz %v2975
        %v2977 = vsub.s32 %v2976, 2
        %vm2978 = vcmp.gt.s32.totalorder 0, %v2977
        %v2979 = vsel %vm2978, 0, %v2977
        %v2980 = vsub.s32 32, %v2979
        %v2981 = vshll.u32 %v2972, %v2979
        %v2982 = vshrl.u32 %v2964, %v2980
        %v2983 = vor.u32 %v2981, %v2982
        %v2984 = vsub.s32 4294967266, %v2979
        %v2985 = vadd.s32 %v2984, 127
        %v2986 = vshll.u32 %v2985, 23
        %v2987 = vor.u32 4788187, %v2986
        %v2988 = vand.u32 2147483647, %v2987
        %v2990 = vcvt.s32.f32 %v2983
        %v2991 = vmul.f32 %v2990, %v2988
        %v2992 = vxor.u32 %v2991, 2147483648
        %v2993 = vsel %vm2910, %v2992, %v2991
        %v2994 = vsub.s32 4, %v2970
        %v2995 = vsel %vm2910, %v2994, %v2970
        %v2996 = vsel %vm2909, %v632, %v2993
        %v2997 = vsel %vm2909, 0, %v2995
        %v2998 = vcosq.f32.pop %v2996
        %v2999 = vsinq.f32.pop %v2996
        %vm3000 = vweird.f32 %v632
        %v3001 = vand.u32 %v2997, 3
        %vm3002 = vcmp.lt.s32.totalorder %v3001, 2
        %vm3003 = vcmp.eq.s32.totalorder %v3001, 0
        %v3004 = vxor.u32 %v2999, 2147483648
        %v3005 = vsel %vm3003, %v2998, %v3004
        %vm3006 = vcmp.eq.s32.totalorder %v3001, 2
        %v3007 = vxor.u32 %v2998, 2147483648
        %v3008 = vsel %vm3006, %v3007, %v2999
        %v3009 = vsel %vm3002, %v3005, %v3008
        %v3010 = vsel %vm3000, nan, %v3009
        %v3011 = vand.u32 2147483647, %v633
        %vm3012 = vcmp.le.f32.partialorder %v3011, 0.7853982
        %vm3013 = vcmp.lt.s32.totalorder %v633, 0
        %v3014 = vand.u32 %v633, 2139095040
        %v3015 = vshrl.u32 %v3014, 23
        %v3016 = vsub.s32 %v3015, 127
        %v3017 = vand.u32 2147483647, %v633
        %v3018 = vand.u32 %v3017, 8388607
        %v3019 = vor.u32 %v3018, 8388608
        %v3020 = vsub.s32 0, %v3019
        %v3021 = vadd.s32 %v3016, 1
        %vm3022 = vcmp.gt.s32.totalorder %v3021, 0
        %v3023 = vsel %vm3022, %v3021, 0
        %v3024 = vshrl.u32 %v3023, 5
        %v3025 = vand.u32 %v3023, 31
        %v3026 = vsub.s32 32, %v3025
        %v3027 = vshrl.u32 683565275, %v3026
        %v3028 = vshll.u32 683565275, %v3025
        %v3029 = vshrl.u32 2475754826, %v3026
        %v3030 = vor.u32 %v3028, %v3029
        %v3031 = vshll.u32 2475754826, %v3025
        %v3032 = vshrl.u32 2131351028, %v3026
        %v3033 = vor.u32 %v3031, %v3032
        %v3034 = vshll.u32 2131351028, %v3025
        %v3035 = vshrl.u32 2102212464, %v3026
        %v3036 = vor.u32 %v3034, %v3035
        %v3037 = vshll.u32 2102212464, %v3025
        %v3038 = vshrl.u32 920167782, %v3026
        %v3039 = vor.u32 %v3037, %v3038
        %v3040 = vshll.u32 920167782, %v3025
        %v3041 = vshrl.u32 1326507024, %v3026
        %v3042 = vor.u32 %v3040, %v3041
        %vm3043 = vcmp.lt.s32.totalorder %v3024, 1
        %vm3044 = vcmp.lt.s32.totalorder %v3024, 2
        %vm3045 = vcmp.lt.s32.totalorder %v3024, 3
        %vm3046 = vcmp.lt.s32.totalorder %v3024, 4
        %v3047 = vsel %vm3043, %v3027, %v3030
        %v3048 = vsel %vm3046, %v3036, 2102212464
        %v3049 = vsel %vm3045, %v3033, %v3048
        %v3050 = vsel %vm3044, %v3047, %v3049
        %v3051 = vsel %vm3043, %v3030, %v3033
        %v3052 = vsel %vm3046, %v3039, 920167782
        %v3053 = vsel %vm3045, %v3036, %v3052
        %v3054 = vsel %vm3044, %v3051, %v3053
        %v3055 = vsel %vm3043, %v3033, %v3036
        %v3056 = vsel %vm3046, %v3042, 1326507024
        %v3057 = vsel %vm3045, %v3039, %v3056
        %v3058 = vsel %vm3044, %v3055, %v3057
        %v3059 = vshll.u32 %v3019, 8
        %v3060 = vmul.u32.u64.compose %v3059, %v3058
        %v3061 = vextract.low.u32 %v3060
        %v3062 = vextract.high.u32 %v3060
        %v3063 = vmul.u32.u64.compose %v3059, %v3054
        %v3064 = vextract.low.u32 %v3063
        %v3065 = vextract.high.u32 %v3063
        %v3066 = vmul.u32 %v3059, %v3050
        %v3067 = vadd.s32 %v3062, %v3064
        %vm3068 = vc.u32 %v3062, %v3064
        %v3069 = vadd.s32 %v3065, 1
        %v3070 = vsel %vm3068, %v3069, %v3065
        %v3071 = vadd.s32 %v3066, %v3070
        %v3072 = vadd.s32 %v3071, 536870912
        %v3073 = vshrl.u32 %v3072, 30
        %v3074 = vshll.u32 %v3073, 30
        %v3075 = vsub.s32 %v3071, %v3074
        %vm3076 = vcmp.lt.s32.totalorder %v3075, 0
        %v3077 = vsub.s32 0, %v3075
        %v3078 = vsel %vm3076, %v3077, %v3075
        %v3079 = vclz %v3078
        %v3080 = vsub.s32 %v3079, 2
        %vm3081 = vcmp.gt.s32.totalorder 0, %v3080
        %v3082 = vsel %vm3081, 0, %v3080
        %v3083 = vsub.s32 32, %v3082
        %v3084 = vshll.u32 %v3075, %v3082
        %v3085 = vshrl.u32 %v3067, %v3083
        %v3086 = vor.u32 %v3084, %v3085
        %v3087 = vsub.s32 4294967266, %v3082
        %v3088 = vadd.s32 %v3087, 127
        %v3089 = vshll.u32 %v3088, 23
        %v3090 = vor.u32 4788187, %v3089
        %v3091 = vand.u32 2147483647, %v3090
        %v3093 = vcvt.s32.f32 %v3086
        %v3094 = vmul.f32 %v3093, %v3091
        %v3095 = vxor.u32 %v3094, 2147483648
        %v3096 = vsel %vm3013, %v3095, %v3094
        %v3097 = vsub.s32 4, %v3073
        %v3098 = vsel %vm3013, %v3097, %v3073
        %v3099 = vsel %vm3012, %v633, %v3096
        %v3100 = vsel %vm3012, 0, %v3098
        %v3101 = vcosq.f32.pop %v3099
        %v3102 = vsinq.f32.pop %v3099
        %vm3103 = vweird.f32 %v633
        %v3104 = vand.u32 %v3100, 3
        %vm3105 = vcmp.lt.s32.totalorder %v3104, 2
        %vm3106 = vcmp.eq.s32.totalorder %v3104, 0
        %v3107 = vxor.u32 %v3102, 2147483648
        %v3108 = vsel %vm3106, %v3101, %v3107
        %vm3109 = vcmp.eq.s32.totalorder %v3104, 2
        %v3110 = vxor.u32 %v3101, 2147483648
        %v3111 = vsel %vm3109, %v3110, %v3102
        %v3112 = vsel %vm3105, %v3108, %v3111
        %v3113 = vsel %vm3103, nan, %v3112
        %v3114 = vand.u32 2147483647, %v634
        %vm3115 = vcmp.le.f32.partialorder %v3114, 0.7853982
        %vm3116 = vcmp.lt.s32.totalorder %v634, 0
        %v3117 = vand.u32 %v634, 2139095040
        %v3118 = vshrl.u32 %v3117, 23
        %v3119 = vsub.s32 %v3118, 127
        %v3120 = vand.u32 2147483647, %v634
        %v3121 = vand.u32 %v3120, 8388607
        %v3122 = vor.u32 %v3121, 8388608
        %v3123 = vsub.s32 0, %v3122
        %v3124 = vadd.s32 %v3119, 1
        %vm3125 = vcmp.gt.s32.totalorder %v3124, 0
        %v3126 = vsel %vm3125, %v3124, 0
        %v3127 = vshrl.u32 %v3126, 5
        %v3128 = vand.u32 %v3126, 31
        %v3129 = vsub.s32 32, %v3128
        %v3130 = vshrl.u32 683565275, %v3129
        %v3131 = vshll.u32 683565275, %v3128
        %v3132 = vshrl.u32 2475754826, %v3129
        %v3133 = vor.u32 %v3131, %v3132
        %v3134 = vshll.u32 2475754826, %v3128
        %v3135 = vshrl.u32 2131351028, %v3129
        %v3136 = vor.u32 %v3134, %v3135
        %v3137 = vshll.u32 2131351028, %v3128
        %v3138 = vshrl.u32 2102212464, %v3129
        %v3139 = vor.u32 %v3137, %v3138
        %v3140 = vshll.u32 2102212464, %v3128
        %v3141 = vshrl.u32 920167782, %v3129
        %v3142 = vor.u32 %v3140, %v3141
        %v3143 = vshll.u32 920167782, %v3128
        %v3144 = vshrl.u32 1326507024, %v3129
        %v3145 = vor.u32 %v3143, %v3144
        %vm3146 = vcmp.lt.s32.totalorder %v3127, 1
        %vm3147 = vcmp.lt.s32.totalorder %v3127, 2
        %vm3148 = vcmp.lt.s32.totalorder %v3127, 3
        %vm3149 = vcmp.lt.s32.totalorder %v3127, 4
        %v3150 = vsel %vm3146, %v3130, %v3133
        %v3151 = vsel %vm3149, %v3139, 2102212464
        %v3152 = vsel %vm3148, %v3136, %v3151
        %v3153 = vsel %vm3147, %v3150, %v3152
        %v3154 = vsel %vm3146, %v3133, %v3136
        %v3155 = vsel %vm3149, %v3142, 920167782
        %v3156 = vsel %vm3148, %v3139, %v3155
        %v3157 = vsel %vm3147, %v3154, %v3156
        %v3158 = vsel %vm3146, %v3136, %v3139
        %v3159 = vsel %vm3149, %v3145, 1326507024
        %v3160 = vsel %vm3148, %v3142, %v3159
        %v3161 = vsel %vm3147, %v3158, %v3160
        %v3162 = vshll.u32 %v3122, 8
        %v3163 = vmul.u32.u64.compose %v3162, %v3161
        %v3164 = vextract.low.u32 %v3163
        %v3165 = vextract.high.u32 %v3163
        %v3166 = vmul.u32.u64.compose %v3162, %v3157
        %v3167 = vextract.low.u32 %v3166
        %v3168 = vextract.high.u32 %v3166
        %v3169 = vmul.u32 %v3162, %v3153
        %v3170 = vadd.s32 %v3165, %v3167
        %vm3171 = vc.u32 %v3165, %v3167
        %v3172 = vadd.s32 %v3168, 1
        %v3173 = vsel %vm3171, %v3172, %v3168
        %v3174 = vadd.s32 %v3169, %v3173
        %v3175 = vadd.s32 %v3174, 536870912
        %v3176 = vshrl.u32 %v3175, 30
        %v3177 = vshll.u32 %v3176, 30
        %v3178 = vsub.s32 %v3174, %v3177
        %vm3179 = vcmp.lt.s32.totalorder %v3178, 0
        %v3180 = vsub.s32 0, %v3178
        %v3181 = vsel %vm3179, %v3180, %v3178
        %v3182 = vclz %v3181
        %v3183 = vsub.s32 %v3182, 2
        %vm3184 = vcmp.gt.s32.totalorder 0, %v3183
        %v3185 = vsel %vm3184, 0, %v3183
        %v3186 = vsub.s32 32, %v3185
        %v3187 = vshll.u32 %v3178, %v3185
        %v3188 = vshrl.u32 %v3170, %v3186
        %v3189 = vor.u32 %v3187, %v3188
        %v3190 = vsub.s32 4294967266, %v3185
        %v3191 = vadd.s32 %v3190, 127
        %v3192 = vshll.u32 %v3191, 23
        %v3193 = vor.u32 4788187, %v3192
        %v3194 = vand.u32 2147483647, %v3193
        %v3196 = vcvt.s32.f32 %v3189
        %v3197 = vmul.f32 %v3196, %v3194
        %v3198 = vxor.u32 %v3197, 2147483648
        %v3199 = vsel %vm3116, %v3198, %v3197
        %v3200 = vsub.s32 4, %v3176
        %v3201 = vsel %vm3116, %v3200, %v3176
        %v3202 = vsel %vm3115, %v634, %v3199
        %v3203 = vsel %vm3115, 0, %v3201
        %v3204 = vcosq.f32.pop %v3202
        %v3205 = vsinq.f32.pop %v3202
        %vm3206 = vweird.f32 %v634
        %v3207 = vand.u32 %v3203, 3
        %vm3208 = vcmp.lt.s32.totalorder %v3207, 2
        %vm3209 = vcmp.eq.s32.totalorder %v3207, 0
        %v3210 = vxor.u32 %v3205, 2147483648
        %v3211 = vsel %vm3209, %v3204, %v3210
        %vm3212 = vcmp.eq.s32.totalorder %v3207, 2
        %v3213 = vxor.u32 %v3204, 2147483648
        %v3214 = vsel %vm3212, %v3213, %v3205
        %v3215 = vsel %vm3208, %v3211, %v3214
        %v3216 = vsel %vm3206, nan, %v3215
        %v3217 = vand.u32 2147483647, %v635
        %vm3218 = vcmp.le.f32.partialorder %v3217, 0.7853982
        %vm3219 = vcmp.lt.s32.totalorder %v635, 0
        %v3220 = vand.u32 %v635, 2139095040
        %v3221 = vshrl.u32 %v3220, 23
        %v3222 = vsub.s32 %v3221, 127
        %v3223 = vand.u32 2147483647, %v635
        %v3224 = vand.u32 %v3223, 8388607
        %v3225 = vor.u32 %v3224, 8388608
        %v3226 = vsub.s32 0, %v3225
        %v3227 = vadd.s32 %v3222, 1
        %vm3228 = vcmp.gt.s32.totalorder %v3227, 0
        %v3229 = vsel %vm3228, %v3227, 0
        %v3230 = vshrl.u32 %v3229, 5
        %v3231 = vand.u32 %v3229, 31
        %v3232 = vsub.s32 32, %v3231
        %v3233 = vshrl.u32 683565275, %v3232
        %v3234 = vshll.u32 683565275, %v3231
        %v3235 = vshrl.u32 2475754826, %v3232
        %v3236 = vor.u32 %v3234, %v3235
        %v3237 = vshll.u32 2475754826, %v3231
        %v3238 = vshrl.u32 2131351028, %v3232
        %v3239 = vor.u32 %v3237, %v3238
        %v3240 = vshll.u32 2131351028, %v3231
        %v3241 = vshrl.u32 2102212464, %v3232
        %v3242 = vor.u32 %v3240, %v3241
        %v3243 = vshll.u32 2102212464, %v3231
        %v3244 = vshrl.u32 920167782, %v3232
        %v3245 = vor.u32 %v3243, %v3244
        %v3246 = vshll.u32 920167782, %v3231
        %v3247 = vshrl.u32 1326507024, %v3232
        %v3248 = vor.u32 %v3246, %v3247
        %vm3249 = vcmp.lt.s32.totalorder %v3230, 1
        %vm3250 = vcmp.lt.s32.totalorder %v3230, 2
        %vm3251 = vcmp.lt.s32.totalorder %v3230, 3
        %vm3252 = vcmp.lt.s32.totalorder %v3230, 4
        %v3253 = vsel %vm3249, %v3233, %v3236
        %v3254 = vsel %vm3252, %v3242, 2102212464
        %v3255 = vsel %vm3251, %v3239, %v3254
        %v3256 = vsel %vm3250, %v3253, %v3255
        %v3257 = vsel %vm3249, %v3236, %v3239
        %v3258 = vsel %vm3252, %v3245, 920167782
        %v3259 = vsel %vm3251, %v3242, %v3258
        %v3260 = vsel %vm3250, %v3257, %v3259
        %v3261 = vsel %vm3249, %v3239, %v3242
        %v3262 = vsel %vm3252, %v3248, 1326507024
        %v3263 = vsel %vm3251, %v3245, %v3262
        %v3264 = vsel %vm3250, %v3261, %v3263
        %v3265 = vshll.u32 %v3225, 8
        %v3266 = vmul.u32.u64.compose %v3265, %v3264
        %v3267 = vextract.low.u32 %v3266
        %v3268 = vextract.high.u32 %v3266
        %v3269 = vmul.u32.u64.compose %v3265, %v3260
        %v3270 = vextract.low.u32 %v3269
        %v3271 = vextract.high.u32 %v3269
        %v3272 = vmul.u32 %v3265, %v3256
        %v3273 = vadd.s32 %v3268, %v3270
        %vm3274 = vc.u32 %v3268, %v3270
        %v3275 = vadd.s32 %v3271, 1
        %v3276 = vsel %vm3274, %v3275, %v3271
        %v3277 = vadd.s32 %v3272, %v3276
        %v3278 = vadd.s32 %v3277, 536870912
        %v3279 = vshrl.u32 %v3278, 30
        %v3280 = vshll.u32 %v3279, 30
        %v3281 = vsub.s32 %v3277, %v3280
        %vm3282 = vcmp.lt.s32.totalorder %v3281, 0
        %v3283 = vsub.s32 0, %v3281
        %v3284 = vsel %vm3282, %v3283, %v3281
        %v3285 = vclz %v3284
        %v3286 = vsub.s32 %v3285, 2
        %vm3287 = vcmp.gt.s32.totalorder 0, %v3286
        %v3288 = vsel %vm3287, 0, %v3286
        %v3289 = vsub.s32 32, %v3288
        %v3290 = vshll.u32 %v3281, %v3288
        %v3291 = vshrl.u32 %v3273, %v3289
        %v3292 = vor.u32 %v3290, %v3291
        %v3293 = vsub.s32 4294967266, %v3288
        %v3294 = vadd.s32 %v3293, 127
        %v3295 = vshll.u32 %v3294, 23
        %v3296 = vor.u32 4788187, %v3295
        %v3297 = vand.u32 2147483647, %v3296
        %v3299 = vcvt.s32.f32 %v3292
        %v3300 = vmul.f32 %v3299, %v3297
        %v3301 = vxor.u32 %v3300, 2147483648
        %v3302 = vsel %vm3219, %v3301, %v3300
        %v3303 = vsub.s32 4, %v3279
        %v3304 = vsel %vm3219, %v3303, %v3279
        %v3305 = vsel %vm3218, %v635, %v3302
        %v3306 = vsel %vm3218, 0, %v3304
        %v3307 = vcosq.f32.pop %v3305
        %v3308 = vsinq.f32.pop %v3305
        %vm3309 = vweird.f32 %v635
        %v3310 = vand.u32 %v3306, 3
        %vm3311 = vcmp.lt.s32.totalorder %v3310, 2
        %vm3312 = vcmp.eq.s32.totalorder %v3310, 0
        %v3313 = vxor.u32 %v3308, 2147483648
        %v3314 = vsel %vm3312, %v3307, %v3313
        %vm3315 = vcmp.eq.s32.totalorder %v3310, 2
        %v3316 = vxor.u32 %v3307, 2147483648
        %v3317 = vsel %vm3315, %v3316, %v3308
        %v3318 = vsel %vm3311, %v3314, %v3317
        %v3319 = vsel %vm3309, nan, %v3318
        %v3320 = vand.u32 2147483647, %v636
        %vm3321 = vcmp.le.f32.partialorder %v3320, 0.7853982
        %vm3322 = vcmp.lt.s32.totalorder %v636, 0
        %v3323 = vand.u32 %v636, 2139095040
        %v3324 = vshrl.u32 %v3323, 23
        %v3325 = vsub.s32 %v3324, 127
        %v3326 = vand.u32 2147483647, %v636
        %v3327 = vand.u32 %v3326, 8388607
        %v3328 = vor.u32 %v3327, 8388608
        %v3329 = vsub.s32 0, %v3328
        %v3330 = vadd.s32 %v3325, 1
        %vm3331 = vcmp.gt.s32.totalorder %v3330, 0
        %v3332 = vsel %vm3331, %v3330, 0
        %v3333 = vshrl.u32 %v3332, 5
        %v3334 = vand.u32 %v3332, 31
        %v3335 = vsub.s32 32, %v3334
        %v3336 = vshrl.u32 683565275, %v3335
        %v3337 = vshll.u32 683565275, %v3334
        %v3338 = vshrl.u32 2475754826, %v3335
        %v3339 = vor.u32 %v3337, %v3338
        %v3340 = vshll.u32 2475754826, %v3334
        %v3341 = vshrl.u32 2131351028, %v3335
        %v3342 = vor.u32 %v3340, %v3341
        %v3343 = vshll.u32 2131351028, %v3334
        %v3344 = vshrl.u32 2102212464, %v3335
        %v3345 = vor.u32 %v3343, %v3344
        %v3346 = vshll.u32 2102212464, %v3334
        %v3347 = vshrl.u32 920167782, %v3335
        %v3348 = vor.u32 %v3346, %v3347
        %v3349 = vshll.u32 920167782, %v3334
        %v3350 = vshrl.u32 1326507024, %v3335
        %v3351 = vor.u32 %v3349, %v3350
        %vm3352 = vcmp.lt.s32.totalorder %v3333, 1
        %vm3353 = vcmp.lt.s32.totalorder %v3333, 2
        %vm3354 = vcmp.lt.s32.totalorder %v3333, 3
        %vm3355 = vcmp.lt.s32.totalorder %v3333, 4
        %v3356 = vsel %vm3352, %v3336, %v3339
        %v3357 = vsel %vm3355, %v3345, 2102212464
        %v3358 = vsel %vm3354, %v3342, %v3357
        %v3359 = vsel %vm3353, %v3356, %v3358
        %v3360 = vsel %vm3352, %v3339, %v3342
        %v3361 = vsel %vm3355, %v3348, 920167782
        %v3362 = vsel %vm3354, %v3345, %v3361
        %v3363 = vsel %vm3353, %v3360, %v3362
        %v3364 = vsel %vm3352, %v3342, %v3345
        %v3365 = vsel %vm3355, %v3351, 1326507024
        %v3366 = vsel %vm3354, %v3348, %v3365
        %v3367 = vsel %vm3353, %v3364, %v3366
        %v3368 = vshll.u32 %v3328, 8
        %v3369 = vmul.u32.u64.compose %v3368, %v3367
        %v3370 = vextract.low.u32 %v3369
        %v3371 = vextract.high.u32 %v3369
        %v3372 = vmul.u32.u64.compose %v3368, %v3363
        %v3373 = vextract.low.u32 %v3372
        %v3374 = vextract.high.u32 %v3372
        %v3375 = vmul.u32 %v3368, %v3359
        %v3376 = vadd.s32 %v3371, %v3373
        %vm3377 = vc.u32 %v3371, %v3373
        %v3378 = vadd.s32 %v3374, 1
        %v3379 = vsel %vm3377, %v3378, %v3374
        %v3380 = vadd.s32 %v3375, %v3379
        %v3381 = vadd.s32 %v3380, 536870912
        %v3382 = vshrl.u32 %v3381, 30
        %v3383 = vshll.u32 %v3382, 30
        %v3384 = vsub.s32 %v3380, %v3383
        %vm3385 = vcmp.lt.s32.totalorder %v3384, 0
        %v3386 = vsub.s32 0, %v3384
        %v3387 = vsel %vm3385, %v3386, %v3384
        %v3388 = vclz %v3387
        %v3389 = vsub.s32 %v3388, 2
        %vm3390 = vcmp.gt.s32.totalorder 0, %v3389
        %v3391 = vsel %vm3390, 0, %v3389
        %v3392 = vsub.s32 32, %v3391
        %v3393 = vshll.u32 %v3384, %v3391
        %v3394 = vshrl.u32 %v3376, %v3392
        %v3395 = vor.u32 %v3393, %v3394
        %v3396 = vsub.s32 4294967266, %v3391
        %v3397 = vadd.s32 %v3396, 127
        %v3398 = vshll.u32 %v3397, 23
        %v3399 = vor.u32 4788187, %v3398
        %v3400 = vand.u32 2147483647, %v3399
        %v3402 = vcvt.s32.f32 %v3395
        %v3403 = vmul.f32 %v3402, %v3400
        %v3404 = vxor.u32 %v3403, 2147483648
        %v3405 = vsel %vm3322, %v3404, %v3403
        %v3406 = vsub.s32 4, %v3382
        %v3407 = vsel %vm3322, %v3406, %v3382
        %v3408 = vsel %vm3321, %v636, %v3405
        %v3409 = vsel %vm3321, 0, %v3407
        %v3410 = vcosq.f32.pop %v3408
        %v3411 = vsinq.f32.pop %v3408
        %vm3412 = vweird.f32 %v636
        %v3413 = vand.u32 %v3409, 3
        %vm3414 = vcmp.lt.s32.totalorder %v3413, 2
        %vm3415 = vcmp.eq.s32.totalorder %v3413, 0
        %v3416 = vxor.u32 %v3411, 2147483648
        %v3417 = vsel %vm3415, %v3410, %v3416
        %vm3418 = vcmp.eq.s32.totalorder %v3413, 2
        %v3419 = vxor.u32 %v3410, 2147483648
        %v3420 = vsel %vm3418, %v3419, %v3411
        %v3421 = vsel %vm3414, %v3417, %v3420
        %v3422 = vsel %vm3412, nan, %v3421
        %v3423 = vand.u32 2147483647, %v637
        %vm3424 = vcmp.le.f32.partialorder %v3423, 0.7853982
        %vm3425 = vcmp.lt.s32.totalorder %v637, 0
        %v3426 = vand.u32 %v637, 2139095040
        %v3427 = vshrl.u32 %v3426, 23
        %v3428 = vsub.s32 %v3427, 127
        %v3429 = vand.u32 2147483647, %v637
        %v3430 = vand.u32 %v3429, 8388607
        %v3431 = vor.u32 %v3430, 8388608
        %v3432 = vsub.s32 0, %v3431
        %v3433 = vadd.s32 %v3428, 1
        %vm3434 = vcmp.gt.s32.totalorder %v3433, 0
        %v3435 = vsel %vm3434, %v3433, 0
        %v3436 = vshrl.u32 %v3435, 5
        %v3437 = vand.u32 %v3435, 31
        %v3438 = vsub.s32 32, %v3437
        %v3439 = vshrl.u32 683565275, %v3438
        %v3440 = vshll.u32 683565275, %v3437
        %v3441 = vshrl.u32 2475754826, %v3438
        %v3442 = vor.u32 %v3440, %v3441
        %v3443 = vshll.u32 2475754826, %v3437
        %v3444 = vshrl.u32 2131351028, %v3438
        %v3445 = vor.u32 %v3443, %v3444
        %v3446 = vshll.u32 2131351028, %v3437
        %v3447 = vshrl.u32 2102212464, %v3438
        %v3448 = vor.u32 %v3446, %v3447
        %v3449 = vshll.u32 2102212464, %v3437
        %v3450 = vshrl.u32 920167782, %v3438
        %v3451 = vor.u32 %v3449, %v3450
        %v3452 = vshll.u32 920167782, %v3437
        %v3453 = vshrl.u32 1326507024, %v3438
        %v3454 = vor.u32 %v3452, %v3453
        %vm3455 = vcmp.lt.s32.totalorder %v3436, 1
        %vm3456 = vcmp.lt.s32.totalorder %v3436, 2
        %vm3457 = vcmp.lt.s32.totalorder %v3436, 3
        %vm3458 = vcmp.lt.s32.totalorder %v3436, 4
        %v3459 = vsel %vm3455, %v3439, %v3442
        %v3460 = vsel %vm3458, %v3448, 2102212464
        %v3461 = vsel %vm3457, %v3445, %v3460
        %v3462 = vsel %vm3456, %v3459, %v3461
        %v3463 = vsel %vm3455, %v3442, %v3445
        %v3464 = vsel %vm3458, %v3451, 920167782
        %v3465 = vsel %vm3457, %v3448, %v3464
        %v3466 = vsel %vm3456, %v3463, %v3465
        %v3467 = vsel %vm3455, %v3445, %v3448
        %v3468 = vsel %vm3458, %v3454, 1326507024
        %v3469 = vsel %vm3457, %v3451, %v3468
        %v3470 = vsel %vm3456, %v3467, %v3469
        %v3471 = vshll.u32 %v3431, 8
        %v3472 = vmul.u32.u64.compose %v3471, %v3470
        %v3473 = vextract.low.u32 %v3472
        %v3474 = vextract.high.u32 %v3472
        %v3475 = vmul.u32.u64.compose %v3471, %v3466
        %v3476 = vextract.low.u32 %v3475
        %v3477 = vextract.high.u32 %v3475
        %v3478 = vmul.u32 %v3471, %v3462
        %v3479 = vadd.s32 %v3474, %v3476
        %vm3480 = vc.u32 %v3474, %v3476
        %v3481 = vadd.s32 %v3477, 1
        %v3482 = vsel %vm3480, %v3481, %v3477
        %v3483 = vadd.s32 %v3478, %v3482
        %v3484 = vadd.s32 %v3483, 536870912
        %v3485 = vshrl.u32 %v3484, 30
        %v3486 = vshll.u32 %v3485, 30
        %v3487 = vsub.s32 %v3483, %v3486
        %vm3488 = vcmp.lt.s32.totalorder %v3487, 0
        %v3489 = vsub.s32 0, %v3487
        %v3490 = vsel %vm3488, %v3489, %v3487
        %v3491 = vclz %v3490
        %v3492 = vsub.s32 %v3491, 2
        %vm3493 = vcmp.gt.s32.totalorder 0, %v3492
        %v3494 = vsel %vm3493, 0, %v3492
        %v3495 = vsub.s32 32, %v3494
        %v3496 = vshll.u32 %v3487, %v3494
        %v3497 = vshrl.u32 %v3479, %v3495
        %v3498 = vor.u32 %v3496, %v3497
        %v3499 = vsub.s32 4294967266, %v3494
        %v3500 = vadd.s32 %v3499, 127
        %v3501 = vshll.u32 %v3500, 23
        %v3502 = vor.u32 4788187, %v3501
        %v3503 = vand.u32 2147483647, %v3502
        %v3505 = vcvt.s32.f32 %v3498
        %v3506 = vmul.f32 %v3505, %v3503
        %v3507 = vxor.u32 %v3506, 2147483648
        %v3508 = vsel %vm3425, %v3507, %v3506
        %v3509 = vsub.s32 4, %v3485
        %v3510 = vsel %vm3425, %v3509, %v3485
        %v3511 = vsel %vm3424, %v637, %v3508
        %v3512 = vsel %vm3424, 0, %v3510
        %v3513 = vcosq.f32.pop %v3511
        %v3514 = vsinq.f32.pop %v3511
        %vm3515 = vweird.f32 %v637
        %v3516 = vand.u32 %v3512, 3
        %vm3517 = vcmp.lt.s32.totalorder %v3516, 2
        %vm3518 = vcmp.eq.s32.totalorder %v3516, 0
        %v3519 = vxor.u32 %v3514, 2147483648
        %v3520 = vsel %vm3518, %v3513, %v3519
        %vm3521 = vcmp.eq.s32.totalorder %v3516, 2
        %v3522 = vxor.u32 %v3513, 2147483648
        %v3523 = vsel %vm3521, %v3522, %v3514
        %v3524 = vsel %vm3517, %v3520, %v3523
        %v3525 = vsel %vm3515, nan, %v3524
        %v3526 = vand.u32 2147483647, %v638
        %vm3527 = vcmp.le.f32.partialorder %v3526, 0.7853982
        %vm3528 = vcmp.lt.s32.totalorder %v638, 0
        %v3529 = vand.u32 %v638, 2139095040
        %v3530 = vshrl.u32 %v3529, 23
        %v3531 = vsub.s32 %v3530, 127
        %v3532 = vand.u32 2147483647, %v638
        %v3533 = vand.u32 %v3532, 8388607
        %v3534 = vor.u32 %v3533, 8388608
        %v3535 = vsub.s32 0, %v3534
        %v3536 = vadd.s32 %v3531, 1
        %vm3537 = vcmp.gt.s32.totalorder %v3536, 0
        %v3538 = vsel %vm3537, %v3536, 0
        %v3539 = vshrl.u32 %v3538, 5
        %v3540 = vand.u32 %v3538, 31
        %v3541 = vsub.s32 32, %v3540
        %v3542 = vshrl.u32 683565275, %v3541
        %v3543 = vshll.u32 683565275, %v3540
        %v3544 = vshrl.u32 2475754826, %v3541
        %v3545 = vor.u32 %v3543, %v3544
        %v3546 = vshll.u32 2475754826, %v3540
        %v3547 = vshrl.u32 2131351028, %v3541
        %v3548 = vor.u32 %v3546, %v3547
        %v3549 = vshll.u32 2131351028, %v3540
        %v3550 = vshrl.u32 2102212464, %v3541
        %v3551 = vor.u32 %v3549, %v3550
        %v3552 = vshll.u32 2102212464, %v3540
        %v3553 = vshrl.u32 920167782, %v3541
        %v3554 = vor.u32 %v3552, %v3553
        %v3555 = vshll.u32 920167782, %v3540
        %v3556 = vshrl.u32 1326507024, %v3541
        %v3557 = vor.u32 %v3555, %v3556
        %vm3558 = vcmp.lt.s32.totalorder %v3539, 1
        %vm3559 = vcmp.lt.s32.totalorder %v3539, 2
        %vm3560 = vcmp.lt.s32.totalorder %v3539, 3
        %vm3561 = vcmp.lt.s32.totalorder %v3539, 4
        %v3562 = vsel %vm3558, %v3542, %v3545
        %v3563 = vsel %vm3561, %v3551, 2102212464
        %v3564 = vsel %vm3560, %v3548, %v3563
        %v3565 = vsel %vm3559, %v3562, %v3564
        %v3566 = vsel %vm3558, %v3545, %v3548
        %v3567 = vsel %vm3561, %v3554, 920167782
        %v3568 = vsel %vm3560, %v3551, %v3567
        %v3569 = vsel %vm3559, %v3566, %v3568
        %v3570 = vsel %vm3558, %v3548, %v3551
        %v3571 = vsel %vm3561, %v3557, 1326507024
        %v3572 = vsel %vm3560, %v3554, %v3571
        %v3573 = vsel %vm3559, %v3570, %v3572
        %v3574 = vshll.u32 %v3534, 8
        %v3575 = vmul.u32.u64.compose %v3574, %v3573
        %v3576 = vextract.low.u32 %v3575
        %v3577 = vextract.high.u32 %v3575
        %v3578 = vmul.u32.u64.compose %v3574, %v3569
        %v3579 = vextract.low.u32 %v3578
        %v3580 = vextract.high.u32 %v3578
        %v3581 = vmul.u32 %v3574, %v3565
        %v3582 = vadd.s32 %v3577, %v3579
        %vm3583 = vc.u32 %v3577, %v3579
        %v3584 = vadd.s32 %v3580, 1
        %v3585 = vsel %vm3583, %v3584, %v3580
        %v3586 = vadd.s32 %v3581, %v3585
        %v3587 = vadd.s32 %v3586, 536870912
        %v3588 = vshrl.u32 %v3587, 30
        %v3589 = vshll.u32 %v3588, 30
        %v3590 = vsub.s32 %v3586, %v3589
        %vm3591 = vcmp.lt.s32.totalorder %v3590, 0
        %v3592 = vsub.s32 0, %v3590
        %v3593 = vsel %vm3591, %v3592, %v3590
        %v3594 = vclz %v3593
        %v3595 = vsub.s32 %v3594, 2
        %vm3596 = vcmp.gt.s32.totalorder 0, %v3595
        %v3597 = vsel %vm3596, 0, %v3595
        %v3598 = vsub.s32 32, %v3597
        %v3599 = vshll.u32 %v3590, %v3597
        %v3600 = vshrl.u32 %v3582, %v3598
        %v3601 = vor.u32 %v3599, %v3600
        %v3602 = vsub.s32 4294967266, %v3597
        %v3603 = vadd.s32 %v3602, 127
        %v3604 = vshll.u32 %v3603, 23
        %v3605 = vor.u32 4788187, %v3604
        %v3606 = vand.u32 2147483647, %v3605
        %v3608 = vcvt.s32.f32 %v3601
        %v3609 = vmul.f32 %v3608, %v3606
        %v3610 = vxor.u32 %v3609, 2147483648
        %v3611 = vsel %vm3528, %v3610, %v3609
        %v3612 = vsub.s32 4, %v3588
        %v3613 = vsel %vm3528, %v3612, %v3588
        %v3614 = vsel %vm3527, %v638, %v3611
        %v3615 = vsel %vm3527, 0, %v3613
        %v3616 = vcosq.f32.pop %v3614
        %v3617 = vsinq.f32.pop %v3614
        %vm3618 = vweird.f32 %v638
        %v3619 = vand.u32 %v3615, 3
        %vm3620 = vcmp.lt.s32.totalorder %v3619, 2
        %vm3621 = vcmp.eq.s32.totalorder %v3619, 0
        %v3622 = vxor.u32 %v3617, 2147483648
        %v3623 = vsel %vm3621, %v3616, %v3622
        %vm3624 = vcmp.eq.s32.totalorder %v3619, 2
        %v3625 = vxor.u32 %v3616, 2147483648
        %v3626 = vsel %vm3624, %v3625, %v3617
        %v3627 = vsel %vm3620, %v3623, %v3626
        %v3628 = vsel %vm3618, nan, %v3627
        %v3629 = vand.u32 2147483647, %v639
        %vm3630 = vcmp.le.f32.partialorder %v3629, 0.7853982
        %vm3631 = vcmp.lt.s32.totalorder %v639, 0
        %v3632 = vand.u32 %v639, 2139095040
        %v3633 = vshrl.u32 %v3632, 23
        %v3634 = vsub.s32 %v3633, 127
        %v3635 = vand.u32 2147483647, %v639
        %v3636 = vand.u32 %v3635, 8388607
        %v3637 = vor.u32 %v3636, 8388608
        %v3638 = vsub.s32 0, %v3637
        %v3639 = vadd.s32 %v3634, 1
        %vm3640 = vcmp.gt.s32.totalorder %v3639, 0
        %v3641 = vsel %vm3640, %v3639, 0
        %v3642 = vshrl.u32 %v3641, 5
        %v3643 = vand.u32 %v3641, 31
        %v3644 = vsub.s32 32, %v3643
        %v3645 = vshrl.u32 683565275, %v3644
        %v3646 = vshll.u32 683565275, %v3643
        %v3647 = vshrl.u32 2475754826, %v3644
        %v3648 = vor.u32 %v3646, %v3647
        %v3649 = vshll.u32 2475754826, %v3643
        %v3650 = vshrl.u32 2131351028, %v3644
        %v3651 = vor.u32 %v3649, %v3650
        %v3652 = vshll.u32 2131351028, %v3643
        %v3653 = vshrl.u32 2102212464, %v3644
        %v3654 = vor.u32 %v3652, %v3653
        %v3655 = vshll.u32 2102212464, %v3643
        %v3656 = vshrl.u32 920167782, %v3644
        %v3657 = vor.u32 %v3655, %v3656
        %v3658 = vshll.u32 920167782, %v3643
        %v3659 = vshrl.u32 1326507024, %v3644
        %v3660 = vor.u32 %v3658, %v3659
        %vm3661 = vcmp.lt.s32.totalorder %v3642, 1
        %vm3662 = vcmp.lt.s32.totalorder %v3642, 2
        %vm3663 = vcmp.lt.s32.totalorder %v3642, 3
        %vm3664 = vcmp.lt.s32.totalorder %v3642, 4
        %v3665 = vsel %vm3661, %v3645, %v3648
        %v3666 = vsel %vm3664, %v3654, 2102212464
        %v3667 = vsel %vm3663, %v3651, %v3666
        %v3668 = vsel %vm3662, %v3665, %v3667
        %v3669 = vsel %vm3661, %v3648, %v3651
        %v3670 = vsel %vm3664, %v3657, 920167782
        %v3671 = vsel %vm3663, %v3654, %v3670
        %v3672 = vsel %vm3662, %v3669, %v3671
        %v3673 = vsel %vm3661, %v3651, %v3654
        %v3674 = vsel %vm3664, %v3660, 1326507024
        %v3675 = vsel %vm3663, %v3657, %v3674
        %v3676 = vsel %vm3662, %v3673, %v3675
        %v3677 = vshll.u32 %v3637, 8
        %v3678 = vmul.u32.u64.compose %v3677, %v3676
        %v3679 = vextract.low.u32 %v3678
        %v3680 = vextract.high.u32 %v3678
        %v3681 = vmul.u32.u64.compose %v3677, %v3672
        %v3682 = vextract.low.u32 %v3681
        %v3683 = vextract.high.u32 %v3681
        %v3684 = vmul.u32 %v3677, %v3668
        %v3685 = vadd.s32 %v3680, %v3682
        %vm3686 = vc.u32 %v3680, %v3682
        %v3687 = vadd.s32 %v3683, 1
        %v3688 = vsel %vm3686, %v3687, %v3683
        %v3689 = vadd.s32 %v3684, %v3688
        %v3690 = vadd.s32 %v3689, 536870912
        %v3691 = vshrl.u32 %v3690, 30
        %v3692 = vshll.u32 %v3691, 30
        %v3693 = vsub.s32 %v3689, %v3692
        %vm3694 = vcmp.lt.s32.totalorder %v3693, 0
        %v3695 = vsub.s32 0, %v3693
        %v3696 = vsel %vm3694, %v3695, %v3693
        %v3697 = vclz %v3696
        %v3698 = vsub.s32 %v3697, 2
        %vm3699 = vcmp.gt.s32.totalorder 0, %v3698
        %v3700 = vsel %vm3699, 0, %v3698
        %v3701 = vsub.s32 32, %v3700
        %v3702 = vshll.u32 %v3693, %v3700
        %v3703 = vshrl.u32 %v3685, %v3701
        %v3704 = vor.u32 %v3702, %v3703
        %v3705 = vsub.s32 4294967266, %v3700
        %v3706 = vadd.s32 %v3705, 127
        %v3707 = vshll.u32 %v3706, 23
        %v3708 = vor.u32 4788187, %v3707
        %v3709 = vand.u32 2147483647, %v3708
        %v3711 = vcvt.s32.f32 %v3704
        %v3712 = vmul.f32 %v3711, %v3709
        %v3713 = vxor.u32 %v3712, 2147483648
        %v3714 = vsel %vm3631, %v3713, %v3712
        %v3715 = vsub.s32 4, %v3691
        %v3716 = vsel %vm3631, %v3715, %v3691
        %v3717 = vsel %vm3630, %v639, %v3714
        %v3718 = vsel %vm3630, 0, %v3716
        %v3719 = vcosq.f32.pop %v3717
        %v3720 = vsinq.f32.pop %v3717
        %vm3721 = vweird.f32 %v639
        %v3722 = vand.u32 %v3718, 3
        %vm3723 = vcmp.lt.s32.totalorder %v3722, 2
        %vm3724 = vcmp.eq.s32.totalorder %v3722, 0
        %v3725 = vxor.u32 %v3720, 2147483648
        %v3726 = vsel %vm3724, %v3719, %v3725
        %vm3727 = vcmp.eq.s32.totalorder %v3722, 2
        %v3728 = vxor.u32 %v3719, 2147483648
        %v3729 = vsel %vm3727, %v3728, %v3720
        %v3730 = vsel %vm3723, %v3726, %v3729
        %v3731 = vsel %vm3721, nan, %v3730
        %v3732 = vand.u32 2147483647, %v640
        %vm3733 = vcmp.le.f32.partialorder %v3732, 0.7853982
        %vm3734 = vcmp.lt.s32.totalorder %v640, 0
        %v3735 = vand.u32 %v640, 2139095040
        %v3736 = vshrl.u32 %v3735, 23
        %v3737 = vsub.s32 %v3736, 127
        %v3738 = vand.u32 2147483647, %v640
        %v3739 = vand.u32 %v3738, 8388607
        %v3740 = vor.u32 %v3739, 8388608
        %v3741 = vsub.s32 0, %v3740
        %v3742 = vadd.s32 %v3737, 1
        %vm3743 = vcmp.gt.s32.totalorder %v3742, 0
        %v3744 = vsel %vm3743, %v3742, 0
        %v3745 = vshrl.u32 %v3744, 5
        %v3746 = vand.u32 %v3744, 31
        %v3747 = vsub.s32 32, %v3746
        %v3748 = vshrl.u32 683565275, %v3747
        %v3749 = vshll.u32 683565275, %v3746
        %v3750 = vshrl.u32 2475754826, %v3747
        %v3751 = vor.u32 %v3749, %v3750
        %v3752 = vshll.u32 2475754826, %v3746
        %v3753 = vshrl.u32 2131351028, %v3747
        %v3754 = vor.u32 %v3752, %v3753
        %v3755 = vshll.u32 2131351028, %v3746
        %v3756 = vshrl.u32 2102212464, %v3747
        %v3757 = vor.u32 %v3755, %v3756
        %v3758 = vshll.u32 2102212464, %v3746
        %v3759 = vshrl.u32 920167782, %v3747
        %v3760 = vor.u32 %v3758, %v3759
        %v3761 = vshll.u32 920167782, %v3746
        %v3762 = vshrl.u32 1326507024, %v3747
        %v3763 = vor.u32 %v3761, %v3762
        %vm3764 = vcmp.lt.s32.totalorder %v3745, 1
        %vm3765 = vcmp.lt.s32.totalorder %v3745, 2
        %vm3766 = vcmp.lt.s32.totalorder %v3745, 3
        %vm3767 = vcmp.lt.s32.totalorder %v3745, 4
        %v3768 = vsel %vm3764, %v3748, %v3751
        %v3769 = vsel %vm3767, %v3757, 2102212464
        %v3770 = vsel %vm3766, %v3754, %v3769
        %v3771 = vsel %vm3765, %v3768, %v3770
        %v3772 = vsel %vm3764, %v3751, %v3754
        %v3773 = vsel %vm3767, %v3760, 920167782
        %v3774 = vsel %vm3766, %v3757, %v3773
        %v3775 = vsel %vm3765, %v3772, %v3774
        %v3776 = vsel %vm3764, %v3754, %v3757
        %v3777 = vsel %vm3767, %v3763, 1326507024
        %v3778 = vsel %vm3766, %v3760, %v3777
        %v3779 = vsel %vm3765, %v3776, %v3778
        %v3780 = vshll.u32 %v3740, 8
        %v3781 = vmul.u32.u64.compose %v3780, %v3779
        %v3782 = vextract.low.u32 %v3781
        %v3783 = vextract.high.u32 %v3781
        %v3784 = vmul.u32.u64.compose %v3780, %v3775
        %v3785 = vextract.low.u32 %v3784
        %v3786 = vextract.high.u32 %v3784
        %v3787 = vmul.u32 %v3780, %v3771
        %v3788 = vadd.s32 %v3783, %v3785
        %vm3789 = vc.u32 %v3783, %v3785
        %v3790 = vadd.s32 %v3786, 1
        %v3791 = vsel %vm3789, %v3790, %v3786
        %v3792 = vadd.s32 %v3787, %v3791
        %v3793 = vadd.s32 %v3792, 536870912
        %v3794 = vshrl.u32 %v3793, 30
        %v3795 = vshll.u32 %v3794, 30
        %v3796 = vsub.s32 %v3792, %v3795
        %vm3797 = vcmp.lt.s32.totalorder %v3796, 0
        %v3798 = vsub.s32 0, %v3796
        %v3799 = vsel %vm3797, %v3798, %v3796
        %v3800 = vclz %v3799
        %v3801 = vsub.s32 %v3800, 2
        %vm3802 = vcmp.gt.s32.totalorder 0, %v3801
        %v3803 = vsel %vm3802, 0, %v3801
        %v3804 = vsub.s32 32, %v3803
        %v3805 = vshll.u32 %v3796, %v3803
        %v3806 = vshrl.u32 %v3788, %v3804
        %v3807 = vor.u32 %v3805, %v3806
        %v3808 = vsub.s32 4294967266, %v3803
        %v3809 = vadd.s32 %v3808, 127
        %v3810 = vshll.u32 %v3809, 23
        %v3811 = vor.u32 4788187, %v3810
        %v3812 = vand.u32 2147483647, %v3811
        %v3814 = vcvt.s32.f32 %v3807
        %v3815 = vmul.f32 %v3814, %v3812
        %v3816 = vxor.u32 %v3815, 2147483648
        %v3817 = vsel %vm3734, %v3816, %v3815
        %v3818 = vsub.s32 4, %v3794
        %v3819 = vsel %vm3734, %v3818, %v3794
        %v3820 = vsel %vm3733, %v640, %v3817
        %v3821 = vsel %vm3733, 0, %v3819
        %v3822 = vcosq.f32.pop %v3820
        %v3823 = vsinq.f32.pop %v3820
        %vm3824 = vweird.f32 %v640
        %v3825 = vand.u32 %v3821, 3
        %vm3826 = vcmp.lt.s32.totalorder %v3825, 2
        %vm3827 = vcmp.eq.s32.totalorder %v3825, 0
        %v3828 = vxor.u32 %v3823, 2147483648
        %v3829 = vsel %vm3827, %v3822, %v3828
        %vm3830 = vcmp.eq.s32.totalorder %v3825, 2
        %v3831 = vxor.u32 %v3822, 2147483648
        %v3832 = vsel %vm3830, %v3831, %v3823
        %v3833 = vsel %vm3826, %v3829, %v3832
        %v3834 = vsel %vm3824, nan, %v3833
        %v3835 = vand.u32 2147483647, %v641
        %vm3836 = vcmp.le.f32.partialorder %v3835, 0.7853982
        %vm3837 = vcmp.lt.s32.totalorder %v641, 0
        %v3838 = vand.u32 %v641, 2139095040
        %v3839 = vshrl.u32 %v3838, 23
        %v3840 = vsub.s32 %v3839, 127
        %v3841 = vand.u32 2147483647, %v641
        %v3842 = vand.u32 %v3841, 8388607
        %v3843 = vor.u32 %v3842, 8388608
        %v3844 = vsub.s32 0, %v3843
        %v3845 = vadd.s32 %v3840, 1
        %vm3846 = vcmp.gt.s32.totalorder %v3845, 0
        %v3847 = vsel %vm3846, %v3845, 0
        %v3848 = vshrl.u32 %v3847, 5
        %v3849 = vand.u32 %v3847, 31
        %v3850 = vsub.s32 32, %v3849
        %v3851 = vshrl.u32 683565275, %v3850
        %v3852 = vshll.u32 683565275, %v3849
        %v3853 = vshrl.u32 2475754826, %v3850
        %v3854 = vor.u32 %v3852, %v3853
        %v3855 = vshll.u32 2475754826, %v3849
        %v3856 = vshrl.u32 2131351028, %v3850
        %v3857 = vor.u32 %v3855, %v3856
        %v3858 = vshll.u32 2131351028, %v3849
        %v3859 = vshrl.u32 2102212464, %v3850
        %v3860 = vor.u32 %v3858, %v3859
        %v3861 = vshll.u32 2102212464, %v3849
        %v3862 = vshrl.u32 920167782, %v3850
        %v3863 = vor.u32 %v3861, %v3862
        %v3864 = vshll.u32 920167782, %v3849
        %v3865 = vshrl.u32 1326507024, %v3850
        %v3866 = vor.u32 %v3864, %v3865
        %vm3867 = vcmp.lt.s32.totalorder %v3848, 1
        %vm3868 = vcmp.lt.s32.totalorder %v3848, 2
        %vm3869 = vcmp.lt.s32.totalorder %v3848, 3
        %vm3870 = vcmp.lt.s32.totalorder %v3848, 4
        %v3871 = vsel %vm3867, %v3851, %v3854
        %v3872 = vsel %vm3870, %v3860, 2102212464
        %v3873 = vsel %vm3869, %v3857, %v3872
        %v3874 = vsel %vm3868, %v3871, %v3873
        %v3875 = vsel %vm3867, %v3854, %v3857
        %v3876 = vsel %vm3870, %v3863, 920167782
        %v3877 = vsel %vm3869, %v3860, %v3876
        %v3878 = vsel %vm3868, %v3875, %v3877
        %v3879 = vsel %vm3867, %v3857, %v3860
        %v3880 = vsel %vm3870, %v3866, 1326507024
        %v3881 = vsel %vm3869, %v3863, %v3880
        %v3882 = vsel %vm3868, %v3879, %v3881
        %v3883 = vshll.u32 %v3843, 8
        %v3884 = vmul.u32.u64.compose %v3883, %v3882
        %v3885 = vextract.low.u32 %v3884
        %v3886 = vextract.high.u32 %v3884
        %v3887 = vmul.u32.u64.compose %v3883, %v3878
        %v3888 = vextract.low.u32 %v3887
        %v3889 = vextract.high.u32 %v3887
        %v3890 = vmul.u32 %v3883, %v3874
        %v3891 = vadd.s32 %v3886, %v3888
        %vm3892 = vc.u32 %v3886, %v3888
        %v3893 = vadd.s32 %v3889, 1
        %v3894 = vsel %vm3892, %v3893, %v3889
        %v3895 = vadd.s32 %v3890, %v3894
        %v3896 = vadd.s32 %v3895, 536870912
        %v3897 = vshrl.u32 %v3896, 30
        %v3898 = vshll.u32 %v3897, 30
        %v3899 = vsub.s32 %v3895, %v3898
        %vm3900 = vcmp.lt.s32.totalorder %v3899, 0
        %v3901 = vsub.s32 0, %v3899
        %v3902 = vsel %vm3900, %v3901, %v3899
        %v3903 = vclz %v3902
        %v3904 = vsub.s32 %v3903, 2
        %vm3905 = vcmp.gt.s32.totalorder 0, %v3904
        %v3906 = vsel %vm3905, 0, %v3904
        %v3907 = vsub.s32 32, %v3906
        %v3908 = vshll.u32 %v3899, %v3906
        %v3909 = vshrl.u32 %v3891, %v3907
        %v3910 = vor.u32 %v3908, %v3909
        %v3911 = vsub.s32 4294967266, %v3906
        %v3912 = vadd.s32 %v3911, 127
        %v3913 = vshll.u32 %v3912, 23
        %v3914 = vor.u32 4788187, %v3913
        %v3915 = vand.u32 2147483647, %v3914
        %v3917 = vcvt.s32.f32 %v3910
        %v3918 = vmul.f32 %v3917, %v3915
        %v3919 = vxor.u32 %v3918, 2147483648
        %v3920 = vsel %vm3837, %v3919, %v3918
        %v3921 = vsub.s32 4, %v3897
        %v3922 = vsel %vm3837, %v3921, %v3897
        %v3923 = vsel %vm3836, %v641, %v3920
        %v3924 = vsel %vm3836, 0, %v3922
        %v3925 = vcosq.f32.pop %v3923
        %v3926 = vsinq.f32.pop %v3923
        %vm3927 = vweird.f32 %v641
        %v3928 = vand.u32 %v3924, 3
        %vm3929 = vcmp.lt.s32.totalorder %v3928, 2
        %vm3930 = vcmp.eq.s32.totalorder %v3928, 0
        %v3931 = vxor.u32 %v3926, 2147483648
        %v3932 = vsel %vm3930, %v3925, %v3931
        %vm3933 = vcmp.eq.s32.totalorder %v3928, 2
        %v3934 = vxor.u32 %v3925, 2147483648
        %v3935 = vsel %vm3933, %v3934, %v3926
        %v3936 = vsel %vm3929, %v3932, %v3935
        %v3937 = vsel %vm3927, nan, %v3936
        %3938 = vst [vmem:[%s168] sm:$0xff] %v744
        %3939 = vst [vmem:[%s168 + $0x8] sm:$0xff] %v847
        %3940 = vst [vmem:[%s168 + $0x10] sm:$0xff] %v950
        %3941 = vst [vmem:[%s168 + $0x18] sm:$0xff] %v1053
        %3942 = vst [vmem:[%s168 + $0x20] sm:$0xff] %v1156
        %3943 = vst [vmem:[%s168 + $0x28] sm:$0xff] %v1259
        %3944 = vst [vmem:[%s168 + $0x30] sm:$0xff] %v1362
        %3945 = vst [vmem:[%s168 + $0x38] sm:$0xff] %v1465
        %3946 = vst [vmem:[%s168 + $0x40] sm:$0xff] %v1568
        %3947 = vst [vmem:[%s168 + $0x48] sm:$0xff] %v1671
        %3948 = vst [vmem:[%s168 + $0x50] sm:$0xff] %v1774
        %3949 = vst [vmem:[%s168 + $0x58] sm:$0xff] %v1877
        %3950 = vst [vmem:[%s168 + $0x60] sm:$0xff] %v1980
        %3951 = vst [vmem:[%s168 + $0x68] sm:$0xff] %v2083
        %3952 = vst [vmem:[%s168 + $0x70] sm:$0xff] %v2186
        %3953 = vst [vmem:[%s168 + $0x78] sm:$0xff] %v2289
        %3954 = vst [vmem:[%s168 + $0x80] sm:$0xff] %v2392
        %3955 = vst [vmem:[%s168 + $0x88] sm:$0xff] %v2495
        %3956 = vst [vmem:[%s168 + $0x90] sm:$0xff] %v2598
        %3957 = vst [vmem:[%s168 + $0x98] sm:$0xff] %v2701
        %3958 = vst [vmem:[%s168 + $0xa0] sm:$0xff] %v2804
        %3959 = vst [vmem:[%s168 + $0xa8] sm:$0xff] %v2907
        %3960 = vst [vmem:[%s168 + $0xb0] sm:$0xff] %v3010
        %3961 = vst [vmem:[%s168 + $0xb8] sm:$0xff] %v3113
        %3962 = vst [vmem:[%s168 + $0xc0] sm:$0xff] %v3216
        %3963 = vst [vmem:[%s168 + $0xc8] sm:$0xff] %v3319
        %3964 = vst [vmem:[%s168 + $0xd0] sm:$0xff] %v3422
        %3965 = vst [vmem:[%s168 + $0xd8] sm:$0xff] %v3525
        %3966 = vst [vmem:[%s168 + $0xe0] sm:$0xff] %v3628
        %3967 = vst [vmem:[%s168 + $0xe8] sm:$0xff] %v3731
        %3968 = vst [vmem:[%s168 + $0xf0] sm:$0xff] %v3834
        %3969 = vst [vmem:[%s168 + $0xf8] sm:$0xff] %v3937
        %v3970 = vand.u32 2147483647, %v610
        %vm3971 = vcmp.le.f32.partialorder %v3970, 0.7853982
        %vm3972 = vcmp.lt.s32.totalorder %v610, 0
        %v3973 = vand.u32 %v610, 2139095040
        %v3974 = vshrl.u32 %v3973, 23
        %v3975 = vsub.s32 %v3974, 127
        %v3976 = vand.u32 2147483647, %v610
        %v3977 = vand.u32 %v3976, 8388607
        %v3978 = vor.u32 %v3977, 8388608
        %v3979 = vsub.s32 0, %v3978
        %v3980 = vadd.s32 %v3975, 1
        %vm3981 = vcmp.gt.s32.totalorder %v3980, 0
        %v3982 = vsel %vm3981, %v3980, 0
        %v3983 = vshrl.u32 %v3982, 5
        %v3984 = vand.u32 %v3982, 31
        %v3985 = vsub.s32 32, %v3984
        %v3986 = vshrl.u32 683565275, %v3985
        %v3987 = vshll.u32 683565275, %v3984
        %v3988 = vshrl.u32 2475754826, %v3985
        %v3989 = vor.u32 %v3987, %v3988
        %v3990 = vshll.u32 2475754826, %v3984
        %v3991 = vshrl.u32 2131351028, %v3985
        %v3992 = vor.u32 %v3990, %v3991
        %v3993 = vshll.u32 2131351028, %v3984
        %v3994 = vshrl.u32 2102212464, %v3985
        %v3995 = vor.u32 %v3993, %v3994
        %v3996 = vshll.u32 2102212464, %v3984
        %v3997 = vshrl.u32 920167782, %v3985
        %v3998 = vor.u32 %v3996, %v3997
        %v3999 = vshll.u32 920167782, %v3984
        %v4000 = vshrl.u32 1326507024, %v3985
        %v4001 = vor.u32 %v3999, %v4000
        %vm4002 = vcmp.lt.s32.totalorder %v3983, 1
        %vm4003 = vcmp.lt.s32.totalorder %v3983, 2
        %vm4004 = vcmp.lt.s32.totalorder %v3983, 3
        %vm4005 = vcmp.lt.s32.totalorder %v3983, 4
        %v4006 = vsel %vm4002, %v3986, %v3989
        %v4007 = vsel %vm4005, %v3995, 2102212464
        %v4008 = vsel %vm4004, %v3992, %v4007
        %v4009 = vsel %vm4003, %v4006, %v4008
        %v4010 = vsel %vm4002, %v3989, %v3992
        %v4011 = vsel %vm4005, %v3998, 920167782
        %v4012 = vsel %vm4004, %v3995, %v4011
        %v4013 = vsel %vm4003, %v4010, %v4012
        %v4014 = vsel %vm4002, %v3992, %v3995
        %v4015 = vsel %vm4005, %v4001, 1326507024
        %v4016 = vsel %vm4004, %v3998, %v4015
        %v4017 = vsel %vm4003, %v4014, %v4016
        %v4018 = vshll.u32 %v3978, 8
        %v4019 = vmul.u32.u64.compose %v4018, %v4017
        %v4020 = vextract.low.u32 %v4019
        %v4021 = vextract.high.u32 %v4019
        %v4022 = vmul.u32.u64.compose %v4018, %v4013
        %v4023 = vextract.low.u32 %v4022
        %v4024 = vextract.high.u32 %v4022
        %v4025 = vmul.u32 %v4018, %v4009
        %v4026 = vadd.s32 %v4021, %v4023
        %vm4027 = vc.u32 %v4021, %v4023
        %v4028 = vadd.s32 %v4024, 1
        %v4029 = vsel %vm4027, %v4028, %v4024
        %v4030 = vadd.s32 %v4025, %v4029
        %v4031 = vadd.s32 %v4030, 536870912
        %v4032 = vshrl.u32 %v4031, 30
        %v4033 = vshll.u32 %v4032, 30
        %v4034 = vsub.s32 %v4030, %v4033
        %vm4035 = vcmp.lt.s32.totalorder %v4034, 0
        %v4036 = vsub.s32 0, %v4034
        %v4037 = vsel %vm4035, %v4036, %v4034
        %v4038 = vclz %v4037
        %v4039 = vsub.s32 %v4038, 2
        %vm4040 = vcmp.gt.s32.totalorder 0, %v4039
        %v4041 = vsel %vm4040, 0, %v4039
        %v4042 = vsub.s32 32, %v4041
        %v4043 = vshll.u32 %v4034, %v4041
        %v4044 = vshrl.u32 %v4026, %v4042
        %v4045 = vor.u32 %v4043, %v4044
        %v4046 = vsub.s32 4294967266, %v4041
        %v4047 = vadd.s32 %v4046, 127
        %v4048 = vshll.u32 %v4047, 23
        %v4049 = vor.u32 4788187, %v4048
        %v4050 = vand.u32 2147483647, %v4049
        %v4052 = vcvt.s32.f32 %v4045
        %v4053 = vmul.f32 %v4052, %v4050
        %v4054 = vxor.u32 %v4053, 2147483648
        %v4055 = vsel %vm3972, %v4054, %v4053
        %v4056 = vsub.s32 4, %v4032
        %v4057 = vsel %vm3972, %v4056, %v4032
        %v4058 = vsel %vm3971, %v610, %v4055
        %v4059 = vsel %vm3971, 0, %v4057
        %v4060 = vcosq.f32.pop %v4058
        %v4061 = vsinq.f32.pop %v4058
        %vm4062 = vweird.f32 %v610
        %v4063 = vadd.s32 %v4059, 3
        %v4064 = vand.u32 %v4063, 3
        %vm4065 = vcmp.lt.s32.totalorder %v4064, 2
        %vm4066 = vcmp.eq.s32.totalorder %v4064, 0
        %v4067 = vxor.u32 %v4061, 2147483648
        %v4068 = vsel %vm4066, %v4060, %v4067
        %vm4069 = vcmp.eq.s32.totalorder %v4064, 2
        %v4070 = vxor.u32 %v4060, 2147483648
        %v4071 = vsel %vm4069, %v4070, %v4061
        %v4072 = vsel %vm4065, %v4068, %v4071
        %v4073 = vsel %vm4062, nan, %v4072
        %v4074 = vand.u32 2147483647, %v611
        %vm4075 = vcmp.le.f32.partialorder %v4074, 0.7853982
        %vm4076 = vcmp.lt.s32.totalorder %v611, 0
        %v4077 = vand.u32 %v611, 2139095040
        %v4078 = vshrl.u32 %v4077, 23
        %v4079 = vsub.s32 %v4078, 127
        %v4080 = vand.u32 2147483647, %v611
        %v4081 = vand.u32 %v4080, 8388607
        %v4082 = vor.u32 %v4081, 8388608
        %v4083 = vsub.s32 0, %v4082
        %v4084 = vadd.s32 %v4079, 1
        %vm4085 = vcmp.gt.s32.totalorder %v4084, 0
        %v4086 = vsel %vm4085, %v4084, 0
        %v4087 = vshrl.u32 %v4086, 5
        %v4088 = vand.u32 %v4086, 31
        %v4089 = vsub.s32 32, %v4088
        %v4090 = vshrl.u32 683565275, %v4089
        %v4091 = vshll.u32 683565275, %v4088
        %v4092 = vshrl.u32 2475754826, %v4089
        %v4093 = vor.u32 %v4091, %v4092
        %v4094 = vshll.u32 2475754826, %v4088
        %v4095 = vshrl.u32 2131351028, %v4089
        %v4096 = vor.u32 %v4094, %v4095
        %v4097 = vshll.u32 2131351028, %v4088
        %v4098 = vshrl.u32 2102212464, %v4089
        %v4099 = vor.u32 %v4097, %v4098
        %v4100 = vshll.u32 2102212464, %v4088
        %v4101 = vshrl.u32 920167782, %v4089
        %v4102 = vor.u32 %v4100, %v4101
        %v4103 = vshll.u32 920167782, %v4088
        %v4104 = vshrl.u32 1326507024, %v4089
        %v4105 = vor.u32 %v4103, %v4104
        %vm4106 = vcmp.lt.s32.totalorder %v4087, 1
        %vm4107 = vcmp.lt.s32.totalorder %v4087, 2
        %vm4108 = vcmp.lt.s32.totalorder %v4087, 3
        %vm4109 = vcmp.lt.s32.totalorder %v4087, 4
        %v4110 = vsel %vm4106, %v4090, %v4093
        %v4111 = vsel %vm4109, %v4099, 2102212464
        %v4112 = vsel %vm4108, %v4096, %v4111
        %v4113 = vsel %vm4107, %v4110, %v4112
        %v4114 = vsel %vm4106, %v4093, %v4096
        %v4115 = vsel %vm4109, %v4102, 920167782
        %v4116 = vsel %vm4108, %v4099, %v4115
        %v4117 = vsel %vm4107, %v4114, %v4116
        %v4118 = vsel %vm4106, %v4096, %v4099
        %v4119 = vsel %vm4109, %v4105, 1326507024
        %v4120 = vsel %vm4108, %v4102, %v4119
        %v4121 = vsel %vm4107, %v4118, %v4120
        %v4122 = vshll.u32 %v4082, 8
        %v4123 = vmul.u32.u64.compose %v4122, %v4121
        %v4124 = vextract.low.u32 %v4123
        %v4125 = vextract.high.u32 %v4123
        %v4126 = vmul.u32.u64.compose %v4122, %v4117
        %v4127 = vextract.low.u32 %v4126
        %v4128 = vextract.high.u32 %v4126
        %v4129 = vmul.u32 %v4122, %v4113
        %v4130 = vadd.s32 %v4125, %v4127
        %vm4131 = vc.u32 %v4125, %v4127
        %v4132 = vadd.s32 %v4128, 1
        %v4133 = vsel %vm4131, %v4132, %v4128
        %v4134 = vadd.s32 %v4129, %v4133
        %v4135 = vadd.s32 %v4134, 536870912
        %v4136 = vshrl.u32 %v4135, 30
        %v4137 = vshll.u32 %v4136, 30
        %v4138 = vsub.s32 %v4134, %v4137
        %vm4139 = vcmp.lt.s32.totalorder %v4138, 0
        %v4140 = vsub.s32 0, %v4138
        %v4141 = vsel %vm4139, %v4140, %v4138
        %v4142 = vclz %v4141
        %v4143 = vsub.s32 %v4142, 2
        %vm4144 = vcmp.gt.s32.totalorder 0, %v4143
        %v4145 = vsel %vm4144, 0, %v4143
        %v4146 = vsub.s32 32, %v4145
        %v4147 = vshll.u32 %v4138, %v4145
        %v4148 = vshrl.u32 %v4130, %v4146
        %v4149 = vor.u32 %v4147, %v4148
        %v4150 = vsub.s32 4294967266, %v4145
        %v4151 = vadd.s32 %v4150, 127
        %v4152 = vshll.u32 %v4151, 23
        %v4153 = vor.u32 4788187, %v4152
        %v4154 = vand.u32 2147483647, %v4153
        %v4156 = vcvt.s32.f32 %v4149
        %v4157 = vmul.f32 %v4156, %v4154
        %v4158 = vxor.u32 %v4157, 2147483648
        %v4159 = vsel %vm4076, %v4158, %v4157
        %v4160 = vsub.s32 4, %v4136
        %v4161 = vsel %vm4076, %v4160, %v4136
        %v4162 = vsel %vm4075, %v611, %v4159
        %v4163 = vsel %vm4075, 0, %v4161
        %v4164 = vcosq.f32.pop %v4162
        %v4165 = vsinq.f32.pop %v4162
        %vm4166 = vweird.f32 %v611
        %v4167 = vadd.s32 %v4163, 3
        %v4168 = vand.u32 %v4167, 3
        %vm4169 = vcmp.lt.s32.totalorder %v4168, 2
        %vm4170 = vcmp.eq.s32.totalorder %v4168, 0
        %v4171 = vxor.u32 %v4165, 2147483648
        %v4172 = vsel %vm4170, %v4164, %v4171
        %vm4173 = vcmp.eq.s32.totalorder %v4168, 2
        %v4174 = vxor.u32 %v4164, 2147483648
        %v4175 = vsel %vm4173, %v4174, %v4165
        %v4176 = vsel %vm4169, %v4172, %v4175
        %v4177 = vsel %vm4166, nan, %v4176
        %v4178 = vand.u32 2147483647, %v612
        %vm4179 = vcmp.le.f32.partialorder %v4178, 0.7853982
        %vm4180 = vcmp.lt.s32.totalorder %v612, 0
        %v4181 = vand.u32 %v612, 2139095040
        %v4182 = vshrl.u32 %v4181, 23
        %v4183 = vsub.s32 %v4182, 127
        %v4184 = vand.u32 2147483647, %v612
        %v4185 = vand.u32 %v4184, 8388607
        %v4186 = vor.u32 %v4185, 8388608
        %v4187 = vsub.s32 0, %v4186
        %v4188 = vadd.s32 %v4183, 1
        %vm4189 = vcmp.gt.s32.totalorder %v4188, 0
        %v4190 = vsel %vm4189, %v4188, 0
        %v4191 = vshrl.u32 %v4190, 5
        %v4192 = vand.u32 %v4190, 31
        %v4193 = vsub.s32 32, %v4192
        %v4194 = vshrl.u32 683565275, %v4193
        %v4195 = vshll.u32 683565275, %v4192
        %v4196 = vshrl.u32 2475754826, %v4193
        %v4197 = vor.u32 %v4195, %v4196
        %v4198 = vshll.u32 2475754826, %v4192
        %v4199 = vshrl.u32 2131351028, %v4193
        %v4200 = vor.u32 %v4198, %v4199
        %v4201 = vshll.u32 2131351028, %v4192
        %v4202 = vshrl.u32 2102212464, %v4193
        %v4203 = vor.u32 %v4201, %v4202
        %v4204 = vshll.u32 2102212464, %v4192
        %v4205 = vshrl.u32 920167782, %v4193
        %v4206 = vor.u32 %v4204, %v4205
        %v4207 = vshll.u32 920167782, %v4192
        %v4208 = vshrl.u32 1326507024, %v4193
        %v4209 = vor.u32 %v4207, %v4208
        %vm4210 = vcmp.lt.s32.totalorder %v4191, 1
        %vm4211 = vcmp.lt.s32.totalorder %v4191, 2
        %vm4212 = vcmp.lt.s32.totalorder %v4191, 3
        %vm4213 = vcmp.lt.s32.totalorder %v4191, 4
        %v4214 = vsel %vm4210, %v4194, %v4197
        %v4215 = vsel %vm4213, %v4203, 2102212464
        %v4216 = vsel %vm4212, %v4200, %v4215
        %v4217 = vsel %vm4211, %v4214, %v4216
        %v4218 = vsel %vm4210, %v4197, %v4200
        %v4219 = vsel %vm4213, %v4206, 920167782
        %v4220 = vsel %vm4212, %v4203, %v4219
        %v4221 = vsel %vm4211, %v4218, %v4220
        %v4222 = vsel %vm4210, %v4200, %v4203
        %v4223 = vsel %vm4213, %v4209, 1326507024
        %v4224 = vsel %vm4212, %v4206, %v4223
        %v4225 = vsel %vm4211, %v4222, %v4224
        %v4226 = vshll.u32 %v4186, 8
        %v4227 = vmul.u32.u64.compose %v4226, %v4225
        %v4228 = vextract.low.u32 %v4227
        %v4229 = vextract.high.u32 %v4227
        %v4230 = vmul.u32.u64.compose %v4226, %v4221
        %v4231 = vextract.low.u32 %v4230
        %v4232 = vextract.high.u32 %v4230
        %v4233 = vmul.u32 %v4226, %v4217
        %v4234 = vadd.s32 %v4229, %v4231
        %vm4235 = vc.u32 %v4229, %v4231
        %v4236 = vadd.s32 %v4232, 1
        %v4237 = vsel %vm4235, %v4236, %v4232
        %v4238 = vadd.s32 %v4233, %v4237
        %v4239 = vadd.s32 %v4238, 536870912
        %v4240 = vshrl.u32 %v4239, 30
        %v4241 = vshll.u32 %v4240, 30
        %v4242 = vsub.s32 %v4238, %v4241
        %vm4243 = vcmp.lt.s32.totalorder %v4242, 0
        %v4244 = vsub.s32 0, %v4242
        %v4245 = vsel %vm4243, %v4244, %v4242
        %v4246 = vclz %v4245
        %v4247 = vsub.s32 %v4246, 2
        %vm4248 = vcmp.gt.s32.totalorder 0, %v4247
        %v4249 = vsel %vm4248, 0, %v4247
        %v4250 = vsub.s32 32, %v4249
        %v4251 = vshll.u32 %v4242, %v4249
        %v4252 = vshrl.u32 %v4234, %v4250
        %v4253 = vor.u32 %v4251, %v4252
        %v4254 = vsub.s32 4294967266, %v4249
        %v4255 = vadd.s32 %v4254, 127
        %v4256 = vshll.u32 %v4255, 23
        %v4257 = vor.u32 4788187, %v4256
        %v4258 = vand.u32 2147483647, %v4257
        %v4260 = vcvt.s32.f32 %v4253
        %v4261 = vmul.f32 %v4260, %v4258
        %v4262 = vxor.u32 %v4261, 2147483648
        %v4263 = vsel %vm4180, %v4262, %v4261
        %v4264 = vsub.s32 4, %v4240
        %v4265 = vsel %vm4180, %v4264, %v4240
        %v4266 = vsel %vm4179, %v612, %v4263
        %v4267 = vsel %vm4179, 0, %v4265
        %v4268 = vcosq.f32.pop %v4266
        %v4269 = vsinq.f32.pop %v4266
        %vm4270 = vweird.f32 %v612
        %v4271 = vadd.s32 %v4267, 3
        %v4272 = vand.u32 %v4271, 3
        %vm4273 = vcmp.lt.s32.totalorder %v4272, 2
        %vm4274 = vcmp.eq.s32.totalorder %v4272, 0
        %v4275 = vxor.u32 %v4269, 2147483648
        %v4276 = vsel %vm4274, %v4268, %v4275
        %vm4277 = vcmp.eq.s32.totalorder %v4272, 2
        %v4278 = vxor.u32 %v4268, 2147483648
        %v4279 = vsel %vm4277, %v4278, %v4269
        %v4280 = vsel %vm4273, %v4276, %v4279
        %v4281 = vsel %vm4270, nan, %v4280
        %v4282 = vand.u32 2147483647, %v613
        %vm4283 = vcmp.le.f32.partialorder %v4282, 0.7853982
        %vm4284 = vcmp.lt.s32.totalorder %v613, 0
        %v4285 = vand.u32 %v613, 2139095040
        %v4286 = vshrl.u32 %v4285, 23
        %v4287 = vsub.s32 %v4286, 127
        %v4288 = vand.u32 2147483647, %v613
        %v4289 = vand.u32 %v4288, 8388607
        %v4290 = vor.u32 %v4289, 8388608
        %v4291 = vsub.s32 0, %v4290
        %v4292 = vadd.s32 %v4287, 1
        %vm4293 = vcmp.gt.s32.totalorder %v4292, 0
        %v4294 = vsel %vm4293, %v4292, 0
        %v4295 = vshrl.u32 %v4294, 5
        %v4296 = vand.u32 %v4294, 31
        %v4297 = vsub.s32 32, %v4296
        %v4298 = vshrl.u32 683565275, %v4297
        %v4299 = vshll.u32 683565275, %v4296
        %v4300 = vshrl.u32 2475754826, %v4297
        %v4301 = vor.u32 %v4299, %v4300
        %v4302 = vshll.u32 2475754826, %v4296
        %v4303 = vshrl.u32 2131351028, %v4297
        %v4304 = vor.u32 %v4302, %v4303
        %v4305 = vshll.u32 2131351028, %v4296
        %v4306 = vshrl.u32 2102212464, %v4297
        %v4307 = vor.u32 %v4305, %v4306
        %v4308 = vshll.u32 2102212464, %v4296
        %v4309 = vshrl.u32 920167782, %v4297
        %v4310 = vor.u32 %v4308, %v4309
        %v4311 = vshll.u32 920167782, %v4296
        %v4312 = vshrl.u32 1326507024, %v4297
        %v4313 = vor.u32 %v4311, %v4312
        %vm4314 = vcmp.lt.s32.totalorder %v4295, 1
        %vm4315 = vcmp.lt.s32.totalorder %v4295, 2
        %vm4316 = vcmp.lt.s32.totalorder %v4295, 3
        %vm4317 = vcmp.lt.s32.totalorder %v4295, 4
        %v4318 = vsel %vm4314, %v4298, %v4301
        %v4319 = vsel %vm4317, %v4307, 2102212464
        %v4320 = vsel %vm4316, %v4304, %v4319
        %v4321 = vsel %vm4315, %v4318, %v4320
        %v4322 = vsel %vm4314, %v4301, %v4304
        %v4323 = vsel %vm4317, %v4310, 920167782
        %v4324 = vsel %vm4316, %v4307, %v4323
        %v4325 = vsel %vm4315, %v4322, %v4324
        %v4326 = vsel %vm4314, %v4304, %v4307
        %v4327 = vsel %vm4317, %v4313, 1326507024
        %v4328 = vsel %vm4316, %v4310, %v4327
        %v4329 = vsel %vm4315, %v4326, %v4328
        %v4330 = vshll.u32 %v4290, 8
        %v4331 = vmul.u32.u64.compose %v4330, %v4329
        %v4332 = vextract.low.u32 %v4331
        %v4333 = vextract.high.u32 %v4331
        %v4334 = vmul.u32.u64.compose %v4330, %v4325
        %v4335 = vextract.low.u32 %v4334
        %v4336 = vextract.high.u32 %v4334
        %v4337 = vmul.u32 %v4330, %v4321
        %v4338 = vadd.s32 %v4333, %v4335
        %vm4339 = vc.u32 %v4333, %v4335
        %v4340 = vadd.s32 %v4336, 1
        %v4341 = vsel %vm4339, %v4340, %v4336
        %v4342 = vadd.s32 %v4337, %v4341
        %v4343 = vadd.s32 %v4342, 536870912
        %v4344 = vshrl.u32 %v4343, 30
        %v4345 = vshll.u32 %v4344, 30
        %v4346 = vsub.s32 %v4342, %v4345
        %vm4347 = vcmp.lt.s32.totalorder %v4346, 0
        %v4348 = vsub.s32 0, %v4346
        %v4349 = vsel %vm4347, %v4348, %v4346
        %v4350 = vclz %v4349
        %v4351 = vsub.s32 %v4350, 2
        %vm4352 = vcmp.gt.s32.totalorder 0, %v4351
        %v4353 = vsel %vm4352, 0, %v4351
        %v4354 = vsub.s32 32, %v4353
        %v4355 = vshll.u32 %v4346, %v4353
        %v4356 = vshrl.u32 %v4338, %v4354
        %v4357 = vor.u32 %v4355, %v4356
        %v4358 = vsub.s32 4294967266, %v4353
        %v4359 = vadd.s32 %v4358, 127
        %v4360 = vshll.u32 %v4359, 23
        %v4361 = vor.u32 4788187, %v4360
        %v4362 = vand.u32 2147483647, %v4361
        %v4364 = vcvt.s32.f32 %v4357
        %v4365 = vmul.f32 %v4364, %v4362
        %v4366 = vxor.u32 %v4365, 2147483648
        %v4367 = vsel %vm4284, %v4366, %v4365
        %v4368 = vsub.s32 4, %v4344
        %v4369 = vsel %vm4284, %v4368, %v4344
        %v4370 = vsel %vm4283, %v613, %v4367
        %v4371 = vsel %vm4283, 0, %v4369
        %v4372 = vcosq.f32.pop %v4370
        %v4373 = vsinq.f32.pop %v4370
        %vm4374 = vweird.f32 %v613
        %v4375 = vadd.s32 %v4371, 3
        %v4376 = vand.u32 %v4375, 3
        %vm4377 = vcmp.lt.s32.totalorder %v4376, 2
        %vm4378 = vcmp.eq.s32.totalorder %v4376, 0
        %v4379 = vxor.u32 %v4373, 2147483648
        %v4380 = vsel %vm4378, %v4372, %v4379
        %vm4381 = vcmp.eq.s32.totalorder %v4376, 2
        %v4382 = vxor.u32 %v4372, 2147483648
        %v4383 = vsel %vm4381, %v4382, %v4373
        %v4384 = vsel %vm4377, %v4380, %v4383
        %v4385 = vsel %vm4374, nan, %v4384
        %v4386 = vand.u32 2147483647, %v614
        %vm4387 = vcmp.le.f32.partialorder %v4386, 0.7853982
        %vm4388 = vcmp.lt.s32.totalorder %v614, 0
        %v4389 = vand.u32 %v614, 2139095040
        %v4390 = vshrl.u32 %v4389, 23
        %v4391 = vsub.s32 %v4390, 127
        %v4392 = vand.u32 2147483647, %v614
        %v4393 = vand.u32 %v4392, 8388607
        %v4394 = vor.u32 %v4393, 8388608
        %v4395 = vsub.s32 0, %v4394
        %v4396 = vadd.s32 %v4391, 1
        %vm4397 = vcmp.gt.s32.totalorder %v4396, 0
        %v4398 = vsel %vm4397, %v4396, 0
        %v4399 = vshrl.u32 %v4398, 5
        %v4400 = vand.u32 %v4398, 31
        %v4401 = vsub.s32 32, %v4400
        %v4402 = vshrl.u32 683565275, %v4401
        %v4403 = vshll.u32 683565275, %v4400
        %v4404 = vshrl.u32 2475754826, %v4401
        %v4405 = vor.u32 %v4403, %v4404
        %v4406 = vshll.u32 2475754826, %v4400
        %v4407 = vshrl.u32 2131351028, %v4401
        %v4408 = vor.u32 %v4406, %v4407
        %v4409 = vshll.u32 2131351028, %v4400
        %v4410 = vshrl.u32 2102212464, %v4401
        %v4411 = vor.u32 %v4409, %v4410
        %v4412 = vshll.u32 2102212464, %v4400
        %v4413 = vshrl.u32 920167782, %v4401
        %v4414 = vor.u32 %v4412, %v4413
        %v4415 = vshll.u32 920167782, %v4400
        %v4416 = vshrl.u32 1326507024, %v4401
        %v4417 = vor.u32 %v4415, %v4416
        %vm4418 = vcmp.lt.s32.totalorder %v4399, 1
        %vm4419 = vcmp.lt.s32.totalorder %v4399, 2
        %vm4420 = vcmp.lt.s32.totalorder %v4399, 3
        %vm4421 = vcmp.lt.s32.totalorder %v4399, 4
        %v4422 = vsel %vm4418, %v4402, %v4405
        %v4423 = vsel %vm4421, %v4411, 2102212464
        %v4424 = vsel %vm4420, %v4408, %v4423
        %v4425 = vsel %vm4419, %v4422, %v4424
        %v4426 = vsel %vm4418, %v4405, %v4408
        %v4427 = vsel %vm4421, %v4414, 920167782
        %v4428 = vsel %vm4420, %v4411, %v4427
        %v4429 = vsel %vm4419, %v4426, %v4428
        %v4430 = vsel %vm4418, %v4408, %v4411
        %v4431 = vsel %vm4421, %v4417, 1326507024
        %v4432 = vsel %vm4420, %v4414, %v4431
        %v4433 = vsel %vm4419, %v4430, %v4432
        %v4434 = vshll.u32 %v4394, 8
        %v4435 = vmul.u32.u64.compose %v4434, %v4433
        %v4436 = vextract.low.u32 %v4435
        %v4437 = vextract.high.u32 %v4435
        %v4438 = vmul.u32.u64.compose %v4434, %v4429
        %v4439 = vextract.low.u32 %v4438
        %v4440 = vextract.high.u32 %v4438
        %v4441 = vmul.u32 %v4434, %v4425
        %v4442 = vadd.s32 %v4437, %v4439
        %vm4443 = vc.u32 %v4437, %v4439
        %v4444 = vadd.s32 %v4440, 1
        %v4445 = vsel %vm4443, %v4444, %v4440
        %v4446 = vadd.s32 %v4441, %v4445
        %v4447 = vadd.s32 %v4446, 536870912
        %v4448 = vshrl.u32 %v4447, 30
        %v4449 = vshll.u32 %v4448, 30
        %v4450 = vsub.s32 %v4446, %v4449
        %vm4451 = vcmp.lt.s32.totalorder %v4450, 0
        %v4452 = vsub.s32 0, %v4450
        %v4453 = vsel %vm4451, %v4452, %v4450
        %v4454 = vclz %v4453
        %v4455 = vsub.s32 %v4454, 2
        %vm4456 = vcmp.gt.s32.totalorder 0, %v4455
        %v4457 = vsel %vm4456, 0, %v4455
        %v4458 = vsub.s32 32, %v4457
        %v4459 = vshll.u32 %v4450, %v4457
        %v4460 = vshrl.u32 %v4442, %v4458
        %v4461 = vor.u32 %v4459, %v4460
        %v4462 = vsub.s32 4294967266, %v4457
        %v4463 = vadd.s32 %v4462, 127
        %v4464 = vshll.u32 %v4463, 23
        %v4465 = vor.u32 4788187, %v4464
        %v4466 = vand.u32 2147483647, %v4465
        %v4468 = vcvt.s32.f32 %v4461
        %v4469 = vmul.f32 %v4468, %v4466
        %v4470 = vxor.u32 %v4469, 2147483648
        %v4471 = vsel %vm4388, %v4470, %v4469
        %v4472 = vsub.s32 4, %v4448
        %v4473 = vsel %vm4388, %v4472, %v4448
        %v4474 = vsel %vm4387, %v614, %v4471
        %v4475 = vsel %vm4387, 0, %v4473
        %v4476 = vcosq.f32.pop %v4474
        %v4477 = vsinq.f32.pop %v4474
        %vm4478 = vweird.f32 %v614
        %v4479 = vadd.s32 %v4475, 3
        %v4480 = vand.u32 %v4479, 3
        %vm4481 = vcmp.lt.s32.totalorder %v4480, 2
        %vm4482 = vcmp.eq.s32.totalorder %v4480, 0
        %v4483 = vxor.u32 %v4477, 2147483648
        %v4484 = vsel %vm4482, %v4476, %v4483
        %vm4485 = vcmp.eq.s32.totalorder %v4480, 2
        %v4486 = vxor.u32 %v4476, 2147483648
        %v4487 = vsel %vm4485, %v4486, %v4477
        %v4488 = vsel %vm4481, %v4484, %v4487
        %v4489 = vsel %vm4478, nan, %v4488
        %v4490 = vand.u32 2147483647, %v615
        %vm4491 = vcmp.le.f32.partialorder %v4490, 0.7853982
        %vm4492 = vcmp.lt.s32.totalorder %v615, 0
        %v4493 = vand.u32 %v615, 2139095040
        %v4494 = vshrl.u32 %v4493, 23
        %v4495 = vsub.s32 %v4494, 127
        %v4496 = vand.u32 2147483647, %v615
        %v4497 = vand.u32 %v4496, 8388607
        %v4498 = vor.u32 %v4497, 8388608
        %v4499 = vsub.s32 0, %v4498
        %v4500 = vadd.s32 %v4495, 1
        %vm4501 = vcmp.gt.s32.totalorder %v4500, 0
        %v4502 = vsel %vm4501, %v4500, 0
        %v4503 = vshrl.u32 %v4502, 5
        %v4504 = vand.u32 %v4502, 31
        %v4505 = vsub.s32 32, %v4504
        %v4506 = vshrl.u32 683565275, %v4505
        %v4507 = vshll.u32 683565275, %v4504
        %v4508 = vshrl.u32 2475754826, %v4505
        %v4509 = vor.u32 %v4507, %v4508
        %v4510 = vshll.u32 2475754826, %v4504
        %v4511 = vshrl.u32 2131351028, %v4505
        %v4512 = vor.u32 %v4510, %v4511
        %v4513 = vshll.u32 2131351028, %v4504
        %v4514 = vshrl.u32 2102212464, %v4505
        %v4515 = vor.u32 %v4513, %v4514
        %v4516 = vshll.u32 2102212464, %v4504
        %v4517 = vshrl.u32 920167782, %v4505
        %v4518 = vor.u32 %v4516, %v4517
        %v4519 = vshll.u32 920167782, %v4504
        %v4520 = vshrl.u32 1326507024, %v4505
        %v4521 = vor.u32 %v4519, %v4520
        %vm4522 = vcmp.lt.s32.totalorder %v4503, 1
        %vm4523 = vcmp.lt.s32.totalorder %v4503, 2
        %vm4524 = vcmp.lt.s32.totalorder %v4503, 3
        %vm4525 = vcmp.lt.s32.totalorder %v4503, 4
        %v4526 = vsel %vm4522, %v4506, %v4509
        %v4527 = vsel %vm4525, %v4515, 2102212464
        %v4528 = vsel %vm4524, %v4512, %v4527
        %v4529 = vsel %vm4523, %v4526, %v4528
        %v4530 = vsel %vm4522, %v4509, %v4512
        %v4531 = vsel %vm4525, %v4518, 920167782
        %v4532 = vsel %vm4524, %v4515, %v4531
        %v4533 = vsel %vm4523, %v4530, %v4532
        %v4534 = vsel %vm4522, %v4512, %v4515
        %v4535 = vsel %vm4525, %v4521, 1326507024
        %v4536 = vsel %vm4524, %v4518, %v4535
        %v4537 = vsel %vm4523, %v4534, %v4536
        %v4538 = vshll.u32 %v4498, 8
        %v4539 = vmul.u32.u64.compose %v4538, %v4537
        %v4540 = vextract.low.u32 %v4539
        %v4541 = vextract.high.u32 %v4539
        %v4542 = vmul.u32.u64.compose %v4538, %v4533
        %v4543 = vextract.low.u32 %v4542
        %v4544 = vextract.high.u32 %v4542
        %v4545 = vmul.u32 %v4538, %v4529
        %v4546 = vadd.s32 %v4541, %v4543
        %vm4547 = vc.u32 %v4541, %v4543
        %v4548 = vadd.s32 %v4544, 1
        %v4549 = vsel %vm4547, %v4548, %v4544
        %v4550 = vadd.s32 %v4545, %v4549
        %v4551 = vadd.s32 %v4550, 536870912
        %v4552 = vshrl.u32 %v4551, 30
        %v4553 = vshll.u32 %v4552, 30
        %v4554 = vsub.s32 %v4550, %v4553
        %vm4555 = vcmp.lt.s32.totalorder %v4554, 0
        %v4556 = vsub.s32 0, %v4554
        %v4557 = vsel %vm4555, %v4556, %v4554
        %v4558 = vclz %v4557
        %v4559 = vsub.s32 %v4558, 2
        %vm4560 = vcmp.gt.s32.totalorder 0, %v4559
        %v4561 = vsel %vm4560, 0, %v4559
        %v4562 = vsub.s32 32, %v4561
        %v4563 = vshll.u32 %v4554, %v4561
        %v4564 = vshrl.u32 %v4546, %v4562
        %v4565 = vor.u32 %v4563, %v4564
        %v4566 = vsub.s32 4294967266, %v4561
        %v4567 = vadd.s32 %v4566, 127
        %v4568 = vshll.u32 %v4567, 23
        %v4569 = vor.u32 4788187, %v4568
        %v4570 = vand.u32 2147483647, %v4569
        %v4572 = vcvt.s32.f32 %v4565
        %v4573 = vmul.f32 %v4572, %v4570
        %v4574 = vxor.u32 %v4573, 2147483648
        %v4575 = vsel %vm4492, %v4574, %v4573
        %v4576 = vsub.s32 4, %v4552
        %v4577 = vsel %vm4492, %v4576, %v4552
        %v4578 = vsel %vm4491, %v615, %v4575
        %v4579 = vsel %vm4491, 0, %v4577
        %v4580 = vcosq.f32.pop %v4578
        %v4581 = vsinq.f32.pop %v4578
        %vm4582 = vweird.f32 %v615
        %v4583 = vadd.s32 %v4579, 3
        %v4584 = vand.u32 %v4583, 3
        %vm4585 = vcmp.lt.s32.totalorder %v4584, 2
        %vm4586 = vcmp.eq.s32.totalorder %v4584, 0
        %v4587 = vxor.u32 %v4581, 2147483648
        %v4588 = vsel %vm4586, %v4580, %v4587
        %vm4589 = vcmp.eq.s32.totalorder %v4584, 2
        %v4590 = vxor.u32 %v4580, 2147483648
        %v4591 = vsel %vm4589, %v4590, %v4581
        %v4592 = vsel %vm4585, %v4588, %v4591
        %v4593 = vsel %vm4582, nan, %v4592
        %v4594 = vand.u32 2147483647, %v616
        %vm4595 = vcmp.le.f32.partialorder %v4594, 0.7853982
        %vm4596 = vcmp.lt.s32.totalorder %v616, 0
        %v4597 = vand.u32 %v616, 2139095040
        %v4598 = vshrl.u32 %v4597, 23
        %v4599 = vsub.s32 %v4598, 127
        %v4600 = vand.u32 2147483647, %v616
        %v4601 = vand.u32 %v4600, 8388607
        %v4602 = vor.u32 %v4601, 8388608
        %v4603 = vsub.s32 0, %v4602
        %v4604 = vadd.s32 %v4599, 1
        %vm4605 = vcmp.gt.s32.totalorder %v4604, 0
        %v4606 = vsel %vm4605, %v4604, 0
        %v4607 = vshrl.u32 %v4606, 5
        %v4608 = vand.u32 %v4606, 31
        %v4609 = vsub.s32 32, %v4608
        %v4610 = vshrl.u32 683565275, %v4609
        %v4611 = vshll.u32 683565275, %v4608
        %v4612 = vshrl.u32 2475754826, %v4609
        %v4613 = vor.u32 %v4611, %v4612
        %v4614 = vshll.u32 2475754826, %v4608
        %v4615 = vshrl.u32 2131351028, %v4609
        %v4616 = vor.u32 %v4614, %v4615
        %v4617 = vshll.u32 2131351028, %v4608
        %v4618 = vshrl.u32 2102212464, %v4609
        %v4619 = vor.u32 %v4617, %v4618
        %v4620 = vshll.u32 2102212464, %v4608
        %v4621 = vshrl.u32 920167782, %v4609
        %v4622 = vor.u32 %v4620, %v4621
        %v4623 = vshll.u32 920167782, %v4608
        %v4624 = vshrl.u32 1326507024, %v4609
        %v4625 = vor.u32 %v4623, %v4624
        %vm4626 = vcmp.lt.s32.totalorder %v4607, 1
        %vm4627 = vcmp.lt.s32.totalorder %v4607, 2
        %vm4628 = vcmp.lt.s32.totalorder %v4607, 3
        %vm4629 = vcmp.lt.s32.totalorder %v4607, 4
        %v4630 = vsel %vm4626, %v4610, %v4613
        %v4631 = vsel %vm4629, %v4619, 2102212464
        %v4632 = vsel %vm4628, %v4616, %v4631
        %v4633 = vsel %vm4627, %v4630, %v4632
        %v4634 = vsel %vm4626, %v4613, %v4616
        %v4635 = vsel %vm4629, %v4622, 920167782
        %v4636 = vsel %vm4628, %v4619, %v4635
        %v4637 = vsel %vm4627, %v4634, %v4636
        %v4638 = vsel %vm4626, %v4616, %v4619
        %v4639 = vsel %vm4629, %v4625, 1326507024
        %v4640 = vsel %vm4628, %v4622, %v4639
        %v4641 = vsel %vm4627, %v4638, %v4640
        %v4642 = vshll.u32 %v4602, 8
        %v4643 = vmul.u32.u64.compose %v4642, %v4641
        %v4644 = vextract.low.u32 %v4643
        %v4645 = vextract.high.u32 %v4643
        %v4646 = vmul.u32.u64.compose %v4642, %v4637
        %v4647 = vextract.low.u32 %v4646
        %v4648 = vextract.high.u32 %v4646
        %v4649 = vmul.u32 %v4642, %v4633
        %v4650 = vadd.s32 %v4645, %v4647
        %vm4651 = vc.u32 %v4645, %v4647
        %v4652 = vadd.s32 %v4648, 1
        %v4653 = vsel %vm4651, %v4652, %v4648
        %v4654 = vadd.s32 %v4649, %v4653
        %v4655 = vadd.s32 %v4654, 536870912
        %v4656 = vshrl.u32 %v4655, 30
        %v4657 = vshll.u32 %v4656, 30
        %v4658 = vsub.s32 %v4654, %v4657
        %vm4659 = vcmp.lt.s32.totalorder %v4658, 0
        %v4660 = vsub.s32 0, %v4658
        %v4661 = vsel %vm4659, %v4660, %v4658
        %v4662 = vclz %v4661
        %v4663 = vsub.s32 %v4662, 2
        %vm4664 = vcmp.gt.s32.totalorder 0, %v4663
        %v4665 = vsel %vm4664, 0, %v4663
        %v4666 = vsub.s32 32, %v4665
        %v4667 = vshll.u32 %v4658, %v4665
        %v4668 = vshrl.u32 %v4650, %v4666
        %v4669 = vor.u32 %v4667, %v4668
        %v4670 = vsub.s32 4294967266, %v4665
        %v4671 = vadd.s32 %v4670, 127
        %v4672 = vshll.u32 %v4671, 23
        %v4673 = vor.u32 4788187, %v4672
        %v4674 = vand.u32 2147483647, %v4673
        %v4676 = vcvt.s32.f32 %v4669
        %v4677 = vmul.f32 %v4676, %v4674
        %v4678 = vxor.u32 %v4677, 2147483648
        %v4679 = vsel %vm4596, %v4678, %v4677
        %v4680 = vsub.s32 4, %v4656
        %v4681 = vsel %vm4596, %v4680, %v4656
        %v4682 = vsel %vm4595, %v616, %v4679
        %v4683 = vsel %vm4595, 0, %v4681
        %v4684 = vcosq.f32.pop %v4682
        %v4685 = vsinq.f32.pop %v4682
        %vm4686 = vweird.f32 %v616
        %v4687 = vadd.s32 %v4683, 3
        %v4688 = vand.u32 %v4687, 3
        %vm4689 = vcmp.lt.s32.totalorder %v4688, 2
        %vm4690 = vcmp.eq.s32.totalorder %v4688, 0
        %v4691 = vxor.u32 %v4685, 2147483648
        %v4692 = vsel %vm4690, %v4684, %v4691
        %vm4693 = vcmp.eq.s32.totalorder %v4688, 2
        %v4694 = vxor.u32 %v4684, 2147483648
        %v4695 = vsel %vm4693, %v4694, %v4685
        %v4696 = vsel %vm4689, %v4692, %v4695
        %v4697 = vsel %vm4686, nan, %v4696
        %v4698 = vand.u32 2147483647, %v617
        %vm4699 = vcmp.le.f32.partialorder %v4698, 0.7853982
        %vm4700 = vcmp.lt.s32.totalorder %v617, 0
        %v4701 = vand.u32 %v617, 2139095040
        %v4702 = vshrl.u32 %v4701, 23
        %v4703 = vsub.s32 %v4702, 127
        %v4704 = vand.u32 2147483647, %v617
        %v4705 = vand.u32 %v4704, 8388607
        %v4706 = vor.u32 %v4705, 8388608
        %v4707 = vsub.s32 0, %v4706
        %v4708 = vadd.s32 %v4703, 1
        %vm4709 = vcmp.gt.s32.totalorder %v4708, 0
        %v4710 = vsel %vm4709, %v4708, 0
        %v4711 = vshrl.u32 %v4710, 5
        %v4712 = vand.u32 %v4710, 31
        %v4713 = vsub.s32 32, %v4712
        %v4714 = vshrl.u32 683565275, %v4713
        %v4715 = vshll.u32 683565275, %v4712
        %v4716 = vshrl.u32 2475754826, %v4713
        %v4717 = vor.u32 %v4715, %v4716
        %v4718 = vshll.u32 2475754826, %v4712
        %v4719 = vshrl.u32 2131351028, %v4713
        %v4720 = vor.u32 %v4718, %v4719
        %v4721 = vshll.u32 2131351028, %v4712
        %v4722 = vshrl.u32 2102212464, %v4713
        %v4723 = vor.u32 %v4721, %v4722
        %v4724 = vshll.u32 2102212464, %v4712
        %v4725 = vshrl.u32 920167782, %v4713
        %v4726 = vor.u32 %v4724, %v4725
        %v4727 = vshll.u32 920167782, %v4712
        %v4728 = vshrl.u32 1326507024, %v4713
        %v4729 = vor.u32 %v4727, %v4728
        %vm4730 = vcmp.lt.s32.totalorder %v4711, 1
        %vm4731 = vcmp.lt.s32.totalorder %v4711, 2
        %vm4732 = vcmp.lt.s32.totalorder %v4711, 3
        %vm4733 = vcmp.lt.s32.totalorder %v4711, 4
        %v4734 = vsel %vm4730, %v4714, %v4717
        %v4735 = vsel %vm4733, %v4723, 2102212464
        %v4736 = vsel %vm4732, %v4720, %v4735
        %v4737 = vsel %vm4731, %v4734, %v4736
        %v4738 = vsel %vm4730, %v4717, %v4720
        %v4739 = vsel %vm4733, %v4726, 920167782
        %v4740 = vsel %vm4732, %v4723, %v4739
        %v4741 = vsel %vm4731, %v4738, %v4740
        %v4742 = vsel %vm4730, %v4720, %v4723
        %v4743 = vsel %vm4733, %v4729, 1326507024
        %v4744 = vsel %vm4732, %v4726, %v4743
        %v4745 = vsel %vm4731, %v4742, %v4744
        %v4746 = vshll.u32 %v4706, 8
        %v4747 = vmul.u32.u64.compose %v4746, %v4745
        %v4748 = vextract.low.u32 %v4747
        %v4749 = vextract.high.u32 %v4747
        %v4750 = vmul.u32.u64.compose %v4746, %v4741
        %v4751 = vextract.low.u32 %v4750
        %v4752 = vextract.high.u32 %v4750
        %v4753 = vmul.u32 %v4746, %v4737
        %v4754 = vadd.s32 %v4749, %v4751
        %vm4755 = vc.u32 %v4749, %v4751
        %v4756 = vadd.s32 %v4752, 1
        %v4757 = vsel %vm4755, %v4756, %v4752
        %v4758 = vadd.s32 %v4753, %v4757
        %v4759 = vadd.s32 %v4758, 536870912
        %v4760 = vshrl.u32 %v4759, 30
        %v4761 = vshll.u32 %v4760, 30
        %v4762 = vsub.s32 %v4758, %v4761
        %vm4763 = vcmp.lt.s32.totalorder %v4762, 0
        %v4764 = vsub.s32 0, %v4762
        %v4765 = vsel %vm4763, %v4764, %v4762
        %v4766 = vclz %v4765
        %v4767 = vsub.s32 %v4766, 2
        %vm4768 = vcmp.gt.s32.totalorder 0, %v4767
        %v4769 = vsel %vm4768, 0, %v4767
        %v4770 = vsub.s32 32, %v4769
        %v4771 = vshll.u32 %v4762, %v4769
        %v4772 = vshrl.u32 %v4754, %v4770
        %v4773 = vor.u32 %v4771, %v4772
        %v4774 = vsub.s32 4294967266, %v4769
        %v4775 = vadd.s32 %v4774, 127
        %v4776 = vshll.u32 %v4775, 23
        %v4777 = vor.u32 4788187, %v4776
        %v4778 = vand.u32 2147483647, %v4777
        %v4780 = vcvt.s32.f32 %v4773
        %v4781 = vmul.f32 %v4780, %v4778
        %v4782 = vxor.u32 %v4781, 2147483648
        %v4783 = vsel %vm4700, %v4782, %v4781
        %v4784 = vsub.s32 4, %v4760
        %v4785 = vsel %vm4700, %v4784, %v4760
        %v4786 = vsel %vm4699, %v617, %v4783
        %v4787 = vsel %vm4699, 0, %v4785
        %v4788 = vcosq.f32.pop %v4786
        %v4789 = vsinq.f32.pop %v4786
        %vm4790 = vweird.f32 %v617
        %v4791 = vadd.s32 %v4787, 3
        %v4792 = vand.u32 %v4791, 3
        %vm4793 = vcmp.lt.s32.totalorder %v4792, 2
        %vm4794 = vcmp.eq.s32.totalorder %v4792, 0
        %v4795 = vxor.u32 %v4789, 2147483648
        %v4796 = vsel %vm4794, %v4788, %v4795
        %vm4797 = vcmp.eq.s32.totalorder %v4792, 2
        %v4798 = vxor.u32 %v4788, 2147483648
        %v4799 = vsel %vm4797, %v4798, %v4789
        %v4800 = vsel %vm4793, %v4796, %v4799
        %v4801 = vsel %vm4790, nan, %v4800
        %v4802 = vand.u32 2147483647, %v618
        %vm4803 = vcmp.le.f32.partialorder %v4802, 0.7853982
        %vm4804 = vcmp.lt.s32.totalorder %v618, 0
        %v4805 = vand.u32 %v618, 2139095040
        %v4806 = vshrl.u32 %v4805, 23
        %v4807 = vsub.s32 %v4806, 127
        %v4808 = vand.u32 2147483647, %v618
        %v4809 = vand.u32 %v4808, 8388607
        %v4810 = vor.u32 %v4809, 8388608
        %v4811 = vsub.s32 0, %v4810
        %v4812 = vadd.s32 %v4807, 1
        %vm4813 = vcmp.gt.s32.totalorder %v4812, 0
        %v4814 = vsel %vm4813, %v4812, 0
        %v4815 = vshrl.u32 %v4814, 5
        %v4816 = vand.u32 %v4814, 31
        %v4817 = vsub.s32 32, %v4816
        %v4818 = vshrl.u32 683565275, %v4817
        %v4819 = vshll.u32 683565275, %v4816
        %v4820 = vshrl.u32 2475754826, %v4817
        %v4821 = vor.u32 %v4819, %v4820
        %v4822 = vshll.u32 2475754826, %v4816
        %v4823 = vshrl.u32 2131351028, %v4817
        %v4824 = vor.u32 %v4822, %v4823
        %v4825 = vshll.u32 2131351028, %v4816
        %v4826 = vshrl.u32 2102212464, %v4817
        %v4827 = vor.u32 %v4825, %v4826
        %v4828 = vshll.u32 2102212464, %v4816
        %v4829 = vshrl.u32 920167782, %v4817
        %v4830 = vor.u32 %v4828, %v4829
        %v4831 = vshll.u32 920167782, %v4816
        %v4832 = vshrl.u32 1326507024, %v4817
        %v4833 = vor.u32 %v4831, %v4832
        %vm4834 = vcmp.lt.s32.totalorder %v4815, 1
        %vm4835 = vcmp.lt.s32.totalorder %v4815, 2
        %vm4836 = vcmp.lt.s32.totalorder %v4815, 3
        %vm4837 = vcmp.lt.s32.totalorder %v4815, 4
        %v4838 = vsel %vm4834, %v4818, %v4821
        %v4839 = vsel %vm4837, %v4827, 2102212464
        %v4840 = vsel %vm4836, %v4824, %v4839
        %v4841 = vsel %vm4835, %v4838, %v4840
        %v4842 = vsel %vm4834, %v4821, %v4824
        %v4843 = vsel %vm4837, %v4830, 920167782
        %v4844 = vsel %vm4836, %v4827, %v4843
        %v4845 = vsel %vm4835, %v4842, %v4844
        %v4846 = vsel %vm4834, %v4824, %v4827
        %v4847 = vsel %vm4837, %v4833, 1326507024
        %v4848 = vsel %vm4836, %v4830, %v4847
        %v4849 = vsel %vm4835, %v4846, %v4848
        %v4850 = vshll.u32 %v4810, 8
        %v4851 = vmul.u32.u64.compose %v4850, %v4849
        %v4852 = vextract.low.u32 %v4851
        %v4853 = vextract.high.u32 %v4851
        %v4854 = vmul.u32.u64.compose %v4850, %v4845
        %v4855 = vextract.low.u32 %v4854
        %v4856 = vextract.high.u32 %v4854
        %v4857 = vmul.u32 %v4850, %v4841
        %v4858 = vadd.s32 %v4853, %v4855
        %vm4859 = vc.u32 %v4853, %v4855
        %v4860 = vadd.s32 %v4856, 1
        %v4861 = vsel %vm4859, %v4860, %v4856
        %v4862 = vadd.s32 %v4857, %v4861
        %v4863 = vadd.s32 %v4862, 536870912
        %v4864 = vshrl.u32 %v4863, 30
        %v4865 = vshll.u32 %v4864, 30
        %v4866 = vsub.s32 %v4862, %v4865
        %vm4867 = vcmp.lt.s32.totalorder %v4866, 0
        %v4868 = vsub.s32 0, %v4866
        %v4869 = vsel %vm4867, %v4868, %v4866
        %v4870 = vclz %v4869
        %v4871 = vsub.s32 %v4870, 2
        %vm4872 = vcmp.gt.s32.totalorder 0, %v4871
        %v4873 = vsel %vm4872, 0, %v4871
        %v4874 = vsub.s32 32, %v4873
        %v4875 = vshll.u32 %v4866, %v4873
        %v4876 = vshrl.u32 %v4858, %v4874
        %v4877 = vor.u32 %v4875, %v4876
        %v4878 = vsub.s32 4294967266, %v4873
        %v4879 = vadd.s32 %v4878, 127
        %v4880 = vshll.u32 %v4879, 23
        %v4881 = vor.u32 4788187, %v4880
        %v4882 = vand.u32 2147483647, %v4881
        %v4884 = vcvt.s32.f32 %v4877
        %v4885 = vmul.f32 %v4884, %v4882
        %v4886 = vxor.u32 %v4885, 2147483648
        %v4887 = vsel %vm4804, %v4886, %v4885
        %v4888 = vsub.s32 4, %v4864
        %v4889 = vsel %vm4804, %v4888, %v4864
        %v4890 = vsel %vm4803, %v618, %v4887
        %v4891 = vsel %vm4803, 0, %v4889
        %v4892 = vcosq.f32.pop %v4890
        %v4893 = vsinq.f32.pop %v4890
        %vm4894 = vweird.f32 %v618
        %v4895 = vadd.s32 %v4891, 3
        %v4896 = vand.u32 %v4895, 3
        %vm4897 = vcmp.lt.s32.totalorder %v4896, 2
        %vm4898 = vcmp.eq.s32.totalorder %v4896, 0
        %v4899 = vxor.u32 %v4893, 2147483648
        %v4900 = vsel %vm4898, %v4892, %v4899
        %vm4901 = vcmp.eq.s32.totalorder %v4896, 2
        %v4902 = vxor.u32 %v4892, 2147483648
        %v4903 = vsel %vm4901, %v4902, %v4893
        %v4904 = vsel %vm4897, %v4900, %v4903
        %v4905 = vsel %vm4894, nan, %v4904
        %v4906 = vand.u32 2147483647, %v619
        %vm4907 = vcmp.le.f32.partialorder %v4906, 0.7853982
        %vm4908 = vcmp.lt.s32.totalorder %v619, 0
        %v4909 = vand.u32 %v619, 2139095040
        %v4910 = vshrl.u32 %v4909, 23
        %v4911 = vsub.s32 %v4910, 127
        %v4912 = vand.u32 2147483647, %v619
        %v4913 = vand.u32 %v4912, 8388607
        %v4914 = vor.u32 %v4913, 8388608
        %v4915 = vsub.s32 0, %v4914
        %v4916 = vadd.s32 %v4911, 1
        %vm4917 = vcmp.gt.s32.totalorder %v4916, 0
        %v4918 = vsel %vm4917, %v4916, 0
        %v4919 = vshrl.u32 %v4918, 5
        %v4920 = vand.u32 %v4918, 31
        %v4921 = vsub.s32 32, %v4920
        %v4922 = vshrl.u32 683565275, %v4921
        %v4923 = vshll.u32 683565275, %v4920
        %v4924 = vshrl.u32 2475754826, %v4921
        %v4925 = vor.u32 %v4923, %v4924
        %v4926 = vshll.u32 2475754826, %v4920
        %v4927 = vshrl.u32 2131351028, %v4921
        %v4928 = vor.u32 %v4926, %v4927
        %v4929 = vshll.u32 2131351028, %v4920
        %v4930 = vshrl.u32 2102212464, %v4921
        %v4931 = vor.u32 %v4929, %v4930
        %v4932 = vshll.u32 2102212464, %v4920
        %v4933 = vshrl.u32 920167782, %v4921
        %v4934 = vor.u32 %v4932, %v4933
        %v4935 = vshll.u32 920167782, %v4920
        %v4936 = vshrl.u32 1326507024, %v4921
        %v4937 = vor.u32 %v4935, %v4936
        %vm4938 = vcmp.lt.s32.totalorder %v4919, 1
        %vm4939 = vcmp.lt.s32.totalorder %v4919, 2
        %vm4940 = vcmp.lt.s32.totalorder %v4919, 3
        %vm4941 = vcmp.lt.s32.totalorder %v4919, 4
        %v4942 = vsel %vm4938, %v4922, %v4925
        %v4943 = vsel %vm4941, %v4931, 2102212464
        %v4944 = vsel %vm4940, %v4928, %v4943
        %v4945 = vsel %vm4939, %v4942, %v4944
        %v4946 = vsel %vm4938, %v4925, %v4928
        %v4947 = vsel %vm4941, %v4934, 920167782
        %v4948 = vsel %vm4940, %v4931, %v4947
        %v4949 = vsel %vm4939, %v4946, %v4948
        %v4950 = vsel %vm4938, %v4928, %v4931
        %v4951 = vsel %vm4941, %v4937, 1326507024
        %v4952 = vsel %vm4940, %v4934, %v4951
        %v4953 = vsel %vm4939, %v4950, %v4952
        %v4954 = vshll.u32 %v4914, 8
        %v4955 = vmul.u32.u64.compose %v4954, %v4953
        %v4956 = vextract.low.u32 %v4955
        %v4957 = vextract.high.u32 %v4955
        %v4958 = vmul.u32.u64.compose %v4954, %v4949
        %v4959 = vextract.low.u32 %v4958
        %v4960 = vextract.high.u32 %v4958
        %v4961 = vmul.u32 %v4954, %v4945
        %v4962 = vadd.s32 %v4957, %v4959
        %vm4963 = vc.u32 %v4957, %v4959
        %v4964 = vadd.s32 %v4960, 1
        %v4965 = vsel %vm4963, %v4964, %v4960
        %v4966 = vadd.s32 %v4961, %v4965
        %v4967 = vadd.s32 %v4966, 536870912
        %v4968 = vshrl.u32 %v4967, 30
        %v4969 = vshll.u32 %v4968, 30
        %v4970 = vsub.s32 %v4966, %v4969
        %vm4971 = vcmp.lt.s32.totalorder %v4970, 0
        %v4972 = vsub.s32 0, %v4970
        %v4973 = vsel %vm4971, %v4972, %v4970
        %v4974 = vclz %v4973
        %v4975 = vsub.s32 %v4974, 2
        %vm4976 = vcmp.gt.s32.totalorder 0, %v4975
        %v4977 = vsel %vm4976, 0, %v4975
        %v4978 = vsub.s32 32, %v4977
        %v4979 = vshll.u32 %v4970, %v4977
        %v4980 = vshrl.u32 %v4962, %v4978
        %v4981 = vor.u32 %v4979, %v4980
        %v4982 = vsub.s32 4294967266, %v4977
        %v4983 = vadd.s32 %v4982, 127
        %v4984 = vshll.u32 %v4983, 23
        %v4985 = vor.u32 4788187, %v4984
        %v4986 = vand.u32 2147483647, %v4985
        %v4988 = vcvt.s32.f32 %v4981
        %v4989 = vmul.f32 %v4988, %v4986
        %v4990 = vxor.u32 %v4989, 2147483648
        %v4991 = vsel %vm4908, %v4990, %v4989
        %v4992 = vsub.s32 4, %v4968
        %v4993 = vsel %vm4908, %v4992, %v4968
        %v4994 = vsel %vm4907, %v619, %v4991
        %v4995 = vsel %vm4907, 0, %v4993
        %v4996 = vcosq.f32.pop %v4994
        %v4997 = vsinq.f32.pop %v4994
        %vm4998 = vweird.f32 %v619
        %v4999 = vadd.s32 %v4995, 3
        %v5000 = vand.u32 %v4999, 3
        %vm5001 = vcmp.lt.s32.totalorder %v5000, 2
        %vm5002 = vcmp.eq.s32.totalorder %v5000, 0
        %v5003 = vxor.u32 %v4997, 2147483648
        %v5004 = vsel %vm5002, %v4996, %v5003
        %vm5005 = vcmp.eq.s32.totalorder %v5000, 2
        %v5006 = vxor.u32 %v4996, 2147483648
        %v5007 = vsel %vm5005, %v5006, %v4997
        %v5008 = vsel %vm5001, %v5004, %v5007
        %v5009 = vsel %vm4998, nan, %v5008
        %v5010 = vand.u32 2147483647, %v620
        %vm5011 = vcmp.le.f32.partialorder %v5010, 0.7853982
        %vm5012 = vcmp.lt.s32.totalorder %v620, 0
        %v5013 = vand.u32 %v620, 2139095040
        %v5014 = vshrl.u32 %v5013, 23
        %v5015 = vsub.s32 %v5014, 127
        %v5016 = vand.u32 2147483647, %v620
        %v5017 = vand.u32 %v5016, 8388607
        %v5018 = vor.u32 %v5017, 8388608
        %v5019 = vsub.s32 0, %v5018
        %v5020 = vadd.s32 %v5015, 1
        %vm5021 = vcmp.gt.s32.totalorder %v5020, 0
        %v5022 = vsel %vm5021, %v5020, 0
        %v5023 = vshrl.u32 %v5022, 5
        %v5024 = vand.u32 %v5022, 31
        %v5025 = vsub.s32 32, %v5024
        %v5026 = vshrl.u32 683565275, %v5025
        %v5027 = vshll.u32 683565275, %v5024
        %v5028 = vshrl.u32 2475754826, %v5025
        %v5029 = vor.u32 %v5027, %v5028
        %v5030 = vshll.u32 2475754826, %v5024
        %v5031 = vshrl.u32 2131351028, %v5025
        %v5032 = vor.u32 %v5030, %v5031
        %v5033 = vshll.u32 2131351028, %v5024
        %v5034 = vshrl.u32 2102212464, %v5025
        %v5035 = vor.u32 %v5033, %v5034
        %v5036 = vshll.u32 2102212464, %v5024
        %v5037 = vshrl.u32 920167782, %v5025
        %v5038 = vor.u32 %v5036, %v5037
        %v5039 = vshll.u32 920167782, %v5024
        %v5040 = vshrl.u32 1326507024, %v5025
        %v5041 = vor.u32 %v5039, %v5040
        %vm5042 = vcmp.lt.s32.totalorder %v5023, 1
        %vm5043 = vcmp.lt.s32.totalorder %v5023, 2
        %vm5044 = vcmp.lt.s32.totalorder %v5023, 3
        %vm5045 = vcmp.lt.s32.totalorder %v5023, 4
        %v5046 = vsel %vm5042, %v5026, %v5029
        %v5047 = vsel %vm5045, %v5035, 2102212464
        %v5048 = vsel %vm5044, %v5032, %v5047
        %v5049 = vsel %vm5043, %v5046, %v5048
        %v5050 = vsel %vm5042, %v5029, %v5032
        %v5051 = vsel %vm5045, %v5038, 920167782
        %v5052 = vsel %vm5044, %v5035, %v5051
        %v5053 = vsel %vm5043, %v5050, %v5052
        %v5054 = vsel %vm5042, %v5032, %v5035
        %v5055 = vsel %vm5045, %v5041, 1326507024
        %v5056 = vsel %vm5044, %v5038, %v5055
        %v5057 = vsel %vm5043, %v5054, %v5056
        %v5058 = vshll.u32 %v5018, 8
        %v5059 = vmul.u32.u64.compose %v5058, %v5057
        %v5060 = vextract.low.u32 %v5059
        %v5061 = vextract.high.u32 %v5059
        %v5062 = vmul.u32.u64.compose %v5058, %v5053
        %v5063 = vextract.low.u32 %v5062
        %v5064 = vextract.high.u32 %v5062
        %v5065 = vmul.u32 %v5058, %v5049
        %v5066 = vadd.s32 %v5061, %v5063
        %vm5067 = vc.u32 %v5061, %v5063
        %v5068 = vadd.s32 %v5064, 1
        %v5069 = vsel %vm5067, %v5068, %v5064
        %v5070 = vadd.s32 %v5065, %v5069
        %v5071 = vadd.s32 %v5070, 536870912
        %v5072 = vshrl.u32 %v5071, 30
        %v5073 = vshll.u32 %v5072, 30
        %v5074 = vsub.s32 %v5070, %v5073
        %vm5075 = vcmp.lt.s32.totalorder %v5074, 0
        %v5076 = vsub.s32 0, %v5074
        %v5077 = vsel %vm5075, %v5076, %v5074
        %v5078 = vclz %v5077
        %v5079 = vsub.s32 %v5078, 2
        %vm5080 = vcmp.gt.s32.totalorder 0, %v5079
        %v5081 = vsel %vm5080, 0, %v5079
        %v5082 = vsub.s32 32, %v5081
        %v5083 = vshll.u32 %v5074, %v5081
        %v5084 = vshrl.u32 %v5066, %v5082
        %v5085 = vor.u32 %v5083, %v5084
        %v5086 = vsub.s32 4294967266, %v5081
        %v5087 = vadd.s32 %v5086, 127
        %v5088 = vshll.u32 %v5087, 23
        %v5089 = vor.u32 4788187, %v5088
        %v5090 = vand.u32 2147483647, %v5089
        %v5092 = vcvt.s32.f32 %v5085
        %v5093 = vmul.f32 %v5092, %v5090
        %v5094 = vxor.u32 %v5093, 2147483648
        %v5095 = vsel %vm5012, %v5094, %v5093
        %v5096 = vsub.s32 4, %v5072
        %v5097 = vsel %vm5012, %v5096, %v5072
        %v5098 = vsel %vm5011, %v620, %v5095
        %v5099 = vsel %vm5011, 0, %v5097
        %v5100 = vcosq.f32.pop %v5098
        %v5101 = vsinq.f32.pop %v5098
        %vm5102 = vweird.f32 %v620
        %v5103 = vadd.s32 %v5099, 3
        %v5104 = vand.u32 %v5103, 3
        %vm5105 = vcmp.lt.s32.totalorder %v5104, 2
        %vm5106 = vcmp.eq.s32.totalorder %v5104, 0
        %v5107 = vxor.u32 %v5101, 2147483648
        %v5108 = vsel %vm5106, %v5100, %v5107
        %vm5109 = vcmp.eq.s32.totalorder %v5104, 2
        %v5110 = vxor.u32 %v5100, 2147483648
        %v5111 = vsel %vm5109, %v5110, %v5101
        %v5112 = vsel %vm5105, %v5108, %v5111
        %v5113 = vsel %vm5102, nan, %v5112
        %v5114 = vand.u32 2147483647, %v621
        %vm5115 = vcmp.le.f32.partialorder %v5114, 0.7853982
        %vm5116 = vcmp.lt.s32.totalorder %v621, 0
        %v5117 = vand.u32 %v621, 2139095040
        %v5118 = vshrl.u32 %v5117, 23
        %v5119 = vsub.s32 %v5118, 127
        %v5120 = vand.u32 2147483647, %v621
        %v5121 = vand.u32 %v5120, 8388607
        %v5122 = vor.u32 %v5121, 8388608
        %v5123 = vsub.s32 0, %v5122
        %v5124 = vadd.s32 %v5119, 1
        %vm5125 = vcmp.gt.s32.totalorder %v5124, 0
        %v5126 = vsel %vm5125, %v5124, 0
        %v5127 = vshrl.u32 %v5126, 5
        %v5128 = vand.u32 %v5126, 31
        %v5129 = vsub.s32 32, %v5128
        %v5130 = vshrl.u32 683565275, %v5129
        %v5131 = vshll.u32 683565275, %v5128
        %v5132 = vshrl.u32 2475754826, %v5129
        %v5133 = vor.u32 %v5131, %v5132
        %v5134 = vshll.u32 2475754826, %v5128
        %v5135 = vshrl.u32 2131351028, %v5129
        %v5136 = vor.u32 %v5134, %v5135
        %v5137 = vshll.u32 2131351028, %v5128
        %v5138 = vshrl.u32 2102212464, %v5129
        %v5139 = vor.u32 %v5137, %v5138
        %v5140 = vshll.u32 2102212464, %v5128
        %v5141 = vshrl.u32 920167782, %v5129
        %v5142 = vor.u32 %v5140, %v5141
        %v5143 = vshll.u32 920167782, %v5128
        %v5144 = vshrl.u32 1326507024, %v5129
        %v5145 = vor.u32 %v5143, %v5144
        %vm5146 = vcmp.lt.s32.totalorder %v5127, 1
        %vm5147 = vcmp.lt.s32.totalorder %v5127, 2
        %vm5148 = vcmp.lt.s32.totalorder %v5127, 3
        %vm5149 = vcmp.lt.s32.totalorder %v5127, 4
        %v5150 = vsel %vm5146, %v5130, %v5133
        %v5151 = vsel %vm5149, %v5139, 2102212464
        %v5152 = vsel %vm5148, %v5136, %v5151
        %v5153 = vsel %vm5147, %v5150, %v5152
        %v5154 = vsel %vm5146, %v5133, %v5136
        %v5155 = vsel %vm5149, %v5142, 920167782
        %v5156 = vsel %vm5148, %v5139, %v5155
        %v5157 = vsel %vm5147, %v5154, %v5156
        %v5158 = vsel %vm5146, %v5136, %v5139
        %v5159 = vsel %vm5149, %v5145, 1326507024
        %v5160 = vsel %vm5148, %v5142, %v5159
        %v5161 = vsel %vm5147, %v5158, %v5160
        %v5162 = vshll.u32 %v5122, 8
        %v5163 = vmul.u32.u64.compose %v5162, %v5161
        %v5164 = vextract.low.u32 %v5163
        %v5165 = vextract.high.u32 %v5163
        %v5166 = vmul.u32.u64.compose %v5162, %v5157
        %v5167 = vextract.low.u32 %v5166
        %v5168 = vextract.high.u32 %v5166
        %v5169 = vmul.u32 %v5162, %v5153
        %v5170 = vadd.s32 %v5165, %v5167
        %vm5171 = vc.u32 %v5165, %v5167
        %v5172 = vadd.s32 %v5168, 1
        %v5173 = vsel %vm5171, %v5172, %v5168
        %v5174 = vadd.s32 %v5169, %v5173
        %v5175 = vadd.s32 %v5174, 536870912
        %v5176 = vshrl.u32 %v5175, 30
        %v5177 = vshll.u32 %v5176, 30
        %v5178 = vsub.s32 %v5174, %v5177
        %vm5179 = vcmp.lt.s32.totalorder %v5178, 0
        %v5180 = vsub.s32 0, %v5178
        %v5181 = vsel %vm5179, %v5180, %v5178
        %v5182 = vclz %v5181
        %v5183 = vsub.s32 %v5182, 2
        %vm5184 = vcmp.gt.s32.totalorder 0, %v5183
        %v5185 = vsel %vm5184, 0, %v5183
        %v5186 = vsub.s32 32, %v5185
        %v5187 = vshll.u32 %v5178, %v5185
        %v5188 = vshrl.u32 %v5170, %v5186
        %v5189 = vor.u32 %v5187, %v5188
        %v5190 = vsub.s32 4294967266, %v5185
        %v5191 = vadd.s32 %v5190, 127
        %v5192 = vshll.u32 %v5191, 23
        %v5193 = vor.u32 4788187, %v5192
        %v5194 = vand.u32 2147483647, %v5193
        %v5196 = vcvt.s32.f32 %v5189
        %v5197 = vmul.f32 %v5196, %v5194
        %v5198 = vxor.u32 %v5197, 2147483648
        %v5199 = vsel %vm5116, %v5198, %v5197
        %v5200 = vsub.s32 4, %v5176
        %v5201 = vsel %vm5116, %v5200, %v5176
        %v5202 = vsel %vm5115, %v621, %v5199
        %v5203 = vsel %vm5115, 0, %v5201
        %v5204 = vcosq.f32.pop %v5202
        %v5205 = vsinq.f32.pop %v5202
        %vm5206 = vweird.f32 %v621
        %v5207 = vadd.s32 %v5203, 3
        %v5208 = vand.u32 %v5207, 3
        %vm5209 = vcmp.lt.s32.totalorder %v5208, 2
        %vm5210 = vcmp.eq.s32.totalorder %v5208, 0
        %v5211 = vxor.u32 %v5205, 2147483648
        %v5212 = vsel %vm5210, %v5204, %v5211
        %vm5213 = vcmp.eq.s32.totalorder %v5208, 2
        %v5214 = vxor.u32 %v5204, 2147483648
        %v5215 = vsel %vm5213, %v5214, %v5205
        %v5216 = vsel %vm5209, %v5212, %v5215
        %v5217 = vsel %vm5206, nan, %v5216
        %v5218 = vand.u32 2147483647, %v622
        %vm5219 = vcmp.le.f32.partialorder %v5218, 0.7853982
        %vm5220 = vcmp.lt.s32.totalorder %v622, 0
        %v5221 = vand.u32 %v622, 2139095040
        %v5222 = vshrl.u32 %v5221, 23
        %v5223 = vsub.s32 %v5222, 127
        %v5224 = vand.u32 2147483647, %v622
        %v5225 = vand.u32 %v5224, 8388607
        %v5226 = vor.u32 %v5225, 8388608
        %v5227 = vsub.s32 0, %v5226
        %v5228 = vadd.s32 %v5223, 1
        %vm5229 = vcmp.gt.s32.totalorder %v5228, 0
        %v5230 = vsel %vm5229, %v5228, 0
        %v5231 = vshrl.u32 %v5230, 5
        %v5232 = vand.u32 %v5230, 31
        %v5233 = vsub.s32 32, %v5232
        %v5234 = vshrl.u32 683565275, %v5233
        %v5235 = vshll.u32 683565275, %v5232
        %v5236 = vshrl.u32 2475754826, %v5233
        %v5237 = vor.u32 %v5235, %v5236
        %v5238 = vshll.u32 2475754826, %v5232
        %v5239 = vshrl.u32 2131351028, %v5233
        %v5240 = vor.u32 %v5238, %v5239
        %v5241 = vshll.u32 2131351028, %v5232
        %v5242 = vshrl.u32 2102212464, %v5233
        %v5243 = vor.u32 %v5241, %v5242
        %v5244 = vshll.u32 2102212464, %v5232
        %v5245 = vshrl.u32 920167782, %v5233
        %v5246 = vor.u32 %v5244, %v5245
        %v5247 = vshll.u32 920167782, %v5232
        %v5248 = vshrl.u32 1326507024, %v5233
        %v5249 = vor.u32 %v5247, %v5248
        %vm5250 = vcmp.lt.s32.totalorder %v5231, 1
        %vm5251 = vcmp.lt.s32.totalorder %v5231, 2
        %vm5252 = vcmp.lt.s32.totalorder %v5231, 3
        %vm5253 = vcmp.lt.s32.totalorder %v5231, 4
        %v5254 = vsel %vm5250, %v5234, %v5237
        %v5255 = vsel %vm5253, %v5243, 2102212464
        %v5256 = vsel %vm5252, %v5240, %v5255
        %v5257 = vsel %vm5251, %v5254, %v5256
        %v5258 = vsel %vm5250, %v5237, %v5240
        %v5259 = vsel %vm5253, %v5246, 920167782
        %v5260 = vsel %vm5252, %v5243, %v5259
        %v5261 = vsel %vm5251, %v5258, %v5260
        %v5262 = vsel %vm5250, %v5240, %v5243
        %v5263 = vsel %vm5253, %v5249, 1326507024
        %v5264 = vsel %vm5252, %v5246, %v5263
        %v5265 = vsel %vm5251, %v5262, %v5264
        %v5266 = vshll.u32 %v5226, 8
        %v5267 = vmul.u32.u64.compose %v5266, %v5265
        %v5268 = vextract.low.u32 %v5267
        %v5269 = vextract.high.u32 %v5267
        %v5270 = vmul.u32.u64.compose %v5266, %v5261
        %v5271 = vextract.low.u32 %v5270
        %v5272 = vextract.high.u32 %v5270
        %v5273 = vmul.u32 %v5266, %v5257
        %v5274 = vadd.s32 %v5269, %v5271
        %vm5275 = vc.u32 %v5269, %v5271
        %v5276 = vadd.s32 %v5272, 1
        %v5277 = vsel %vm5275, %v5276, %v5272
        %v5278 = vadd.s32 %v5273, %v5277
        %v5279 = vadd.s32 %v5278, 536870912
        %v5280 = vshrl.u32 %v5279, 30
        %v5281 = vshll.u32 %v5280, 30
        %v5282 = vsub.s32 %v5278, %v5281
        %vm5283 = vcmp.lt.s32.totalorder %v5282, 0
        %v5284 = vsub.s32 0, %v5282
        %v5285 = vsel %vm5283, %v5284, %v5282
        %v5286 = vclz %v5285
        %v5287 = vsub.s32 %v5286, 2
        %vm5288 = vcmp.gt.s32.totalorder 0, %v5287
        %v5289 = vsel %vm5288, 0, %v5287
        %v5290 = vsub.s32 32, %v5289
        %v5291 = vshll.u32 %v5282, %v5289
        %v5292 = vshrl.u32 %v5274, %v5290
        %v5293 = vor.u32 %v5291, %v5292
        %v5294 = vsub.s32 4294967266, %v5289
        %v5295 = vadd.s32 %v5294, 127
        %v5296 = vshll.u32 %v5295, 23
        %v5297 = vor.u32 4788187, %v5296
        %v5298 = vand.u32 2147483647, %v5297
        %v5300 = vcvt.s32.f32 %v5293
        %v5301 = vmul.f32 %v5300, %v5298
        %v5302 = vxor.u32 %v5301, 2147483648
        %v5303 = vsel %vm5220, %v5302, %v5301
        %v5304 = vsub.s32 4, %v5280
        %v5305 = vsel %vm5220, %v5304, %v5280
        %v5306 = vsel %vm5219, %v622, %v5303
        %v5307 = vsel %vm5219, 0, %v5305
        %v5308 = vcosq.f32.pop %v5306
        %v5309 = vsinq.f32.pop %v5306
        %vm5310 = vweird.f32 %v622
        %v5311 = vadd.s32 %v5307, 3
        %v5312 = vand.u32 %v5311, 3
        %vm5313 = vcmp.lt.s32.totalorder %v5312, 2
        %vm5314 = vcmp.eq.s32.totalorder %v5312, 0
        %v5315 = vxor.u32 %v5309, 2147483648
        %v5316 = vsel %vm5314, %v5308, %v5315
        %vm5317 = vcmp.eq.s32.totalorder %v5312, 2
        %v5318 = vxor.u32 %v5308, 2147483648
        %v5319 = vsel %vm5317, %v5318, %v5309
        %v5320 = vsel %vm5313, %v5316, %v5319
        %v5321 = vsel %vm5310, nan, %v5320
        %v5322 = vand.u32 2147483647, %v623
        %vm5323 = vcmp.le.f32.partialorder %v5322, 0.7853982
        %vm5324 = vcmp.lt.s32.totalorder %v623, 0
        %v5325 = vand.u32 %v623, 2139095040
        %v5326 = vshrl.u32 %v5325, 23
        %v5327 = vsub.s32 %v5326, 127
        %v5328 = vand.u32 2147483647, %v623
        %v5329 = vand.u32 %v5328, 8388607
        %v5330 = vor.u32 %v5329, 8388608
        %v5331 = vsub.s32 0, %v5330
        %v5332 = vadd.s32 %v5327, 1
        %vm5333 = vcmp.gt.s32.totalorder %v5332, 0
        %v5334 = vsel %vm5333, %v5332, 0
        %v5335 = vshrl.u32 %v5334, 5
        %v5336 = vand.u32 %v5334, 31
        %v5337 = vsub.s32 32, %v5336
        %v5338 = vshrl.u32 683565275, %v5337
        %v5339 = vshll.u32 683565275, %v5336
        %v5340 = vshrl.u32 2475754826, %v5337
        %v5341 = vor.u32 %v5339, %v5340
        %v5342 = vshll.u32 2475754826, %v5336
        %v5343 = vshrl.u32 2131351028, %v5337
        %v5344 = vor.u32 %v5342, %v5343
        %v5345 = vshll.u32 2131351028, %v5336
        %v5346 = vshrl.u32 2102212464, %v5337
        %v5347 = vor.u32 %v5345, %v5346
        %v5348 = vshll.u32 2102212464, %v5336
        %v5349 = vshrl.u32 920167782, %v5337
        %v5350 = vor.u32 %v5348, %v5349
        %v5351 = vshll.u32 920167782, %v5336
        %v5352 = vshrl.u32 1326507024, %v5337
        %v5353 = vor.u32 %v5351, %v5352
        %vm5354 = vcmp.lt.s32.totalorder %v5335, 1
        %vm5355 = vcmp.lt.s32.totalorder %v5335, 2
        %vm5356 = vcmp.lt.s32.totalorder %v5335, 3
        %vm5357 = vcmp.lt.s32.totalorder %v5335, 4
        %v5358 = vsel %vm5354, %v5338, %v5341
        %v5359 = vsel %vm5357, %v5347, 2102212464
        %v5360 = vsel %vm5356, %v5344, %v5359
        %v5361 = vsel %vm5355, %v5358, %v5360
        %v5362 = vsel %vm5354, %v5341, %v5344
        %v5363 = vsel %vm5357, %v5350, 920167782
        %v5364 = vsel %vm5356, %v5347, %v5363
        %v5365 = vsel %vm5355, %v5362, %v5364
        %v5366 = vsel %vm5354, %v5344, %v5347
        %v5367 = vsel %vm5357, %v5353, 1326507024
        %v5368 = vsel %vm5356, %v5350, %v5367
        %v5369 = vsel %vm5355, %v5366, %v5368
        %v5370 = vshll.u32 %v5330, 8
        %v5371 = vmul.u32.u64.compose %v5370, %v5369
        %v5372 = vextract.low.u32 %v5371
        %v5373 = vextract.high.u32 %v5371
        %v5374 = vmul.u32.u64.compose %v5370, %v5365
        %v5375 = vextract.low.u32 %v5374
        %v5376 = vextract.high.u32 %v5374
        %v5377 = vmul.u32 %v5370, %v5361
        %v5378 = vadd.s32 %v5373, %v5375
        %vm5379 = vc.u32 %v5373, %v5375
        %v5380 = vadd.s32 %v5376, 1
        %v5381 = vsel %vm5379, %v5380, %v5376
        %v5382 = vadd.s32 %v5377, %v5381
        %v5383 = vadd.s32 %v5382, 536870912
        %v5384 = vshrl.u32 %v5383, 30
        %v5385 = vshll.u32 %v5384, 30
        %v5386 = vsub.s32 %v5382, %v5385
        %vm5387 = vcmp.lt.s32.totalorder %v5386, 0
        %v5388 = vsub.s32 0, %v5386
        %v5389 = vsel %vm5387, %v5388, %v5386
        %v5390 = vclz %v5389
        %v5391 = vsub.s32 %v5390, 2
        %vm5392 = vcmp.gt.s32.totalorder 0, %v5391
        %v5393 = vsel %vm5392, 0, %v5391
        %v5394 = vsub.s32 32, %v5393
        %v5395 = vshll.u32 %v5386, %v5393
        %v5396 = vshrl.u32 %v5378, %v5394
        %v5397 = vor.u32 %v5395, %v5396
        %v5398 = vsub.s32 4294967266, %v5393
        %v5399 = vadd.s32 %v5398, 127
        %v5400 = vshll.u32 %v5399, 23
        %v5401 = vor.u32 4788187, %v5400
        %v5402 = vand.u32 2147483647, %v5401
        %v5404 = vcvt.s32.f32 %v5397
        %v5405 = vmul.f32 %v5404, %v5402
        %v5406 = vxor.u32 %v5405, 2147483648
        %v5407 = vsel %vm5324, %v5406, %v5405
        %v5408 = vsub.s32 4, %v5384
        %v5409 = vsel %vm5324, %v5408, %v5384
        %v5410 = vsel %vm5323, %v623, %v5407
        %v5411 = vsel %vm5323, 0, %v5409
        %v5412 = vcosq.f32.pop %v5410
        %v5413 = vsinq.f32.pop %v5410
        %vm5414 = vweird.f32 %v623
        %v5415 = vadd.s32 %v5411, 3
        %v5416 = vand.u32 %v5415, 3
        %vm5417 = vcmp.lt.s32.totalorder %v5416, 2
        %vm5418 = vcmp.eq.s32.totalorder %v5416, 0
        %v5419 = vxor.u32 %v5413, 2147483648
        %v5420 = vsel %vm5418, %v5412, %v5419
        %vm5421 = vcmp.eq.s32.totalorder %v5416, 2
        %v5422 = vxor.u32 %v5412, 2147483648
        %v5423 = vsel %vm5421, %v5422, %v5413
        %v5424 = vsel %vm5417, %v5420, %v5423
        %v5425 = vsel %vm5414, nan, %v5424
        %v5426 = vand.u32 2147483647, %v624
        %vm5427 = vcmp.le.f32.partialorder %v5426, 0.7853982
        %vm5428 = vcmp.lt.s32.totalorder %v624, 0
        %v5429 = vand.u32 %v624, 2139095040
        %v5430 = vshrl.u32 %v5429, 23
        %v5431 = vsub.s32 %v5430, 127
        %v5432 = vand.u32 2147483647, %v624
        %v5433 = vand.u32 %v5432, 8388607
        %v5434 = vor.u32 %v5433, 8388608
        %v5435 = vsub.s32 0, %v5434
        %v5436 = vadd.s32 %v5431, 1
        %vm5437 = vcmp.gt.s32.totalorder %v5436, 0
        %v5438 = vsel %vm5437, %v5436, 0
        %v5439 = vshrl.u32 %v5438, 5
        %v5440 = vand.u32 %v5438, 31
        %v5441 = vsub.s32 32, %v5440
        %v5442 = vshrl.u32 683565275, %v5441
        %v5443 = vshll.u32 683565275, %v5440
        %v5444 = vshrl.u32 2475754826, %v5441
        %v5445 = vor.u32 %v5443, %v5444
        %v5446 = vshll.u32 2475754826, %v5440
        %v5447 = vshrl.u32 2131351028, %v5441
        %v5448 = vor.u32 %v5446, %v5447
        %v5449 = vshll.u32 2131351028, %v5440
        %v5450 = vshrl.u32 2102212464, %v5441
        %v5451 = vor.u32 %v5449, %v5450
        %v5452 = vshll.u32 2102212464, %v5440
        %v5453 = vshrl.u32 920167782, %v5441
        %v5454 = vor.u32 %v5452, %v5453
        %v5455 = vshll.u32 920167782, %v5440
        %v5456 = vshrl.u32 1326507024, %v5441
        %v5457 = vor.u32 %v5455, %v5456
        %vm5458 = vcmp.lt.s32.totalorder %v5439, 1
        %vm5459 = vcmp.lt.s32.totalorder %v5439, 2
        %vm5460 = vcmp.lt.s32.totalorder %v5439, 3
        %vm5461 = vcmp.lt.s32.totalorder %v5439, 4
        %v5462 = vsel %vm5458, %v5442, %v5445
        %v5463 = vsel %vm5461, %v5451, 2102212464
        %v5464 = vsel %vm5460, %v5448, %v5463
        %v5465 = vsel %vm5459, %v5462, %v5464
        %v5466 = vsel %vm5458, %v5445, %v5448
        %v5467 = vsel %vm5461, %v5454, 920167782
        %v5468 = vsel %vm5460, %v5451, %v5467
        %v5469 = vsel %vm5459, %v5466, %v5468
        %v5470 = vsel %vm5458, %v5448, %v5451
        %v5471 = vsel %vm5461, %v5457, 1326507024
        %v5472 = vsel %vm5460, %v5454, %v5471
        %v5473 = vsel %vm5459, %v5470, %v5472
        %v5474 = vshll.u32 %v5434, 8
        %v5475 = vmul.u32.u64.compose %v5474, %v5473
        %v5476 = vextract.low.u32 %v5475
        %v5477 = vextract.high.u32 %v5475
        %v5478 = vmul.u32.u64.compose %v5474, %v5469
        %v5479 = vextract.low.u32 %v5478
        %v5480 = vextract.high.u32 %v5478
        %v5481 = vmul.u32 %v5474, %v5465
        %v5482 = vadd.s32 %v5477, %v5479
        %vm5483 = vc.u32 %v5477, %v5479
        %v5484 = vadd.s32 %v5480, 1
        %v5485 = vsel %vm5483, %v5484, %v5480
        %v5486 = vadd.s32 %v5481, %v5485
        %v5487 = vadd.s32 %v5486, 536870912
        %v5488 = vshrl.u32 %v5487, 30
        %v5489 = vshll.u32 %v5488, 30
        %v5490 = vsub.s32 %v5486, %v5489
        %vm5491 = vcmp.lt.s32.totalorder %v5490, 0
        %v5492 = vsub.s32 0, %v5490
        %v5493 = vsel %vm5491, %v5492, %v5490
        %v5494 = vclz %v5493
        %v5495 = vsub.s32 %v5494, 2
        %vm5496 = vcmp.gt.s32.totalorder 0, %v5495
        %v5497 = vsel %vm5496, 0, %v5495
        %v5498 = vsub.s32 32, %v5497
        %v5499 = vshll.u32 %v5490, %v5497
        %v5500 = vshrl.u32 %v5482, %v5498
        %v5501 = vor.u32 %v5499, %v5500
        %v5502 = vsub.s32 4294967266, %v5497
        %v5503 = vadd.s32 %v5502, 127
        %v5504 = vshll.u32 %v5503, 23
        %v5505 = vor.u32 4788187, %v5504
        %v5506 = vand.u32 2147483647, %v5505
        %v5508 = vcvt.s32.f32 %v5501
        %v5509 = vmul.f32 %v5508, %v5506
        %v5510 = vxor.u32 %v5509, 2147483648
        %v5511 = vsel %vm5428, %v5510, %v5509
        %v5512 = vsub.s32 4, %v5488
        %v5513 = vsel %vm5428, %v5512, %v5488
        %v5514 = vsel %vm5427, %v624, %v5511
        %v5515 = vsel %vm5427, 0, %v5513
        %v5516 = vcosq.f32.pop %v5514
        %v5517 = vsinq.f32.pop %v5514
        %vm5518 = vweird.f32 %v624
        %v5519 = vadd.s32 %v5515, 3
        %v5520 = vand.u32 %v5519, 3
        %vm5521 = vcmp.lt.s32.totalorder %v5520, 2
        %vm5522 = vcmp.eq.s32.totalorder %v5520, 0
        %v5523 = vxor.u32 %v5517, 2147483648
        %v5524 = vsel %vm5522, %v5516, %v5523
        %vm5525 = vcmp.eq.s32.totalorder %v5520, 2
        %v5526 = vxor.u32 %v5516, 2147483648
        %v5527 = vsel %vm5525, %v5526, %v5517
        %v5528 = vsel %vm5521, %v5524, %v5527
        %v5529 = vsel %vm5518, nan, %v5528
        %v5530 = vand.u32 2147483647, %v625
        %vm5531 = vcmp.le.f32.partialorder %v5530, 0.7853982
        %vm5532 = vcmp.lt.s32.totalorder %v625, 0
        %v5533 = vand.u32 %v625, 2139095040
        %v5534 = vshrl.u32 %v5533, 23
        %v5535 = vsub.s32 %v5534, 127
        %v5536 = vand.u32 2147483647, %v625
        %v5537 = vand.u32 %v5536, 8388607
        %v5538 = vor.u32 %v5537, 8388608
        %v5539 = vsub.s32 0, %v5538
        %v5540 = vadd.s32 %v5535, 1
        %vm5541 = vcmp.gt.s32.totalorder %v5540, 0
        %v5542 = vsel %vm5541, %v5540, 0
        %v5543 = vshrl.u32 %v5542, 5
        %v5544 = vand.u32 %v5542, 31
        %v5545 = vsub.s32 32, %v5544
        %v5546 = vshrl.u32 683565275, %v5545
        %v5547 = vshll.u32 683565275, %v5544
        %v5548 = vshrl.u32 2475754826, %v5545
        %v5549 = vor.u32 %v5547, %v5548
        %v5550 = vshll.u32 2475754826, %v5544
        %v5551 = vshrl.u32 2131351028, %v5545
        %v5552 = vor.u32 %v5550, %v5551
        %v5553 = vshll.u32 2131351028, %v5544
        %v5554 = vshrl.u32 2102212464, %v5545
        %v5555 = vor.u32 %v5553, %v5554
        %v5556 = vshll.u32 2102212464, %v5544
        %v5557 = vshrl.u32 920167782, %v5545
        %v5558 = vor.u32 %v5556, %v5557
        %v5559 = vshll.u32 920167782, %v5544
        %v5560 = vshrl.u32 1326507024, %v5545
        %v5561 = vor.u32 %v5559, %v5560
        %vm5562 = vcmp.lt.s32.totalorder %v5543, 1
        %vm5563 = vcmp.lt.s32.totalorder %v5543, 2
        %vm5564 = vcmp.lt.s32.totalorder %v5543, 3
        %vm5565 = vcmp.lt.s32.totalorder %v5543, 4
        %v5566 = vsel %vm5562, %v5546, %v5549
        %v5567 = vsel %vm5565, %v5555, 2102212464
        %v5568 = vsel %vm5564, %v5552, %v5567
        %v5569 = vsel %vm5563, %v5566, %v5568
        %v5570 = vsel %vm5562, %v5549, %v5552
        %v5571 = vsel %vm5565, %v5558, 920167782
        %v5572 = vsel %vm5564, %v5555, %v5571
        %v5573 = vsel %vm5563, %v5570, %v5572
        %v5574 = vsel %vm5562, %v5552, %v5555
        %v5575 = vsel %vm5565, %v5561, 1326507024
        %v5576 = vsel %vm5564, %v5558, %v5575
        %v5577 = vsel %vm5563, %v5574, %v5576
        %v5578 = vshll.u32 %v5538, 8
        %v5579 = vmul.u32.u64.compose %v5578, %v5577
        %v5580 = vextract.low.u32 %v5579
        %v5581 = vextract.high.u32 %v5579
        %v5582 = vmul.u32.u64.compose %v5578, %v5573
        %v5583 = vextract.low.u32 %v5582
        %v5584 = vextract.high.u32 %v5582
        %v5585 = vmul.u32 %v5578, %v5569
        %v5586 = vadd.s32 %v5581, %v5583
        %vm5587 = vc.u32 %v5581, %v5583
        %v5588 = vadd.s32 %v5584, 1
        %v5589 = vsel %vm5587, %v5588, %v5584
        %v5590 = vadd.s32 %v5585, %v5589
        %v5591 = vadd.s32 %v5590, 536870912
        %v5592 = vshrl.u32 %v5591, 30
        %v5593 = vshll.u32 %v5592, 30
        %v5594 = vsub.s32 %v5590, %v5593
        %vm5595 = vcmp.lt.s32.totalorder %v5594, 0
        %v5596 = vsub.s32 0, %v5594
        %v5597 = vsel %vm5595, %v5596, %v5594
        %v5598 = vclz %v5597
        %v5599 = vsub.s32 %v5598, 2
        %vm5600 = vcmp.gt.s32.totalorder 0, %v5599
        %v5601 = vsel %vm5600, 0, %v5599
        %v5602 = vsub.s32 32, %v5601
        %v5603 = vshll.u32 %v5594, %v5601
        %v5604 = vshrl.u32 %v5586, %v5602
        %v5605 = vor.u32 %v5603, %v5604
        %v5606 = vsub.s32 4294967266, %v5601
        %v5607 = vadd.s32 %v5606, 127
        %v5608 = vshll.u32 %v5607, 23
        %v5609 = vor.u32 4788187, %v5608
        %v5610 = vand.u32 2147483647, %v5609
        %v5612 = vcvt.s32.f32 %v5605
        %v5613 = vmul.f32 %v5612, %v5610
        %v5614 = vxor.u32 %v5613, 2147483648
        %v5615 = vsel %vm5532, %v5614, %v5613
        %v5616 = vsub.s32 4, %v5592
        %v5617 = vsel %vm5532, %v5616, %v5592
        %v5618 = vsel %vm5531, %v625, %v5615
        %v5619 = vsel %vm5531, 0, %v5617
        %v5620 = vcosq.f32.pop %v5618
        %v5621 = vsinq.f32.pop %v5618
        %vm5622 = vweird.f32 %v625
        %v5623 = vadd.s32 %v5619, 3
        %v5624 = vand.u32 %v5623, 3
        %vm5625 = vcmp.lt.s32.totalorder %v5624, 2
        %vm5626 = vcmp.eq.s32.totalorder %v5624, 0
        %v5627 = vxor.u32 %v5621, 2147483648
        %v5628 = vsel %vm5626, %v5620, %v5627
        %vm5629 = vcmp.eq.s32.totalorder %v5624, 2
        %v5630 = vxor.u32 %v5620, 2147483648
        %v5631 = vsel %vm5629, %v5630, %v5621
        %v5632 = vsel %vm5625, %v5628, %v5631
        %v5633 = vsel %vm5622, nan, %v5632
        %v5634 = vand.u32 2147483647, %v626
        %vm5635 = vcmp.le.f32.partialorder %v5634, 0.7853982
        %vm5636 = vcmp.lt.s32.totalorder %v626, 0
        %v5637 = vand.u32 %v626, 2139095040
        %v5638 = vshrl.u32 %v5637, 23
        %v5639 = vsub.s32 %v5638, 127
        %v5640 = vand.u32 2147483647, %v626
        %v5641 = vand.u32 %v5640, 8388607
        %v5642 = vor.u32 %v5641, 8388608
        %v5643 = vsub.s32 0, %v5642
        %v5644 = vadd.s32 %v5639, 1
        %vm5645 = vcmp.gt.s32.totalorder %v5644, 0
        %v5646 = vsel %vm5645, %v5644, 0
        %v5647 = vshrl.u32 %v5646, 5
        %v5648 = vand.u32 %v5646, 31
        %v5649 = vsub.s32 32, %v5648
        %v5650 = vshrl.u32 683565275, %v5649
        %v5651 = vshll.u32 683565275, %v5648
        %v5652 = vshrl.u32 2475754826, %v5649
        %v5653 = vor.u32 %v5651, %v5652
        %v5654 = vshll.u32 2475754826, %v5648
        %v5655 = vshrl.u32 2131351028, %v5649
        %v5656 = vor.u32 %v5654, %v5655
        %v5657 = vshll.u32 2131351028, %v5648
        %v5658 = vshrl.u32 2102212464, %v5649
        %v5659 = vor.u32 %v5657, %v5658
        %v5660 = vshll.u32 2102212464, %v5648
        %v5661 = vshrl.u32 920167782, %v5649
        %v5662 = vor.u32 %v5660, %v5661
        %v5663 = vshll.u32 920167782, %v5648
        %v5664 = vshrl.u32 1326507024, %v5649
        %v5665 = vor.u32 %v5663, %v5664
        %vm5666 = vcmp.lt.s32.totalorder %v5647, 1
        %vm5667 = vcmp.lt.s32.totalorder %v5647, 2
        %vm5668 = vcmp.lt.s32.totalorder %v5647, 3
        %vm5669 = vcmp.lt.s32.totalorder %v5647, 4
        %v5670 = vsel %vm5666, %v5650, %v5653
        %v5671 = vsel %vm5669, %v5659, 2102212464
        %v5672 = vsel %vm5668, %v5656, %v5671
        %v5673 = vsel %vm5667, %v5670, %v5672
        %v5674 = vsel %vm5666, %v5653, %v5656
        %v5675 = vsel %vm5669, %v5662, 920167782
        %v5676 = vsel %vm5668, %v5659, %v5675
        %v5677 = vsel %vm5667, %v5674, %v5676
        %v5678 = vsel %vm5666, %v5656, %v5659
        %v5679 = vsel %vm5669, %v5665, 1326507024
        %v5680 = vsel %vm5668, %v5662, %v5679
        %v5681 = vsel %vm5667, %v5678, %v5680
        %v5682 = vshll.u32 %v5642, 8
        %v5683 = vmul.u32.u64.compose %v5682, %v5681
        %v5684 = vextract.low.u32 %v5683
        %v5685 = vextract.high.u32 %v5683
        %v5686 = vmul.u32.u64.compose %v5682, %v5677
        %v5687 = vextract.low.u32 %v5686
        %v5688 = vextract.high.u32 %v5686
        %v5689 = vmul.u32 %v5682, %v5673
        %v5690 = vadd.s32 %v5685, %v5687
        %vm5691 = vc.u32 %v5685, %v5687
        %v5692 = vadd.s32 %v5688, 1
        %v5693 = vsel %vm5691, %v5692, %v5688
        %v5694 = vadd.s32 %v5689, %v5693
        %v5695 = vadd.s32 %v5694, 536870912
        %v5696 = vshrl.u32 %v5695, 30
        %v5697 = vshll.u32 %v5696, 30
        %v5698 = vsub.s32 %v5694, %v5697
        %vm5699 = vcmp.lt.s32.totalorder %v5698, 0
        %v5700 = vsub.s32 0, %v5698
        %v5701 = vsel %vm5699, %v5700, %v5698
        %v5702 = vclz %v5701
        %v5703 = vsub.s32 %v5702, 2
        %vm5704 = vcmp.gt.s32.totalorder 0, %v5703
        %v5705 = vsel %vm5704, 0, %v5703
        %v5706 = vsub.s32 32, %v5705
        %v5707 = vshll.u32 %v5698, %v5705
        %v5708 = vshrl.u32 %v5690, %v5706
        %v5709 = vor.u32 %v5707, %v5708
        %v5710 = vsub.s32 4294967266, %v5705
        %v5711 = vadd.s32 %v5710, 127
        %v5712 = vshll.u32 %v5711, 23
        %v5713 = vor.u32 4788187, %v5712
        %v5714 = vand.u32 2147483647, %v5713
        %v5716 = vcvt.s32.f32 %v5709
        %v5717 = vmul.f32 %v5716, %v5714
        %v5718 = vxor.u32 %v5717, 2147483648
        %v5719 = vsel %vm5636, %v5718, %v5717
        %v5720 = vsub.s32 4, %v5696
        %v5721 = vsel %vm5636, %v5720, %v5696
        %v5722 = vsel %vm5635, %v626, %v5719
        %v5723 = vsel %vm5635, 0, %v5721
        %v5724 = vcosq.f32.pop %v5722
        %v5725 = vsinq.f32.pop %v5722
        %vm5726 = vweird.f32 %v626
        %v5727 = vadd.s32 %v5723, 3
        %v5728 = vand.u32 %v5727, 3
        %vm5729 = vcmp.lt.s32.totalorder %v5728, 2
        %vm5730 = vcmp.eq.s32.totalorder %v5728, 0
        %v5731 = vxor.u32 %v5725, 2147483648
        %v5732 = vsel %vm5730, %v5724, %v5731
        %vm5733 = vcmp.eq.s32.totalorder %v5728, 2
        %v5734 = vxor.u32 %v5724, 2147483648
        %v5735 = vsel %vm5733, %v5734, %v5725
        %v5736 = vsel %vm5729, %v5732, %v5735
        %v5737 = vsel %vm5726, nan, %v5736
        %v5738 = vand.u32 2147483647, %v627
        %vm5739 = vcmp.le.f32.partialorder %v5738, 0.7853982
        %vm5740 = vcmp.lt.s32.totalorder %v627, 0
        %v5741 = vand.u32 %v627, 2139095040
        %v5742 = vshrl.u32 %v5741, 23
        %v5743 = vsub.s32 %v5742, 127
        %v5744 = vand.u32 2147483647, %v627
        %v5745 = vand.u32 %v5744, 8388607
        %v5746 = vor.u32 %v5745, 8388608
        %v5747 = vsub.s32 0, %v5746
        %v5748 = vadd.s32 %v5743, 1
        %vm5749 = vcmp.gt.s32.totalorder %v5748, 0
        %v5750 = vsel %vm5749, %v5748, 0
        %v5751 = vshrl.u32 %v5750, 5
        %v5752 = vand.u32 %v5750, 31
        %v5753 = vsub.s32 32, %v5752
        %v5754 = vshrl.u32 683565275, %v5753
        %v5755 = vshll.u32 683565275, %v5752
        %v5756 = vshrl.u32 2475754826, %v5753
        %v5757 = vor.u32 %v5755, %v5756
        %v5758 = vshll.u32 2475754826, %v5752
        %v5759 = vshrl.u32 2131351028, %v5753
        %v5760 = vor.u32 %v5758, %v5759
        %v5761 = vshll.u32 2131351028, %v5752
        %v5762 = vshrl.u32 2102212464, %v5753
        %v5763 = vor.u32 %v5761, %v5762
        %v5764 = vshll.u32 2102212464, %v5752
        %v5765 = vshrl.u32 920167782, %v5753
        %v5766 = vor.u32 %v5764, %v5765
        %v5767 = vshll.u32 920167782, %v5752
        %v5768 = vshrl.u32 1326507024, %v5753
        %v5769 = vor.u32 %v5767, %v5768
        %vm5770 = vcmp.lt.s32.totalorder %v5751, 1
        %vm5771 = vcmp.lt.s32.totalorder %v5751, 2
        %vm5772 = vcmp.lt.s32.totalorder %v5751, 3
        %vm5773 = vcmp.lt.s32.totalorder %v5751, 4
        %v5774 = vsel %vm5770, %v5754, %v5757
        %v5775 = vsel %vm5773, %v5763, 2102212464
        %v5776 = vsel %vm5772, %v5760, %v5775
        %v5777 = vsel %vm5771, %v5774, %v5776
        %v5778 = vsel %vm5770, %v5757, %v5760
        %v5779 = vsel %vm5773, %v5766, 920167782
        %v5780 = vsel %vm5772, %v5763, %v5779
        %v5781 = vsel %vm5771, %v5778, %v5780
        %v5782 = vsel %vm5770, %v5760, %v5763
        %v5783 = vsel %vm5773, %v5769, 1326507024
        %v5784 = vsel %vm5772, %v5766, %v5783
        %v5785 = vsel %vm5771, %v5782, %v5784
        %v5786 = vshll.u32 %v5746, 8
        %v5787 = vmul.u32.u64.compose %v5786, %v5785
        %v5788 = vextract.low.u32 %v5787
        %v5789 = vextract.high.u32 %v5787
        %v5790 = vmul.u32.u64.compose %v5786, %v5781
        %v5791 = vextract.low.u32 %v5790
        %v5792 = vextract.high.u32 %v5790
        %v5793 = vmul.u32 %v5786, %v5777
        %v5794 = vadd.s32 %v5789, %v5791
        %vm5795 = vc.u32 %v5789, %v5791
        %v5796 = vadd.s32 %v5792, 1
        %v5797 = vsel %vm5795, %v5796, %v5792
        %v5798 = vadd.s32 %v5793, %v5797
        %v5799 = vadd.s32 %v5798, 536870912
        %v5800 = vshrl.u32 %v5799, 30
        %v5801 = vshll.u32 %v5800, 30
        %v5802 = vsub.s32 %v5798, %v5801
        %vm5803 = vcmp.lt.s32.totalorder %v5802, 0
        %v5804 = vsub.s32 0, %v5802
        %v5805 = vsel %vm5803, %v5804, %v5802
        %v5806 = vclz %v5805
        %v5807 = vsub.s32 %v5806, 2
        %vm5808 = vcmp.gt.s32.totalorder 0, %v5807
        %v5809 = vsel %vm5808, 0, %v5807
        %v5810 = vsub.s32 32, %v5809
        %v5811 = vshll.u32 %v5802, %v5809
        %v5812 = vshrl.u32 %v5794, %v5810
        %v5813 = vor.u32 %v5811, %v5812
        %v5814 = vsub.s32 4294967266, %v5809
        %v5815 = vadd.s32 %v5814, 127
        %v5816 = vshll.u32 %v5815, 23
        %v5817 = vor.u32 4788187, %v5816
        %v5818 = vand.u32 2147483647, %v5817
        %v5820 = vcvt.s32.f32 %v5813
        %v5821 = vmul.f32 %v5820, %v5818
        %v5822 = vxor.u32 %v5821, 2147483648
        %v5823 = vsel %vm5740, %v5822, %v5821
        %v5824 = vsub.s32 4, %v5800
        %v5825 = vsel %vm5740, %v5824, %v5800
        %v5826 = vsel %vm5739, %v627, %v5823
        %v5827 = vsel %vm5739, 0, %v5825
        %v5828 = vcosq.f32.pop %v5826
        %v5829 = vsinq.f32.pop %v5826
        %vm5830 = vweird.f32 %v627
        %v5831 = vadd.s32 %v5827, 3
        %v5832 = vand.u32 %v5831, 3
        %vm5833 = vcmp.lt.s32.totalorder %v5832, 2
        %vm5834 = vcmp.eq.s32.totalorder %v5832, 0
        %v5835 = vxor.u32 %v5829, 2147483648
        %v5836 = vsel %vm5834, %v5828, %v5835
        %vm5837 = vcmp.eq.s32.totalorder %v5832, 2
        %v5838 = vxor.u32 %v5828, 2147483648
        %v5839 = vsel %vm5837, %v5838, %v5829
        %v5840 = vsel %vm5833, %v5836, %v5839
        %v5841 = vsel %vm5830, nan, %v5840
        %v5842 = vand.u32 2147483647, %v628
        %vm5843 = vcmp.le.f32.partialorder %v5842, 0.7853982
        %vm5844 = vcmp.lt.s32.totalorder %v628, 0
        %v5845 = vand.u32 %v628, 2139095040
        %v5846 = vshrl.u32 %v5845, 23
        %v5847 = vsub.s32 %v5846, 127
        %v5848 = vand.u32 2147483647, %v628
        %v5849 = vand.u32 %v5848, 8388607
        %v5850 = vor.u32 %v5849, 8388608
        %v5851 = vsub.s32 0, %v5850
        %v5852 = vadd.s32 %v5847, 1
        %vm5853 = vcmp.gt.s32.totalorder %v5852, 0
        %v5854 = vsel %vm5853, %v5852, 0
        %v5855 = vshrl.u32 %v5854, 5
        %v5856 = vand.u32 %v5854, 31
        %v5857 = vsub.s32 32, %v5856
        %v5858 = vshrl.u32 683565275, %v5857
        %v5859 = vshll.u32 683565275, %v5856
        %v5860 = vshrl.u32 2475754826, %v5857
        %v5861 = vor.u32 %v5859, %v5860
        %v5862 = vshll.u32 2475754826, %v5856
        %v5863 = vshrl.u32 2131351028, %v5857
        %v5864 = vor.u32 %v5862, %v5863
        %v5865 = vshll.u32 2131351028, %v5856
        %v5866 = vshrl.u32 2102212464, %v5857
        %v5867 = vor.u32 %v5865, %v5866
        %v5868 = vshll.u32 2102212464, %v5856
        %v5869 = vshrl.u32 920167782, %v5857
        %v5870 = vor.u32 %v5868, %v5869
        %v5871 = vshll.u32 920167782, %v5856
        %v5872 = vshrl.u32 1326507024, %v5857
        %v5873 = vor.u32 %v5871, %v5872
        %vm5874 = vcmp.lt.s32.totalorder %v5855, 1
        %vm5875 = vcmp.lt.s32.totalorder %v5855, 2
        %vm5876 = vcmp.lt.s32.totalorder %v5855, 3
        %vm5877 = vcmp.lt.s32.totalorder %v5855, 4
        %v5878 = vsel %vm5874, %v5858, %v5861
        %v5879 = vsel %vm5877, %v5867, 2102212464
        %v5880 = vsel %vm5876, %v5864, %v5879
        %v5881 = vsel %vm5875, %v5878, %v5880
        %v5882 = vsel %vm5874, %v5861, %v5864
        %v5883 = vsel %vm5877, %v5870, 920167782
        %v5884 = vsel %vm5876, %v5867, %v5883
        %v5885 = vsel %vm5875, %v5882, %v5884
        %v5886 = vsel %vm5874, %v5864, %v5867
        %v5887 = vsel %vm5877, %v5873, 1326507024
        %v5888 = vsel %vm5876, %v5870, %v5887
        %v5889 = vsel %vm5875, %v5886, %v5888
        %v5890 = vshll.u32 %v5850, 8
        %v5891 = vmul.u32.u64.compose %v5890, %v5889
        %v5892 = vextract.low.u32 %v5891
        %v5893 = vextract.high.u32 %v5891
        %v5894 = vmul.u32.u64.compose %v5890, %v5885
        %v5895 = vextract.low.u32 %v5894
        %v5896 = vextract.high.u32 %v5894
        %v5897 = vmul.u32 %v5890, %v5881
        %v5898 = vadd.s32 %v5893, %v5895
        %vm5899 = vc.u32 %v5893, %v5895
        %v5900 = vadd.s32 %v5896, 1
        %v5901 = vsel %vm5899, %v5900, %v5896
        %v5902 = vadd.s32 %v5897, %v5901
        %v5903 = vadd.s32 %v5902, 536870912
        %v5904 = vshrl.u32 %v5903, 30
        %v5905 = vshll.u32 %v5904, 30
        %v5906 = vsub.s32 %v5902, %v5905
        %vm5907 = vcmp.lt.s32.totalorder %v5906, 0
        %v5908 = vsub.s32 0, %v5906
        %v5909 = vsel %vm5907, %v5908, %v5906
        %v5910 = vclz %v5909
        %v5911 = vsub.s32 %v5910, 2
        %vm5912 = vcmp.gt.s32.totalorder 0, %v5911
        %v5913 = vsel %vm5912, 0, %v5911
        %v5914 = vsub.s32 32, %v5913
        %v5915 = vshll.u32 %v5906, %v5913
        %v5916 = vshrl.u32 %v5898, %v5914
        %v5917 = vor.u32 %v5915, %v5916
        %v5918 = vsub.s32 4294967266, %v5913
        %v5919 = vadd.s32 %v5918, 127
        %v5920 = vshll.u32 %v5919, 23
        %v5921 = vor.u32 4788187, %v5920
        %v5922 = vand.u32 2147483647, %v5921
        %v5924 = vcvt.s32.f32 %v5917
        %v5925 = vmul.f32 %v5924, %v5922
        %v5926 = vxor.u32 %v5925, 2147483648
        %v5927 = vsel %vm5844, %v5926, %v5925
        %v5928 = vsub.s32 4, %v5904
        %v5929 = vsel %vm5844, %v5928, %v5904
        %v5930 = vsel %vm5843, %v628, %v5927
        %v5931 = vsel %vm5843, 0, %v5929
        %v5932 = vcosq.f32.pop %v5930
        %v5933 = vsinq.f32.pop %v5930
        %vm5934 = vweird.f32 %v628
        %v5935 = vadd.s32 %v5931, 3
        %v5936 = vand.u32 %v5935, 3
        %vm5937 = vcmp.lt.s32.totalorder %v5936, 2
        %vm5938 = vcmp.eq.s32.totalorder %v5936, 0
        %v5939 = vxor.u32 %v5933, 2147483648
        %v5940 = vsel %vm5938, %v5932, %v5939
        %vm5941 = vcmp.eq.s32.totalorder %v5936, 2
        %v5942 = vxor.u32 %v5932, 2147483648
        %v5943 = vsel %vm5941, %v5942, %v5933
        %v5944 = vsel %vm5937, %v5940, %v5943
        %v5945 = vsel %vm5934, nan, %v5944
        %v5946 = vand.u32 2147483647, %v629
        %vm5947 = vcmp.le.f32.partialorder %v5946, 0.7853982
        %vm5948 = vcmp.lt.s32.totalorder %v629, 0
        %v5949 = vand.u32 %v629, 2139095040
        %v5950 = vshrl.u32 %v5949, 23
        %v5951 = vsub.s32 %v5950, 127
        %v5952 = vand.u32 2147483647, %v629
        %v5953 = vand.u32 %v5952, 8388607
        %v5954 = vor.u32 %v5953, 8388608
        %v5955 = vsub.s32 0, %v5954
        %v5956 = vadd.s32 %v5951, 1
        %vm5957 = vcmp.gt.s32.totalorder %v5956, 0
        %v5958 = vsel %vm5957, %v5956, 0
        %v5959 = vshrl.u32 %v5958, 5
        %v5960 = vand.u32 %v5958, 31
        %v5961 = vsub.s32 32, %v5960
        %v5962 = vshrl.u32 683565275, %v5961
        %v5963 = vshll.u32 683565275, %v5960
        %v5964 = vshrl.u32 2475754826, %v5961
        %v5965 = vor.u32 %v5963, %v5964
        %v5966 = vshll.u32 2475754826, %v5960
        %v5967 = vshrl.u32 2131351028, %v5961
        %v5968 = vor.u32 %v5966, %v5967
        %v5969 = vshll.u32 2131351028, %v5960
        %v5970 = vshrl.u32 2102212464, %v5961
        %v5971 = vor.u32 %v5969, %v5970
        %v5972 = vshll.u32 2102212464, %v5960
        %v5973 = vshrl.u32 920167782, %v5961
        %v5974 = vor.u32 %v5972, %v5973
        %v5975 = vshll.u32 920167782, %v5960
        %v5976 = vshrl.u32 1326507024, %v5961
        %v5977 = vor.u32 %v5975, %v5976
        %vm5978 = vcmp.lt.s32.totalorder %v5959, 1
        %vm5979 = vcmp.lt.s32.totalorder %v5959, 2
        %vm5980 = vcmp.lt.s32.totalorder %v5959, 3
        %vm5981 = vcmp.lt.s32.totalorder %v5959, 4
        %v5982 = vsel %vm5978, %v5962, %v5965
        %v5983 = vsel %vm5981, %v5971, 2102212464
        %v5984 = vsel %vm5980, %v5968, %v5983
        %v5985 = vsel %vm5979, %v5982, %v5984
        %v5986 = vsel %vm5978, %v5965, %v5968
        %v5987 = vsel %vm5981, %v5974, 920167782
        %v5988 = vsel %vm5980, %v5971, %v5987
        %v5989 = vsel %vm5979, %v5986, %v5988
        %v5990 = vsel %vm5978, %v5968, %v5971
        %v5991 = vsel %vm5981, %v5977, 1326507024
        %v5992 = vsel %vm5980, %v5974, %v5991
        %v5993 = vsel %vm5979, %v5990, %v5992
        %v5994 = vshll.u32 %v5954, 8
        %v5995 = vmul.u32.u64.compose %v5994, %v5993
        %v5996 = vextract.low.u32 %v5995
        %v5997 = vextract.high.u32 %v5995
        %v5998 = vmul.u32.u64.compose %v5994, %v5989
        %v5999 = vextract.low.u32 %v5998
        %v6000 = vextract.high.u32 %v5998
        %v6001 = vmul.u32 %v5994, %v5985
        %v6002 = vadd.s32 %v5997, %v5999
        %vm6003 = vc.u32 %v5997, %v5999
        %v6004 = vadd.s32 %v6000, 1
        %v6005 = vsel %vm6003, %v6004, %v6000
        %v6006 = vadd.s32 %v6001, %v6005
        %v6007 = vadd.s32 %v6006, 536870912
        %v6008 = vshrl.u32 %v6007, 30
        %v6009 = vshll.u32 %v6008, 30
        %v6010 = vsub.s32 %v6006, %v6009
        %vm6011 = vcmp.lt.s32.totalorder %v6010, 0
        %v6012 = vsub.s32 0, %v6010
        %v6013 = vsel %vm6011, %v6012, %v6010
        %v6014 = vclz %v6013
        %v6015 = vsub.s32 %v6014, 2
        %vm6016 = vcmp.gt.s32.totalorder 0, %v6015
        %v6017 = vsel %vm6016, 0, %v6015
        %v6018 = vsub.s32 32, %v6017
        %v6019 = vshll.u32 %v6010, %v6017
        %v6020 = vshrl.u32 %v6002, %v6018
        %v6021 = vor.u32 %v6019, %v6020
        %v6022 = vsub.s32 4294967266, %v6017
        %v6023 = vadd.s32 %v6022, 127
        %v6024 = vshll.u32 %v6023, 23
        %v6025 = vor.u32 4788187, %v6024
        %v6026 = vand.u32 2147483647, %v6025
        %v6028 = vcvt.s32.f32 %v6021
        %v6029 = vmul.f32 %v6028, %v6026
        %v6030 = vxor.u32 %v6029, 2147483648
        %v6031 = vsel %vm5948, %v6030, %v6029
        %v6032 = vsub.s32 4, %v6008
        %v6033 = vsel %vm5948, %v6032, %v6008
        %v6034 = vsel %vm5947, %v629, %v6031
        %v6035 = vsel %vm5947, 0, %v6033
        %v6036 = vcosq.f32.pop %v6034
        %v6037 = vsinq.f32.pop %v6034
        %vm6038 = vweird.f32 %v629
        %v6039 = vadd.s32 %v6035, 3
        %v6040 = vand.u32 %v6039, 3
        %vm6041 = vcmp.lt.s32.totalorder %v6040, 2
        %vm6042 = vcmp.eq.s32.totalorder %v6040, 0
        %v6043 = vxor.u32 %v6037, 2147483648
        %v6044 = vsel %vm6042, %v6036, %v6043
        %vm6045 = vcmp.eq.s32.totalorder %v6040, 2
        %v6046 = vxor.u32 %v6036, 2147483648
        %v6047 = vsel %vm6045, %v6046, %v6037
        %v6048 = vsel %vm6041, %v6044, %v6047
        %v6049 = vsel %vm6038, nan, %v6048
        %v6050 = vand.u32 2147483647, %v630
        %vm6051 = vcmp.le.f32.partialorder %v6050, 0.7853982
        %vm6052 = vcmp.lt.s32.totalorder %v630, 0
        %v6053 = vand.u32 %v630, 2139095040
        %v6054 = vshrl.u32 %v6053, 23
        %v6055 = vsub.s32 %v6054, 127
        %v6056 = vand.u32 2147483647, %v630
        %v6057 = vand.u32 %v6056, 8388607
        %v6058 = vor.u32 %v6057, 8388608
        %v6059 = vsub.s32 0, %v6058
        %v6060 = vadd.s32 %v6055, 1
        %vm6061 = vcmp.gt.s32.totalorder %v6060, 0
        %v6062 = vsel %vm6061, %v6060, 0
        %v6063 = vshrl.u32 %v6062, 5
        %v6064 = vand.u32 %v6062, 31
        %v6065 = vsub.s32 32, %v6064
        %v6066 = vshrl.u32 683565275, %v6065
        %v6067 = vshll.u32 683565275, %v6064
        %v6068 = vshrl.u32 2475754826, %v6065
        %v6069 = vor.u32 %v6067, %v6068
        %v6070 = vshll.u32 2475754826, %v6064
        %v6071 = vshrl.u32 2131351028, %v6065
        %v6072 = vor.u32 %v6070, %v6071
        %v6073 = vshll.u32 2131351028, %v6064
        %v6074 = vshrl.u32 2102212464, %v6065
        %v6075 = vor.u32 %v6073, %v6074
        %v6076 = vshll.u32 2102212464, %v6064
        %v6077 = vshrl.u32 920167782, %v6065
        %v6078 = vor.u32 %v6076, %v6077
        %v6079 = vshll.u32 920167782, %v6064
        %v6080 = vshrl.u32 1326507024, %v6065
        %v6081 = vor.u32 %v6079, %v6080
        %vm6082 = vcmp.lt.s32.totalorder %v6063, 1
        %vm6083 = vcmp.lt.s32.totalorder %v6063, 2
        %vm6084 = vcmp.lt.s32.totalorder %v6063, 3
        %vm6085 = vcmp.lt.s32.totalorder %v6063, 4
        %v6086 = vsel %vm6082, %v6066, %v6069
        %v6087 = vsel %vm6085, %v6075, 2102212464
        %v6088 = vsel %vm6084, %v6072, %v6087
        %v6089 = vsel %vm6083, %v6086, %v6088
        %v6090 = vsel %vm6082, %v6069, %v6072
        %v6091 = vsel %vm6085, %v6078, 920167782
        %v6092 = vsel %vm6084, %v6075, %v6091
        %v6093 = vsel %vm6083, %v6090, %v6092
        %v6094 = vsel %vm6082, %v6072, %v6075
        %v6095 = vsel %vm6085, %v6081, 1326507024
        %v6096 = vsel %vm6084, %v6078, %v6095
        %v6097 = vsel %vm6083, %v6094, %v6096
        %v6098 = vshll.u32 %v6058, 8
        %v6099 = vmul.u32.u64.compose %v6098, %v6097
        %v6100 = vextract.low.u32 %v6099
        %v6101 = vextract.high.u32 %v6099
        %v6102 = vmul.u32.u64.compose %v6098, %v6093
        %v6103 = vextract.low.u32 %v6102
        %v6104 = vextract.high.u32 %v6102
        %v6105 = vmul.u32 %v6098, %v6089
        %v6106 = vadd.s32 %v6101, %v6103
        %vm6107 = vc.u32 %v6101, %v6103
        %v6108 = vadd.s32 %v6104, 1
        %v6109 = vsel %vm6107, %v6108, %v6104
        %v6110 = vadd.s32 %v6105, %v6109
        %v6111 = vadd.s32 %v6110, 536870912
        %v6112 = vshrl.u32 %v6111, 30
        %v6113 = vshll.u32 %v6112, 30
        %v6114 = vsub.s32 %v6110, %v6113
        %vm6115 = vcmp.lt.s32.totalorder %v6114, 0
        %v6116 = vsub.s32 0, %v6114
        %v6117 = vsel %vm6115, %v6116, %v6114
        %v6118 = vclz %v6117
        %v6119 = vsub.s32 %v6118, 2
        %vm6120 = vcmp.gt.s32.totalorder 0, %v6119
        %v6121 = vsel %vm6120, 0, %v6119
        %v6122 = vsub.s32 32, %v6121
        %v6123 = vshll.u32 %v6114, %v6121
        %v6124 = vshrl.u32 %v6106, %v6122
        %v6125 = vor.u32 %v6123, %v6124
        %v6126 = vsub.s32 4294967266, %v6121
        %v6127 = vadd.s32 %v6126, 127
        %v6128 = vshll.u32 %v6127, 23
        %v6129 = vor.u32 4788187, %v6128
        %v6130 = vand.u32 2147483647, %v6129
        %v6132 = vcvt.s32.f32 %v6125
        %v6133 = vmul.f32 %v6132, %v6130
        %v6134 = vxor.u32 %v6133, 2147483648
        %v6135 = vsel %vm6052, %v6134, %v6133
        %v6136 = vsub.s32 4, %v6112
        %v6137 = vsel %vm6052, %v6136, %v6112
        %v6138 = vsel %vm6051, %v630, %v6135
        %v6139 = vsel %vm6051, 0, %v6137
        %v6140 = vcosq.f32.pop %v6138
        %v6141 = vsinq.f32.pop %v6138
        %vm6142 = vweird.f32 %v630
        %v6143 = vadd.s32 %v6139, 3
        %v6144 = vand.u32 %v6143, 3
        %vm6145 = vcmp.lt.s32.totalorder %v6144, 2
        %vm6146 = vcmp.eq.s32.totalorder %v6144, 0
        %v6147 = vxor.u32 %v6141, 2147483648
        %v6148 = vsel %vm6146, %v6140, %v6147
        %vm6149 = vcmp.eq.s32.totalorder %v6144, 2
        %v6150 = vxor.u32 %v6140, 2147483648
        %v6151 = vsel %vm6149, %v6150, %v6141
        %v6152 = vsel %vm6145, %v6148, %v6151
        %v6153 = vsel %vm6142, nan, %v6152
        %v6154 = vand.u32 2147483647, %v631
        %vm6155 = vcmp.le.f32.partialorder %v6154, 0.7853982
        %vm6156 = vcmp.lt.s32.totalorder %v631, 0
        %v6157 = vand.u32 %v631, 2139095040
        %v6158 = vshrl.u32 %v6157, 23
        %v6159 = vsub.s32 %v6158, 127
        %v6160 = vand.u32 2147483647, %v631
        %v6161 = vand.u32 %v6160, 8388607
        %v6162 = vor.u32 %v6161, 8388608
        %v6163 = vsub.s32 0, %v6162
        %v6164 = vadd.s32 %v6159, 1
        %vm6165 = vcmp.gt.s32.totalorder %v6164, 0
        %v6166 = vsel %vm6165, %v6164, 0
        %v6167 = vshrl.u32 %v6166, 5
        %v6168 = vand.u32 %v6166, 31
        %v6169 = vsub.s32 32, %v6168
        %v6170 = vshrl.u32 683565275, %v6169
        %v6171 = vshll.u32 683565275, %v6168
        %v6172 = vshrl.u32 2475754826, %v6169
        %v6173 = vor.u32 %v6171, %v6172
        %v6174 = vshll.u32 2475754826, %v6168
        %v6175 = vshrl.u32 2131351028, %v6169
        %v6176 = vor.u32 %v6174, %v6175
        %v6177 = vshll.u32 2131351028, %v6168
        %v6178 = vshrl.u32 2102212464, %v6169
        %v6179 = vor.u32 %v6177, %v6178
        %v6180 = vshll.u32 2102212464, %v6168
        %v6181 = vshrl.u32 920167782, %v6169
        %v6182 = vor.u32 %v6180, %v6181
        %v6183 = vshll.u32 920167782, %v6168
        %v6184 = vshrl.u32 1326507024, %v6169
        %v6185 = vor.u32 %v6183, %v6184
        %vm6186 = vcmp.lt.s32.totalorder %v6167, 1
        %vm6187 = vcmp.lt.s32.totalorder %v6167, 2
        %vm6188 = vcmp.lt.s32.totalorder %v6167, 3
        %vm6189 = vcmp.lt.s32.totalorder %v6167, 4
        %v6190 = vsel %vm6186, %v6170, %v6173
        %v6191 = vsel %vm6189, %v6179, 2102212464
        %v6192 = vsel %vm6188, %v6176, %v6191
        %v6193 = vsel %vm6187, %v6190, %v6192
        %v6194 = vsel %vm6186, %v6173, %v6176
        %v6195 = vsel %vm6189, %v6182, 920167782
        %v6196 = vsel %vm6188, %v6179, %v6195
        %v6197 = vsel %vm6187, %v6194, %v6196
        %v6198 = vsel %vm6186, %v6176, %v6179
        %v6199 = vsel %vm6189, %v6185, 1326507024
        %v6200 = vsel %vm6188, %v6182, %v6199
        %v6201 = vsel %vm6187, %v6198, %v6200
        %v6202 = vshll.u32 %v6162, 8
        %v6203 = vmul.u32.u64.compose %v6202, %v6201
        %v6204 = vextract.low.u32 %v6203
        %v6205 = vextract.high.u32 %v6203
        %v6206 = vmul.u32.u64.compose %v6202, %v6197
        %v6207 = vextract.low.u32 %v6206
        %v6208 = vextract.high.u32 %v6206
        %v6209 = vmul.u32 %v6202, %v6193
        %v6210 = vadd.s32 %v6205, %v6207
        %vm6211 = vc.u32 %v6205, %v6207
        %v6212 = vadd.s32 %v6208, 1
        %v6213 = vsel %vm6211, %v6212, %v6208
        %v6214 = vadd.s32 %v6209, %v6213
        %v6215 = vadd.s32 %v6214, 536870912
        %v6216 = vshrl.u32 %v6215, 30
        %v6217 = vshll.u32 %v6216, 30
        %v6218 = vsub.s32 %v6214, %v6217
        %vm6219 = vcmp.lt.s32.totalorder %v6218, 0
        %v6220 = vsub.s32 0, %v6218
        %v6221 = vsel %vm6219, %v6220, %v6218
        %v6222 = vclz %v6221
        %v6223 = vsub.s32 %v6222, 2
        %vm6224 = vcmp.gt.s32.totalorder 0, %v6223
        %v6225 = vsel %vm6224, 0, %v6223
        %v6226 = vsub.s32 32, %v6225
        %v6227 = vshll.u32 %v6218, %v6225
        %v6228 = vshrl.u32 %v6210, %v6226
        %v6229 = vor.u32 %v6227, %v6228
        %v6230 = vsub.s32 4294967266, %v6225
        %v6231 = vadd.s32 %v6230, 127
        %v6232 = vshll.u32 %v6231, 23
        %v6233 = vor.u32 4788187, %v6232
        %v6234 = vand.u32 2147483647, %v6233
        %v6236 = vcvt.s32.f32 %v6229
        %v6237 = vmul.f32 %v6236, %v6234
        %v6238 = vxor.u32 %v6237, 2147483648
        %v6239 = vsel %vm6156, %v6238, %v6237
        %v6240 = vsub.s32 4, %v6216
        %v6241 = vsel %vm6156, %v6240, %v6216
        %v6242 = vsel %vm6155, %v631, %v6239
        %v6243 = vsel %vm6155, 0, %v6241
        %v6244 = vcosq.f32.pop %v6242
        %v6245 = vsinq.f32.pop %v6242
        %vm6246 = vweird.f32 %v631
        %v6247 = vadd.s32 %v6243, 3
        %v6248 = vand.u32 %v6247, 3
        %vm6249 = vcmp.lt.s32.totalorder %v6248, 2
        %vm6250 = vcmp.eq.s32.totalorder %v6248, 0
        %v6251 = vxor.u32 %v6245, 2147483648
        %v6252 = vsel %vm6250, %v6244, %v6251
        %vm6253 = vcmp.eq.s32.totalorder %v6248, 2
        %v6254 = vxor.u32 %v6244, 2147483648
        %v6255 = vsel %vm6253, %v6254, %v6245
        %v6256 = vsel %vm6249, %v6252, %v6255
        %v6257 = vsel %vm6246, nan, %v6256
        %v6258 = vand.u32 2147483647, %v632
        %vm6259 = vcmp.le.f32.partialorder %v6258, 0.7853982
        %vm6260 = vcmp.lt.s32.totalorder %v632, 0
        %v6261 = vand.u32 %v632, 2139095040
        %v6262 = vshrl.u32 %v6261, 23
        %v6263 = vsub.s32 %v6262, 127
        %v6264 = vand.u32 2147483647, %v632
        %v6265 = vand.u32 %v6264, 8388607
        %v6266 = vor.u32 %v6265, 8388608
        %v6267 = vsub.s32 0, %v6266
        %v6268 = vadd.s32 %v6263, 1
        %vm6269 = vcmp.gt.s32.totalorder %v6268, 0
        %v6270 = vsel %vm6269, %v6268, 0
        %v6271 = vshrl.u32 %v6270, 5
        %v6272 = vand.u32 %v6270, 31
        %v6273 = vsub.s32 32, %v6272
        %v6274 = vshrl.u32 683565275, %v6273
        %v6275 = vshll.u32 683565275, %v6272
        %v6276 = vshrl.u32 2475754826, %v6273
        %v6277 = vor.u32 %v6275, %v6276
        %v6278 = vshll.u32 2475754826, %v6272
        %v6279 = vshrl.u32 2131351028, %v6273
        %v6280 = vor.u32 %v6278, %v6279
        %v6281 = vshll.u32 2131351028, %v6272
        %v6282 = vshrl.u32 2102212464, %v6273
        %v6283 = vor.u32 %v6281, %v6282
        %v6284 = vshll.u32 2102212464, %v6272
        %v6285 = vshrl.u32 920167782, %v6273
        %v6286 = vor.u32 %v6284, %v6285
        %v6287 = vshll.u32 920167782, %v6272
        %v6288 = vshrl.u32 1326507024, %v6273
        %v6289 = vor.u32 %v6287, %v6288
        %vm6290 = vcmp.lt.s32.totalorder %v6271, 1
        %vm6291 = vcmp.lt.s32.totalorder %v6271, 2
        %vm6292 = vcmp.lt.s32.totalorder %v6271, 3
        %vm6293 = vcmp.lt.s32.totalorder %v6271, 4
        %v6294 = vsel %vm6290, %v6274, %v6277
        %v6295 = vsel %vm6293, %v6283, 2102212464
        %v6296 = vsel %vm6292, %v6280, %v6295
        %v6297 = vsel %vm6291, %v6294, %v6296
        %v6298 = vsel %vm6290, %v6277, %v6280
        %v6299 = vsel %vm6293, %v6286, 920167782
        %v6300 = vsel %vm6292, %v6283, %v6299
        %v6301 = vsel %vm6291, %v6298, %v6300
        %v6302 = vsel %vm6290, %v6280, %v6283
        %v6303 = vsel %vm6293, %v6289, 1326507024
        %v6304 = vsel %vm6292, %v6286, %v6303
        %v6305 = vsel %vm6291, %v6302, %v6304
        %v6306 = vshll.u32 %v6266, 8
        %v6307 = vmul.u32.u64.compose %v6306, %v6305
        %v6308 = vextract.low.u32 %v6307
        %v6309 = vextract.high.u32 %v6307
        %v6310 = vmul.u32.u64.compose %v6306, %v6301
        %v6311 = vextract.low.u32 %v6310
        %v6312 = vextract.high.u32 %v6310
        %v6313 = vmul.u32 %v6306, %v6297
        %v6314 = vadd.s32 %v6309, %v6311
        %vm6315 = vc.u32 %v6309, %v6311
        %v6316 = vadd.s32 %v6312, 1
        %v6317 = vsel %vm6315, %v6316, %v6312
        %v6318 = vadd.s32 %v6313, %v6317
        %v6319 = vadd.s32 %v6318, 536870912
        %v6320 = vshrl.u32 %v6319, 30
        %v6321 = vshll.u32 %v6320, 30
        %v6322 = vsub.s32 %v6318, %v6321
        %vm6323 = vcmp.lt.s32.totalorder %v6322, 0
        %v6324 = vsub.s32 0, %v6322
        %v6325 = vsel %vm6323, %v6324, %v6322
        %v6326 = vclz %v6325
        %v6327 = vsub.s32 %v6326, 2
        %vm6328 = vcmp.gt.s32.totalorder 0, %v6327
        %v6329 = vsel %vm6328, 0, %v6327
        %v6330 = vsub.s32 32, %v6329
        %v6331 = vshll.u32 %v6322, %v6329
        %v6332 = vshrl.u32 %v6314, %v6330
        %v6333 = vor.u32 %v6331, %v6332
        %v6334 = vsub.s32 4294967266, %v6329
        %v6335 = vadd.s32 %v6334, 127
        %v6336 = vshll.u32 %v6335, 23
        %v6337 = vor.u32 4788187, %v6336
        %v6338 = vand.u32 2147483647, %v6337
        %v6340 = vcvt.s32.f32 %v6333
        %v6341 = vmul.f32 %v6340, %v6338
        %v6342 = vxor.u32 %v6341, 2147483648
        %v6343 = vsel %vm6260, %v6342, %v6341
        %v6344 = vsub.s32 4, %v6320
        %v6345 = vsel %vm6260, %v6344, %v6320
        %v6346 = vsel %vm6259, %v632, %v6343
        %v6347 = vsel %vm6259, 0, %v6345
        %v6348 = vcosq.f32.pop %v6346
        %v6349 = vsinq.f32.pop %v6346
        %vm6350 = vweird.f32 %v632
        %v6351 = vadd.s32 %v6347, 3
        %v6352 = vand.u32 %v6351, 3
        %vm6353 = vcmp.lt.s32.totalorder %v6352, 2
        %vm6354 = vcmp.eq.s32.totalorder %v6352, 0
        %v6355 = vxor.u32 %v6349, 2147483648
        %v6356 = vsel %vm6354, %v6348, %v6355
        %vm6357 = vcmp.eq.s32.totalorder %v6352, 2
        %v6358 = vxor.u32 %v6348, 2147483648
        %v6359 = vsel %vm6357, %v6358, %v6349
        %v6360 = vsel %vm6353, %v6356, %v6359
        %v6361 = vsel %vm6350, nan, %v6360
        %v6362 = vand.u32 2147483647, %v633
        %vm6363 = vcmp.le.f32.partialorder %v6362, 0.7853982
        %vm6364 = vcmp.lt.s32.totalorder %v633, 0
        %v6365 = vand.u32 %v633, 2139095040
        %v6366 = vshrl.u32 %v6365, 23
        %v6367 = vsub.s32 %v6366, 127
        %v6368 = vand.u32 2147483647, %v633
        %v6369 = vand.u32 %v6368, 8388607
        %v6370 = vor.u32 %v6369, 8388608
        %v6371 = vsub.s32 0, %v6370
        %v6372 = vadd.s32 %v6367, 1
        %vm6373 = vcmp.gt.s32.totalorder %v6372, 0
        %v6374 = vsel %vm6373, %v6372, 0
        %v6375 = vshrl.u32 %v6374, 5
        %v6376 = vand.u32 %v6374, 31
        %v6377 = vsub.s32 32, %v6376
        %v6378 = vshrl.u32 683565275, %v6377
        %v6379 = vshll.u32 683565275, %v6376
        %v6380 = vshrl.u32 2475754826, %v6377
        %v6381 = vor.u32 %v6379, %v6380
        %v6382 = vshll.u32 2475754826, %v6376
        %v6383 = vshrl.u32 2131351028, %v6377
        %v6384 = vor.u32 %v6382, %v6383
        %v6385 = vshll.u32 2131351028, %v6376
        %v6386 = vshrl.u32 2102212464, %v6377
        %v6387 = vor.u32 %v6385, %v6386
        %v6388 = vshll.u32 2102212464, %v6376
        %v6389 = vshrl.u32 920167782, %v6377
        %v6390 = vor.u32 %v6388, %v6389
        %v6391 = vshll.u32 920167782, %v6376
        %v6392 = vshrl.u32 1326507024, %v6377
        %v6393 = vor.u32 %v6391, %v6392
        %vm6394 = vcmp.lt.s32.totalorder %v6375, 1
        %vm6395 = vcmp.lt.s32.totalorder %v6375, 2
        %vm6396 = vcmp.lt.s32.totalorder %v6375, 3
        %vm6397 = vcmp.lt.s32.totalorder %v6375, 4
        %v6398 = vsel %vm6394, %v6378, %v6381
        %v6399 = vsel %vm6397, %v6387, 2102212464
        %v6400 = vsel %vm6396, %v6384, %v6399
        %v6401 = vsel %vm6395, %v6398, %v6400
        %v6402 = vsel %vm6394, %v6381, %v6384
        %v6403 = vsel %vm6397, %v6390, 920167782
        %v6404 = vsel %vm6396, %v6387, %v6403
        %v6405 = vsel %vm6395, %v6402, %v6404
        %v6406 = vsel %vm6394, %v6384, %v6387
        %v6407 = vsel %vm6397, %v6393, 1326507024
        %v6408 = vsel %vm6396, %v6390, %v6407
        %v6409 = vsel %vm6395, %v6406, %v6408
        %v6410 = vshll.u32 %v6370, 8
        %v6411 = vmul.u32.u64.compose %v6410, %v6409
        %v6412 = vextract.low.u32 %v6411
        %v6413 = vextract.high.u32 %v6411
        %v6414 = vmul.u32.u64.compose %v6410, %v6405
        %v6415 = vextract.low.u32 %v6414
        %v6416 = vextract.high.u32 %v6414
        %v6417 = vmul.u32 %v6410, %v6401
        %v6418 = vadd.s32 %v6413, %v6415
        %vm6419 = vc.u32 %v6413, %v6415
        %v6420 = vadd.s32 %v6416, 1
        %v6421 = vsel %vm6419, %v6420, %v6416
        %v6422 = vadd.s32 %v6417, %v6421
        %v6423 = vadd.s32 %v6422, 536870912
        %v6424 = vshrl.u32 %v6423, 30
        %v6425 = vshll.u32 %v6424, 30
        %v6426 = vsub.s32 %v6422, %v6425
        %vm6427 = vcmp.lt.s32.totalorder %v6426, 0
        %v6428 = vsub.s32 0, %v6426
        %v6429 = vsel %vm6427, %v6428, %v6426
        %v6430 = vclz %v6429
        %v6431 = vsub.s32 %v6430, 2
        %vm6432 = vcmp.gt.s32.totalorder 0, %v6431
        %v6433 = vsel %vm6432, 0, %v6431
        %v6434 = vsub.s32 32, %v6433
        %v6435 = vshll.u32 %v6426, %v6433
        %v6436 = vshrl.u32 %v6418, %v6434
        %v6437 = vor.u32 %v6435, %v6436
        %v6438 = vsub.s32 4294967266, %v6433
        %v6439 = vadd.s32 %v6438, 127
        %v6440 = vshll.u32 %v6439, 23
        %v6441 = vor.u32 4788187, %v6440
        %v6442 = vand.u32 2147483647, %v6441
        %v6444 = vcvt.s32.f32 %v6437
        %v6445 = vmul.f32 %v6444, %v6442
        %v6446 = vxor.u32 %v6445, 2147483648
        %v6447 = vsel %vm6364, %v6446, %v6445
        %v6448 = vsub.s32 4, %v6424
        %v6449 = vsel %vm6364, %v6448, %v6424
        %v6450 = vsel %vm6363, %v633, %v6447
        %v6451 = vsel %vm6363, 0, %v6449
        %v6452 = vcosq.f32.pop %v6450
        %v6453 = vsinq.f32.pop %v6450
        %vm6454 = vweird.f32 %v633
        %v6455 = vadd.s32 %v6451, 3
        %v6456 = vand.u32 %v6455, 3
        %vm6457 = vcmp.lt.s32.totalorder %v6456, 2
        %vm6458 = vcmp.eq.s32.totalorder %v6456, 0
        %v6459 = vxor.u32 %v6453, 2147483648
        %v6460 = vsel %vm6458, %v6452, %v6459
        %vm6461 = vcmp.eq.s32.totalorder %v6456, 2
        %v6462 = vxor.u32 %v6452, 2147483648
        %v6463 = vsel %vm6461, %v6462, %v6453
        %v6464 = vsel %vm6457, %v6460, %v6463
        %v6465 = vsel %vm6454, nan, %v6464
        %v6466 = vand.u32 2147483647, %v634
        %vm6467 = vcmp.le.f32.partialorder %v6466, 0.7853982
        %vm6468 = vcmp.lt.s32.totalorder %v634, 0
        %v6469 = vand.u32 %v634, 2139095040
        %v6470 = vshrl.u32 %v6469, 23
        %v6471 = vsub.s32 %v6470, 127
        %v6472 = vand.u32 2147483647, %v634
        %v6473 = vand.u32 %v6472, 8388607
        %v6474 = vor.u32 %v6473, 8388608
        %v6475 = vsub.s32 0, %v6474
        %v6476 = vadd.s32 %v6471, 1
        %vm6477 = vcmp.gt.s32.totalorder %v6476, 0
        %v6478 = vsel %vm6477, %v6476, 0
        %v6479 = vshrl.u32 %v6478, 5
        %v6480 = vand.u32 %v6478, 31
        %v6481 = vsub.s32 32, %v6480
        %v6482 = vshrl.u32 683565275, %v6481
        %v6483 = vshll.u32 683565275, %v6480
        %v6484 = vshrl.u32 2475754826, %v6481
        %v6485 = vor.u32 %v6483, %v6484
        %v6486 = vshll.u32 2475754826, %v6480
        %v6487 = vshrl.u32 2131351028, %v6481
        %v6488 = vor.u32 %v6486, %v6487
        %v6489 = vshll.u32 2131351028, %v6480
        %v6490 = vshrl.u32 2102212464, %v6481
        %v6491 = vor.u32 %v6489, %v6490
        %v6492 = vshll.u32 2102212464, %v6480
        %v6493 = vshrl.u32 920167782, %v6481
        %v6494 = vor.u32 %v6492, %v6493
        %v6495 = vshll.u32 920167782, %v6480
        %v6496 = vshrl.u32 1326507024, %v6481
        %v6497 = vor.u32 %v6495, %v6496
        %vm6498 = vcmp.lt.s32.totalorder %v6479, 1
        %vm6499 = vcmp.lt.s32.totalorder %v6479, 2
        %vm6500 = vcmp.lt.s32.totalorder %v6479, 3
        %vm6501 = vcmp.lt.s32.totalorder %v6479, 4
        %v6502 = vsel %vm6498, %v6482, %v6485
        %v6503 = vsel %vm6501, %v6491, 2102212464
        %v6504 = vsel %vm6500, %v6488, %v6503
        %v6505 = vsel %vm6499, %v6502, %v6504
        %v6506 = vsel %vm6498, %v6485, %v6488
        %v6507 = vsel %vm6501, %v6494, 920167782
        %v6508 = vsel %vm6500, %v6491, %v6507
        %v6509 = vsel %vm6499, %v6506, %v6508
        %v6510 = vsel %vm6498, %v6488, %v6491
        %v6511 = vsel %vm6501, %v6497, 1326507024
        %v6512 = vsel %vm6500, %v6494, %v6511
        %v6513 = vsel %vm6499, %v6510, %v6512
        %v6514 = vshll.u32 %v6474, 8
        %v6515 = vmul.u32.u64.compose %v6514, %v6513
        %v6516 = vextract.low.u32 %v6515
        %v6517 = vextract.high.u32 %v6515
        %v6518 = vmul.u32.u64.compose %v6514, %v6509
        %v6519 = vextract.low.u32 %v6518
        %v6520 = vextract.high.u32 %v6518
        %v6521 = vmul.u32 %v6514, %v6505
        %v6522 = vadd.s32 %v6517, %v6519
        %vm6523 = vc.u32 %v6517, %v6519
        %v6524 = vadd.s32 %v6520, 1
        %v6525 = vsel %vm6523, %v6524, %v6520
        %v6526 = vadd.s32 %v6521, %v6525
        %v6527 = vadd.s32 %v6526, 536870912
        %v6528 = vshrl.u32 %v6527, 30
        %v6529 = vshll.u32 %v6528, 30
        %v6530 = vsub.s32 %v6526, %v6529
        %vm6531 = vcmp.lt.s32.totalorder %v6530, 0
        %v6532 = vsub.s32 0, %v6530
        %v6533 = vsel %vm6531, %v6532, %v6530
        %v6534 = vclz %v6533
        %v6535 = vsub.s32 %v6534, 2
        %vm6536 = vcmp.gt.s32.totalorder 0, %v6535
        %v6537 = vsel %vm6536, 0, %v6535
        %v6538 = vsub.s32 32, %v6537
        %v6539 = vshll.u32 %v6530, %v6537
        %v6540 = vshrl.u32 %v6522, %v6538
        %v6541 = vor.u32 %v6539, %v6540
        %v6542 = vsub.s32 4294967266, %v6537
        %v6543 = vadd.s32 %v6542, 127
        %v6544 = vshll.u32 %v6543, 23
        %v6545 = vor.u32 4788187, %v6544
        %v6546 = vand.u32 2147483647, %v6545
        %v6548 = vcvt.s32.f32 %v6541
        %v6549 = vmul.f32 %v6548, %v6546
        %v6550 = vxor.u32 %v6549, 2147483648
        %v6551 = vsel %vm6468, %v6550, %v6549
        %v6552 = vsub.s32 4, %v6528
        %v6553 = vsel %vm6468, %v6552, %v6528
        %v6554 = vsel %vm6467, %v634, %v6551
        %v6555 = vsel %vm6467, 0, %v6553
        %v6556 = vcosq.f32.pop %v6554
        %v6557 = vsinq.f32.pop %v6554
        %vm6558 = vweird.f32 %v634
        %v6559 = vadd.s32 %v6555, 3
        %v6560 = vand.u32 %v6559, 3
        %vm6561 = vcmp.lt.s32.totalorder %v6560, 2
        %vm6562 = vcmp.eq.s32.totalorder %v6560, 0
        %v6563 = vxor.u32 %v6557, 2147483648
        %v6564 = vsel %vm6562, %v6556, %v6563
        %vm6565 = vcmp.eq.s32.totalorder %v6560, 2
        %v6566 = vxor.u32 %v6556, 2147483648
        %v6567 = vsel %vm6565, %v6566, %v6557
        %v6568 = vsel %vm6561, %v6564, %v6567
        %v6569 = vsel %vm6558, nan, %v6568
        %v6570 = vand.u32 2147483647, %v635
        %vm6571 = vcmp.le.f32.partialorder %v6570, 0.7853982
        %vm6572 = vcmp.lt.s32.totalorder %v635, 0
        %v6573 = vand.u32 %v635, 2139095040
        %v6574 = vshrl.u32 %v6573, 23
        %v6575 = vsub.s32 %v6574, 127
        %v6576 = vand.u32 2147483647, %v635
        %v6577 = vand.u32 %v6576, 8388607
        %v6578 = vor.u32 %v6577, 8388608
        %v6579 = vsub.s32 0, %v6578
        %v6580 = vadd.s32 %v6575, 1
        %vm6581 = vcmp.gt.s32.totalorder %v6580, 0
        %v6582 = vsel %vm6581, %v6580, 0
        %v6583 = vshrl.u32 %v6582, 5
        %v6584 = vand.u32 %v6582, 31
        %v6585 = vsub.s32 32, %v6584
        %v6586 = vshrl.u32 683565275, %v6585
        %v6587 = vshll.u32 683565275, %v6584
        %v6588 = vshrl.u32 2475754826, %v6585
        %v6589 = vor.u32 %v6587, %v6588
        %v6590 = vshll.u32 2475754826, %v6584
        %v6591 = vshrl.u32 2131351028, %v6585
        %v6592 = vor.u32 %v6590, %v6591
        %v6593 = vshll.u32 2131351028, %v6584
        %v6594 = vshrl.u32 2102212464, %v6585
        %v6595 = vor.u32 %v6593, %v6594
        %v6596 = vshll.u32 2102212464, %v6584
        %v6597 = vshrl.u32 920167782, %v6585
        %v6598 = vor.u32 %v6596, %v6597
        %v6599 = vshll.u32 920167782, %v6584
        %v6600 = vshrl.u32 1326507024, %v6585
        %v6601 = vor.u32 %v6599, %v6600
        %vm6602 = vcmp.lt.s32.totalorder %v6583, 1
        %vm6603 = vcmp.lt.s32.totalorder %v6583, 2
        %vm6604 = vcmp.lt.s32.totalorder %v6583, 3
        %vm6605 = vcmp.lt.s32.totalorder %v6583, 4
        %v6606 = vsel %vm6602, %v6586, %v6589
        %v6607 = vsel %vm6605, %v6595, 2102212464
        %v6608 = vsel %vm6604, %v6592, %v6607
        %v6609 = vsel %vm6603, %v6606, %v6608
        %v6610 = vsel %vm6602, %v6589, %v6592
        %v6611 = vsel %vm6605, %v6598, 920167782
        %v6612 = vsel %vm6604, %v6595, %v6611
        %v6613 = vsel %vm6603, %v6610, %v6612
        %v6614 = vsel %vm6602, %v6592, %v6595
        %v6615 = vsel %vm6605, %v6601, 1326507024
        %v6616 = vsel %vm6604, %v6598, %v6615
        %v6617 = vsel %vm6603, %v6614, %v6616
        %v6618 = vshll.u32 %v6578, 8
        %v6619 = vmul.u32.u64.compose %v6618, %v6617
        %v6620 = vextract.low.u32 %v6619
        %v6621 = vextract.high.u32 %v6619
        %v6622 = vmul.u32.u64.compose %v6618, %v6613
        %v6623 = vextract.low.u32 %v6622
        %v6624 = vextract.high.u32 %v6622
        %v6625 = vmul.u32 %v6618, %v6609
        %v6626 = vadd.s32 %v6621, %v6623
        %vm6627 = vc.u32 %v6621, %v6623
        %v6628 = vadd.s32 %v6624, 1
        %v6629 = vsel %vm6627, %v6628, %v6624
        %v6630 = vadd.s32 %v6625, %v6629
        %v6631 = vadd.s32 %v6630, 536870912
        %v6632 = vshrl.u32 %v6631, 30
        %v6633 = vshll.u32 %v6632, 30
        %v6634 = vsub.s32 %v6630, %v6633
        %vm6635 = vcmp.lt.s32.totalorder %v6634, 0
        %v6636 = vsub.s32 0, %v6634
        %v6637 = vsel %vm6635, %v6636, %v6634
        %v6638 = vclz %v6637
        %v6639 = vsub.s32 %v6638, 2
        %vm6640 = vcmp.gt.s32.totalorder 0, %v6639
        %v6641 = vsel %vm6640, 0, %v6639
        %v6642 = vsub.s32 32, %v6641
        %v6643 = vshll.u32 %v6634, %v6641
        %v6644 = vshrl.u32 %v6626, %v6642
        %v6645 = vor.u32 %v6643, %v6644
        %v6646 = vsub.s32 4294967266, %v6641
        %v6647 = vadd.s32 %v6646, 127
        %v6648 = vshll.u32 %v6647, 23
        %v6649 = vor.u32 4788187, %v6648
        %v6650 = vand.u32 2147483647, %v6649
        %v6652 = vcvt.s32.f32 %v6645
        %v6653 = vmul.f32 %v6652, %v6650
        %v6654 = vxor.u32 %v6653, 2147483648
        %v6655 = vsel %vm6572, %v6654, %v6653
        %v6656 = vsub.s32 4, %v6632
        %v6657 = vsel %vm6572, %v6656, %v6632
        %v6658 = vsel %vm6571, %v635, %v6655
        %v6659 = vsel %vm6571, 0, %v6657
        %v6660 = vcosq.f32.pop %v6658
        %v6661 = vsinq.f32.pop %v6658
        %vm6662 = vweird.f32 %v635
        %v6663 = vadd.s32 %v6659, 3
        %v6664 = vand.u32 %v6663, 3
        %vm6665 = vcmp.lt.s32.totalorder %v6664, 2
        %vm6666 = vcmp.eq.s32.totalorder %v6664, 0
        %v6667 = vxor.u32 %v6661, 2147483648
        %v6668 = vsel %vm6666, %v6660, %v6667
        %vm6669 = vcmp.eq.s32.totalorder %v6664, 2
        %v6670 = vxor.u32 %v6660, 2147483648
        %v6671 = vsel %vm6669, %v6670, %v6661
        %v6672 = vsel %vm6665, %v6668, %v6671
        %v6673 = vsel %vm6662, nan, %v6672
        %v6674 = vand.u32 2147483647, %v636
        %vm6675 = vcmp.le.f32.partialorder %v6674, 0.7853982
        %vm6676 = vcmp.lt.s32.totalorder %v636, 0
        %v6677 = vand.u32 %v636, 2139095040
        %v6678 = vshrl.u32 %v6677, 23
        %v6679 = vsub.s32 %v6678, 127
        %v6680 = vand.u32 2147483647, %v636
        %v6681 = vand.u32 %v6680, 8388607
        %v6682 = vor.u32 %v6681, 8388608
        %v6683 = vsub.s32 0, %v6682
        %v6684 = vadd.s32 %v6679, 1
        %vm6685 = vcmp.gt.s32.totalorder %v6684, 0
        %v6686 = vsel %vm6685, %v6684, 0
        %v6687 = vshrl.u32 %v6686, 5
        %v6688 = vand.u32 %v6686, 31
        %v6689 = vsub.s32 32, %v6688
        %v6690 = vshrl.u32 683565275, %v6689
        %v6691 = vshll.u32 683565275, %v6688
        %v6692 = vshrl.u32 2475754826, %v6689
        %v6693 = vor.u32 %v6691, %v6692
        %v6694 = vshll.u32 2475754826, %v6688
        %v6695 = vshrl.u32 2131351028, %v6689
        %v6696 = vor.u32 %v6694, %v6695
        %v6697 = vshll.u32 2131351028, %v6688
        %v6698 = vshrl.u32 2102212464, %v6689
        %v6699 = vor.u32 %v6697, %v6698
        %v6700 = vshll.u32 2102212464, %v6688
        %v6701 = vshrl.u32 920167782, %v6689
        %v6702 = vor.u32 %v6700, %v6701
        %v6703 = vshll.u32 920167782, %v6688
        %v6704 = vshrl.u32 1326507024, %v6689
        %v6705 = vor.u32 %v6703, %v6704
        %vm6706 = vcmp.lt.s32.totalorder %v6687, 1
        %vm6707 = vcmp.lt.s32.totalorder %v6687, 2
        %vm6708 = vcmp.lt.s32.totalorder %v6687, 3
        %vm6709 = vcmp.lt.s32.totalorder %v6687, 4
        %v6710 = vsel %vm6706, %v6690, %v6693
        %v6711 = vsel %vm6709, %v6699, 2102212464
        %v6712 = vsel %vm6708, %v6696, %v6711
        %v6713 = vsel %vm6707, %v6710, %v6712
        %v6714 = vsel %vm6706, %v6693, %v6696
        %v6715 = vsel %vm6709, %v6702, 920167782
        %v6716 = vsel %vm6708, %v6699, %v6715
        %v6717 = vsel %vm6707, %v6714, %v6716
        %v6718 = vsel %vm6706, %v6696, %v6699
        %v6719 = vsel %vm6709, %v6705, 1326507024
        %v6720 = vsel %vm6708, %v6702, %v6719
        %v6721 = vsel %vm6707, %v6718, %v6720
        %v6722 = vshll.u32 %v6682, 8
        %v6723 = vmul.u32.u64.compose %v6722, %v6721
        %v6724 = vextract.low.u32 %v6723
        %v6725 = vextract.high.u32 %v6723
        %v6726 = vmul.u32.u64.compose %v6722, %v6717
        %v6727 = vextract.low.u32 %v6726
        %v6728 = vextract.high.u32 %v6726
        %v6729 = vmul.u32 %v6722, %v6713
        %v6730 = vadd.s32 %v6725, %v6727
        %vm6731 = vc.u32 %v6725, %v6727
        %v6732 = vadd.s32 %v6728, 1
        %v6733 = vsel %vm6731, %v6732, %v6728
        %v6734 = vadd.s32 %v6729, %v6733
        %v6735 = vadd.s32 %v6734, 536870912
        %v6736 = vshrl.u32 %v6735, 30
        %v6737 = vshll.u32 %v6736, 30
        %v6738 = vsub.s32 %v6734, %v6737
        %vm6739 = vcmp.lt.s32.totalorder %v6738, 0
        %v6740 = vsub.s32 0, %v6738
        %v6741 = vsel %vm6739, %v6740, %v6738
        %v6742 = vclz %v6741
        %v6743 = vsub.s32 %v6742, 2
        %vm6744 = vcmp.gt.s32.totalorder 0, %v6743
        %v6745 = vsel %vm6744, 0, %v6743
        %v6746 = vsub.s32 32, %v6745
        %v6747 = vshll.u32 %v6738, %v6745
        %v6748 = vshrl.u32 %v6730, %v6746
        %v6749 = vor.u32 %v6747, %v6748
        %v6750 = vsub.s32 4294967266, %v6745
        %v6751 = vadd.s32 %v6750, 127
        %v6752 = vshll.u32 %v6751, 23
        %v6753 = vor.u32 4788187, %v6752
        %v6754 = vand.u32 2147483647, %v6753
        %v6756 = vcvt.s32.f32 %v6749
        %v6757 = vmul.f32 %v6756, %v6754
        %v6758 = vxor.u32 %v6757, 2147483648
        %v6759 = vsel %vm6676, %v6758, %v6757
        %v6760 = vsub.s32 4, %v6736
        %v6761 = vsel %vm6676, %v6760, %v6736
        %v6762 = vsel %vm6675, %v636, %v6759
        %v6763 = vsel %vm6675, 0, %v6761
        %v6764 = vcosq.f32.pop %v6762
        %v6765 = vsinq.f32.pop %v6762
        %vm6766 = vweird.f32 %v636
        %v6767 = vadd.s32 %v6763, 3
        %v6768 = vand.u32 %v6767, 3
        %vm6769 = vcmp.lt.s32.totalorder %v6768, 2
        %vm6770 = vcmp.eq.s32.totalorder %v6768, 0
        %v6771 = vxor.u32 %v6765, 2147483648
        %v6772 = vsel %vm6770, %v6764, %v6771
        %vm6773 = vcmp.eq.s32.totalorder %v6768, 2
        %v6774 = vxor.u32 %v6764, 2147483648
        %v6775 = vsel %vm6773, %v6774, %v6765
        %v6776 = vsel %vm6769, %v6772, %v6775
        %v6777 = vsel %vm6766, nan, %v6776
        %v6778 = vand.u32 2147483647, %v637
        %vm6779 = vcmp.le.f32.partialorder %v6778, 0.7853982
        %vm6780 = vcmp.lt.s32.totalorder %v637, 0
        %v6781 = vand.u32 %v637, 2139095040
        %v6782 = vshrl.u32 %v6781, 23
        %v6783 = vsub.s32 %v6782, 127
        %v6784 = vand.u32 2147483647, %v637
        %v6785 = vand.u32 %v6784, 8388607
        %v6786 = vor.u32 %v6785, 8388608
        %v6787 = vsub.s32 0, %v6786
        %v6788 = vadd.s32 %v6783, 1
        %vm6789 = vcmp.gt.s32.totalorder %v6788, 0
        %v6790 = vsel %vm6789, %v6788, 0
        %v6791 = vshrl.u32 %v6790, 5
        %v6792 = vand.u32 %v6790, 31
        %v6793 = vsub.s32 32, %v6792
        %v6794 = vshrl.u32 683565275, %v6793
        %v6795 = vshll.u32 683565275, %v6792
        %v6796 = vshrl.u32 2475754826, %v6793
        %v6797 = vor.u32 %v6795, %v6796
        %v6798 = vshll.u32 2475754826, %v6792
        %v6799 = vshrl.u32 2131351028, %v6793
        %v6800 = vor.u32 %v6798, %v6799
        %v6801 = vshll.u32 2131351028, %v6792
        %v6802 = vshrl.u32 2102212464, %v6793
        %v6803 = vor.u32 %v6801, %v6802
        %v6804 = vshll.u32 2102212464, %v6792
        %v6805 = vshrl.u32 920167782, %v6793
        %v6806 = vor.u32 %v6804, %v6805
        %v6807 = vshll.u32 920167782, %v6792
        %v6808 = vshrl.u32 1326507024, %v6793
        %v6809 = vor.u32 %v6807, %v6808
        %vm6810 = vcmp.lt.s32.totalorder %v6791, 1
        %vm6811 = vcmp.lt.s32.totalorder %v6791, 2
        %vm6812 = vcmp.lt.s32.totalorder %v6791, 3
        %vm6813 = vcmp.lt.s32.totalorder %v6791, 4
        %v6814 = vsel %vm6810, %v6794, %v6797
        %v6815 = vsel %vm6813, %v6803, 2102212464
        %v6816 = vsel %vm6812, %v6800, %v6815
        %v6817 = vsel %vm6811, %v6814, %v6816
        %v6818 = vsel %vm6810, %v6797, %v6800
        %v6819 = vsel %vm6813, %v6806, 920167782
        %v6820 = vsel %vm6812, %v6803, %v6819
        %v6821 = vsel %vm6811, %v6818, %v6820
        %v6822 = vsel %vm6810, %v6800, %v6803
        %v6823 = vsel %vm6813, %v6809, 1326507024
        %v6824 = vsel %vm6812, %v6806, %v6823
        %v6825 = vsel %vm6811, %v6822, %v6824
        %v6826 = vshll.u32 %v6786, 8
        %v6827 = vmul.u32.u64.compose %v6826, %v6825
        %v6828 = vextract.low.u32 %v6827
        %v6829 = vextract.high.u32 %v6827
        %v6830 = vmul.u32.u64.compose %v6826, %v6821
        %v6831 = vextract.low.u32 %v6830
        %v6832 = vextract.high.u32 %v6830
        %v6833 = vmul.u32 %v6826, %v6817
        %v6834 = vadd.s32 %v6829, %v6831
        %vm6835 = vc.u32 %v6829, %v6831
        %v6836 = vadd.s32 %v6832, 1
        %v6837 = vsel %vm6835, %v6836, %v6832
        %v6838 = vadd.s32 %v6833, %v6837
        %v6839 = vadd.s32 %v6838, 536870912
        %v6840 = vshrl.u32 %v6839, 30
        %v6841 = vshll.u32 %v6840, 30
        %v6842 = vsub.s32 %v6838, %v6841
        %vm6843 = vcmp.lt.s32.totalorder %v6842, 0
        %v6844 = vsub.s32 0, %v6842
        %v6845 = vsel %vm6843, %v6844, %v6842
        %v6846 = vclz %v6845
        %v6847 = vsub.s32 %v6846, 2
        %vm6848 = vcmp.gt.s32.totalorder 0, %v6847
        %v6849 = vsel %vm6848, 0, %v6847
        %v6850 = vsub.s32 32, %v6849
        %v6851 = vshll.u32 %v6842, %v6849
        %v6852 = vshrl.u32 %v6834, %v6850
        %v6853 = vor.u32 %v6851, %v6852
        %v6854 = vsub.s32 4294967266, %v6849
        %v6855 = vadd.s32 %v6854, 127
        %v6856 = vshll.u32 %v6855, 23
        %v6857 = vor.u32 4788187, %v6856
        %v6858 = vand.u32 2147483647, %v6857
        %v6860 = vcvt.s32.f32 %v6853
        %v6861 = vmul.f32 %v6860, %v6858
        %v6862 = vxor.u32 %v6861, 2147483648
        %v6863 = vsel %vm6780, %v6862, %v6861
        %v6864 = vsub.s32 4, %v6840
        %v6865 = vsel %vm6780, %v6864, %v6840
        %v6866 = vsel %vm6779, %v637, %v6863
        %v6867 = vsel %vm6779, 0, %v6865
        %v6868 = vcosq.f32.pop %v6866
        %v6869 = vsinq.f32.pop %v6866
        %vm6870 = vweird.f32 %v637
        %v6871 = vadd.s32 %v6867, 3
        %v6872 = vand.u32 %v6871, 3
        %vm6873 = vcmp.lt.s32.totalorder %v6872, 2
        %vm6874 = vcmp.eq.s32.totalorder %v6872, 0
        %v6875 = vxor.u32 %v6869, 2147483648
        %v6876 = vsel %vm6874, %v6868, %v6875
        %vm6877 = vcmp.eq.s32.totalorder %v6872, 2
        %v6878 = vxor.u32 %v6868, 2147483648
        %v6879 = vsel %vm6877, %v6878, %v6869
        %v6880 = vsel %vm6873, %v6876, %v6879
        %v6881 = vsel %vm6870, nan, %v6880
        %v6882 = vand.u32 2147483647, %v638
        %vm6883 = vcmp.le.f32.partialorder %v6882, 0.7853982
        %vm6884 = vcmp.lt.s32.totalorder %v638, 0
        %v6885 = vand.u32 %v638, 2139095040
        %v6886 = vshrl.u32 %v6885, 23
        %v6887 = vsub.s32 %v6886, 127
        %v6888 = vand.u32 2147483647, %v638
        %v6889 = vand.u32 %v6888, 8388607
        %v6890 = vor.u32 %v6889, 8388608
        %v6891 = vsub.s32 0, %v6890
        %v6892 = vadd.s32 %v6887, 1
        %vm6893 = vcmp.gt.s32.totalorder %v6892, 0
        %v6894 = vsel %vm6893, %v6892, 0
        %v6895 = vshrl.u32 %v6894, 5
        %v6896 = vand.u32 %v6894, 31
        %v6897 = vsub.s32 32, %v6896
        %v6898 = vshrl.u32 683565275, %v6897
        %v6899 = vshll.u32 683565275, %v6896
        %v6900 = vshrl.u32 2475754826, %v6897
        %v6901 = vor.u32 %v6899, %v6900
        %v6902 = vshll.u32 2475754826, %v6896
        %v6903 = vshrl.u32 2131351028, %v6897
        %v6904 = vor.u32 %v6902, %v6903
        %v6905 = vshll.u32 2131351028, %v6896
        %v6906 = vshrl.u32 2102212464, %v6897
        %v6907 = vor.u32 %v6905, %v6906
        %v6908 = vshll.u32 2102212464, %v6896
        %v6909 = vshrl.u32 920167782, %v6897
        %v6910 = vor.u32 %v6908, %v6909
        %v6911 = vshll.u32 920167782, %v6896
        %v6912 = vshrl.u32 1326507024, %v6897
        %v6913 = vor.u32 %v6911, %v6912
        %vm6914 = vcmp.lt.s32.totalorder %v6895, 1
        %vm6915 = vcmp.lt.s32.totalorder %v6895, 2
        %vm6916 = vcmp.lt.s32.totalorder %v6895, 3
        %vm6917 = vcmp.lt.s32.totalorder %v6895, 4
        %v6918 = vsel %vm6914, %v6898, %v6901
        %v6919 = vsel %vm6917, %v6907, 2102212464
        %v6920 = vsel %vm6916, %v6904, %v6919
        %v6921 = vsel %vm6915, %v6918, %v6920
        %v6922 = vsel %vm6914, %v6901, %v6904
        %v6923 = vsel %vm6917, %v6910, 920167782
        %v6924 = vsel %vm6916, %v6907, %v6923
        %v6925 = vsel %vm6915, %v6922, %v6924
        %v6926 = vsel %vm6914, %v6904, %v6907
        %v6927 = vsel %vm6917, %v6913, 1326507024
        %v6928 = vsel %vm6916, %v6910, %v6927
        %v6929 = vsel %vm6915, %v6926, %v6928
        %v6930 = vshll.u32 %v6890, 8
        %v6931 = vmul.u32.u64.compose %v6930, %v6929
        %v6932 = vextract.low.u32 %v6931
        %v6933 = vextract.high.u32 %v6931
        %v6934 = vmul.u32.u64.compose %v6930, %v6925
        %v6935 = vextract.low.u32 %v6934
        %v6936 = vextract.high.u32 %v6934
        %v6937 = vmul.u32 %v6930, %v6921
        %v6938 = vadd.s32 %v6933, %v6935
        %vm6939 = vc.u32 %v6933, %v6935
        %v6940 = vadd.s32 %v6936, 1
        %v6941 = vsel %vm6939, %v6940, %v6936
        %v6942 = vadd.s32 %v6937, %v6941
        %v6943 = vadd.s32 %v6942, 536870912
        %v6944 = vshrl.u32 %v6943, 30
        %v6945 = vshll.u32 %v6944, 30
        %v6946 = vsub.s32 %v6942, %v6945
        %vm6947 = vcmp.lt.s32.totalorder %v6946, 0
        %v6948 = vsub.s32 0, %v6946
        %v6949 = vsel %vm6947, %v6948, %v6946
        %v6950 = vclz %v6949
        %v6951 = vsub.s32 %v6950, 2
        %vm6952 = vcmp.gt.s32.totalorder 0, %v6951
        %v6953 = vsel %vm6952, 0, %v6951
        %v6954 = vsub.s32 32, %v6953
        %v6955 = vshll.u32 %v6946, %v6953
        %v6956 = vshrl.u32 %v6938, %v6954
        %v6957 = vor.u32 %v6955, %v6956
        %v6958 = vsub.s32 4294967266, %v6953
        %v6959 = vadd.s32 %v6958, 127
        %v6960 = vshll.u32 %v6959, 23
        %v6961 = vor.u32 4788187, %v6960
        %v6962 = vand.u32 2147483647, %v6961
        %v6964 = vcvt.s32.f32 %v6957
        %v6965 = vmul.f32 %v6964, %v6962
        %v6966 = vxor.u32 %v6965, 2147483648
        %v6967 = vsel %vm6884, %v6966, %v6965
        %v6968 = vsub.s32 4, %v6944
        %v6969 = vsel %vm6884, %v6968, %v6944
        %v6970 = vsel %vm6883, %v638, %v6967
        %v6971 = vsel %vm6883, 0, %v6969
        %v6972 = vcosq.f32.pop %v6970
        %v6973 = vsinq.f32.pop %v6970
        %vm6974 = vweird.f32 %v638
        %v6975 = vadd.s32 %v6971, 3
        %v6976 = vand.u32 %v6975, 3
        %vm6977 = vcmp.lt.s32.totalorder %v6976, 2
        %vm6978 = vcmp.eq.s32.totalorder %v6976, 0
        %v6979 = vxor.u32 %v6973, 2147483648
        %v6980 = vsel %vm6978, %v6972, %v6979
        %vm6981 = vcmp.eq.s32.totalorder %v6976, 2
        %v6982 = vxor.u32 %v6972, 2147483648
        %v6983 = vsel %vm6981, %v6982, %v6973
        %v6984 = vsel %vm6977, %v6980, %v6983
        %v6985 = vsel %vm6974, nan, %v6984
        %v6986 = vand.u32 2147483647, %v639
        %vm6987 = vcmp.le.f32.partialorder %v6986, 0.7853982
        %vm6988 = vcmp.lt.s32.totalorder %v639, 0
        %v6989 = vand.u32 %v639, 2139095040
        %v6990 = vshrl.u32 %v6989, 23
        %v6991 = vsub.s32 %v6990, 127
        %v6992 = vand.u32 2147483647, %v639
        %v6993 = vand.u32 %v6992, 8388607
        %v6994 = vor.u32 %v6993, 8388608
        %v6995 = vsub.s32 0, %v6994
        %v6996 = vadd.s32 %v6991, 1
        %vm6997 = vcmp.gt.s32.totalorder %v6996, 0
        %v6998 = vsel %vm6997, %v6996, 0
        %v6999 = vshrl.u32 %v6998, 5
        %v7000 = vand.u32 %v6998, 31
        %v7001 = vsub.s32 32, %v7000
        %v7002 = vshrl.u32 683565275, %v7001
        %v7003 = vshll.u32 683565275, %v7000
        %v7004 = vshrl.u32 2475754826, %v7001
        %v7005 = vor.u32 %v7003, %v7004
        %v7006 = vshll.u32 2475754826, %v7000
        %v7007 = vshrl.u32 2131351028, %v7001
        %v7008 = vor.u32 %v7006, %v7007
        %v7009 = vshll.u32 2131351028, %v7000
        %v7010 = vshrl.u32 2102212464, %v7001
        %v7011 = vor.u32 %v7009, %v7010
        %v7012 = vshll.u32 2102212464, %v7000
        %v7013 = vshrl.u32 920167782, %v7001
        %v7014 = vor.u32 %v7012, %v7013
        %v7015 = vshll.u32 920167782, %v7000
        %v7016 = vshrl.u32 1326507024, %v7001
        %v7017 = vor.u32 %v7015, %v7016
        %vm7018 = vcmp.lt.s32.totalorder %v6999, 1
        %vm7019 = vcmp.lt.s32.totalorder %v6999, 2
        %vm7020 = vcmp.lt.s32.totalorder %v6999, 3
        %vm7021 = vcmp.lt.s32.totalorder %v6999, 4
        %v7022 = vsel %vm7018, %v7002, %v7005
        %v7023 = vsel %vm7021, %v7011, 2102212464
        %v7024 = vsel %vm7020, %v7008, %v7023
        %v7025 = vsel %vm7019, %v7022, %v7024
        %v7026 = vsel %vm7018, %v7005, %v7008
        %v7027 = vsel %vm7021, %v7014, 920167782
        %v7028 = vsel %vm7020, %v7011, %v7027
        %v7029 = vsel %vm7019, %v7026, %v7028
        %v7030 = vsel %vm7018, %v7008, %v7011
        %v7031 = vsel %vm7021, %v7017, 1326507024
        %v7032 = vsel %vm7020, %v7014, %v7031
        %v7033 = vsel %vm7019, %v7030, %v7032
        %v7034 = vshll.u32 %v6994, 8
        %v7035 = vmul.u32.u64.compose %v7034, %v7033
        %v7036 = vextract.low.u32 %v7035
        %v7037 = vextract.high.u32 %v7035
        %v7038 = vmul.u32.u64.compose %v7034, %v7029
        %v7039 = vextract.low.u32 %v7038
        %v7040 = vextract.high.u32 %v7038
        %v7041 = vmul.u32 %v7034, %v7025
        %v7042 = vadd.s32 %v7037, %v7039
        %vm7043 = vc.u32 %v7037, %v7039
        %v7044 = vadd.s32 %v7040, 1
        %v7045 = vsel %vm7043, %v7044, %v7040
        %v7046 = vadd.s32 %v7041, %v7045
        %v7047 = vadd.s32 %v7046, 536870912
        %v7048 = vshrl.u32 %v7047, 30
        %v7049 = vshll.u32 %v7048, 30
        %v7050 = vsub.s32 %v7046, %v7049
        %vm7051 = vcmp.lt.s32.totalorder %v7050, 0
        %v7052 = vsub.s32 0, %v7050
        %v7053 = vsel %vm7051, %v7052, %v7050
        %v7054 = vclz %v7053
        %v7055 = vsub.s32 %v7054, 2
        %vm7056 = vcmp.gt.s32.totalorder 0, %v7055
        %v7057 = vsel %vm7056, 0, %v7055
        %v7058 = vsub.s32 32, %v7057
        %v7059 = vshll.u32 %v7050, %v7057
        %v7060 = vshrl.u32 %v7042, %v7058
        %v7061 = vor.u32 %v7059, %v7060
        %v7062 = vsub.s32 4294967266, %v7057
        %v7063 = vadd.s32 %v7062, 127
        %v7064 = vshll.u32 %v7063, 23
        %v7065 = vor.u32 4788187, %v7064
        %v7066 = vand.u32 2147483647, %v7065
        %v7068 = vcvt.s32.f32 %v7061
        %v7069 = vmul.f32 %v7068, %v7066
        %v7070 = vxor.u32 %v7069, 2147483648
        %v7071 = vsel %vm6988, %v7070, %v7069
        %v7072 = vsub.s32 4, %v7048
        %v7073 = vsel %vm6988, %v7072, %v7048
        %v7074 = vsel %vm6987, %v639, %v7071
        %v7075 = vsel %vm6987, 0, %v7073
        %v7076 = vcosq.f32.pop %v7074
        %v7077 = vsinq.f32.pop %v7074
        %vm7078 = vweird.f32 %v639
        %v7079 = vadd.s32 %v7075, 3
        %v7080 = vand.u32 %v7079, 3
        %vm7081 = vcmp.lt.s32.totalorder %v7080, 2
        %vm7082 = vcmp.eq.s32.totalorder %v7080, 0
        %v7083 = vxor.u32 %v7077, 2147483648
        %v7084 = vsel %vm7082, %v7076, %v7083
        %vm7085 = vcmp.eq.s32.totalorder %v7080, 2
        %v7086 = vxor.u32 %v7076, 2147483648
        %v7087 = vsel %vm7085, %v7086, %v7077
        %v7088 = vsel %vm7081, %v7084, %v7087
        %v7089 = vsel %vm7078, nan, %v7088
        %v7090 = vand.u32 2147483647, %v640
        %vm7091 = vcmp.le.f32.partialorder %v7090, 0.7853982
        %vm7092 = vcmp.lt.s32.totalorder %v640, 0
        %v7093 = vand.u32 %v640, 2139095040
        %v7094 = vshrl.u32 %v7093, 23
        %v7095 = vsub.s32 %v7094, 127
        %v7096 = vand.u32 2147483647, %v640
        %v7097 = vand.u32 %v7096, 8388607
        %v7098 = vor.u32 %v7097, 8388608
        %v7099 = vsub.s32 0, %v7098
        %v7100 = vadd.s32 %v7095, 1
        %vm7101 = vcmp.gt.s32.totalorder %v7100, 0
        %v7102 = vsel %vm7101, %v7100, 0
        %v7103 = vshrl.u32 %v7102, 5
        %v7104 = vand.u32 %v7102, 31
        %v7105 = vsub.s32 32, %v7104
        %v7106 = vshrl.u32 683565275, %v7105
        %v7107 = vshll.u32 683565275, %v7104
        %v7108 = vshrl.u32 2475754826, %v7105
        %v7109 = vor.u32 %v7107, %v7108
        %v7110 = vshll.u32 2475754826, %v7104
        %v7111 = vshrl.u32 2131351028, %v7105
        %v7112 = vor.u32 %v7110, %v7111
        %v7113 = vshll.u32 2131351028, %v7104
        %v7114 = vshrl.u32 2102212464, %v7105
        %v7115 = vor.u32 %v7113, %v7114
        %v7116 = vshll.u32 2102212464, %v7104
        %v7117 = vshrl.u32 920167782, %v7105
        %v7118 = vor.u32 %v7116, %v7117
        %v7119 = vshll.u32 920167782, %v7104
        %v7120 = vshrl.u32 1326507024, %v7105
        %v7121 = vor.u32 %v7119, %v7120
        %vm7122 = vcmp.lt.s32.totalorder %v7103, 1
        %vm7123 = vcmp.lt.s32.totalorder %v7103, 2
        %vm7124 = vcmp.lt.s32.totalorder %v7103, 3
        %vm7125 = vcmp.lt.s32.totalorder %v7103, 4
        %v7126 = vsel %vm7122, %v7106, %v7109
        %v7127 = vsel %vm7125, %v7115, 2102212464
        %v7128 = vsel %vm7124, %v7112, %v7127
        %v7129 = vsel %vm7123, %v7126, %v7128
        %v7130 = vsel %vm7122, %v7109, %v7112
        %v7131 = vsel %vm7125, %v7118, 920167782
        %v7132 = vsel %vm7124, %v7115, %v7131
        %v7133 = vsel %vm7123, %v7130, %v7132
        %v7134 = vsel %vm7122, %v7112, %v7115
        %v7135 = vsel %vm7125, %v7121, 1326507024
        %v7136 = vsel %vm7124, %v7118, %v7135
        %v7137 = vsel %vm7123, %v7134, %v7136
        %v7138 = vshll.u32 %v7098, 8
        %v7139 = vmul.u32.u64.compose %v7138, %v7137
        %v7140 = vextract.low.u32 %v7139
        %v7141 = vextract.high.u32 %v7139
        %v7142 = vmul.u32.u64.compose %v7138, %v7133
        %v7143 = vextract.low.u32 %v7142
        %v7144 = vextract.high.u32 %v7142
        %v7145 = vmul.u32 %v7138, %v7129
        %v7146 = vadd.s32 %v7141, %v7143
        %vm7147 = vc.u32 %v7141, %v7143
        %v7148 = vadd.s32 %v7144, 1
        %v7149 = vsel %vm7147, %v7148, %v7144
        %v7150 = vadd.s32 %v7145, %v7149
        %v7151 = vadd.s32 %v7150, 536870912
        %v7152 = vshrl.u32 %v7151, 30
        %v7153 = vshll.u32 %v7152, 30
        %v7154 = vsub.s32 %v7150, %v7153
        %vm7155 = vcmp.lt.s32.totalorder %v7154, 0
        %v7156 = vsub.s32 0, %v7154
        %v7157 = vsel %vm7155, %v7156, %v7154
        %v7158 = vclz %v7157
        %v7159 = vsub.s32 %v7158, 2
        %vm7160 = vcmp.gt.s32.totalorder 0, %v7159
        %v7161 = vsel %vm7160, 0, %v7159
        %v7162 = vsub.s32 32, %v7161
        %v7163 = vshll.u32 %v7154, %v7161
        %v7164 = vshrl.u32 %v7146, %v7162
        %v7165 = vor.u32 %v7163, %v7164
        %v7166 = vsub.s32 4294967266, %v7161
        %v7167 = vadd.s32 %v7166, 127
        %v7168 = vshll.u32 %v7167, 23
        %v7169 = vor.u32 4788187, %v7168
        %v7170 = vand.u32 2147483647, %v7169
        %v7172 = vcvt.s32.f32 %v7165
        %v7173 = vmul.f32 %v7172, %v7170
        %v7174 = vxor.u32 %v7173, 2147483648
        %v7175 = vsel %vm7092, %v7174, %v7173
        %v7176 = vsub.s32 4, %v7152
        %v7177 = vsel %vm7092, %v7176, %v7152
        %v7178 = vsel %vm7091, %v640, %v7175
        %v7179 = vsel %vm7091, 0, %v7177
        %v7180 = vcosq.f32.pop %v7178
        %v7181 = vsinq.f32.pop %v7178
        %vm7182 = vweird.f32 %v640
        %v7183 = vadd.s32 %v7179, 3
        %v7184 = vand.u32 %v7183, 3
        %vm7185 = vcmp.lt.s32.totalorder %v7184, 2
        %vm7186 = vcmp.eq.s32.totalorder %v7184, 0
        %v7187 = vxor.u32 %v7181, 2147483648
        %v7188 = vsel %vm7186, %v7180, %v7187
        %vm7189 = vcmp.eq.s32.totalorder %v7184, 2
        %v7190 = vxor.u32 %v7180, 2147483648
        %v7191 = vsel %vm7189, %v7190, %v7181
        %v7192 = vsel %vm7185, %v7188, %v7191
        %v7193 = vsel %vm7182, nan, %v7192
        %v7194 = vand.u32 2147483647, %v641
        %vm7195 = vcmp.le.f32.partialorder %v7194, 0.7853982
        %vm7196 = vcmp.lt.s32.totalorder %v641, 0
        %v7197 = vand.u32 %v641, 2139095040
        %v7198 = vshrl.u32 %v7197, 23
        %v7199 = vsub.s32 %v7198, 127
        %v7200 = vand.u32 2147483647, %v641
        %v7201 = vand.u32 %v7200, 8388607
        %v7202 = vor.u32 %v7201, 8388608
        %v7203 = vsub.s32 0, %v7202
        %v7204 = vadd.s32 %v7199, 1
        %vm7205 = vcmp.gt.s32.totalorder %v7204, 0
        %v7206 = vsel %vm7205, %v7204, 0
        %v7207 = vshrl.u32 %v7206, 5
        %v7208 = vand.u32 %v7206, 31
        %v7209 = vsub.s32 32, %v7208
        %v7210 = vshrl.u32 683565275, %v7209
        %v7211 = vshll.u32 683565275, %v7208
        %v7212 = vshrl.u32 2475754826, %v7209
        %v7213 = vor.u32 %v7211, %v7212
        %v7214 = vshll.u32 2475754826, %v7208
        %v7215 = vshrl.u32 2131351028, %v7209
        %v7216 = vor.u32 %v7214, %v7215
        %v7217 = vshll.u32 2131351028, %v7208
        %v7218 = vshrl.u32 2102212464, %v7209
        %v7219 = vor.u32 %v7217, %v7218
        %v7220 = vshll.u32 2102212464, %v7208
        %v7221 = vshrl.u32 920167782, %v7209
        %v7222 = vor.u32 %v7220, %v7221
        %v7223 = vshll.u32 920167782, %v7208
        %v7224 = vshrl.u32 1326507024, %v7209
        %v7225 = vor.u32 %v7223, %v7224
        %vm7226 = vcmp.lt.s32.totalorder %v7207, 1
        %vm7227 = vcmp.lt.s32.totalorder %v7207, 2
        %vm7228 = vcmp.lt.s32.totalorder %v7207, 3
        %vm7229 = vcmp.lt.s32.totalorder %v7207, 4
        %v7230 = vsel %vm7226, %v7210, %v7213
        %v7231 = vsel %vm7229, %v7219, 2102212464
        %v7232 = vsel %vm7228, %v7216, %v7231
        %v7233 = vsel %vm7227, %v7230, %v7232
        %v7234 = vsel %vm7226, %v7213, %v7216
        %v7235 = vsel %vm7229, %v7222, 920167782
        %v7236 = vsel %vm7228, %v7219, %v7235
        %v7237 = vsel %vm7227, %v7234, %v7236
        %v7238 = vsel %vm7226, %v7216, %v7219
        %v7239 = vsel %vm7229, %v7225, 1326507024
        %v7240 = vsel %vm7228, %v7222, %v7239
        %v7241 = vsel %vm7227, %v7238, %v7240
        %v7242 = vshll.u32 %v7202, 8
        %v7243 = vmul.u32.u64.compose %v7242, %v7241
        %v7244 = vextract.low.u32 %v7243
        %v7245 = vextract.high.u32 %v7243
        %v7246 = vmul.u32.u64.compose %v7242, %v7237
        %v7247 = vextract.low.u32 %v7246
        %v7248 = vextract.high.u32 %v7246
        %v7249 = vmul.u32 %v7242, %v7233
        %v7250 = vadd.s32 %v7245, %v7247
        %vm7251 = vc.u32 %v7245, %v7247
        %v7252 = vadd.s32 %v7248, 1
        %v7253 = vsel %vm7251, %v7252, %v7248
        %v7254 = vadd.s32 %v7249, %v7253
        %v7255 = vadd.s32 %v7254, 536870912
        %v7256 = vshrl.u32 %v7255, 30
        %v7257 = vshll.u32 %v7256, 30
        %v7258 = vsub.s32 %v7254, %v7257
        %vm7259 = vcmp.lt.s32.totalorder %v7258, 0
        %v7260 = vsub.s32 0, %v7258
        %v7261 = vsel %vm7259, %v7260, %v7258
        %v7262 = vclz %v7261
        %v7263 = vsub.s32 %v7262, 2
        %vm7264 = vcmp.gt.s32.totalorder 0, %v7263
        %v7265 = vsel %vm7264, 0, %v7263
        %v7266 = vsub.s32 32, %v7265
        %v7267 = vshll.u32 %v7258, %v7265
        %v7268 = vshrl.u32 %v7250, %v7266
        %v7269 = vor.u32 %v7267, %v7268
        %v7270 = vsub.s32 4294967266, %v7265
        %v7271 = vadd.s32 %v7270, 127
        %v7272 = vshll.u32 %v7271, 23
        %v7273 = vor.u32 4788187, %v7272
        %v7274 = vand.u32 2147483647, %v7273
        %v7276 = vcvt.s32.f32 %v7269
        %v7277 = vmul.f32 %v7276, %v7274
        %v7278 = vxor.u32 %v7277, 2147483648
        %v7279 = vsel %vm7196, %v7278, %v7277
        %v7280 = vsub.s32 4, %v7256
        %v7281 = vsel %vm7196, %v7280, %v7256
        %v7282 = vsel %vm7195, %v641, %v7279
        %v7283 = vsel %vm7195, 0, %v7281
        %v7284 = vcosq.f32.pop %v7282
        %v7285 = vsinq.f32.pop %v7282
        %vm7286 = vweird.f32 %v641
        %v7287 = vadd.s32 %v7283, 3
        %v7288 = vand.u32 %v7287, 3
        %vm7289 = vcmp.lt.s32.totalorder %v7288, 2
        %vm7290 = vcmp.eq.s32.totalorder %v7288, 0
        %v7291 = vxor.u32 %v7285, 2147483648
        %v7292 = vsel %vm7290, %v7284, %v7291
        %vm7293 = vcmp.eq.s32.totalorder %v7288, 2
        %v7294 = vxor.u32 %v7284, 2147483648
        %v7295 = vsel %vm7293, %v7294, %v7285
        %v7296 = vsel %vm7289, %v7292, %v7295
        %v7297 = vsel %vm7286, nan, %v7296
        %7298 = vst [vmem:[%s175] sm:$0xff] %v4073
        %7299 = vst [vmem:[%s175 + $0x8] sm:$0xff] %v4177
        %7300 = vst [vmem:[%s175 + $0x10] sm:$0xff] %v4281
        %7301 = vst [vmem:[%s175 + $0x18] sm:$0xff] %v4385
        %7302 = vst [vmem:[%s175 + $0x20] sm:$0xff] %v4489
        %7303 = vst [vmem:[%s175 + $0x28] sm:$0xff] %v4593
        %7304 = vst [vmem:[%s175 + $0x30] sm:$0xff] %v4697
        %7305 = vst [vmem:[%s175 + $0x38] sm:$0xff] %v4801
        %7306 = vst [vmem:[%s175 + $0x40] sm:$0xff] %v4905
        %7307 = vst [vmem:[%s175 + $0x48] sm:$0xff] %v5009
        %7308 = vst [vmem:[%s175 + $0x50] sm:$0xff] %v5113
        %7309 = vst [vmem:[%s175 + $0x58] sm:$0xff] %v5217
        %7310 = vst [vmem:[%s175 + $0x60] sm:$0xff] %v5321
        %7311 = vst [vmem:[%s175 + $0x68] sm:$0xff] %v5425
        %7312 = vst [vmem:[%s175 + $0x70] sm:$0xff] %v5529
        %7313 = vst [vmem:[%s175 + $0x78] sm:$0xff] %v5633
        %7314 = vst [vmem:[%s175 + $0x80] sm:$0xff] %v5737
        %7315 = vst [vmem:[%s175 + $0x88] sm:$0xff] %v5841
        %7316 = vst [vmem:[%s175 + $0x90] sm:$0xff] %v5945
        %7317 = vst [vmem:[%s175 + $0x98] sm:$0xff] %v6049
        %7318 = vst [vmem:[%s175 + $0xa0] sm:$0xff] %v6153
        %7319 = vst [vmem:[%s175 + $0xa8] sm:$0xff] %v6257
        %7320 = vst [vmem:[%s175 + $0xb0] sm:$0xff] %v6361
        %7321 = vst [vmem:[%s175 + $0xb8] sm:$0xff] %v6465
        %7322 = vst [vmem:[%s175 + $0xc0] sm:$0xff] %v6569
        %7323 = vst [vmem:[%s175 + $0xc8] sm:$0xff] %v6673
        %7324 = vst [vmem:[%s175 + $0xd0] sm:$0xff] %v6777
        %7325 = vst [vmem:[%s175 + $0xd8] sm:$0xff] %v6881
        %7326 = vst [vmem:[%s175 + $0xe0] sm:$0xff] %v6985
        %7327 = vst [vmem:[%s175 + $0xe8] sm:$0xff] %v7089
        %7328 = vst [vmem:[%s175 + $0xf0] sm:$0xff] %v7193
        %7329 = vst [vmem:[%s175 + $0xf8] sm:$0xff] %v7297
        %s7330 = sand.u32 %s76, 1
        %s7331 = scalar_lea.sflag [#allocation3], %s7330
        %s7332 = sand.u32 %s76, 1
        %s7333 = smul.addr %s7332, 256
        %s7334 = scalar_lea.vmem [#allocation2], %s7333
        %s7335 = sand.u32 %s102, 1
        %s7336 = scalar_lea.sflag [#allocation5], %s7335
        %s7337 = sand.u32 %s102, 1
        %s7338 = smul.addr %s7337, 256
        %s7339 = scalar_lea.vmem [#allocation4], %s7338
        // Predicated region
        $region29: #{tpu_custom_call.1} parent=27 // pred_check
          %p7340 = pneg %p86
        $region30: #{tpu_custom_call.1} parent=27 // pred_check_branch
          %7342 = sbr.rel (%p7340) target = $region32
        $region31: #{tpu_custom_call.1} parent=27 // pred_region
          %s7343 = smul.u32 32, %s21
          %s7345 = ssub.s32 4096, 4096
          %7346 = vsyncadd %s7331, %s7345
          %s7347 = smul.addr %s7343, 128
          %s7348 = scalar_lea.hbm %s2, %s7347
          %s7349 = sshll.u32 %s7334, 4
          %s7350 = int_to_ptr.vmem [resolvable:$true] %s7349
          %7355 = dma.vmem_to_hbm [thread:$0]  %s7350, 4096, %s7348, %s7331, 128, 128, 8
        $region32: #{tpu_custom_call.1} parent=27 // pred_fallthru
          _
        // Predicated region
        $region33: #{tpu_custom_call.1} parent=27 // pred_check
          %p7356 = pneg %p112
        $region34: #{tpu_custom_call.1} parent=27 // pred_check_branch
          %7358 = sbr.rel (%p7356) target = $region36
        $region35: #{tpu_custom_call.1} parent=27 // pred_region
          %s7359 = smul.u32 32, %s21
          %s7361 = ssub.s32 4096, 4096
          %7362 = vsyncadd %s7336, %s7361
          %s7363 = smul.addr %s7359, 128
          %s7364 = scalar_lea.hbm %s3, %s7363
          %s7365 = sshll.u32 %s7339, 4
          %s7366 = int_to_ptr.vmem [resolvable:$true] %s7365
          %7371 = dma.vmem_to_hbm [thread:$0]  %s7366, 4096, %s7364, %s7336, 128, 128, 8
        $region36: #{tpu_custom_call.1} parent=27 // pred_fallthru
          _
      $region28: #{tpu_custom_call.1} parent=5 // pred_fallthru
        _
      %p7372 = scmp.le.s32.totalorder 2, %s16
      // Predicated region
      $region37: #{tpu_custom_call.1} parent=5 // pred_check
        %p7373 = pneg %p7372
      $region38: #{tpu_custom_call.1} parent=5 // pred_check_branch
        %7375 = sbr.rel (%p7373) target = $region40
      $region39: #{tpu_custom_call.1} parent=5 // pred_region
        %s7376 = ssub.s32 %s16, 2
        // Predicated region
        $region41: #{tpu_custom_call.1} parent=39 // pred_check
          %p7377 = pneg %p92
        $region42: #{tpu_custom_call.1} parent=39 // pred_check_branch
          %7379 = sbr.rel (%p7377) target = $region44
        $region43: #{tpu_custom_call.1} parent=39 // pred_region
          %s7380 = sand.u32 %s77, 1
          %s7381 = scalar_lea.sflag [#allocation3], %s7380
          %s7382 = sand.u32 %s77, 1
          %s7383 = smul.addr %s7382, 256
          %s7384 = scalar_lea.vmem [#allocation2], %s7383
          %7385 = dma.done %s7381, 4096
        $region44: #{tpu_custom_call.1} parent=39 // pred_fallthru
          _
        // Predicated region
        $region45: #{tpu_custom_call.1} parent=39 // pred_check
          %p7386 = pneg %p118
        $region46: #{tpu_custom_call.1} parent=39 // pred_check_branch
          %7388 = sbr.rel (%p7386) target = $region48
        $region47: #{tpu_custom_call.1} parent=39 // pred_region
          %s7389 = sand.u32 %s103, 1
          %s7390 = scalar_lea.sflag [#allocation5], %s7389
          %s7391 = sand.u32 %s103, 1
          %s7392 = smul.addr %s7391, 256
          %s7393 = scalar_lea.vmem [#allocation4], %s7392
          %7394 = dma.done %s7390, 4096
        $region48: #{tpu_custom_call.1} parent=39 // pred_fallthru
          _
      $region40: #{tpu_custom_call.1} parent=5 // pred_fallthru
        _
    $region6: #{tpu_custom_call.1} parent=1 // loop_footer
      %s20 = sadd.s32 1, %s16
    $region7: #{tpu_custom_call.1} parent=1 // loop_footer_branch
      %15 = sbr.rel target = $region3
    $region8: #{tpu_custom_call.1} parent=1 // loop_exit
      _
    %7395 = vsyncpa [#allocation3], 1
    %s7396 = scalar_lea.sflag [#allocation3], 1
    %7397 = vsyncpa %s7396, 1
    %7398 = vsyncpa [#allocation5], 1
    %s7399 = scalar_lea.sflag [#allocation5], 1
    %7400 = vsyncpa %s7399, 1

</llo_original>
